<compile_context>
chip_gen: v5e
topology: v5e:2x2
jax: 0.10.0
libtpu: 0.0.40
codegen_flags: <defaults>
</compile_context>

<pallas_src>
import functools

import numpy as np

import jax
import jax.numpy as jnp
from jax.experimental import pallas as pl
from jax.experimental.pallas import tpu as pltpu

N_FILTERS = 32
BN_EPS = 1e-5
LEAKY_SLOPE = 0.2
HEAD_PAD = 128          # Cout=1 head padded to 128 output lanes (lane-dense final store)
L1_LHS_LANES = 128      # layer-1 LHS lanes: kh*win*cin = 4*28*1 = 112, zero-padded to 128

# Per-layer conv geometry (square kernels / square spatial maps):
#   layer 1: k4 s2 p1,   1 ->  32, 28 -> 14   (wo padded 14 -> 16  => 16*32  = 512 lanes)
#   layer 2: k4 s2 p1,  32 ->  64, 14 ->  7   (wo padded  7 ->  8  =>  8*64  = 512 lanes)  + BN
#   layer 3: k3 s2 p1,  64 -> 128,  7 ->  4   (                         4*128 = 512 lanes) + BN
#   layer 4: k4 s1 p0, 128 ->   1,  4 ->  1   (cout padded 1 -> 128)


def _out_size(hin, k, s, p):
    return (hin + 2 * p - k) // s + 1


# -------------------------------------------------------------------------------------------
# Host-side weight repacking (done once, outside jit)
# -------------------------------------------------------------------------------------------
def _build_bw(w_hwio, win, stride, pad, *, win_pad=None, wo_pad=None,
              cout_pad=None, row_pad=None):
    """Fold the kw taps, stride and W-padding of a conv into one dense matmul weight.

    Returns BW (kh*win_pad*cin [rows optionally padded to row_pad], wo_pad*cout_pad) bf16 with
        BW[(i, w, c), (o, co)] = w[i, w + pad - stride*o, c, co]   (0 outside the kernel,
                                                                    0 for padded w / o / co),
    so that  Y[(ho, n), (o, co)] = X[(ho, n), (i, w, c)] @ BW,
    where X row (ho, n) lane-concatenates the kh input rows h = stride*ho + i - pad.
    Rows for padded w (w >= win) are zero, so padded input lanes may hold garbage (e.g. the
    BatchNorm shift on the previous layer's padded lanes) without affecting the result.
    """
    kh, kw, cin, cout = w_hwio.shape
    wo = _out_size(win, kw, stride, pad)
    win_p = win if win_pad is None else win_pad
    wo_p = wo if wo_pad is None else wo_pad
    cout_p = cout if cout_pad is None else cout_pad
    w_np = np.asarray(w_hwio, np.float32)
    bw = np.zeros((kh, win_p, cin, wo_p, cout_p), np.float32)
    for i in range(kh):
        for w in range(win):
            for o in range(wo):
                j = w + pad - stride * o
                if 0 <= j < kw:
                    bw[i, w, :, o, :cout] = w_np[i, j, :, :]
    bw = bw.reshape(kh * win_p * cin, wo_p * cout_p)
    if row_pad is not None and row_pad > bw.shape[0]:
        bw = np.pad(bw, ((0, row_pad - bw.shape[0]), (0, 0)))
    return jnp.asarray(bw, jnp.bfloat16)


def _build_group_mats(wo_pad, cout):
    """gs (wo_pad*cout, cout): sums the wo groups per channel.   gs_bc = gs.T broadcasts back."""
    gs = np.tile(np.eye(cout, dtype=np.float32), (wo_pad, 1))
    return jnp.asarray(gs), jnp.asarray(np.ascontiguousarray(gs.T))


def init_params(key, n_filters=N_FILTERS):
    """Deterministic synthetic weights. Conv weights stored HWIO: (KH, KW, Cin, Cout).
    All convs are bias-free, matching nn.Conv2d(..., bias=False) in the reference module."""
    k1, k2, k3, k4 = jax.random.split(key, 4)

    def w(k, shape):
        return 0.02 * jax.random.normal(k, shape, jnp.float32)

    nf = n_filters
    return {
        "w1": w(k1, (4, 4, 1, nf)),
        "w2": w(k2, (4, 4, nf, nf * 2)),
        "gamma2": jnp.ones((nf * 2,), jnp.float32),
        "beta2": jnp.zeros((nf * 2,), jnp.float32),
        "w3": w(k3, (3, 3, nf * 2, nf * 4)),
        "gamma3": jnp.ones((nf * 4,), jnp.float32),
        "beta3": jnp.zeros((nf * 4,), jnp.float32),
        "w4": w(k4, (4, 4, nf * 4, 1)),
    }


def prepare_kernel_params(params):
    """Repack conv/BN parameters into the lane-aligned operands consumed by the fused kernel."""
    nf = N_FILTERS
    kp = {
        "bw1": _build_bw(params["w1"], win=28, stride=2, pad=1, wo_pad=16, row_pad=L1_LHS_LANES),
        "bw2": _build_bw(params["w2"], win=14, stride=2, pad=1, win_pad=16, wo_pad=8),
        "bw3": _build_bw(params["w3"], win=7, stride=2, pad=1, win_pad=8, wo_pad=4),
        "bw4": _build_bw(params["w4"], win=4, stride=1, pad=0, cout_pad=HEAD_PAD),
    }
    kp["gs2"], kp["gsb2"] = _build_group_mats(wo_pad=8, cout=2 * nf)
    kp["gs3"], kp["gsb3"] = _build_group_mats(wo_pad=4, cout=4 * nf)
    for l in (2, 3):
        kp[f"gamma{l}"] = params[f"gamma{l}"].reshape(1, -1).astype(jnp.float32)
        kp[f"beta{l}"] = params[f"beta{l}"].reshape(1, -1).astype(jnp.float32)
    return kp


# -------------------------------------------------------------------------------------------
# In-kernel helpers (traced once; only vreg-aligned static slices/concats, 2-D matmuls, VPU/EUP)
# -------------------------------------------------------------------------------------------
def _gather_rows(a, *, n, hin, lanes, kh, stride, pad, ho):
    """Build the (ho*n, kh*lanes) matmul LHS from activation a of shape (hin*n, lanes).

    Rows of `a` are (h, n)-ordered; rows of the result are (ho, n)-ordered.  Out-of-range taps
    (H zero padding) become zero blocks.  With n a multiple of 16 and `lanes` a multiple of 128
    every piece is a whole number of vregs (no masked partial stores / lane shifts).
    """
    zeros_tap = jnp.zeros((n, lanes), a.dtype)
    blocks = []
    for o in range(ho):
        taps = []
        for i in range(kh):
            h = stride * o + i - pad
            taps.append(a[h * n:(h + 1) * n, :] if 0 <= h < hin else zeros_tap)
        blocks.append(jnp.concatenate(taps, axis=1))
    return jnp.concatenate(blocks, axis=0)


def _leaky_relu(y):
    return jnp.maximum(y, LEAKY_SLOPE * y)


def _batchnorm(y, gs, gs_bc, gamma, beta, *, count):
    """Training-mode BatchNorm2d (biased batch stats) folded to a single FMA epilogue.

    y lanes are (wo, cout)-ordered.  The sum / sum-of-squares group reduction and the
    scale / shift lane broadcast are each a single tiny M=2 matmul (no lane concats).
    """
    s = jnp.concatenate([jnp.sum(y, axis=0, keepdims=True),
                         jnp.sum(y * y, axis=0, keepdims=True)], axis=0)       # (2, wo*cout)
    cs = jnp.dot(s, gs, preferred_element_type=jnp.float32)                    # (2, cout)
    mean = cs[0:1, :] / count
    # TODO(synk): single-pass E[y^2]-E[y]^2 can cancel if activations develop large means;
    #             switch to a two-pass (subtract-mean) reduction if reused with trained weights.
    var = jnp.maximum(cs[1:2, :] / count - mean * mean, 0.0)
    scale = gamma * jax.lax.rsqrt(var + BN_EPS)                                # (1, cout)
    shift = beta - mean * scale
    ss = jnp.dot(jnp.concatenate([scale, shift], axis=0), gs_bc,
                 preferred_element_type=jnp.float32)                           # (2, wo*cout)
    return y * ss[0:1, :] + ss[1:2, :]


def _discriminator_kernel(x1_ref, bw1_ref, bw2_ref, bw3_ref, bw4_ref,
                          gs2_ref, gsb2_ref, gamma2_ref, beta2_ref,
                          gs3_ref, gsb3_ref, gamma3_ref, beta3_ref,
                          out_ref, *, n):
    # ---- Layer 1: conv(1->32, k4 s2 p1) + LeakyReLU.  LHS prebuilt lane-dense in the wrapper.
    y = jnp.dot(x1_ref[...], bw1_ref[...], preferred_element_type=jnp.float32)   # (14n, 512)
    a = _leaky_relu(y).astype(jnp.bfloat16)

    # ---- Layer 2: conv(32->64, k4 s2 p1) + BatchNorm + LeakyReLU.
    x = _gather_rows(a, n=n, hin=14, lanes=16 * 32, kh=4, stride=2, pad=1, ho=7)
    y = jnp.dot(x, bw2_ref[...], preferred_element_type=jnp.float32)             # (7n, 512)
    y = _batchnorm(y, gs2_ref[...], gsb2_ref[...], gamma2_ref[...], beta2_ref[...],
                   count=float(n * 7 * 7))
    a = _leaky_relu(y).astype(jnp.bfloat16)

    # ---- Layer 3: conv(64->128, k3 s2 p1) + BatchNorm + LeakyReLU.
    x = _gather_rows(a, n=n, hin=7, lanes=8 * 64, kh=3, stride=2, pad=1, ho=4)
    y = jnp.dot(x, bw3_ref[...], preferred_element_type=jnp.float32)             # (4n, 512)
    y = _batchnorm(y, gs3_ref[...], gsb3_ref[...], gamma3_ref[...], beta3_ref[...],
                   count=float(n * 4 * 4))
    a = _leaky_relu(y).astype(jnp.bfloat16)

    # ---- Layer 4: conv(128->1, k4 s1 p0) + Sigmoid (head padded to 128 output lanes).
    x = _gather_rows(a, n=n, hin=4, lanes=4 * 128, kh=4, stride=1, pad=0, ho=1)
    y = jnp.dot(x, bw4_ref[...], preferred_element_type=jnp.float32)             # (n, 128)
    out_ref[...] = pl.reciprocal(1.0 + jnp.exp(-y), approx=True)                 # sigmoid on EUP


# -------------------------------------------------------------------------------------------
# Wrapper
# -------------------------------------------------------------------------------------------
def _build_layer1_lhs(x_nchw):
    """Wrapper-side im2col over kh for layer 1: (N,1,28,28) -> lane-dense (14*N, 128) bf16.

    Rows are (ho, n)-ordered; lanes are (i, w)-ordered (4*28 = 112 real lanes + 16 zero pads),
    matching the row ordering of bw1."""
    n = x_nchw.shape[0]
    kh, stride, pad, win, ho = 4, 2, 1, 28, 14
    img = jnp.transpose(x_nchw[:, 0, :, :], (1, 0, 2)).astype(jnp.float32)   # (28, N, 28): (h,n,w)
    img = jnp.pad(img, ((pad, pad), (0, 0), (0, 0)))                          # H zero padding
    taps = [img[i:i + stride * (ho - 1) + 1:stride] for i in range(kh)]       # kh x (14, N, 28)
    x = jnp.stack(taps, axis=2).reshape(ho * n, kh * win)
    x = jnp.pad(x, ((0, 0), (0, L1_LHS_LANES - kh * win)))
    return x.astype(jnp.bfloat16)


def discriminator_forward(x_nchw, kparams):
    """Forward pass matching Discriminator(n_filters=32).forward (training-mode BatchNorm)."""
    n = x_nchw.shape[0]
    x1 = _build_layer1_lhs(x_nchw)

    operands = (x1,
                kparams["bw1"], kparams["bw2"], kparams["bw3"], kparams["bw4"],
                kparams["gs2"], kparams["gsb2"], kparams["gamma2"], kparams["beta2"],
                kparams["gs3"], kparams["gsb3"], kparams["gamma3"], kparams["beta3"])

    def full_spec(arr):
        nd = arr.ndim
        return pl.BlockSpec(arr.shape, lambda i, _nd=nd: (0,) * _nd)

    out = pl.pallas_call(
        functools.partial(_discriminator_kernel, n=n),
        out_shape=jax.ShapeDtypeStruct((n, HEAD_PAD), jnp.float32),
        grid=(1,),
        in_specs=[full_spec(a) for a in operands],
        out_specs=pl.BlockSpec((n, HEAD_PAD), lambda i: (0, 0)),
        compiler_params=pltpu.CompilerParams(
            dimension_semantics=("arbitrary",),
            # ~4.3 MiB bf16 weights + ~1 MiB gs/activations at N=16: comfortably inside the
            # default scoped VMEM on v5e/v6e and well under v7x's 64 MiB physical VMEM.
            vmem_limit_bytes=32 * 1024 * 1024,
        ),
    )(*operands)

    result = out[:, :1].reshape(-1, 1)          # == output.view(-1, 1)
    if result.shape[0] == 1:                    # .squeeze(0) only bites when batch == 1
        result = jnp.squeeze(result, axis=0)
    return result


def reference_forward(x_nchw, params):
    """Pure-JAX (XLA conv) reference with identical semantics, used for the self-check."""
    x = jnp.transpose(x_nchw, (0, 2, 3, 1)).astype(jnp.float32)     # NHWC

    def conv(h, w, stride, pad):
        return jax.lax.conv_general_dilated(
            h, w, (stride, stride), [(pad, pad), (pad, pad)],
            dimension_numbers=("NHWC", "HWIO", "NHWC"))

    def bn(h, gamma, beta):
        mean = jnp.mean(h, axis=(0, 1, 2), keepdims=True)
        var = jnp.mean(jnp.square(h - mean), axis=(0, 1, 2), keepdims=True)
        hn = (h - mean) * jax.lax.rsqrt(var + BN_EPS)
        return hn * gamma.reshape(1, 1, 1, -1) + beta.reshape(1, 1, 1, -1)

    lrelu = lambda h: jnp.where(h >= 0, h, LEAKY_SLOPE * h)

    h = lrelu(conv(x, params["w1"], 2, 1))
    h = lrelu(bn(conv(h, params["w2"], 2, 1), params["gamma2"], params["beta2"]))
    h = lrelu(bn(conv(h, params["w3"], 2, 1), params["gamma3"], params["beta3"]))
    h = jax.nn.sigmoid(conv(h, params["w4"], 1, 0))
    out = h.reshape(-1, 1)
    if out.shape[0] == 1:
        out = jnp.squeeze(out, axis=0)
    return out


if __name__ == "__main__":
    key = jax.random.PRNGKey(0)
    kx, kp = jax.random.split(key)

    # Small deterministic input consistent with the module: N=16, C=1, 28x28 (MNIST-like).
    # N=16 keeps every gather tap block a whole vreg (>=16 rows) and gives the MXU 16-224 rows.
    N = 16
    x = jax.random.normal(kx, (N, 1, 28, 28), jnp.float32)
    params = init_params(kp)
    kparams = prepare_kernel_params(params)

    fwd = jax.jit(discriminator_forward)
    out = jax.block_until_ready(fwd(x, kparams))

    assert out.shape == (N, 1), out.shape
    assert bool(jnp.all((out >= 0.0) & (out <= 1.0))), "sigmoid output out of range"

    # Self-check against a pure-JAX reference (loose tolerance: bf16 weights + bf16 activations).
    ref = jax.block_until_ready(reference_forward(x, params))
    assert bool(jnp.allclose(out, ref, atol=4e-2, rtol=0.0)), (out, ref)

    print("KERNEL_OK")
</pallas_src>

<mosaic_0001>
module attributes {stable_mosaic.version = 11 : i64} {
  func.func @_discriminator_kernel(%arg0: i32, %arg1: memref<224x128xbf16, #tpu.memory_space<vmem>>, %arg2: memref<128x512xbf16, #tpu.memory_space<vmem>>, %arg3: memref<2048x512xbf16, #tpu.memory_space<vmem>>, %arg4: memref<1536x512xbf16, #tpu.memory_space<vmem>>, %arg5: memref<2048x128xbf16, #tpu.memory_space<vmem>>, %arg6: memref<512x64xf32, #tpu.memory_space<vmem>>, %arg7: memref<64x512xf32, #tpu.memory_space<vmem>>, %arg8: memref<1x64xf32, #tpu.memory_space<vmem>>, %arg9: memref<1x64xf32, #tpu.memory_space<vmem>>, %arg10: memref<512x128xf32, #tpu.memory_space<vmem>>, %arg11: memref<128x512xf32, #tpu.memory_space<vmem>>, %arg12: memref<1x128xf32, #tpu.memory_space<vmem>>, %arg13: memref<1x128xf32, #tpu.memory_space<vmem>>, %arg14: memref<16x128xf32, #tpu.memory_space<vmem>>) attributes {dimension_semantics = [#tpu.dimension_semantics<arbitrary>], iteration_bounds = array<i64: 1>, scalar_prefetch = 0 : i64, scratch_operands = 0 : i64, tpu.core_type = #tpu.core_type<tc>, window_params = [{pipeline_mode = #tpu.pipeline_mode<synchronous>, transform_indices = @transform_0, window_bounds = array<i64: 224, 128>}, {pipeline_mode = #tpu.pipeline_mode<synchronous>, transform_indices = @transform_1, window_bounds = array<i64: 128, 512>}, {pipeline_mode = #tpu.pipeline_mode<synchronous>, transform_indices = @transform_2, window_bounds = array<i64: 2048, 512>}, {pipeline_mode = #tpu.pipeline_mode<synchronous>, transform_indices = @transform_3, window_bounds = array<i64: 1536, 512>}, {pipeline_mode = #tpu.pipeline_mode<synchronous>, transform_indices = @transform_4, window_bounds = array<i64: 2048, 128>}, {pipeline_mode = #tpu.pipeline_mode<synchronous>, transform_indices = @transform_5, window_bounds = array<i64: 512, 64>}, {pipeline_mode = #tpu.pipeline_mode<synchronous>, transform_indices = @transform_6, window_bounds = array<i64: 64, 512>}, {pipeline_mode = #tpu.pipeline_mode<synchronous>, transform_indices = @transform_7, window_bounds = array<i64: 1, 64>}, {pipeline_mode = #tpu.pipeline_mode<synchronous>, transform_indices = @transform_8, window_bounds = array<i64: 1, 64>}, {pipeline_mode = #tpu.pipeline_mode<synchronous>, transform_indices = @transform_9, window_bounds = array<i64: 512, 128>}, {pipeline_mode = #tpu.pipeline_mode<synchronous>, transform_indices = @transform_10, window_bounds = array<i64: 128, 512>}, {pipeline_mode = #tpu.pipeline_mode<synchronous>, transform_indices = @transform_11, window_bounds = array<i64: 1, 128>}, {pipeline_mode = #tpu.pipeline_mode<synchronous>, transform_indices = @transform_12, window_bounds = array<i64: 1, 128>}, {pipeline_mode = #tpu.pipeline_mode<synchronous>, transform_indices = @transform_13, window_bounds = array<i64: 16, 128>}]} {
    %c0 = arith.constant 0 : index
    %c0_0 = arith.constant 0 : index
    %0 = vector.load %arg1[%c0, %c0_0] : memref<224x128xbf16, #tpu.memory_space<vmem>>, vector<224x128xbf16>
    %c0_1 = arith.constant 0 : index
    %c0_2 = arith.constant 0 : index
    %1 = vector.load %arg2[%c0_1, %c0_2] : memref<128x512xbf16, #tpu.memory_space<vmem>>, vector<128x512xbf16>
    %cst = arith.constant dense<0.000000e+00> : vector<224x512xf32>
    %2 = tpu.matmul %0, %1, %cst {dimension_numbers = #tpu.dot_dimension_numbers<[1], [0], [0], [1], [0, 0, 1, 1], [], []>} : vector<224x128xbf16>, vector<128x512xbf16>, vector<224x512xf32> -> vector<224x512xf32>
    %cst_3 = arith.constant 2.000000e-01 : f32
    %3 = vector.broadcast %cst_3 : f32 to vector<224x512xf32>
    %4 = arith.mulf %3, %2 : vector<224x512xf32>
    %5 = arith.maximumf %2, %4 : vector<224x512xf32>
    %6 = arith.truncf %5 : vector<224x512xf32> to vector<224x512xbf16>
    %cst_4 = arith.constant 0.000000e+00 : bf16
    %7 = vector.broadcast %cst_4 : bf16 to vector<16x512xbf16>
    %8 = vector.extract_strided_slice %6 {offsets = [0, 0], sizes = [16, 512], strides = [1, 1]} : vector<224x512xbf16> to vector<16x512xbf16>
    %9 = vector.extract_strided_slice %6 {offsets = [16, 0], sizes = [16, 512], strides = [1, 1]} : vector<224x512xbf16> to vector<16x512xbf16>
    %10 = vector.extract_strided_slice %6 {offsets = [32, 0], sizes = [16, 512], strides = [1, 1]} : vector<224x512xbf16> to vector<16x512xbf16>
    %11 = tpu.concatenate %7, %8, %9, %10 in 1 : vector<16x512xbf16>, vector<16x512xbf16>, vector<16x512xbf16>, vector<16x512xbf16> -> vector<16x2048xbf16>
    %12 = vector.extract_strided_slice %6 {offsets = [16, 0], sizes = [16, 512], strides = [1, 1]} : vector<224x512xbf16> to vector<16x512xbf16>
    %13 = vector.extract_strided_slice %6 {offsets = [32, 0], sizes = [16, 512], strides = [1, 1]} : vector<224x512xbf16> to vector<16x512xbf16>
    %14 = vector.extract_strided_slice %6 {offsets = [48, 0], sizes = [16, 512], strides = [1, 1]} : vector<224x512xbf16> to vector<16x512xbf16>
    %15 = vector.extract_strided_slice %6 {offsets = [64, 0], sizes = [16, 512], strides = [1, 1]} : vector<224x512xbf16> to vector<16x512xbf16>
    %16 = tpu.concatenate %12, %13, %14, %15 in 1 : vector<16x512xbf16>, vector<16x512xbf16>, vector<16x512xbf16>, vector<16x512xbf16> -> vector<16x2048xbf16>
    %17 = vector.extract_strided_slice %6 {offsets = [48, 0], sizes = [16, 512], strides = [1, 1]} : vector<224x512xbf16> to vector<16x512xbf16>
    %18 = vector.extract_strided_slice %6 {offsets = [64, 0], sizes = [16, 512], strides = [1, 1]} : vector<224x512xbf16> to vector<16x512xbf16>
    %19 = vector.extract_strided_slice %6 {offsets = [80, 0], sizes = [16, 512], strides = [1, 1]} : vector<224x512xbf16> to vector<16x512xbf16>
    %20 = vector.extract_strided_slice %6 {offsets = [96, 0], sizes = [16, 512], strides = [1, 1]} : vector<224x512xbf16> to vector<16x512xbf16>
    %21 = tpu.concatenate %17, %18, %19, %20 in 1 : vector<16x512xbf16>, vector<16x512xbf16>, vector<16x512xbf16>, vector<16x512xbf16> -> vector<16x2048xbf16>
    %22 = vector.extract_strided_slice %6 {offsets = [80, 0], sizes = [16, 512], strides = [1, 1]} : vector<224x512xbf16> to vector<16x512xbf16>
    %23 = vector.extract_strided_slice %6 {offsets = [96, 0], sizes = [16, 512], strides = [1, 1]} : vector<224x512xbf16> to vector<16x512xbf16>
    %24 = vector.extract_strided_slice %6 {offsets = [112, 0], sizes = [16, 512], strides = [1, 1]} : vector<224x512xbf16> to vector<16x512xbf16>
    %25 = vector.extract_strided_slice %6 {offsets = [128, 0], sizes = [16, 512], strides = [1, 1]} : vector<224x512xbf16> to vector<16x512xbf16>
    %26 = tpu.concatenate %22, %23, %24, %25 in 1 : vector<16x512xbf16>, vector<16x512xbf16>, vector<16x512xbf16>, vector<16x512xbf16> -> vector<16x2048xbf16>
    %27 = vector.extract_strided_slice %6 {offsets = [112, 0], sizes = [16, 512], strides = [1, 1]} : vector<224x512xbf16> to vector<16x512xbf16>
    %28 = vector.extract_strided_slice %6 {offsets = [128, 0], sizes = [16, 512], strides = [1, 1]} : vector<224x512xbf16> to vector<16x512xbf16>
    %29 = vector.extract_strided_slice %6 {offsets = [144, 0], sizes = [16, 512], strides = [1, 1]} : vector<224x512xbf16> to vector<16x512xbf16>
    %30 = vector.extract_strided_slice %6 {offsets = [160, 0], sizes = [16, 512], strides = [1, 1]} : vector<224x512xbf16> to vector<16x512xbf16>
    %31 = tpu.concatenate %27, %28, %29, %30 in 1 : vector<16x512xbf16>, vector<16x512xbf16>, vector<16x512xbf16>, vector<16x512xbf16> -> vector<16x2048xbf16>
    %32 = vector.extract_strided_slice %6 {offsets = [144, 0], sizes = [16, 512], strides = [1, 1]} : vector<224x512xbf16> to vector<16x512xbf16>
    %33 = vector.extract_strided_slice %6 {offsets = [160, 0], sizes = [16, 512], strides = [1, 1]} : vector<224x512xbf16> to vector<16x512xbf16>
    %34 = vector.extract_strided_slice %6 {offsets = [176, 0], sizes = [16, 512], strides = [1, 1]} : vector<224x512xbf16> to vector<16x512xbf16>
    %35 = vector.extract_strided_slice %6 {offsets = [192, 0], sizes = [16, 512], strides = [1, 1]} : vector<224x512xbf16> to vector<16x512xbf16>
    %36 = tpu.concatenate %32, %33, %34, %35 in 1 : vector<16x512xbf16>, vector<16x512xbf16>, vector<16x512xbf16>, vector<16x512xbf16> -> vector<16x2048xbf16>
    %37 = vector.extract_strided_slice %6 {offsets = [176, 0], sizes = [16, 512], strides = [1, 1]} : vector<224x512xbf16> to vector<16x512xbf16>
    %38 = vector.extract_strided_slice %6 {offsets = [192, 0], sizes = [16, 512], strides = [1, 1]} : vector<224x512xbf16> to vector<16x512xbf16>
    %39 = vector.extract_strided_slice %6 {offsets = [208, 0], sizes = [16, 512], strides = [1, 1]} : vector<224x512xbf16> to vector<16x512xbf16>
    %40 = tpu.concatenate %37, %38, %39, %7 in 1 : vector<16x512xbf16>, vector<16x512xbf16>, vector<16x512xbf16>, vector<16x512xbf16> -> vector<16x2048xbf16>
    %41 = tpu.concatenate %11, %16, %21, %26, %31, %36, %40 in 0 : vector<16x2048xbf16>, vector<16x2048xbf16>, vector<16x2048xbf16>, vector<16x2048xbf16>, vector<16x2048xbf16>, vector<16x2048xbf16>, vector<16x2048xbf16> -> vector<112x2048xbf16>
    %c0_5 = arith.constant 0 : index
    %c0_6 = arith.constant 0 : index
    %42 = vector.load %arg3[%c0_5, %c0_6] : memref<2048x512xbf16, #tpu.memory_space<vmem>>, vector<2048x512xbf16>
    %cst_7 = arith.constant dense<0.000000e+00> : vector<112x512xf32>
    %43 = tpu.matmul %41, %42, %cst_7 {dimension_numbers = #tpu.dot_dimension_numbers<[1], [0], [0], [1], [0, 0, 1, 1], [], []>} : vector<112x2048xbf16>, vector<2048x512xbf16>, vector<112x512xf32> -> vector<112x512xf32>
    %c0_8 = arith.constant 0 : index
    %c0_9 = arith.constant 0 : index
    %44 = vector.load %arg6[%c0_8, %c0_9] : memref<512x64xf32, #tpu.memory_space<vmem>>, vector<512x64xf32>
    %c0_10 = arith.constant 0 : index
    %c0_11 = arith.constant 0 : index
    %45 = vector.load %arg7[%c0_10, %c0_11] : memref<64x512xf32, #tpu.memory_space<vmem>>, vector<64x512xf32>
    %c0_12 = arith.constant 0 : index
    %c0_13 = arith.constant 0 : index
    %46 = vector.load %arg8[%c0_12, %c0_13] : memref<1x64xf32, #tpu.memory_space<vmem>>, vector<1x64xf32>
    %c0_14 = arith.constant 0 : index
    %c0_15 = arith.constant 0 : index
    %47 = vector.load %arg9[%c0_14, %c0_15] : memref<1x64xf32, #tpu.memory_space<vmem>>, vector<1x64xf32>
    %cst_16 = arith.constant dense<0.000000e+00> : vector<512xf32>
    %48 = vector.multi_reduction <add>, %43, %cst_16 [0] : vector<112x512xf32> to vector<512xf32>
    %49 = vector.shape_cast %48 : vector<512xf32> to vector<1x512xf32>
    %50 = arith.mulf %43, %43 : vector<112x512xf32>
    %cst_17 = arith.constant dense<0.000000e+00> : vector<512xf32>
    %51 = vector.multi_reduction <add>, %50, %cst_17 [0] : vector<112x512xf32> to vector<512xf32>
    %52 = vector.shape_cast %51 : vector<512xf32> to vector<1x512xf32>
    %53 = tpu.concatenate %49, %52 in 0 : vector<1x512xf32>, vector<1x512xf32> -> vector<2x512xf32>
    %cst_18 = arith.constant dense<0.000000e+00> : vector<2x64xf32>
    %54 = tpu.matmul %53, %44, %cst_18 {dimension_numbers = #tpu.dot_dimension_numbers<[1], [0], [0], [1], [0, 0, 1, 1], [], []>} : vector<2x512xf32>, vector<512x64xf32>, vector<2x64xf32> -> vector<2x64xf32>
    %55 = vector.extract_strided_slice %54 {offsets = [0, 0], sizes = [1, 64], strides = [1, 1]} : vector<2x64xf32> to vector<1x64xf32>
    %cst_19 = arith.constant 7.840000e+02 : f32
    %56 = vector.broadcast %cst_19 : f32 to vector<1x64xf32>
    %57 = arith.divf %55, %56 : vector<1x64xf32>
    %58 = vector.extract_strided_slice %54 {offsets = [1, 0], sizes = [1, 64], strides = [1, 1]} : vector<2x64xf32> to vector<1x64xf32>
    %cst_20 = arith.constant 7.840000e+02 : f32
    %59 = vector.broadcast %cst_20 : f32 to vector<1x64xf32>
    %60 = arith.divf %58, %59 : vector<1x64xf32>
    %61 = arith.mulf %57, %57 : vector<1x64xf32>
    %62 = arith.subf %60, %61 : vector<1x64xf32>
    %cst_21 = arith.constant 0.000000e+00 : f32
    %63 = vector.broadcast %cst_21 : f32 to vector<1x64xf32>
    %64 = arith.maximumf %62, %63 : vector<1x64xf32>
    %cst_22 = arith.constant 9.99999974E-6 : f32
    %65 = vector.broadcast %cst_22 : f32 to vector<1x64xf32>
    %66 = arith.addf %64, %65 : vector<1x64xf32>
    %67 = math.rsqrt %66 : vector<1x64xf32>
    %68 = arith.mulf %46, %67 : vector<1x64xf32>
    %69 = arith.mulf %57, %68 : vector<1x64xf32>
    %70 = arith.subf %47, %69 : vector<1x64xf32>
    %71 = tpu.concatenate %68, %70 in 0 : vector<1x64xf32>, vector<1x64xf32> -> vector<2x64xf32>
    %cst_23 = arith.constant dense<0.000000e+00> : vector<2x512xf32>
    %72 = tpu.matmul %71, %45, %cst_23 {dimension_numbers = #tpu.dot_dimension_numbers<[1], [0], [0], [1], [0, 0, 1, 1], [], []>} : vector<2x64xf32>, vector<64x512xf32>, vector<2x512xf32> -> vector<2x512xf32>
    %73 = vector.extract_strided_slice %72 {offsets = [0, 0], sizes = [1, 512], strides = [1, 1]} : vector<2x512xf32> to vector<1x512xf32>
    %74 = vector.broadcast %73 : vector<1x512xf32> to vector<112x512xf32>
    %75 = arith.mulf %43, %74 : vector<112x512xf32>
    %76 = vector.extract_strided_slice %72 {offsets = [1, 0], sizes = [1, 512], strides = [1, 1]} : vector<2x512xf32> to vector<1x512xf32>
    %77 = vector.broadcast %76 : vector<1x512xf32> to vector<112x512xf32>
    %78 = arith.addf %75, %77 : vector<112x512xf32>
    %cst_24 = arith.constant 2.000000e-01 : f32
    %79 = vector.broadcast %cst_24 : f32 to vector<112x512xf32>
    %80 = arith.mulf %79, %78 : vector<112x512xf32>
    %81 = arith.maximumf %78, %80 : vector<112x512xf32>
    %82 = arith.truncf %81 : vector<112x512xf32> to vector<112x512xbf16>
    %cst_25 = arith.constant 0.000000e+00 : bf16
    %83 = vector.broadcast %cst_25 : bf16 to vector<16x512xbf16>
    %84 = vector.extract_strided_slice %82 {offsets = [0, 0], sizes = [16, 512], strides = [1, 1]} : vector<112x512xbf16> to vector<16x512xbf16>
    %85 = vector.extract_strided_slice %82 {offsets = [16, 0], sizes = [16, 512], strides = [1, 1]} : vector<112x512xbf16> to vector<16x512xbf16>
    %86 = tpu.concatenate %83, %84, %85 in 1 : vector<16x512xbf16>, vector<16x512xbf16>, vector<16x512xbf16> -> vector<16x1536xbf16>
    %87 = vector.extract_strided_slice %82 {offsets = [16, 0], sizes = [16, 512], strides = [1, 1]} : vector<112x512xbf16> to vector<16x512xbf16>
    %88 = vector.extract_strided_slice %82 {offsets = [32, 0], sizes = [16, 512], strides = [1, 1]} : vector<112x512xbf16> to vector<16x512xbf16>
    %89 = vector.extract_strided_slice %82 {offsets = [48, 0], sizes = [16, 512], strides = [1, 1]} : vector<112x512xbf16> to vector<16x512xbf16>
    %90 = tpu.concatenate %87, %88, %89 in 1 : vector<16x512xbf16>, vector<16x512xbf16>, vector<16x512xbf16> -> vector<16x1536xbf16>
    %91 = vector.extract_strided_slice %82 {offsets = [48, 0], sizes = [16, 512], strides = [1, 1]} : vector<112x512xbf16> to vector<16x512xbf16>
    %92 = vector.extract_strided_slice %82 {offsets = [64, 0], sizes = [16, 512], strides = [1, 1]} : vector<112x512xbf16> to vector<16x512xbf16>
    %93 = vector.extract_strided_slice %82 {offsets = [80, 0], sizes = [16, 512], strides = [1, 1]} : vector<112x512xbf16> to vector<16x512xbf16>
    %94 = tpu.concatenate %91, %92, %93 in 1 : vector<16x512xbf16>, vector<16x512xbf16>, vector<16x512xbf16> -> vector<16x1536xbf16>
    %95 = vector.extract_strided_slice %82 {offsets = [80, 0], sizes = [16, 512], strides = [1, 1]} : vector<112x512xbf16> to vector<16x512xbf16>
    %96 = vector.extract_strided_slice %82 {offsets = [96, 0], sizes = [16, 512], strides = [1, 1]} : vector<112x512xbf16> to vector<16x512xbf16>
    %97 = tpu.concatenate %95, %96, %83 in 1 : vector<16x512xbf16>, vector<16x512xbf16>, vector<16x512xbf16> -> vector<16x1536xbf16>
    %98 = tpu.concatenate %86, %90, %94, %97 in 0 : vector<16x1536xbf16>, vector<16x1536xbf16>, vector<16x1536xbf16>, vector<16x1536xbf16> -> vector<64x1536xbf16>
    %c0_26 = arith.constant 0 : index
    %c0_27 = arith.constant 0 : index
    %99 = vector.load %arg4[%c0_26, %c0_27] : memref<1536x512xbf16, #tpu.memory_space<vmem>>, vector<1536x512xbf16>
    %cst_28 = arith.constant dense<0.000000e+00> : vector<64x512xf32>
    %100 = tpu.matmul %98, %99, %cst_28 {dimension_numbers = #tpu.dot_dimension_numbers<[1], [0], [0], [1], [0, 0, 1, 1], [], []>} : vector<64x1536xbf16>, vector<1536x512xbf16>, vector<64x512xf32> -> vector<64x512xf32>
    %c0_29 = arith.constant 0 : index
    %c0_30 = arith.constant 0 : index
    %101 = vector.load %arg10[%c0_29, %c0_30] : memref<512x128xf32, #tpu.memory_space<vmem>>, vector<512x128xf32>
    %c0_31 = arith.constant 0 : index
    %c0_32 = arith.constant 0 : index
    %102 = vector.load %arg11[%c0_31, %c0_32] : memref<128x512xf32, #tpu.memory_space<vmem>>, vector<128x512xf32>
    %c0_33 = arith.constant 0 : index
    %c0_34 = arith.constant 0 : index
    %103 = vector.load %arg12[%c0_33, %c0_34] : memref<1x128xf32, #tpu.memory_space<vmem>>, vector<1x128xf32>
    %c0_35 = arith.constant 0 : index
    %c0_36 = arith.constant 0 : index
    %104 = vector.load %arg13[%c0_35, %c0_36] : memref<1x128xf32, #tpu.memory_space<vmem>>, vector<1x128xf32>
    %cst_37 = arith.constant dense<0.000000e+00> : vector<512xf32>
    %105 = vector.multi_reduction <add>, %100, %cst_37 [0] : vector<64x512xf32> to vector<512xf32>
    %106 = vector.shape_cast %105 : vector<512xf32> to vector<1x512xf32>
    %107 = arith.mulf %100, %100 : vector<64x512xf32>
    %cst_38 = arith.constant dense<0.000000e+00> : vector<512xf32>
    %108 = vector.multi_reduction <add>, %107, %cst_38 [0] : vector<64x512xf32> to vector<512xf32>
    %109 = vector.shape_cast %108 : vector<512xf32> to vector<1x512xf32>
    %110 = tpu.concatenate %106, %109 in 0 : vector<1x512xf32>, vector<1x512xf32> -> vector<2x512xf32>
    %cst_39 = arith.constant dense<0.000000e+00> : vector<2x128xf32>
    %111 = tpu.matmul %110, %101, %cst_39 {dimension_numbers = #tpu.dot_dimension_numbers<[1], [0], [0], [1], [0, 0, 1, 1], [], []>} : vector<2x512xf32>, vector<512x128xf32>, vector<2x128xf32> -> vector<2x128xf32>
    %112 = vector.extract_strided_slice %111 {offsets = [0, 0], sizes = [1, 128], strides = [1, 1]} : vector<2x128xf32> to vector<1x128xf32>
    %cst_40 = arith.constant 2.560000e+02 : f32
    %113 = vector.broadcast %cst_40 : f32 to vector<1x128xf32>
    %114 = arith.divf %112, %113 : vector<1x128xf32>
    %115 = vector.extract_strided_slice %111 {offsets = [1, 0], sizes = [1, 128], strides = [1, 1]} : vector<2x128xf32> to vector<1x128xf32>
    %cst_41 = arith.constant 2.560000e+02 : f32
    %116 = vector.broadcast %cst_41 : f32 to vector<1x128xf32>
    %117 = arith.divf %115, %116 : vector<1x128xf32>
    %118 = arith.mulf %114, %114 : vector<1x128xf32>
    %119 = arith.subf %117, %118 : vector<1x128xf32>
    %cst_42 = arith.constant 0.000000e+00 : f32
    %120 = vector.broadcast %cst_42 : f32 to vector<1x128xf32>
    %121 = arith.maximumf %119, %120 : vector<1x128xf32>
    %cst_43 = arith.constant 9.99999974E-6 : f32
    %122 = vector.broadcast %cst_43 : f32 to vector<1x128xf32>
    %123 = arith.addf %121, %122 : vector<1x128xf32>
    %124 = math.rsqrt %123 : vector<1x128xf32>
    %125 = arith.mulf %103, %124 : vector<1x128xf32>
    %126 = arith.mulf %114, %125 : vector<1x128xf32>
    %127 = arith.subf %104, %126 : vector<1x128xf32>
    %128 = tpu.concatenate %125, %127 in 0 : vector<1x128xf32>, vector<1x128xf32> -> vector<2x128xf32>
    %cst_44 = arith.constant dense<0.000000e+00> : vector<2x512xf32>
    %129 = tpu.matmul %128, %102, %cst_44 {dimension_numbers = #tpu.dot_dimension_numbers<[1], [0], [0], [1], [0, 0, 1, 1], [], []>} : vector<2x128xf32>, vector<128x512xf32>, vector<2x512xf32> -> vector<2x512xf32>
    %130 = vector.extract_strided_slice %129 {offsets = [0, 0], sizes = [1, 512], strides = [1, 1]} : vector<2x512xf32> to vector<1x512xf32>
    %131 = vector.broadcast %130 : vector<1x512xf32> to vector<64x512xf32>
    %132 = arith.mulf %100, %131 : vector<64x512xf32>
    %133 = vector.extract_strided_slice %129 {offsets = [1, 0], sizes = [1, 512], strides = [1, 1]} : vector<2x512xf32> to vector<1x512xf32>
    %134 = vector.broadcast %133 : vector<1x512xf32> to vector<64x512xf32>
    %135 = arith.addf %132, %134 : vector<64x512xf32>
    %cst_45 = arith.constant 2.000000e-01 : f32
    %136 = vector.broadcast %cst_45 : f32 to vector<64x512xf32>
    %137 = arith.mulf %136, %135 : vector<64x512xf32>
    %138 = arith.maximumf %135, %137 : vector<64x512xf32>
    %139 = arith.truncf %138 : vector<64x512xf32> to vector<64x512xbf16>
    %140 = vector.extract_strided_slice %139 {offsets = [0, 0], sizes = [16, 512], strides = [1, 1]} : vector<64x512xbf16> to vector<16x512xbf16>
    %141 = vector.extract_strided_slice %139 {offsets = [16, 0], sizes = [16, 512], strides = [1, 1]} : vector<64x512xbf16> to vector<16x512xbf16>
    %142 = vector.extract_strided_slice %139 {offsets = [32, 0], sizes = [16, 512], strides = [1, 1]} : vector<64x512xbf16> to vector<16x512xbf16>
    %143 = vector.extract_strided_slice %139 {offsets = [48, 0], sizes = [16, 512], strides = [1, 1]} : vector<64x512xbf16> to vector<16x512xbf16>
    %144 = tpu.concatenate %140, %141, %142, %143 in 1 : vector<16x512xbf16>, vector<16x512xbf16>, vector<16x512xbf16>, vector<16x512xbf16> -> vector<16x2048xbf16>
    %c0_46 = arith.constant 0 : index
    %c0_47 = arith.constant 0 : index
    %145 = vector.load %arg5[%c0_46, %c0_47] : memref<2048x128xbf16, #tpu.memory_space<vmem>>, vector<2048x128xbf16>
    %cst_48 = arith.constant dense<0.000000e+00> : vector<16x128xf32>
    %146 = tpu.matmul %144, %145, %cst_48 {dimension_numbers = #tpu.dot_dimension_numbers<[1], [0], [0], [1], [0, 0, 1, 1], [], []>} : vector<16x2048xbf16>, vector<2048x128xbf16>, vector<16x128xf32> -> vector<16x128xf32>
    %cst_49 = arith.constant 0.000000e+00 : f32
    %147 = vector.broadcast %cst_49 : f32 to vector<16x128xf32>
    %148 = arith.subf %147, %146 : vector<16x128xf32>
    %149 = math.exp %148 : vector<16x128xf32>
    %cst_50 = arith.constant 1.000000e+00 : f32
    %150 = vector.broadcast %cst_50 : f32 to vector<16x128xf32>
    %151 = arith.addf %150, %149 : vector<16x128xf32>
    %152 = tpu.reciprocal %151 {approx = true} : vector<16x128xf32> -> vector<16x128xf32>
    %c0_51 = arith.constant 0 : index
    %c0_52 = arith.constant 0 : index
    %153 = vector.load %arg14[%c0_51, %c0_52] : memref<16x128xf32, #tpu.memory_space<vmem>>, vector<16x128xf32>
    tpu.vector_store %arg14[%c0_51, %c0_52], %152 {strides = array<i32>} : memref<16x128xf32, #tpu.memory_space<vmem>>, vector<16x128xf32>,
    return
  }
  func.func @transform_0(%arg0: i32) -> (i32, i32) {
    %c0_i32 = arith.constant 0 : i32
    %c0_i32_0 = arith.constant 0 : i32
    %c0_i32_1 = arith.constant 0 : i32
    return %c0_i32, %c0_i32_0 : i32, i32
  }
  func.func @transform_1(%arg0: i32) -> (i32, i32) {
    %c0_i32 = arith.constant 0 : i32
    %c0_i32_0 = arith.constant 0 : i32
    %c0_i32_1 = arith.constant 0 : i32
    return %c0_i32, %c0_i32_0 : i32, i32
  }
  func.func @transform_2(%arg0: i32) -> (i32, i32) {
    %c0_i32 = arith.constant 0 : i32
    %c0_i32_0 = arith.constant 0 : i32
    %c0_i32_1 = arith.constant 0 : i32
    return %c0_i32, %c0_i32_0 : i32, i32
  }
  func.func @transform_3(%arg0: i32) -> (i32, i32) {
    %c0_i32 = arith.constant 0 : i32
    %c0_i32_0 = arith.constant 0 : i32
    %c0_i32_1 = arith.constant 0 : i32
    return %c0_i32, %c0_i32_0 : i32, i32
  }
  func.func @transform_4(%arg0: i32) -> (i32, i32) {
    %c0_i32 = arith.constant 0 : i32
    %c0_i32_0 = arith.constant 0 : i32
    %c0_i32_1 = arith.constant 0 : i32
    return %c0_i32, %c0_i32_0 : i32, i32
  }
  func.func @transform_5(%arg0: i32) -> (i32, i32) {
    %c0_i32 = arith.constant 0 : i32
    %c0_i32_0 = arith.constant 0 : i32
    %c0_i32_1 = arith.constant 0 : i32
    return %c0_i32, %c0_i32_0 : i32, i32
  }
  func.func @transform_6(%arg0: i32) -> (i32, i32) {
    %c0_i32 = arith.constant 0 : i32
    %c0_i32_0 = arith.constant 0 : i32
    %c0_i32_1 = arith.constant 0 : i32
    return %c0_i32, %c0_i32_0 : i32, i32
  }
  func.func @transform_7(%arg0: i32) -> (i32, i32) {
    %c0_i32 = arith.constant 0 : i32
    %c0_i32_0 = arith.constant 0 : i32
    %c0_i32_1 = arith.constant 0 : i32
    return %c0_i32, %c0_i32_0 : i32, i32
  }
  func.func @transform_8(%arg0: i32) -> (i32, i32) {
    %c0_i32 = arith.constant 0 : i32
    %c0_i32_0 = arith.constant 0 : i32
    %c0_i32_1 = arith.constant 0 : i32
    return %c0_i32, %c0_i32_0 : i32, i32
  }
  func.func @transform_9(%arg0: i32) -> (i32, i32) {
    %c0_i32 = arith.constant 0 : i32
    %c0_i32_0 = arith.constant 0 : i32
    %c0_i32_1 = arith.constant 0 : i32
    return %c0_i32, %c0_i32_0 : i32, i32
  }
  func.func @transform_10(%arg0: i32) -> (i32, i32) {
    %c0_i32 = arith.constant 0 : i32
    %c0_i32_0 = arith.constant 0 : i32
    %c0_i32_1 = arith.constant 0 : i32
    return %c0_i32, %c0_i32_0 : i32, i32
  }
  func.func @transform_11(%arg0: i32) -> (i32, i32) {
    %c0_i32 = arith.constant 0 : i32
    %c0_i32_0 = arith.constant 0 : i32
    %c0_i32_1 = arith.constant 0 : i32
    return %c0_i32, %c0_i32_0 : i32, i32
  }
  func.func @transform_12(%arg0: i32) -> (i32, i32) {
    %c0_i32 = arith.constant 0 : i32
    %c0_i32_0 = arith.constant 0 : i32
    %c0_i32_1 = arith.constant 0 : i32
    return %c0_i32, %c0_i32_0 : i32, i32
  }
  func.func @transform_13(%arg0: i32) -> (i32, i32) {
    %c0_i32 = arith.constant 0 : i32
    %c0_i32_0 = arith.constant 0 : i32
    %c0_i32_1 = arith.constant 0 : i32
    return %c0_i32, %c0_i32_0 : i32, i32
  }
}

</mosaic_0001>

<llo_original>
// kernel: discriminator_forward.1
$region0: #{discriminator_forward.1}
  #allocation0 [shape = 'u32[]', space=smem, size = 0x4, offset = 0x4, fixed_abs, tag = 'smem constant byte address 0x4 - core index']
  #allocation1 [shape = 'u32[72,128]{1,0:T(1,128)}', space=vmem, size = 0x9000, scoped, tag = 'internal scratch']
  %s0 = inlined_call_operand.vmem [shape: bf16[224,128], index: 0, kind: input, shape index: {}]
  %s1 = inlined_call_operand.hbm [shape: bf16[128,512], index: 1, kind: input, shape index: {}]
  %s2 = inlined_call_operand.vmem [shape: bf16[2048,512], index: 2, kind: input, shape index: {}]
  %s3 = inlined_call_operand.hbm [shape: bf16[1536,512], index: 3, kind: input, shape index: {}]
  %s4 = inlined_call_operand.vmem [shape: bf16[2048,128], index: 4, kind: input, shape index: {}]
  %s5 = inlined_call_operand.vmem [shape: f32[512,64], index: 5, kind: input, shape index: {}]
  %s6 = inlined_call_operand.hbm [shape: f32[64,512], index: 6, kind: input, shape index: {}]
  %s7 = inlined_call_operand.vmem [shape: f32[1,64], index: 7, kind: input, shape index: {}]
  %s8 = inlined_call_operand.vmem [shape: f32[1,64], index: 8, kind: input, shape index: {}]
  %s9 = inlined_call_operand.hbm [shape: f32[512,128], index: 9, kind: input, shape index: {}]
  %s10 = inlined_call_operand.hbm [shape: f32[128,512], index: 10, kind: input, shape index: {}]
  %s11 = inlined_call_operand.vmem [shape: f32[1,128], index: 11, kind: input, shape index: {}]
  %s12 = inlined_call_operand.vmem [shape: f32[1,128], index: 12, kind: input, shape index: {}]
  %s13 = inlined_call_operand.vmem [shape: f32[16,128], index: 13, kind: output, shape index: {}]
  %s14 = sld [smem:[#allocation0]]
  $region82: #{discriminator_forward.1} parent=0
    _
  %s16 = ssub.s32 1, %s14
  %s17 = scalar_select 0, %s16, %s14
  $region1: #{discriminator_forward.1} parent=0
    #allocation2 [shape = 'u8[131072]{0}', space=vmem, size = 0x20000, scoped, tag = 'input window, operand 1, single buffered']
    #allocation3 [shape = 's32[1]{0}', space=sflag, size = 0x4, scoped, tag = 'scoped memory for discriminator_forward.1']
    #allocation4 [shape = 'u8[1572864]{0}', space=vmem, size = 0x180000, scoped, tag = 'input window, operand 3, single buffered']
    #allocation5 [shape = 's32[1]{0}', space=sflag, size = 0x4, scoped, tag = 'scoped memory for discriminator_forward.1']
    #allocation6 [shape = 'u8[131072]{0}', space=vmem, size = 0x20000, scoped, tag = 'input window, operand 6, single buffered']
    #allocation7 [shape = 'u8[262144]{0}', space=vmem, size = 0x40000, scoped, tag = 'input window, operand 9, single buffered']
    #allocation8 [shape = 's32[1]{0}', space=sflag, size = 0x4, scoped, tag = 'scoped memory for discriminator_forward.1']
    #allocation9 [shape = 'u8[262144]{0}', space=vmem, size = 0x40000, scoped, tag = 'input window, operand 10, single buffered']
    %18 = vsyncpa [#allocation3], 0
    %19 = vsyncpa [#allocation5], 0
    %20 = vsyncpa [#allocation8], 0
    // Predicated region
    $region2: #{discriminator_forward.1} parent=1 // pred_check
      _
    $region3: #{discriminator_forward.1} parent=1 // pred_check_branch
      %22 = sbr.rel (0) target = $region5
    $region4: #{discriminator_forward.1} parent=1 // pred_region
      _
    $region5: #{discriminator_forward.1} parent=1 // pred_fallthru
      _
    // Predicated region
    $region6: #{discriminator_forward.1} parent=1 // pred_check
      _
    $region7: #{discriminator_forward.1} parent=1 // pred_check_branch
      %24 = sbr.rel (0) target = $region9
    $region8: #{discriminator_forward.1} parent=1 // pred_region
      %26 = vsyncadd [#allocation3], 0
      %s27 = sshll.u32 %s1, 4
      %s28 = int_to_ptr.hbm [resolvable:$true] %s27
      %s29 = sshll.u32 [#allocation2], 4
      %s30 = int_to_ptr.vmem [resolvable:$true] %s29
      %35 = dma.hbm_to_vmem [thread:$0]  %s28, 4096, %s30, [#allocation3], 256, 256, 16
    $region9: #{discriminator_forward.1} parent=1 // pred_fallthru
      _
    // Predicated region
    $region10: #{discriminator_forward.1} parent=1 // pred_check
      _
    $region11: #{discriminator_forward.1} parent=1 // pred_check_branch
      %37 = sbr.rel (0) target = $region13
    $region12: #{discriminator_forward.1} parent=1 // pred_region
      _
    $region13: #{discriminator_forward.1} parent=1 // pred_fallthru
      _
    // Predicated region
    $region14: #{discriminator_forward.1} parent=1 // pred_check
      _
    $region15: #{discriminator_forward.1} parent=1 // pred_check_branch
      %39 = sbr.rel (0) target = $region17
    $region16: #{discriminator_forward.1} parent=1 // pred_region
      %41 = vsyncadd [#allocation5], 0
      %s42 = sshll.u32 %s3, 4
      %s43 = int_to_ptr.hbm [resolvable:$true] %s42
      %s44 = sshll.u32 [#allocation4], 4
      %s45 = int_to_ptr.vmem [resolvable:$true] %s44
      %50 = dma.hbm_to_vmem [thread:$0]  %s43, 49152, %s45, [#allocation5], 256, 256, 16
    $region17: #{discriminator_forward.1} parent=1 // pred_fallthru
      _
    // Predicated region
    $region18: #{discriminator_forward.1} parent=1 // pred_check
      _
    $region19: #{discriminator_forward.1} parent=1 // pred_check_branch
      %52 = sbr.rel (0) target = $region21
    $region20: #{discriminator_forward.1} parent=1 // pred_region
      _
    $region21: #{discriminator_forward.1} parent=1 // pred_fallthru
      _
    // Predicated region
    $region22: #{discriminator_forward.1} parent=1 // pred_check
      _
    $region23: #{discriminator_forward.1} parent=1 // pred_check_branch
      %54 = sbr.rel (0) target = $region25
    $region24: #{discriminator_forward.1} parent=1 // pred_region
      _
    $region25: #{discriminator_forward.1} parent=1 // pred_fallthru
      _
    // Predicated region
    $region26: #{discriminator_forward.1} parent=1 // pred_check
      _
    $region27: #{discriminator_forward.1} parent=1 // pred_check_branch
      %56 = sbr.rel (0) target = $region29
    $region28: #{discriminator_forward.1} parent=1 // pred_region
      %58 = vsyncadd [#allocation5], 0
      %s59 = sshll.u32 %s6, 4
      %s60 = int_to_ptr.hbm [resolvable:$true] %s59
      %s61 = sshll.u32 [#allocation6], 4
      %s62 = int_to_ptr.vmem [resolvable:$true] %s61
      %67 = dma.hbm_to_vmem [thread:$0]  %s60, 4096, %s62, [#allocation5], 512, 512, 32
    $region29: #{discriminator_forward.1} parent=1 // pred_fallthru
      _
    // Predicated region
    $region30: #{discriminator_forward.1} parent=1 // pred_check
      _
    $region31: #{discriminator_forward.1} parent=1 // pred_check_branch
      %69 = sbr.rel (0) target = $region33
    $region32: #{discriminator_forward.1} parent=1 // pred_region
      _
    $region33: #{discriminator_forward.1} parent=1 // pred_fallthru
      _
    // Predicated region
    $region34: #{discriminator_forward.1} parent=1 // pred_check
      _
    $region35: #{discriminator_forward.1} parent=1 // pred_check_branch
      %71 = sbr.rel (0) target = $region37
    $region36: #{discriminator_forward.1} parent=1 // pred_region
      _
    $region37: #{discriminator_forward.1} parent=1 // pred_fallthru
      _
    // Predicated region
    $region38: #{discriminator_forward.1} parent=1 // pred_check
      _
    $region39: #{discriminator_forward.1} parent=1 // pred_check_branch
      %73 = sbr.rel (0) target = $region41
    $region40: #{discriminator_forward.1} parent=1 // pred_region
      %75 = vsyncadd [#allocation8], 0
      %s76 = sshll.u32 %s9, 4
      %s77 = int_to_ptr.hbm [resolvable:$true] %s76
      %s78 = sshll.u32 [#allocation7], 4
      %s79 = int_to_ptr.vmem [resolvable:$true] %s78
      %84 = dma.hbm_to_vmem [thread:$0]  %s77, 8192, %s79, [#allocation8], 128, 128, 8
    $region41: #{discriminator_forward.1} parent=1 // pred_fallthru
      _
    // Predicated region
    $region42: #{discriminator_forward.1} parent=1 // pred_check
      _
    $region43: #{discriminator_forward.1} parent=1 // pred_check_branch
      %86 = sbr.rel (0) target = $region45
    $region44: #{discriminator_forward.1} parent=1 // pred_region
      %88 = vsyncadd [#allocation8], 0
      %s89 = sshll.u32 %s10, 4
      %s90 = int_to_ptr.hbm [resolvable:$true] %s89
      %s91 = sshll.u32 [#allocation9], 4
      %s92 = int_to_ptr.vmem [resolvable:$true] %s91
      %97 = dma.hbm_to_vmem [thread:$0]  %s90, 8192, %s92, [#allocation8], 512, 512, 32
    $region45: #{discriminator_forward.1} parent=1 // pred_fallthru
      _
    // Predicated region
    $region46: #{discriminator_forward.1} parent=1 // pred_check
      _
    $region47: #{discriminator_forward.1} parent=1 // pred_check_branch
      %99 = sbr.rel (0) target = $region49
    $region48: #{discriminator_forward.1} parent=1 // pred_region
      _
    $region49: #{discriminator_forward.1} parent=1 // pred_fallthru
      _
    // Predicated region
    $region50: #{discriminator_forward.1} parent=1 // pred_check
      _
    $region51: #{discriminator_forward.1} parent=1 // pred_check_branch
      %101 = sbr.rel (0) target = $region53
    $region52: #{discriminator_forward.1} parent=1 // pred_region
      _
    $region53: #{discriminator_forward.1} parent=1 // pred_fallthru
      _
    // Predicated region
    $region54: #{discriminator_forward.1} parent=1 // pred_check
      _
    $region55: #{discriminator_forward.1} parent=1 // pred_check_branch
      %103 = sbr.rel (0) target = $region57
    $region56: #{discriminator_forward.1} parent=1 // pred_region
      %105 = dma.done [#allocation3], 4096
    $region57: #{discriminator_forward.1} parent=1 // pred_fallthru
      _
    // Predicated region
    $region58: #{discriminator_forward.1} parent=1 // pred_check
      _
    $region59: #{discriminator_forward.1} parent=1 // pred_check_branch
      %107 = sbr.rel (0) target = $region61
    $region60: #{discriminator_forward.1} parent=1 // pred_region
      %109 = dma.done [#allocation5], 49152
    $region61: #{discriminator_forward.1} parent=1 // pred_fallthru
      _
    // Predicated region
    $region62: #{discriminator_forward.1} parent=1 // pred_check
      _
    $region63: #{discriminator_forward.1} parent=1 // pred_check_branch
      %111 = sbr.rel (0) target = $region65
    $region64: #{discriminator_forward.1} parent=1 // pred_region
      %113 = dma.done [#allocation5], 4096
    $region65: #{discriminator_forward.1} parent=1 // pred_fallthru
      _
    // Predicated region
    $region66: #{discriminator_forward.1} parent=1 // pred_check
      _
    $region67: #{discriminator_forward.1} parent=1 // pred_check_branch
      %115 = sbr.rel (0) target = $region69
    $region68: #{discriminator_forward.1} parent=1 // pred_region
      %117 = dma.done [#allocation8], 8192
    $region69: #{discriminator_forward.1} parent=1 // pred_fallthru
      _
    // Predicated region
    $region70: #{discriminator_forward.1} parent=1 // pred_check
      _
    $region71: #{discriminator_forward.1} parent=1 // pred_check_branch
      %119 = sbr.rel (0) target = $region73
    $region72: #{discriminator_forward.1} parent=1 // pred_region
      %121 = dma.done [#allocation8], 8192
    $region73: #{discriminator_forward.1} parent=1 // pred_fallthru
      _
    %v123 = vld [vmem:[%s0] sm:$0xf]
    %v124 = vld [vmem:[%s0 + $0x4] sm:$0xf]
    %v125 = vld [vmem:[%s0 + $0x8] sm:$0xf]
    %v126 = vld [vmem:[%s0 + $0xc] sm:$0xf]
    %v127 = vld [vmem:[%s0 + $0x10] sm:$0xf]
    %v128 = vld [vmem:[%s0 + $0x14] sm:$0xf]
    %v129 = vld [vmem:[%s0 + $0x18] sm:$0xf]
    %v130 = vld [vmem:[%s0 + $0x1c] sm:$0xf]
    %v131 = vld [vmem:[%s0 + $0x20] sm:$0xf]
    %v132 = vld [vmem:[%s0 + $0x24] sm:$0xf]
    %v133 = vld [vmem:[%s0 + $0x28] sm:$0xf]
    %v134 = vld [vmem:[%s0 + $0x2c] sm:$0xf]
    %v135 = vld [vmem:[%s0 + $0x30] sm:$0xf]
    %v136 = vld [vmem:[%s0 + $0x34] sm:$0xf]
    %v137 = vld [vmem:[%s0 + $0x38] sm:$0xf]
    %v138 = vld [vmem:[%s0 + $0x3c] sm:$0xf]
    %v139 = vld [vmem:[%s0 + $0x40] sm:$0xf]
    %v140 = vld [vmem:[%s0 + $0x44] sm:$0xf]
    %v141 = vld [vmem:[%s0 + $0x48] sm:$0xf]
    %v142 = vld [vmem:[%s0 + $0x4c] sm:$0xf]
    %v143 = vld [vmem:[%s0 + $0x50] sm:$0xf]
    %v144 = vld [vmem:[%s0 + $0x54] sm:$0xf]
    %v145 = vld [vmem:[%s0 + $0x58] sm:$0xf]
    %v146 = vld [vmem:[%s0 + $0x5c] sm:$0xf]
    %v147 = vld [vmem:[%s0 + $0x60] sm:$0xf]
    %v148 = vld [vmem:[%s0 + $0x64] sm:$0xf]
    %v149 = vld [vmem:[%s0 + $0x68] sm:$0xf]
    %v150 = vld [vmem:[%s0 + $0x6c] sm:$0xf]
    %v151 = vld [vmem:[#allocation2] sm:$0xff]
    %v152 = vld [vmem:[#allocation2 + $0x8] sm:$0xff]
    %v153 = vld [vmem:[#allocation2 + $0x10] sm:$0xff]
    %v154 = vld [vmem:[#allocation2 + $0x18] sm:$0xff]
    %v155 = vld [vmem:[#allocation2 + $0x20] sm:$0xff]
    %v156 = vld [vmem:[#allocation2 + $0x28] sm:$0xff]
    %v157 = vld [vmem:[#allocation2 + $0x30] sm:$0xff]
    %v158 = vld [vmem:[#allocation2 + $0x38] sm:$0xff]
    %v159 = vld [vmem:[#allocation2 + $0x40] sm:$0xff]
    %v160 = vld [vmem:[#allocation2 + $0x48] sm:$0xff]
    %v161 = vld [vmem:[#allocation2 + $0x50] sm:$0xff]
    %v162 = vld [vmem:[#allocation2 + $0x58] sm:$0xff]
    %v163 = vld [vmem:[#allocation2 + $0x60] sm:$0xff]
    %v164 = vld [vmem:[#allocation2 + $0x68] sm:$0xff]
    %v165 = vld [vmem:[#allocation2 + $0x70] sm:$0xff]
    %v166 = vld [vmem:[#allocation2 + $0x78] sm:$0xff]
    %v167 = vld [vmem:[#allocation2 + $0x80] sm:$0xff]
    %v168 = vld [vmem:[#allocation2 + $0x88] sm:$0xff]
    %v169 = vld [vmem:[#allocation2 + $0x90] sm:$0xff]
    %v170 = vld [vmem:[#allocation2 + $0x98] sm:$0xff]
    %v171 = vld [vmem:[#allocation2 + $0xa0] sm:$0xff]
    %v172 = vld [vmem:[#allocation2 + $0xa8] sm:$0xff]
    %v173 = vld [vmem:[#allocation2 + $0xb0] sm:$0xff]
    %v174 = vld [vmem:[#allocation2 + $0xb8] sm:$0xff]
    %v175 = vld [vmem:[#allocation2 + $0xc0] sm:$0xff]
    %v176 = vld [vmem:[#allocation2 + $0xc8] sm:$0xff]
    %v177 = vld [vmem:[#allocation2 + $0xd0] sm:$0xff]
    %v178 = vld [vmem:[#allocation2 + $0xd8] sm:$0xff]
    %v179 = vld [vmem:[#allocation2 + $0xe0] sm:$0xff]
    %v180 = vld [vmem:[#allocation2 + $0xe8] sm:$0xff]
    %v181 = vld [vmem:[#allocation2 + $0xf0] sm:$0xff]
    %v182 = vld [vmem:[#allocation2 + $0xf8] sm:$0xff]
    %v211 = vunpack.c.l.b16 %v123
    %v212 = vunpack.c.l.b16 %v124
    %v213 = vunpack.c.l.b16 %v125
    %v214 = vunpack.c.l.b16 %v126
    %v215 = vunpack.c.l.b16 %v127
    %v216 = vunpack.c.l.b16 %v128
    %v217 = vunpack.c.l.b16 %v129
    %v218 = vunpack.c.l.b16 %v130
    %v219 = vunpack.c.l.b16 %v131
    %v220 = vunpack.c.l.b16 %v132
    %v221 = vunpack.c.l.b16 %v133
    %v222 = vunpack.c.l.b16 %v134
    %v223 = vunpack.c.l.b16 %v135
    %v224 = vunpack.c.l.b16 %v136
    %v225 = vunpack.c.l.b16 %v137
    %v226 = vunpack.c.l.b16 %v138
    %v227 = vunpack.c.l.b16 %v139
    %v228 = vunpack.c.l.b16 %v140
    %v229 = vunpack.c.l.b16 %v141
    %v230 = vunpack.c.l.b16 %v142
    %v231 = vunpack.c.l.b16 %v143
    %v232 = vunpack.c.l.b16 %v144
    %v233 = vunpack.c.l.b16 %v145
    %v234 = vunpack.c.l.b16 %v146
    %v235 = vunpack.c.l.b16 %v147
    %v236 = vunpack.c.l.b16 %v148
    %v237 = vunpack.c.l.b16 %v149
    %v238 = vunpack.c.l.b16 %v150
    %v239 = vpack.c.b16 %v212, %v211
    %v240 = vpack.c.b16 %v214, %v213
    %v241 = vpack.c.b16 %v216, %v215
    %v242 = vpack.c.b16 %v218, %v217
    %v243 = vpack.c.b16 %v220, %v219
    %v244 = vpack.c.b16 %v222, %v221
    %v245 = vpack.c.b16 %v224, %v223
    %v246 = vpack.c.b16 %v226, %v225
    %v247 = vpack.c.b16 %v228, %v227
    %v248 = vpack.c.b16 %v230, %v229
    %v249 = vpack.c.b16 %v232, %v231
    %v250 = vpack.c.b16 %v234, %v233
    %v251 = vpack.c.b16 %v236, %v235
    %v252 = vpack.c.b16 %v238, %v237
    %v299 = vunpack.c.l.b16 %v151
    %v300 = vunpack.c.h.b16 %v151
    %v301 = vunpack.c.l.b16 %v152
    %v302 = vunpack.c.h.b16 %v152
    %v303 = vunpack.c.l.b16 %v153
    %v304 = vunpack.c.h.b16 %v153
    %v305 = vunpack.c.l.b16 %v154
    %v306 = vunpack.c.h.b16 %v154
    %v307 = vunpack.c.l.b16 %v155
    %v308 = vunpack.c.h.b16 %v155
    %v309 = vunpack.c.l.b16 %v156
    %v310 = vunpack.c.h.b16 %v156
    %v311 = vunpack.c.l.b16 %v157
    %v312 = vunpack.c.h.b16 %v157
    %v313 = vunpack.c.l.b16 %v158
    %v314 = vunpack.c.h.b16 %v158
    %v315 = vunpack.c.l.b16 %v159
    %v316 = vunpack.c.h.b16 %v159
    %v317 = vunpack.c.l.b16 %v160
    %v318 = vunpack.c.h.b16 %v160
    %v319 = vunpack.c.l.b16 %v161
    %v320 = vunpack.c.h.b16 %v161
    %v321 = vunpack.c.l.b16 %v162
    %v322 = vunpack.c.h.b16 %v162
    %v323 = vunpack.c.l.b16 %v163
    %v324 = vunpack.c.h.b16 %v163
    %v325 = vunpack.c.l.b16 %v164
    %v326 = vunpack.c.h.b16 %v164
    %v327 = vunpack.c.l.b16 %v165
    %v328 = vunpack.c.h.b16 %v165
    %v329 = vunpack.c.l.b16 %v166
    %v330 = vunpack.c.h.b16 %v166
    %v331 = vunpack.c.l.b16 %v167
    %v332 = vunpack.c.h.b16 %v167
    %v333 = vunpack.c.l.b16 %v168
    %v334 = vunpack.c.h.b16 %v168
    %v335 = vunpack.c.l.b16 %v169
    %v336 = vunpack.c.h.b16 %v169
    %v337 = vunpack.c.l.b16 %v170
    %v338 = vunpack.c.h.b16 %v170
    %v339 = vunpack.c.l.b16 %v171
    %v340 = vunpack.c.h.b16 %v171
    %v341 = vunpack.c.l.b16 %v172
    %v342 = vunpack.c.h.b16 %v172
    %v343 = vunpack.c.l.b16 %v173
    %v344 = vunpack.c.h.b16 %v173
    %v345 = vunpack.c.l.b16 %v174
    %v346 = vunpack.c.h.b16 %v174
    %v347 = vunpack.c.l.b16 %v175
    %v348 = vunpack.c.h.b16 %v175
    %v349 = vunpack.c.l.b16 %v176
    %v350 = vunpack.c.h.b16 %v176
    %v351 = vunpack.c.l.b16 %v177
    %v352 = vunpack.c.h.b16 %v177
    %v353 = vunpack.c.l.b16 %v178
    %v354 = vunpack.c.h.b16 %v178
    %v355 = vunpack.c.l.b16 %v179
    %v356 = vunpack.c.h.b16 %v179
    %v357 = vunpack.c.l.b16 %v180
    %v358 = vunpack.c.h.b16 %v180
    %v359 = vunpack.c.l.b16 %v181
    %v360 = vunpack.c.h.b16 %v181
    %v361 = vunpack.c.l.b16 %v182
    %v362 = vunpack.c.h.b16 %v182
    %v363 = vpack.c.b16 %v303, %v299
    %v364 = vpack.c.b16 %v304, %v300
    %v365 = vpack.c.b16 %v305, %v301
    %v366 = vpack.c.b16 %v306, %v302
    %v367 = vpack.c.b16 %v311, %v307
    %v368 = vpack.c.b16 %v312, %v308
    %v369 = vpack.c.b16 %v313, %v309
    %v370 = vpack.c.b16 %v314, %v310
    %v371 = vpack.c.b16 %v319, %v315
    %v372 = vpack.c.b16 %v320, %v316
    %v373 = vpack.c.b16 %v321, %v317
    %v374 = vpack.c.b16 %v322, %v318
    %v375 = vpack.c.b16 %v327, %v323
    %v376 = vpack.c.b16 %v328, %v324
    %v377 = vpack.c.b16 %v329, %v325
    %v378 = vpack.c.b16 %v330, %v326
    %v379 = vpack.c.b16 %v335, %v331
    %v380 = vpack.c.b16 %v336, %v332
    %v381 = vpack.c.b16 %v337, %v333
    %v382 = vpack.c.b16 %v338, %v334
    %v383 = vpack.c.b16 %v343, %v339
    %v384 = vpack.c.b16 %v344, %v340
    %v385 = vpack.c.b16 %v345, %v341
    %v386 = vpack.c.b16 %v346, %v342
    %v387 = vpack.c.b16 %v351, %v347
    %v388 = vpack.c.b16 %v352, %v348
    %v389 = vpack.c.b16 %v353, %v349
    %v390 = vpack.c.b16 %v354, %v350
    %v391 = vpack.c.b16 %v359, %v355
    %v392 = vpack.c.b16 %v360, %v356
    %v393 = vpack.c.b16 %v361, %v357
    %v394 = vpack.c.b16 %v362, %v358
    %427 = vmatpush.bf16.msra.mxu0 %v391
    %428 = vmatpush.bf16.msra.mxu0 %v387
    %429 = vmatpush.bf16.msra.mxu0 %v383
    %430 = vmatpush.bf16.msra.mxu0 %v379
    %431 = vmatpush.bf16.msra.mxu0 %v375
    %432 = vmatpush.bf16.msra.mxu0 %v371
    %433 = vmatpush.bf16.msra.mxu0 %v367
    %434 = vmatpush.bf16.msra.mxu0 %v363
    %435 = vmatmul.bf16.gmra.mxu0 %v239
    %v436 = vpop.f32.mrf.mxu0
    %v437 = vadd.f32 0.0, %v436
    %v438 = vpop.f32.mrf.mxu0
    %v439 = vadd.f32 0.0, %v438
    %440 = vmatmul.bf16.gmra.mxu0 %v240
    %v441 = vpop.f32.mrf.mxu0
    %v442 = vadd.f32 0.0, %v441
    %v443 = vpop.f32.mrf.mxu0
    %v444 = vadd.f32 0.0, %v443
    %445 = vmatmul.bf16.gmra.mxu0 %v241
    %v446 = vpop.f32.mrf.mxu0
    %v447 = vadd.f32 0.0, %v446
    %v448 = vpop.f32.mrf.mxu0
    %v449 = vadd.f32 0.0, %v448
    %450 = vmatmul.bf16.gmra.mxu0 %v242
    %v451 = vpop.f32.mrf.mxu0
    %v452 = vadd.f32 0.0, %v451
    %v453 = vpop.f32.mrf.mxu0
    %v454 = vadd.f32 0.0, %v453
    %455 = vmatmul.bf16.gmra.mxu0 %v243
    %v456 = vpop.f32.mrf.mxu0
    %v457 = vadd.f32 0.0, %v456
    %v458 = vpop.f32.mrf.mxu0
    %v459 = vadd.f32 0.0, %v458
    %460 = vmatmul.bf16.gmra.mxu0 %v244
    %v461 = vpop.f32.mrf.mxu0
    %v462 = vadd.f32 0.0, %v461
    %v463 = vpop.f32.mrf.mxu0
    %v464 = vadd.f32 0.0, %v463
    %465 = vmatmul.bf16.gmra.mxu0 %v245
    %v466 = vpop.f32.mrf.mxu0
    %v467 = vadd.f32 0.0, %v466
    %v468 = vpop.f32.mrf.mxu0
    %v469 = vadd.f32 0.0, %v468
    %470 = vmatmul.bf16.gmra.mxu0 %v246
    %v471 = vpop.f32.mrf.mxu0
    %v472 = vadd.f32 0.0, %v471
    %v473 = vpop.f32.mrf.mxu0
    %v474 = vadd.f32 0.0, %v473
    %475 = vmatmul.bf16.gmra.mxu0 %v247
    %v476 = vpop.f32.mrf.mxu0
    %v477 = vadd.f32 0.0, %v476
    %v478 = vpop.f32.mrf.mxu0
    %v479 = vadd.f32 0.0, %v478
    %480 = vmatmul.bf16.gmra.mxu0 %v248
    %v481 = vpop.f32.mrf.mxu0
    %v482 = vadd.f32 0.0, %v481
    %v483 = vpop.f32.mrf.mxu0
    %v484 = vadd.f32 0.0, %v483
    %485 = vmatmul.bf16.gmra.mxu0 %v249
    %v486 = vpop.f32.mrf.mxu0
    %v487 = vadd.f32 0.0, %v486
    %v488 = vpop.f32.mrf.mxu0
    %v489 = vadd.f32 0.0, %v488
    %490 = vmatmul.bf16.gmra.mxu0 %v250
    %v491 = vpop.f32.mrf.mxu0
    %v492 = vadd.f32 0.0, %v491
    %v493 = vpop.f32.mrf.mxu0
    %v494 = vadd.f32 0.0, %v493
    %495 = vmatmul.bf16.gmra.mxu0 %v251
    %v496 = vpop.f32.mrf.mxu0
    %v497 = vadd.f32 0.0, %v496
    %v498 = vpop.f32.mrf.mxu0
    %v499 = vadd.f32 0.0, %v498
    %500 = vmatmul.bf16.gmra.mxu0 %v252
    %v501 = vpop.f32.mrf.mxu0
    %v502 = vadd.f32 0.0, %v501
    %v503 = vpop.f32.mrf.mxu0
    %v504 = vadd.f32 0.0, %v503
    %505 = vdwg.mxu0
    %506 = vmatpush.bf16.msra.mxu0 %v392
    %507 = vmatpush.bf16.msra.mxu0 %v388
    %508 = vmatpush.bf16.msra.mxu0 %v384
    %509 = vmatpush.bf16.msra.mxu0 %v380
    %510 = vmatpush.bf16.msra.mxu0 %v376
    %511 = vmatpush.bf16.msra.mxu0 %v372
    %512 = vmatpush.bf16.msra.mxu0 %v368
    %513 = vmatpush.bf16.msra.mxu0 %v364
    %514 = vmatmul.bf16.gmra.mxu0 %v239
    %v515 = vpop.f32.mrf.mxu0
    %v516 = vadd.f32 0.0, %v515
    %v517 = vpop.f32.mrf.mxu0
    %v518 = vadd.f32 0.0, %v517
    %519 = vmatmul.bf16.gmra.mxu0 %v240
    %v520 = vpop.f32.mrf.mxu0
    %v521 = vadd.f32 0.0, %v520
    %v522 = vpop.f32.mrf.mxu0
    %v523 = vadd.f32 0.0, %v522
    %524 = vmatmul.bf16.gmra.mxu0 %v241
    %v525 = vpop.f32.mrf.mxu0
    %v526 = vadd.f32 0.0, %v525
    %v527 = vpop.f32.mrf.mxu0
    %v528 = vadd.f32 0.0, %v527
    %529 = vmatmul.bf16.gmra.mxu0 %v242
    %v530 = vpop.f32.mrf.mxu0
    %v531 = vadd.f32 0.0, %v530
    %v532 = vpop.f32.mrf.mxu0
    %v533 = vadd.f32 0.0, %v532
    %534 = vmatmul.bf16.gmra.mxu0 %v243
    %v535 = vpop.f32.mrf.mxu0
    %v536 = vadd.f32 0.0, %v535
    %v537 = vpop.f32.mrf.mxu0
    %v538 = vadd.f32 0.0, %v537
    %539 = vmatmul.bf16.gmra.mxu0 %v244
    %v540 = vpop.f32.mrf.mxu0
    %v541 = vadd.f32 0.0, %v540
    %v542 = vpop.f32.mrf.mxu0
    %v543 = vadd.f32 0.0, %v542
    %544 = vmatmul.bf16.gmra.mxu0 %v245
    %v545 = vpop.f32.mrf.mxu0
    %v546 = vadd.f32 0.0, %v545
    %v547 = vpop.f32.mrf.mxu0
    %v548 = vadd.f32 0.0, %v547
    %549 = vmatmul.bf16.gmra.mxu0 %v246
    %v550 = vpop.f32.mrf.mxu0
    %v551 = vadd.f32 0.0, %v550
    %v552 = vpop.f32.mrf.mxu0
    %v553 = vadd.f32 0.0, %v552
    %554 = vmatmul.bf16.gmra.mxu0 %v247
    %v555 = vpop.f32.mrf.mxu0
    %v556 = vadd.f32 0.0, %v555
    %v557 = vpop.f32.mrf.mxu0
    %v558 = vadd.f32 0.0, %v557
    %559 = vmatmul.bf16.gmra.mxu0 %v248
    %v560 = vpop.f32.mrf.mxu0
    %v561 = vadd.f32 0.0, %v560
    %v562 = vpop.f32.mrf.mxu0
    %v563 = vadd.f32 0.0, %v562
    %564 = vmatmul.bf16.gmra.mxu0 %v249
    %v565 = vpop.f32.mrf.mxu0
    %v566 = vadd.f32 0.0, %v565
    %v567 = vpop.f32.mrf.mxu0
    %v568 = vadd.f32 0.0, %v567
    %569 = vmatmul.bf16.gmra.mxu0 %v250
    %v570 = vpop.f32.mrf.mxu0
    %v571 = vadd.f32 0.0, %v570
    %v572 = vpop.f32.mrf.mxu0
    %v573 = vadd.f32 0.0, %v572
    %574 = vmatmul.bf16.gmra.mxu0 %v251
    %v575 = vpop.f32.mrf.mxu0
    %v576 = vadd.f32 0.0, %v575
    %v577 = vpop.f32.mrf.mxu0
    %v578 = vadd.f32 0.0, %v577
    %579 = vmatmul.bf16.gmra.mxu0 %v252
    %v580 = vpop.f32.mrf.mxu0
    %v581 = vadd.f32 0.0, %v580
    %v582 = vpop.f32.mrf.mxu0
    %v583 = vadd.f32 0.0, %v582
    %584 = vdwg.mxu0
    %585 = vmatpush.bf16.msra.mxu0 %v393
    %586 = vmatpush.bf16.msra.mxu0 %v389
    %587 = vmatpush.bf16.msra.mxu0 %v385
    %588 = vmatpush.bf16.msra.mxu0 %v381
    %589 = vmatpush.bf16.msra.mxu0 %v377
    %590 = vmatpush.bf16.msra.mxu0 %v373
    %591 = vmatpush.bf16.msra.mxu0 %v369
    %592 = vmatpush.bf16.msra.mxu0 %v365
    %593 = vmatmul.bf16.gmra.mxu0 %v239
    %v594 = vpop.f32.mrf.mxu0
    %v595 = vadd.f32 0.0, %v594
    %v596 = vpop.f32.mrf.mxu0
    %v597 = vadd.f32 0.0, %v596
    %598 = vmatmul.bf16.gmra.mxu0 %v240
    %v599 = vpop.f32.mrf.mxu0
    %v600 = vadd.f32 0.0, %v599
    %v601 = vpop.f32.mrf.mxu0
    %v602 = vadd.f32 0.0, %v601
    %603 = vmatmul.bf16.gmra.mxu0 %v241
    %v604 = vpop.f32.mrf.mxu0
    %v605 = vadd.f32 0.0, %v604
    %v606 = vpop.f32.mrf.mxu0
    %v607 = vadd.f32 0.0, %v606
    %608 = vmatmul.bf16.gmra.mxu0 %v242
    %v609 = vpop.f32.mrf.mxu0
    %v610 = vadd.f32 0.0, %v609
    %v611 = vpop.f32.mrf.mxu0
    %v612 = vadd.f32 0.0, %v611
    %613 = vmatmul.bf16.gmra.mxu0 %v243
    %v614 = vpop.f32.mrf.mxu0
    %v615 = vadd.f32 0.0, %v614
    %v616 = vpop.f32.mrf.mxu0
    %v617 = vadd.f32 0.0, %v616
    %618 = vmatmul.bf16.gmra.mxu0 %v244
    %v619 = vpop.f32.mrf.mxu0
    %v620 = vadd.f32 0.0, %v619
    %v621 = vpop.f32.mrf.mxu0
    %v622 = vadd.f32 0.0, %v621
    %623 = vmatmul.bf16.gmra.mxu0 %v245
    %v624 = vpop.f32.mrf.mxu0
    %v625 = vadd.f32 0.0, %v624
    %v626 = vpop.f32.mrf.mxu0
    %v627 = vadd.f32 0.0, %v626
    %628 = vmatmul.bf16.gmra.mxu0 %v246
    %v629 = vpop.f32.mrf.mxu0
    %v630 = vadd.f32 0.0, %v629
    %v631 = vpop.f32.mrf.mxu0
    %v632 = vadd.f32 0.0, %v631
    %633 = vmatmul.bf16.gmra.mxu0 %v247
    %v634 = vpop.f32.mrf.mxu0
    %v635 = vadd.f32 0.0, %v634
    %v636 = vpop.f32.mrf.mxu0
    %v637 = vadd.f32 0.0, %v636
    %638 = vmatmul.bf16.gmra.mxu0 %v248
    %v639 = vpop.f32.mrf.mxu0
    %v640 = vadd.f32 0.0, %v639
    %v641 = vpop.f32.mrf.mxu0
    %v642 = vadd.f32 0.0, %v641
    %643 = vmatmul.bf16.gmra.mxu0 %v249
    %v644 = vpop.f32.mrf.mxu0
    %v645 = vadd.f32 0.0, %v644
    %v646 = vpop.f32.mrf.mxu0
    %v647 = vadd.f32 0.0, %v646
    %648 = vmatmul.bf16.gmra.mxu0 %v250
    %v649 = vpop.f32.mrf.mxu0
    %v650 = vadd.f32 0.0, %v649
    %v651 = vpop.f32.mrf.mxu0
    %v652 = vadd.f32 0.0, %v651
    %653 = vmatmul.bf16.gmra.mxu0 %v251
    %v654 = vpop.f32.mrf.mxu0
    %v655 = vadd.f32 0.0, %v654
    %v656 = vpop.f32.mrf.mxu0
    %v657 = vadd.f32 0.0, %v656
    %658 = vmatmul.bf16.gmra.mxu0 %v252
    %v659 = vpop.f32.mrf.mxu0
    %v660 = vadd.f32 0.0, %v659
    %v661 = vpop.f32.mrf.mxu0
    %v662 = vadd.f32 0.0, %v661
    %663 = vdwg.mxu0
    %664 = vmatpush.bf16.msra.mxu0 %v394
    %665 = vmatpush.bf16.msra.mxu0 %v390
    %666 = vmatpush.bf16.msra.mxu0 %v386
    %667 = vmatpush.bf16.msra.mxu0 %v382
    %668 = vmatpush.bf16.msra.mxu0 %v378
    %669 = vmatpush.bf16.msra.mxu0 %v374
    %670 = vmatpush.bf16.msra.mxu0 %v370
    %671 = vmatpush.bf16.msra.mxu0 %v366
    %672 = vmatmul.bf16.gmra.mxu0 %v239
    %v673 = vpop.f32.mrf.mxu0
    %v674 = vadd.f32 0.0, %v673
    %v675 = vpop.f32.mrf.mxu0
    %v676 = vadd.f32 0.0, %v675
    %677 = vmatmul.bf16.gmra.mxu0 %v240
    %v678 = vpop.f32.mrf.mxu0
    %v679 = vadd.f32 0.0, %v678
    %v680 = vpop.f32.mrf.mxu0
    %v681 = vadd.f32 0.0, %v680
    %682 = vmatmul.bf16.gmra.mxu0 %v241
    %v683 = vpop.f32.mrf.mxu0
    %v684 = vadd.f32 0.0, %v683
    %v685 = vpop.f32.mrf.mxu0
    %v686 = vadd.f32 0.0, %v685
    %687 = vmatmul.bf16.gmra.mxu0 %v242
    %v688 = vpop.f32.mrf.mxu0
    %v689 = vadd.f32 0.0, %v688
    %v690 = vpop.f32.mrf.mxu0
    %v691 = vadd.f32 0.0, %v690
    %692 = vmatmul.bf16.gmra.mxu0 %v243
    %v693 = vpop.f32.mrf.mxu0
    %v694 = vadd.f32 0.0, %v693
    %v695 = vpop.f32.mrf.mxu0
    %v696 = vadd.f32 0.0, %v695
    %697 = vmatmul.bf16.gmra.mxu0 %v244
    %v698 = vpop.f32.mrf.mxu0
    %v699 = vadd.f32 0.0, %v698
    %v700 = vpop.f32.mrf.mxu0
    %v701 = vadd.f32 0.0, %v700
    %702 = vmatmul.bf16.gmra.mxu0 %v245
    %v703 = vpop.f32.mrf.mxu0
    %v704 = vadd.f32 0.0, %v703
    %v705 = vpop.f32.mrf.mxu0
    %v706 = vadd.f32 0.0, %v705
    %707 = vmatmul.bf16.gmra.mxu0 %v246
    %v708 = vpop.f32.mrf.mxu0
    %v709 = vadd.f32 0.0, %v708
    %v710 = vpop.f32.mrf.mxu0
    %v711 = vadd.f32 0.0, %v710
    %712 = vmatmul.bf16.gmra.mxu0 %v247
    %v713 = vpop.f32.mrf.mxu0
    %v714 = vadd.f32 0.0, %v713
    %v715 = vpop.f32.mrf.mxu0
    %v716 = vadd.f32 0.0, %v715
    %717 = vmatmul.bf16.gmra.mxu0 %v248
    %v718 = vpop.f32.mrf.mxu0
    %v719 = vadd.f32 0.0, %v718
    %v720 = vpop.f32.mrf.mxu0
    %v721 = vadd.f32 0.0, %v720
    %722 = vmatmul.bf16.gmra.mxu0 %v249
    %v723 = vpop.f32.mrf.mxu0
    %v724 = vadd.f32 0.0, %v723
    %v725 = vpop.f32.mrf.mxu0
    %v726 = vadd.f32 0.0, %v725
    %727 = vmatmul.bf16.gmra.mxu0 %v250
    %v728 = vpop.f32.mrf.mxu0
    %v729 = vadd.f32 0.0, %v728
    %v730 = vpop.f32.mrf.mxu0
    %v731 = vadd.f32 0.0, %v730
    %732 = vmatmul.bf16.gmra.mxu0 %v251
    %v733 = vpop.f32.mrf.mxu0
    %v734 = vadd.f32 0.0, %v733
    %v735 = vpop.f32.mrf.mxu0
    %v736 = vadd.f32 0.0, %v735
    %737 = vmatmul.bf16.gmra.mxu0 %v252
    %v738 = vpop.f32.mrf.mxu0
    %v739 = vadd.f32 0.0, %v738
    %v740 = vpop.f32.mrf.mxu0
    %v741 = vadd.f32 0.0, %v740
    %742 = vdwg.mxu0
    %v743 = vmul.f32 %v437, 0.2
    %v744 = vmul.f32 %v516, 0.2
    %v745 = vmul.f32 %v595, 0.2
    %v746 = vmul.f32 %v674, 0.2
    %v747 = vmul.f32 %v439, 0.2
    %v748 = vmul.f32 %v518, 0.2
    %v749 = vmul.f32 %v597, 0.2
    %v750 = vmul.f32 %v676, 0.2
    %v751 = vmul.f32 %v442, 0.2
    %v752 = vmul.f32 %v521, 0.2
    %v753 = vmul.f32 %v600, 0.2
    %v754 = vmul.f32 %v679, 0.2
    %v755 = vmul.f32 %v444, 0.2
    %v756 = vmul.f32 %v523, 0.2
    %v757 = vmul.f32 %v602, 0.2
    %v758 = vmul.f32 %v681, 0.2
    %v759 = vmul.f32 %v447, 0.2
    %v760 = vmul.f32 %v526, 0.2
    %v761 = vmul.f32 %v605, 0.2
    %v762 = vmul.f32 %v684, 0.2
    %v763 = vmul.f32 %v449, 0.2
    %v764 = vmul.f32 %v528, 0.2
    %v765 = vmul.f32 %v607, 0.2
    %v766 = vmul.f32 %v686, 0.2
    %v767 = vmul.f32 %v452, 0.2
    %v768 = vmul.f32 %v531, 0.2
    %v769 = vmul.f32 %v610, 0.2
    %v770 = vmul.f32 %v689, 0.2
    %v771 = vmul.f32 %v454, 0.2
    %v772 = vmul.f32 %v533, 0.2
    %v773 = vmul.f32 %v612, 0.2
    %v774 = vmul.f32 %v691, 0.2
    %v775 = vmul.f32 %v457, 0.2
    %v776 = vmul.f32 %v536, 0.2
    %v777 = vmul.f32 %v615, 0.2
    %v778 = vmul.f32 %v694, 0.2
    %v779 = vmul.f32 %v459, 0.2
    %v780 = vmul.f32 %v538, 0.2
    %v781 = vmul.f32 %v617, 0.2
    %v782 = vmul.f32 %v696, 0.2
    %v783 = vmul.f32 %v462, 0.2
    %v784 = vmul.f32 %v541, 0.2
    %v785 = vmul.f32 %v620, 0.2
    %v786 = vmul.f32 %v699, 0.2
    %v787 = vmul.f32 %v464, 0.2
    %v788 = vmul.f32 %v543, 0.2
    %v789 = vmul.f32 %v622, 0.2
    %v790 = vmul.f32 %v701, 0.2
    %v791 = vmul.f32 %v467, 0.2
    %v792 = vmul.f32 %v546, 0.2
    %v793 = vmul.f32 %v625, 0.2
    %v794 = vmul.f32 %v704, 0.2
    %v795 = vmul.f32 %v469, 0.2
    %v796 = vmul.f32 %v548, 0.2
    %v797 = vmul.f32 %v627, 0.2
    %v798 = vmul.f32 %v706, 0.2
    %v799 = vmul.f32 %v472, 0.2
    %v800 = vmul.f32 %v551, 0.2
    %v801 = vmul.f32 %v630, 0.2
    %v802 = vmul.f32 %v709, 0.2
    %v803 = vmul.f32 %v474, 0.2
    %v804 = vmul.f32 %v553, 0.2
    %v805 = vmul.f32 %v632, 0.2
    %v806 = vmul.f32 %v711, 0.2
    %v807 = vmul.f32 %v477, 0.2
    %v808 = vmul.f32 %v556, 0.2
    %v809 = vmul.f32 %v635, 0.2
    %v810 = vmul.f32 %v714, 0.2
    %v811 = vmul.f32 %v479, 0.2
    %v812 = vmul.f32 %v558, 0.2
    %v813 = vmul.f32 %v637, 0.2
    %v814 = vmul.f32 %v716, 0.2
    %v815 = vmul.f32 %v482, 0.2
    %v816 = vmul.f32 %v561, 0.2
    %v817 = vmul.f32 %v640, 0.2
    %v818 = vmul.f32 %v719, 0.2
    %v819 = vmul.f32 %v484, 0.2
    %v820 = vmul.f32 %v563, 0.2
    %v821 = vmul.f32 %v642, 0.2
    %v822 = vmul.f32 %v721, 0.2
    %v823 = vmul.f32 %v487, 0.2
    %v824 = vmul.f32 %v566, 0.2
    %v825 = vmul.f32 %v645, 0.2
    %v826 = vmul.f32 %v724, 0.2
    %v827 = vmul.f32 %v489, 0.2
    %v828 = vmul.f32 %v568, 0.2
    %v829 = vmul.f32 %v647, 0.2
    %v830 = vmul.f32 %v726, 0.2
    %v831 = vmul.f32 %v492, 0.2
    %v832 = vmul.f32 %v571, 0.2
    %v833 = vmul.f32 %v650, 0.2
    %v834 = vmul.f32 %v729, 0.2
    %v835 = vmul.f32 %v494, 0.2
    %v836 = vmul.f32 %v573, 0.2
    %v837 = vmul.f32 %v652, 0.2
    %v838 = vmul.f32 %v731, 0.2
    %v839 = vmul.f32 %v497, 0.2
    %v840 = vmul.f32 %v576, 0.2
    %v841 = vmul.f32 %v655, 0.2
    %v842 = vmul.f32 %v734, 0.2
    %v843 = vmul.f32 %v499, 0.2
    %v844 = vmul.f32 %v578, 0.2
    %v845 = vmul.f32 %v657, 0.2
    %v846 = vmul.f32 %v736, 0.2
    %v847 = vmul.f32 %v502, 0.2
    %v848 = vmul.f32 %v581, 0.2
    %v849 = vmul.f32 %v660, 0.2
    %v850 = vmul.f32 %v739, 0.2
    %v851 = vmul.f32 %v504, 0.2
    %v852 = vmul.f32 %v583, 0.2
    %v853 = vmul.f32 %v662, 0.2
    %v854 = vmul.f32 %v741, 0.2
    %v855 = vmax.f32 %v437, %v743
    %v856 = vmax.f32 %v516, %v744
    %v857 = vmax.f32 %v595, %v745
    %v858 = vmax.f32 %v674, %v746
    %v859 = vmax.f32 %v439, %v747
    %v860 = vmax.f32 %v518, %v748
    %v861 = vmax.f32 %v597, %v749
    %v862 = vmax.f32 %v676, %v750
    %v863 = vmax.f32 %v442, %v751
    %v864 = vmax.f32 %v521, %v752
    %v865 = vmax.f32 %v600, %v753
    %v866 = vmax.f32 %v679, %v754
    %v867 = vmax.f32 %v444, %v755
    %v868 = vmax.f32 %v523, %v756
    %v869 = vmax.f32 %v602, %v757
    %v870 = vmax.f32 %v681, %v758
    %v871 = vmax.f32 %v447, %v759
    %v872 = vmax.f32 %v526, %v760
    %v873 = vmax.f32 %v605, %v761
    %v874 = vmax.f32 %v684, %v762
    %v875 = vmax.f32 %v449, %v763
    %v876 = vmax.f32 %v528, %v764
    %v877 = vmax.f32 %v607, %v765
    %v878 = vmax.f32 %v686, %v766
    %v879 = vmax.f32 %v452, %v767
    %v880 = vmax.f32 %v531, %v768
    %v881 = vmax.f32 %v610, %v769
    %v882 = vmax.f32 %v689, %v770
    %v883 = vmax.f32 %v454, %v771
    %v884 = vmax.f32 %v533, %v772
    %v885 = vmax.f32 %v612, %v773
    %v886 = vmax.f32 %v691, %v774
    %v887 = vmax.f32 %v457, %v775
    %v888 = vmax.f32 %v536, %v776
    %v889 = vmax.f32 %v615, %v777
    %v890 = vmax.f32 %v694, %v778
    %v891 = vmax.f32 %v459, %v779
    %v892 = vmax.f32 %v538, %v780
    %v893 = vmax.f32 %v617, %v781
    %v894 = vmax.f32 %v696, %v782
    %v895 = vmax.f32 %v462, %v783
    %v896 = vmax.f32 %v541, %v784
    %v897 = vmax.f32 %v620, %v785
    %v898 = vmax.f32 %v699, %v786
    %v899 = vmax.f32 %v464, %v787
    %v900 = vmax.f32 %v543, %v788
    %v901 = vmax.f32 %v622, %v789
    %v902 = vmax.f32 %v701, %v790
    %v903 = vmax.f32 %v467, %v791
    %v904 = vmax.f32 %v546, %v792
    %v905 = vmax.f32 %v625, %v793
    %v906 = vmax.f32 %v704, %v794
    %v907 = vmax.f32 %v469, %v795
    %v908 = vmax.f32 %v548, %v796
    %v909 = vmax.f32 %v627, %v797
    %v910 = vmax.f32 %v706, %v798
    %v911 = vmax.f32 %v472, %v799
    %v912 = vmax.f32 %v551, %v800
    %v913 = vmax.f32 %v630, %v801
    %v914 = vmax.f32 %v709, %v802
    %v915 = vmax.f32 %v474, %v803
    %v916 = vmax.f32 %v553, %v804
    %v917 = vmax.f32 %v632, %v805
    %v918 = vmax.f32 %v711, %v806
    %v919 = vmax.f32 %v477, %v807
    %v920 = vmax.f32 %v556, %v808
    %v921 = vmax.f32 %v635, %v809
    %v922 = vmax.f32 %v714, %v810
    %v923 = vmax.f32 %v479, %v811
    %v924 = vmax.f32 %v558, %v812
    %v925 = vmax.f32 %v637, %v813
    %v926 = vmax.f32 %v716, %v814
    %v927 = vmax.f32 %v482, %v815
    %v928 = vmax.f32 %v561, %v816
    %v929 = vmax.f32 %v640, %v817
    %v930 = vmax.f32 %v719, %v818
    %v931 = vmax.f32 %v484, %v819
    %v932 = vmax.f32 %v563, %v820
    %v933 = vmax.f32 %v642, %v821
    %v934 = vmax.f32 %v721, %v822
    %v935 = vmax.f32 %v487, %v823
    %v936 = vmax.f32 %v566, %v824
    %v937 = vmax.f32 %v645, %v825
    %v938 = vmax.f32 %v724, %v826
    %v939 = vmax.f32 %v489, %v827
    %v940 = vmax.f32 %v568, %v828
    %v941 = vmax.f32 %v647, %v829
    %v942 = vmax.f32 %v726, %v830
    %v943 = vmax.f32 %v492, %v831
    %v944 = vmax.f32 %v571, %v832
    %v945 = vmax.f32 %v650, %v833
    %v946 = vmax.f32 %v729, %v834
    %v947 = vmax.f32 %v494, %v835
    %v948 = vmax.f32 %v573, %v836
    %v949 = vmax.f32 %v652, %v837
    %v950 = vmax.f32 %v731, %v838
    %v951 = vmax.f32 %v497, %v839
    %v952 = vmax.f32 %v576, %v840
    %v953 = vmax.f32 %v655, %v841
    %v954 = vmax.f32 %v734, %v842
    %v955 = vmax.f32 %v499, %v843
    %v956 = vmax.f32 %v578, %v844
    %v957 = vmax.f32 %v657, %v845
    %v958 = vmax.f32 %v736, %v846
    %v959 = vmax.f32 %v502, %v847
    %v960 = vmax.f32 %v581, %v848
    %v961 = vmax.f32 %v660, %v849
    %v962 = vmax.f32 %v739, %v850
    %v963 = vmax.f32 %v504, %v851
    %v964 = vmax.f32 %v583, %v852
    %v965 = vmax.f32 %v662, %v853
    %v966 = vmax.f32 %v741, %v854
    %v967 = vpack.c.bf16 %v856, %v855
    %v968 = vpack.c.bf16 %v858, %v857
    %v969 = vpack.c.bf16 %v860, %v859
    %v970 = vpack.c.bf16 %v862, %v861
    %v971 = vpack.c.bf16 %v864, %v863
    %v972 = vpack.c.bf16 %v866, %v865
    %v973 = vpack.c.bf16 %v868, %v867
    %v974 = vpack.c.bf16 %v870, %v869
    %v975 = vpack.c.bf16 %v872, %v871
    %v976 = vpack.c.bf16 %v874, %v873
    %v977 = vpack.c.bf16 %v876, %v875
    %v978 = vpack.c.bf16 %v878, %v877
    %v979 = vpack.c.bf16 %v880, %v879
    %v980 = vpack.c.bf16 %v882, %v881
    %v981 = vpack.c.bf16 %v884, %v883
    %v982 = vpack.c.bf16 %v886, %v885
    %v983 = vpack.c.bf16 %v888, %v887
    %v984 = vpack.c.bf16 %v890, %v889
    %v985 = vpack.c.bf16 %v892, %v891
    %v986 = vpack.c.bf16 %v894, %v893
    %v987 = vpack.c.bf16 %v896, %v895
    %v988 = vpack.c.bf16 %v898, %v897
    %v989 = vpack.c.bf16 %v900, %v899
    %v990 = vpack.c.bf16 %v902, %v901
    %v991 = vpack.c.bf16 %v904, %v903
    %v992 = vpack.c.bf16 %v906, %v905
    %v993 = vpack.c.bf16 %v908, %v907
    %v994 = vpack.c.bf16 %v910, %v909
    %v995 = vpack.c.bf16 %v912, %v911
    %v996 = vpack.c.bf16 %v914, %v913
    %v997 = vpack.c.bf16 %v916, %v915
    %v998 = vpack.c.bf16 %v918, %v917
    %v999 = vpack.c.bf16 %v920, %v919
    %v1000 = vpack.c.bf16 %v922, %v921
    %v1001 = vpack.c.bf16 %v924, %v923
    %v1002 = vpack.c.bf16 %v926, %v925
    %v1003 = vpack.c.bf16 %v928, %v927
    %v1004 = vpack.c.bf16 %v930, %v929
    %v1005 = vpack.c.bf16 %v932, %v931
    %v1006 = vpack.c.bf16 %v934, %v933
    %v1007 = vpack.c.bf16 %v936, %v935
    %v1008 = vpack.c.bf16 %v938, %v937
    %v1009 = vpack.c.bf16 %v940, %v939
    %v1010 = vpack.c.bf16 %v942, %v941
    %v1011 = vpack.c.bf16 %v944, %v943
    %v1012 = vpack.c.bf16 %v946, %v945
    %v1013 = vpack.c.bf16 %v948, %v947
    %v1014 = vpack.c.bf16 %v950, %v949
    %v1015 = vpack.c.bf16 %v952, %v951
    %v1016 = vpack.c.bf16 %v954, %v953
    %v1017 = vpack.c.bf16 %v956, %v955
    %v1018 = vpack.c.bf16 %v958, %v957
    %v1019 = vpack.c.bf16 %v960, %v959
    %v1020 = vpack.c.bf16 %v962, %v961
    %v1021 = vpack.c.bf16 %v964, %v963
    %v1022 = vpack.c.bf16 %v966, %v965
    %v1027 = vunpack.c.l.b16 %v967
    %v1028 = vunpack.c.h.b16 %v967
    %v1029 = vunpack.c.l.b16 %v968
    %v1030 = vunpack.c.h.b16 %v968
    %v1031 = vunpack.c.l.b16 %v969
    %v1032 = vunpack.c.h.b16 %v969
    %v1033 = vunpack.c.l.b16 %v970
    %v1034 = vunpack.c.h.b16 %v970
    %v1035 = vpack.c.b16 %v1031, %v1027
    %v1036 = vpack.c.b16 %v1032, %v1028
    %v1037 = vpack.c.b16 %v1033, %v1029
    %v1038 = vpack.c.b16 %v1034, %v1030
    %v1047 = vunpack.c.l.b16 %v971
    %v1048 = vunpack.c.h.b16 %v971
    %v1049 = vunpack.c.l.b16 %v972
    %v1050 = vunpack.c.h.b16 %v972
    %v1051 = vunpack.c.l.b16 %v973
    %v1052 = vunpack.c.h.b16 %v973
    %v1053 = vunpack.c.l.b16 %v974
    %v1054 = vunpack.c.h.b16 %v974
    %v1055 = vpack.c.b16 %v1051, %v1047
    %v1056 = vpack.c.b16 %v1052, %v1048
    %v1057 = vpack.c.b16 %v1053, %v1049
    %v1058 = vpack.c.b16 %v1054, %v1050
    %v1067 = vunpack.c.l.b16 %v975
    %v1068 = vunpack.c.h.b16 %v975
    %v1069 = vunpack.c.l.b16 %v976
    %v1070 = vunpack.c.h.b16 %v976
    %v1071 = vunpack.c.l.b16 %v977
    %v1072 = vunpack.c.h.b16 %v977
    %v1073 = vunpack.c.l.b16 %v978
    %v1074 = vunpack.c.h.b16 %v978
    %v1075 = vpack.c.b16 %v1071, %v1067
    %v1076 = vpack.c.b16 %v1072, %v1068
    %v1077 = vpack.c.b16 %v1073, %v1069
    %v1078 = vpack.c.b16 %v1074, %v1070
    %v1087 = vunpack.c.l.b16 %v979
    %v1088 = vunpack.c.h.b16 %v979
    %v1089 = vunpack.c.l.b16 %v980
    %v1090 = vunpack.c.h.b16 %v980
    %v1091 = vunpack.c.l.b16 %v981
    %v1092 = vunpack.c.h.b16 %v981
    %v1093 = vunpack.c.l.b16 %v982
    %v1094 = vunpack.c.h.b16 %v982
    %v1095 = vpack.c.b16 %v1091, %v1087
    %v1096 = vpack.c.b16 %v1092, %v1088
    %v1097 = vpack.c.b16 %v1093, %v1089
    %v1098 = vpack.c.b16 %v1094, %v1090
    %v1107 = vunpack.c.l.b16 %v983
    %v1108 = vunpack.c.h.b16 %v983
    %v1109 = vunpack.c.l.b16 %v984
    %v1110 = vunpack.c.h.b16 %v984
    %v1111 = vunpack.c.l.b16 %v985
    %v1112 = vunpack.c.h.b16 %v985
    %v1113 = vunpack.c.l.b16 %v986
    %v1114 = vunpack.c.h.b16 %v986
    %v1115 = vpack.c.b16 %v1111, %v1107
    %v1116 = vpack.c.b16 %v1112, %v1108
    %v1117 = vpack.c.b16 %v1113, %v1109
    %v1118 = vpack.c.b16 %v1114, %v1110
    %v1127 = vunpack.c.l.b16 %v987
    %v1128 = vunpack.c.h.b16 %v987
    %v1129 = vunpack.c.l.b16 %v988
    %v1130 = vunpack.c.h.b16 %v988
    %v1131 = vunpack.c.l.b16 %v989
    %v1132 = vunpack.c.h.b16 %v989
    %v1133 = vunpack.c.l.b16 %v990
    %v1134 = vunpack.c.h.b16 %v990
    %v1135 = vpack.c.b16 %v1131, %v1127
    %v1136 = vpack.c.b16 %v1132, %v1128
    %v1137 = vpack.c.b16 %v1133, %v1129
    %v1138 = vpack.c.b16 %v1134, %v1130
    %v1147 = vunpack.c.l.b16 %v991
    %v1148 = vunpack.c.h.b16 %v991
    %v1149 = vunpack.c.l.b16 %v992
    %v1150 = vunpack.c.h.b16 %v992
    %v1151 = vunpack.c.l.b16 %v993
    %v1152 = vunpack.c.h.b16 %v993
    %v1153 = vunpack.c.l.b16 %v994
    %v1154 = vunpack.c.h.b16 %v994
    %v1155 = vpack.c.b16 %v1151, %v1147
    %v1156 = vpack.c.b16 %v1152, %v1148
    %v1157 = vpack.c.b16 %v1153, %v1149
    %v1158 = vpack.c.b16 %v1154, %v1150
    %v1167 = vunpack.c.l.b16 %v995
    %v1168 = vunpack.c.h.b16 %v995
    %v1169 = vunpack.c.l.b16 %v996
    %v1170 = vunpack.c.h.b16 %v996
    %v1171 = vunpack.c.l.b16 %v997
    %v1172 = vunpack.c.h.b16 %v997
    %v1173 = vunpack.c.l.b16 %v998
    %v1174 = vunpack.c.h.b16 %v998
    %v1175 = vpack.c.b16 %v1171, %v1167
    %v1176 = vpack.c.b16 %v1172, %v1168
    %v1177 = vpack.c.b16 %v1173, %v1169
    %v1178 = vpack.c.b16 %v1174, %v1170
    %v1187 = vunpack.c.l.b16 %v999
    %v1188 = vunpack.c.h.b16 %v999
    %v1189 = vunpack.c.l.b16 %v1000
    %v1190 = vunpack.c.h.b16 %v1000
    %v1191 = vunpack.c.l.b16 %v1001
    %v1192 = vunpack.c.h.b16 %v1001
    %v1193 = vunpack.c.l.b16 %v1002
    %v1194 = vunpack.c.h.b16 %v1002
    %v1195 = vpack.c.b16 %v1191, %v1187
    %v1196 = vpack.c.b16 %v1192, %v1188
    %v1197 = vpack.c.b16 %v1193, %v1189
    %v1198 = vpack.c.b16 %v1194, %v1190
    %v1207 = vunpack.c.l.b16 %v1003
    %v1208 = vunpack.c.h.b16 %v1003
    %v1209 = vunpack.c.l.b16 %v1004
    %v1210 = vunpack.c.h.b16 %v1004
    %v1211 = vunpack.c.l.b16 %v1005
    %v1212 = vunpack.c.h.b16 %v1005
    %v1213 = vunpack.c.l.b16 %v1006
    %v1214 = vunpack.c.h.b16 %v1006
    %v1215 = vpack.c.b16 %v1211, %v1207
    %v1216 = vpack.c.b16 %v1212, %v1208
    %v1217 = vpack.c.b16 %v1213, %v1209
    %v1218 = vpack.c.b16 %v1214, %v1210
    %v1227 = vunpack.c.l.b16 %v1007
    %v1228 = vunpack.c.h.b16 %v1007
    %v1229 = vunpack.c.l.b16 %v1008
    %v1230 = vunpack.c.h.b16 %v1008
    %v1231 = vunpack.c.l.b16 %v1009
    %v1232 = vunpack.c.h.b16 %v1009
    %v1233 = vunpack.c.l.b16 %v1010
    %v1234 = vunpack.c.h.b16 %v1010
    %v1235 = vpack.c.b16 %v1231, %v1227
    %v1236 = vpack.c.b16 %v1232, %v1228
    %v1237 = vpack.c.b16 %v1233, %v1229
    %v1238 = vpack.c.b16 %v1234, %v1230
    %v1247 = vunpack.c.l.b16 %v1011
    %v1248 = vunpack.c.h.b16 %v1011
    %v1249 = vunpack.c.l.b16 %v1012
    %v1250 = vunpack.c.h.b16 %v1012
    %v1251 = vunpack.c.l.b16 %v1013
    %v1252 = vunpack.c.h.b16 %v1013
    %v1253 = vunpack.c.l.b16 %v1014
    %v1254 = vunpack.c.h.b16 %v1014
    %v1255 = vpack.c.b16 %v1251, %v1247
    %v1256 = vpack.c.b16 %v1252, %v1248
    %v1257 = vpack.c.b16 %v1253, %v1249
    %v1258 = vpack.c.b16 %v1254, %v1250
    %v1267 = vunpack.c.l.b16 %v1015
    %v1268 = vunpack.c.h.b16 %v1015
    %v1269 = vunpack.c.l.b16 %v1016
    %v1270 = vunpack.c.h.b16 %v1016
    %v1271 = vunpack.c.l.b16 %v1017
    %v1272 = vunpack.c.h.b16 %v1017
    %v1273 = vunpack.c.l.b16 %v1018
    %v1274 = vunpack.c.h.b16 %v1018
    %v1275 = vpack.c.b16 %v1271, %v1267
    %v1276 = vpack.c.b16 %v1272, %v1268
    %v1277 = vpack.c.b16 %v1273, %v1269
    %v1278 = vpack.c.b16 %v1274, %v1270
    %v1287 = vunpack.c.l.b16 %v1019
    %v1288 = vunpack.c.h.b16 %v1019
    %v1289 = vunpack.c.l.b16 %v1020
    %v1290 = vunpack.c.h.b16 %v1020
    %v1291 = vunpack.c.l.b16 %v1021
    %v1292 = vunpack.c.h.b16 %v1021
    %v1293 = vunpack.c.l.b16 %v1022
    %v1294 = vunpack.c.h.b16 %v1022
    %v1295 = vpack.c.b16 %v1291, %v1287
    %v1296 = vpack.c.b16 %v1292, %v1288
    %v1297 = vpack.c.b16 %v1293, %v1289
    %v1298 = vpack.c.b16 %v1294, %v1290
    %v1303 = vld [vmem:[%s2] sm:$0xff]
    %v1304 = vld [vmem:[%s2 + $0x8] sm:$0xff]
    %v1305 = vld [vmem:[%s2 + $0x10] sm:$0xff]
    %v1306 = vld [vmem:[%s2 + $0x18] sm:$0xff]
    %v1307 = vld [vmem:[%s2 + $0x20] sm:$0xff]
    %v1308 = vld [vmem:[%s2 + $0x28] sm:$0xff]
    %v1309 = vld [vmem:[%s2 + $0x30] sm:$0xff]
    %v1310 = vld [vmem:[%s2 + $0x38] sm:$0xff]
    %v1311 = vld [vmem:[%s2 + $0x40] sm:$0xff]
    %v1312 = vld [vmem:[%s2 + $0x48] sm:$0xff]
    %v1313 = vld [vmem:[%s2 + $0x50] sm:$0xff]
    %v1314 = vld [vmem:[%s2 + $0x58] sm:$0xff]
    %v1315 = vld [vmem:[%s2 + $0x60] sm:$0xff]
    %v1316 = vld [vmem:[%s2 + $0x68] sm:$0xff]
    %v1317 = vld [vmem:[%s2 + $0x70] sm:$0xff]
    %v1318 = vld [vmem:[%s2 + $0x78] sm:$0xff]
    %v1319 = vld [vmem:[%s2 + $0x80] sm:$0xff]
    %v1320 = vld [vmem:[%s2 + $0x88] sm:$0xff]
    %v1321 = vld [vmem:[%s2 + $0x90] sm:$0xff]
    %v1322 = vld [vmem:[%s2 + $0x98] sm:$0xff]
    %v1323 = vld [vmem:[%s2 + $0xa0] sm:$0xff]
    %v1324 = vld [vmem:[%s2 + $0xa8] sm:$0xff]
    %v1325 = vld [vmem:[%s2 + $0xb0] sm:$0xff]
    %v1326 = vld [vmem:[%s2 + $0xb8] sm:$0xff]
    %v1327 = vld [vmem:[%s2 + $0xc0] sm:$0xff]
    %v1328 = vld [vmem:[%s2 + $0xc8] sm:$0xff]
    %v1329 = vld [vmem:[%s2 + $0xd0] sm:$0xff]
    %v1330 = vld [vmem:[%s2 + $0xd8] sm:$0xff]
    %v1331 = vld [vmem:[%s2 + $0xe0] sm:$0xff]
    %v1332 = vld [vmem:[%s2 + $0xe8] sm:$0xff]
    %v1333 = vld [vmem:[%s2 + $0xf0] sm:$0xff]
    %v1334 = vld [vmem:[%s2 + $0xf8] sm:$0xff]
    %v1335 = vld [vmem:[%s2 + $0x100] sm:$0xff]
    %v1336 = vld [vmem:[%s2 + $0x108] sm:$0xff]
    %v1337 = vld [vmem:[%s2 + $0x110] sm:$0xff]
    %v1338 = vld [vmem:[%s2 + $0x118] sm:$0xff]
    %v1339 = vld [vmem:[%s2 + $0x120] sm:$0xff]
    %v1340 = vld [vmem:[%s2 + $0x128] sm:$0xff]
    %v1341 = vld [vmem:[%s2 + $0x130] sm:$0xff]
    %v1342 = vld [vmem:[%s2 + $0x138] sm:$0xff]
    %v1343 = vld [vmem:[%s2 + $0x140] sm:$0xff]
    %v1344 = vld [vmem:[%s2 + $0x148] sm:$0xff]
    %v1345 = vld [vmem:[%s2 + $0x150] sm:$0xff]
    %v1346 = vld [vmem:[%s2 + $0x158] sm:$0xff]
    %v1347 = vld [vmem:[%s2 + $0x160] sm:$0xff]
    %v1348 = vld [vmem:[%s2 + $0x168] sm:$0xff]
    %v1349 = vld [vmem:[%s2 + $0x170] sm:$0xff]
    %v1350 = vld [vmem:[%s2 + $0x178] sm:$0xff]
    %v1351 = vld [vmem:[%s2 + $0x180] sm:$0xff]
    %v1352 = vld [vmem:[%s2 + $0x188] sm:$0xff]
    %v1353 = vld [vmem:[%s2 + $0x190] sm:$0xff]
    %v1354 = vld [vmem:[%s2 + $0x198] sm:$0xff]
    %v1355 = vld [vmem:[%s2 + $0x1a0] sm:$0xff]
    %v1356 = vld [vmem:[%s2 + $0x1a8] sm:$0xff]
    %v1357 = vld [vmem:[%s2 + $0x1b0] sm:$0xff]
    %v1358 = vld [vmem:[%s2 + $0x1b8] sm:$0xff]
    %v1359 = vld [vmem:[%s2 + $0x1c0] sm:$0xff]
    %v1360 = vld [vmem:[%s2 + $0x1c8] sm:$0xff]
    %v1361 = vld [vmem:[%s2 + $0x1d0] sm:$0xff]
    %v1362 = vld [vmem:[%s2 + $0x1d8] sm:$0xff]
    %v1363 = vld [vmem:[%s2 + $0x1e0] sm:$0xff]
    %v1364 = vld [vmem:[%s2 + $0x1e8] sm:$0xff]
    %v1365 = vld [vmem:[%s2 + $0x1f0] sm:$0xff]
    %v1366 = vld [vmem:[%s2 + $0x1f8] sm:$0xff]
    %v1367 = vld [vmem:[%s2 + $0x200] sm:$0xff]
    %v1368 = vld [vmem:[%s2 + $0x208] sm:$0xff]
    %v1369 = vld [vmem:[%s2 + $0x210] sm:$0xff]
    %v1370 = vld [vmem:[%s2 + $0x218] sm:$0xff]
    %v1371 = vld [vmem:[%s2 + $0x220] sm:$0xff]
    %v1372 = vld [vmem:[%s2 + $0x228] sm:$0xff]
    %v1373 = vld [vmem:[%s2 + $0x230] sm:$0xff]
    %v1374 = vld [vmem:[%s2 + $0x238] sm:$0xff]
    %v1375 = vld [vmem:[%s2 + $0x240] sm:$0xff]
    %v1376 = vld [vmem:[%s2 + $0x248] sm:$0xff]
    %v1377 = vld [vmem:[%s2 + $0x250] sm:$0xff]
    %v1378 = vld [vmem:[%s2 + $0x258] sm:$0xff]
    %v1379 = vld [vmem:[%s2 + $0x260] sm:$0xff]
    %v1380 = vld [vmem:[%s2 + $0x268] sm:$0xff]
    %v1381 = vld [vmem:[%s2 + $0x270] sm:$0xff]
    %v1382 = vld [vmem:[%s2 + $0x278] sm:$0xff]
    %v1383 = vld [vmem:[%s2 + $0x280] sm:$0xff]
    %v1384 = vld [vmem:[%s2 + $0x288] sm:$0xff]
    %v1385 = vld [vmem:[%s2 + $0x290] sm:$0xff]
    %v1386 = vld [vmem:[%s2 + $0x298] sm:$0xff]
    %v1387 = vld [vmem:[%s2 + $0x2a0] sm:$0xff]
    %v1388 = vld [vmem:[%s2 + $0x2a8] sm:$0xff]
    %v1389 = vld [vmem:[%s2 + $0x2b0] sm:$0xff]
    %v1390 = vld [vmem:[%s2 + $0x2b8] sm:$0xff]
    %v1391 = vld [vmem:[%s2 + $0x2c0] sm:$0xff]
    %v1392 = vld [vmem:[%s2 + $0x2c8] sm:$0xff]
    %v1393 = vld [vmem:[%s2 + $0x2d0] sm:$0xff]
    %v1394 = vld [vmem:[%s2 + $0x2d8] sm:$0xff]
    %v1395 = vld [vmem:[%s2 + $0x2e0] sm:$0xff]
    %v1396 = vld [vmem:[%s2 + $0x2e8] sm:$0xff]
    %v1397 = vld [vmem:[%s2 + $0x2f0] sm:$0xff]
    %v1398 = vld [vmem:[%s2 + $0x2f8] sm:$0xff]
    %v1399 = vld [vmem:[%s2 + $0x300] sm:$0xff]
    %v1400 = vld [vmem:[%s2 + $0x308] sm:$0xff]
    %v1401 = vld [vmem:[%s2 + $0x310] sm:$0xff]
    %v1402 = vld [vmem:[%s2 + $0x318] sm:$0xff]
    %v1403 = vld [vmem:[%s2 + $0x320] sm:$0xff]
    %v1404 = vld [vmem:[%s2 + $0x328] sm:$0xff]
    %v1405 = vld [vmem:[%s2 + $0x330] sm:$0xff]
    %v1406 = vld [vmem:[%s2 + $0x338] sm:$0xff]
    %v1407 = vld [vmem:[%s2 + $0x340] sm:$0xff]
    %v1408 = vld [vmem:[%s2 + $0x348] sm:$0xff]
    %v1409 = vld [vmem:[%s2 + $0x350] sm:$0xff]
    %v1410 = vld [vmem:[%s2 + $0x358] sm:$0xff]
    %v1411 = vld [vmem:[%s2 + $0x360] sm:$0xff]
    %v1412 = vld [vmem:[%s2 + $0x368] sm:$0xff]
    %v1413 = vld [vmem:[%s2 + $0x370] sm:$0xff]
    %v1414 = vld [vmem:[%s2 + $0x378] sm:$0xff]
    %v1415 = vld [vmem:[%s2 + $0x380] sm:$0xff]
    %v1416 = vld [vmem:[%s2 + $0x388] sm:$0xff]
    %v1417 = vld [vmem:[%s2 + $0x390] sm:$0xff]
    %v1418 = vld [vmem:[%s2 + $0x398] sm:$0xff]
    %v1419 = vld [vmem:[%s2 + $0x3a0] sm:$0xff]
    %v1420 = vld [vmem:[%s2 + $0x3a8] sm:$0xff]
    %v1421 = vld [vmem:[%s2 + $0x3b0] sm:$0xff]
    %v1422 = vld [vmem:[%s2 + $0x3b8] sm:$0xff]
    %v1423 = vld [vmem:[%s2 + $0x3c0] sm:$0xff]
    %v1424 = vld [vmem:[%s2 + $0x3c8] sm:$0xff]
    %v1425 = vld [vmem:[%s2 + $0x3d0] sm:$0xff]
    %v1426 = vld [vmem:[%s2 + $0x3d8] sm:$0xff]
    %v1427 = vld [vmem:[%s2 + $0x3e0] sm:$0xff]
    %v1428 = vld [vmem:[%s2 + $0x3e8] sm:$0xff]
    %v1429 = vld [vmem:[%s2 + $0x3f0] sm:$0xff]
    %v1430 = vld [vmem:[%s2 + $0x3f8] sm:$0xff]
    %v1431 = vld [vmem:[%s2 + $0x400] sm:$0xff]
    %v1432 = vld [vmem:[%s2 + $0x408] sm:$0xff]
    %v1433 = vld [vmem:[%s2 + $0x410] sm:$0xff]
    %v1434 = vld [vmem:[%s2 + $0x418] sm:$0xff]
    %v1435 = vld [vmem:[%s2 + $0x420] sm:$0xff]
    %v1436 = vld [vmem:[%s2 + $0x428] sm:$0xff]
    %v1437 = vld [vmem:[%s2 + $0x430] sm:$0xff]
    %v1438 = vld [vmem:[%s2 + $0x438] sm:$0xff]
    %v1439 = vld [vmem:[%s2 + $0x440] sm:$0xff]
    %v1440 = vld [vmem:[%s2 + $0x448] sm:$0xff]
    %v1441 = vld [vmem:[%s2 + $0x450] sm:$0xff]
    %v1442 = vld [vmem:[%s2 + $0x458] sm:$0xff]
    %v1443 = vld [vmem:[%s2 + $0x460] sm:$0xff]
    %v1444 = vld [vmem:[%s2 + $0x468] sm:$0xff]
    %v1445 = vld [vmem:[%s2 + $0x470] sm:$0xff]
    %v1446 = vld [vmem:[%s2 + $0x478] sm:$0xff]
    %v1447 = vld [vmem:[%s2 + $0x480] sm:$0xff]
    %v1448 = vld [vmem:[%s2 + $0x488] sm:$0xff]
    %v1449 = vld [vmem:[%s2 + $0x490] sm:$0xff]
    %v1450 = vld [vmem:[%s2 + $0x498] sm:$0xff]
    %v1451 = vld [vmem:[%s2 + $0x4a0] sm:$0xff]
    %v1452 = vld [vmem:[%s2 + $0x4a8] sm:$0xff]
    %v1453 = vld [vmem:[%s2 + $0x4b0] sm:$0xff]
    %v1454 = vld [vmem:[%s2 + $0x4b8] sm:$0xff]
    %v1455 = vld [vmem:[%s2 + $0x4c0] sm:$0xff]
    %v1456 = vld [vmem:[%s2 + $0x4c8] sm:$0xff]
    %v1457 = vld [vmem:[%s2 + $0x4d0] sm:$0xff]
    %v1458 = vld [vmem:[%s2 + $0x4d8] sm:$0xff]
    %v1459 = vld [vmem:[%s2 + $0x4e0] sm:$0xff]
    %v1460 = vld [vmem:[%s2 + $0x4e8] sm:$0xff]
    %v1461 = vld [vmem:[%s2 + $0x4f0] sm:$0xff]
    %v1462 = vld [vmem:[%s2 + $0x4f8] sm:$0xff]
    %v1463 = vld [vmem:[%s2 + $0x500] sm:$0xff]
    %v1464 = vld [vmem:[%s2 + $0x508] sm:$0xff]
    %v1465 = vld [vmem:[%s2 + $0x510] sm:$0xff]
    %v1466 = vld [vmem:[%s2 + $0x518] sm:$0xff]
    %v1467 = vld [vmem:[%s2 + $0x520] sm:$0xff]
    %v1468 = vld [vmem:[%s2 + $0x528] sm:$0xff]
    %v1469 = vld [vmem:[%s2 + $0x530] sm:$0xff]
    %v1470 = vld [vmem:[%s2 + $0x538] sm:$0xff]
    %v1471 = vld [vmem:[%s2 + $0x540] sm:$0xff]
    %v1472 = vld [vmem:[%s2 + $0x548] sm:$0xff]
    %v1473 = vld [vmem:[%s2 + $0x550] sm:$0xff]
    %v1474 = vld [vmem:[%s2 + $0x558] sm:$0xff]
    %v1475 = vld [vmem:[%s2 + $0x560] sm:$0xff]
    %v1476 = vld [vmem:[%s2 + $0x568] sm:$0xff]
    %v1477 = vld [vmem:[%s2 + $0x570] sm:$0xff]
    %v1478 = vld [vmem:[%s2 + $0x578] sm:$0xff]
    %v1479 = vld [vmem:[%s2 + $0x580] sm:$0xff]
    %v1480 = vld [vmem:[%s2 + $0x588] sm:$0xff]
    %v1481 = vld [vmem:[%s2 + $0x590] sm:$0xff]
    %v1482 = vld [vmem:[%s2 + $0x598] sm:$0xff]
    %v1483 = vld [vmem:[%s2 + $0x5a0] sm:$0xff]
    %v1484 = vld [vmem:[%s2 + $0x5a8] sm:$0xff]
    %v1485 = vld [vmem:[%s2 + $0x5b0] sm:$0xff]
    %v1486 = vld [vmem:[%s2 + $0x5b8] sm:$0xff]
    %v1487 = vld [vmem:[%s2 + $0x5c0] sm:$0xff]
    %v1488 = vld [vmem:[%s2 + $0x5c8] sm:$0xff]
    %v1489 = vld [vmem:[%s2 + $0x5d0] sm:$0xff]
    %v1490 = vld [vmem:[%s2 + $0x5d8] sm:$0xff]
    %v1491 = vld [vmem:[%s2 + $0x5e0] sm:$0xff]
    %v1492 = vld [vmem:[%s2 + $0x5e8] sm:$0xff]
    %v1493 = vld [vmem:[%s2 + $0x5f0] sm:$0xff]
    %v1494 = vld [vmem:[%s2 + $0x5f8] sm:$0xff]
    %v1495 = vld [vmem:[%s2 + $0x600] sm:$0xff]
    %v1496 = vld [vmem:[%s2 + $0x608] sm:$0xff]
    %v1497 = vld [vmem:[%s2 + $0x610] sm:$0xff]
    %v1498 = vld [vmem:[%s2 + $0x618] sm:$0xff]
    %v1499 = vld [vmem:[%s2 + $0x620] sm:$0xff]
    %v1500 = vld [vmem:[%s2 + $0x628] sm:$0xff]
    %v1501 = vld [vmem:[%s2 + $0x630] sm:$0xff]
    %v1502 = vld [vmem:[%s2 + $0x638] sm:$0xff]
    %v1503 = vld [vmem:[%s2 + $0x640] sm:$0xff]
    %v1504 = vld [vmem:[%s2 + $0x648] sm:$0xff]
    %v1505 = vld [vmem:[%s2 + $0x650] sm:$0xff]
    %v1506 = vld [vmem:[%s2 + $0x658] sm:$0xff]
    %v1507 = vld [vmem:[%s2 + $0x660] sm:$0xff]
    %v1508 = vld [vmem:[%s2 + $0x668] sm:$0xff]
    %v1509 = vld [vmem:[%s2 + $0x670] sm:$0xff]
    %v1510 = vld [vmem:[%s2 + $0x678] sm:$0xff]
    %v1511 = vld [vmem:[%s2 + $0x680] sm:$0xff]
    %v1512 = vld [vmem:[%s2 + $0x688] sm:$0xff]
    %v1513 = vld [vmem:[%s2 + $0x690] sm:$0xff]
    %v1514 = vld [vmem:[%s2 + $0x698] sm:$0xff]
    %v1515 = vld [vmem:[%s2 + $0x6a0] sm:$0xff]
    %v1516 = vld [vmem:[%s2 + $0x6a8] sm:$0xff]
    %v1517 = vld [vmem:[%s2 + $0x6b0] sm:$0xff]
    %v1518 = vld [vmem:[%s2 + $0x6b8] sm:$0xff]
    %v1519 = vld [vmem:[%s2 + $0x6c0] sm:$0xff]
    %v1520 = vld [vmem:[%s2 + $0x6c8] sm:$0xff]
    %v1521 = vld [vmem:[%s2 + $0x6d0] sm:$0xff]
    %v1522 = vld [vmem:[%s2 + $0x6d8] sm:$0xff]
    %v1523 = vld [vmem:[%s2 + $0x6e0] sm:$0xff]
    %v1524 = vld [vmem:[%s2 + $0x6e8] sm:$0xff]
    %v1525 = vld [vmem:[%s2 + $0x6f0] sm:$0xff]
    %v1526 = vld [vmem:[%s2 + $0x6f8] sm:$0xff]
    %v1527 = vld [vmem:[%s2 + $0x700] sm:$0xff]
    %v1528 = vld [vmem:[%s2 + $0x708] sm:$0xff]
    %v1529 = vld [vmem:[%s2 + $0x710] sm:$0xff]
    %v1530 = vld [vmem:[%s2 + $0x718] sm:$0xff]
    %v1531 = vld [vmem:[%s2 + $0x720] sm:$0xff]
    %v1532 = vld [vmem:[%s2 + $0x728] sm:$0xff]
    %v1533 = vld [vmem:[%s2 + $0x730] sm:$0xff]
    %v1534 = vld [vmem:[%s2 + $0x738] sm:$0xff]
    %v1535 = vld [vmem:[%s2 + $0x740] sm:$0xff]
    %v1536 = vld [vmem:[%s2 + $0x748] sm:$0xff]
    %v1537 = vld [vmem:[%s2 + $0x750] sm:$0xff]
    %v1538 = vld [vmem:[%s2 + $0x758] sm:$0xff]
    %v1539 = vld [vmem:[%s2 + $0x760] sm:$0xff]
    %v1540 = vld [vmem:[%s2 + $0x768] sm:$0xff]
    %v1541 = vld [vmem:[%s2 + $0x770] sm:$0xff]
    %v1542 = vld [vmem:[%s2 + $0x778] sm:$0xff]
    %v1543 = vld [vmem:[%s2 + $0x780] sm:$0xff]
    %v1544 = vld [vmem:[%s2 + $0x788] sm:$0xff]
    %v1545 = vld [vmem:[%s2 + $0x790] sm:$0xff]
    %v1546 = vld [vmem:[%s2 + $0x798] sm:$0xff]
    %v1547 = vld [vmem:[%s2 + $0x7a0] sm:$0xff]
    %v1548 = vld [vmem:[%s2 + $0x7a8] sm:$0xff]
    %v1549 = vld [vmem:[%s2 + $0x7b0] sm:$0xff]
    %v1550 = vld [vmem:[%s2 + $0x7b8] sm:$0xff]
    %v1551 = vld [vmem:[%s2 + $0x7c0] sm:$0xff]
    %v1552 = vld [vmem:[%s2 + $0x7c8] sm:$0xff]
    %v1553 = vld [vmem:[%s2 + $0x7d0] sm:$0xff]
    %v1554 = vld [vmem:[%s2 + $0x7d8] sm:$0xff]
    %v1555 = vld [vmem:[%s2 + $0x7e0] sm:$0xff]
    %v1556 = vld [vmem:[%s2 + $0x7e8] sm:$0xff]
    %v1557 = vld [vmem:[%s2 + $0x7f0] sm:$0xff]
    %v1558 = vld [vmem:[%s2 + $0x7f8] sm:$0xff]
    %v1559 = vld [vmem:[%s2 + $0x800] sm:$0xff]
    %v1560 = vld [vmem:[%s2 + $0x808] sm:$0xff]
    %v1561 = vld [vmem:[%s2 + $0x810] sm:$0xff]
    %v1562 = vld [vmem:[%s2 + $0x818] sm:$0xff]
    %v1563 = vld [vmem:[%s2 + $0x820] sm:$0xff]
    %v1564 = vld [vmem:[%s2 + $0x828] sm:$0xff]
    %v1565 = vld [vmem:[%s2 + $0x830] sm:$0xff]
    %v1566 = vld [vmem:[%s2 + $0x838] sm:$0xff]
    %v1567 = vld [vmem:[%s2 + $0x840] sm:$0xff]
    %v1568 = vld [vmem:[%s2 + $0x848] sm:$0xff]
    %v1569 = vld [vmem:[%s2 + $0x850] sm:$0xff]
    %v1570 = vld [vmem:[%s2 + $0x858] sm:$0xff]
    %v1571 = vld [vmem:[%s2 + $0x860] sm:$0xff]
    %v1572 = vld [vmem:[%s2 + $0x868] sm:$0xff]
    %v1573 = vld [vmem:[%s2 + $0x870] sm:$0xff]
    %v1574 = vld [vmem:[%s2 + $0x878] sm:$0xff]
    %v1575 = vld [vmem:[%s2 + $0x880] sm:$0xff]
    %v1576 = vld [vmem:[%s2 + $0x888] sm:$0xff]
    %v1577 = vld [vmem:[%s2 + $0x890] sm:$0xff]
    %v1578 = vld [vmem:[%s2 + $0x898] sm:$0xff]
    %v1579 = vld [vmem:[%s2 + $0x8a0] sm:$0xff]
    %v1580 = vld [vmem:[%s2 + $0x8a8] sm:$0xff]
    %v1581 = vld [vmem:[%s2 + $0x8b0] sm:$0xff]
    %v1582 = vld [vmem:[%s2 + $0x8b8] sm:$0xff]
    %v1583 = vld [vmem:[%s2 + $0x8c0] sm:$0xff]
    %v1584 = vld [vmem:[%s2 + $0x8c8] sm:$0xff]
    %v1585 = vld [vmem:[%s2 + $0x8d0] sm:$0xff]
    %v1586 = vld [vmem:[%s2 + $0x8d8] sm:$0xff]
    %v1587 = vld [vmem:[%s2 + $0x8e0] sm:$0xff]
    %v1588 = vld [vmem:[%s2 + $0x8e8] sm:$0xff]
    %v1589 = vld [vmem:[%s2 + $0x8f0] sm:$0xff]
    %v1590 = vld [vmem:[%s2 + $0x8f8] sm:$0xff]
    %v1591 = vld [vmem:[%s2 + $0x900] sm:$0xff]
    %v1592 = vld [vmem:[%s2 + $0x908] sm:$0xff]
    %v1593 = vld [vmem:[%s2 + $0x910] sm:$0xff]
    %v1594 = vld [vmem:[%s2 + $0x918] sm:$0xff]
    %v1595 = vld [vmem:[%s2 + $0x920] sm:$0xff]
    %v1596 = vld [vmem:[%s2 + $0x928] sm:$0xff]
    %v1597 = vld [vmem:[%s2 + $0x930] sm:$0xff]
    %v1598 = vld [vmem:[%s2 + $0x938] sm:$0xff]
    %v1599 = vld [vmem:[%s2 + $0x940] sm:$0xff]
    %v1600 = vld [vmem:[%s2 + $0x948] sm:$0xff]
    %v1601 = vld [vmem:[%s2 + $0x950] sm:$0xff]
    %v1602 = vld [vmem:[%s2 + $0x958] sm:$0xff]
    %v1603 = vld [vmem:[%s2 + $0x960] sm:$0xff]
    %v1604 = vld [vmem:[%s2 + $0x968] sm:$0xff]
    %v1605 = vld [vmem:[%s2 + $0x970] sm:$0xff]
    %v1606 = vld [vmem:[%s2 + $0x978] sm:$0xff]
    %v1607 = vld [vmem:[%s2 + $0x980] sm:$0xff]
    %v1608 = vld [vmem:[%s2 + $0x988] sm:$0xff]
    %v1609 = vld [vmem:[%s2 + $0x990] sm:$0xff]
    %v1610 = vld [vmem:[%s2 + $0x998] sm:$0xff]
    %v1611 = vld [vmem:[%s2 + $0x9a0] sm:$0xff]
    %v1612 = vld [vmem:[%s2 + $0x9a8] sm:$0xff]
    %v1613 = vld [vmem:[%s2 + $0x9b0] sm:$0xff]
    %v1614 = vld [vmem:[%s2 + $0x9b8] sm:$0xff]
    %v1615 = vld [vmem:[%s2 + $0x9c0] sm:$0xff]
    %v1616 = vld [vmem:[%s2 + $0x9c8] sm:$0xff]
    %v1617 = vld [vmem:[%s2 + $0x9d0] sm:$0xff]
    %v1618 = vld [vmem:[%s2 + $0x9d8] sm:$0xff]
    %v1619 = vld [vmem:[%s2 + $0x9e0] sm:$0xff]
    %v1620 = vld [vmem:[%s2 + $0x9e8] sm:$0xff]
    %v1621 = vld [vmem:[%s2 + $0x9f0] sm:$0xff]
    %v1622 = vld [vmem:[%s2 + $0x9f8] sm:$0xff]
    %v1623 = vld [vmem:[%s2 + $0xa00] sm:$0xff]
    %v1624 = vld [vmem:[%s2 + $0xa08] sm:$0xff]
    %v1625 = vld [vmem:[%s2 + $0xa10] sm:$0xff]
    %v1626 = vld [vmem:[%s2 + $0xa18] sm:$0xff]
    %v1627 = vld [vmem:[%s2 + $0xa20] sm:$0xff]
    %v1628 = vld [vmem:[%s2 + $0xa28] sm:$0xff]
    %v1629 = vld [vmem:[%s2 + $0xa30] sm:$0xff]
    %v1630 = vld [vmem:[%s2 + $0xa38] sm:$0xff]
    %v1631 = vld [vmem:[%s2 + $0xa40] sm:$0xff]
    %v1632 = vld [vmem:[%s2 + $0xa48] sm:$0xff]
    %v1633 = vld [vmem:[%s2 + $0xa50] sm:$0xff]
    %v1634 = vld [vmem:[%s2 + $0xa58] sm:$0xff]
    %v1635 = vld [vmem:[%s2 + $0xa60] sm:$0xff]
    %v1636 = vld [vmem:[%s2 + $0xa68] sm:$0xff]
    %v1637 = vld [vmem:[%s2 + $0xa70] sm:$0xff]
    %v1638 = vld [vmem:[%s2 + $0xa78] sm:$0xff]
    %v1639 = vld [vmem:[%s2 + $0xa80] sm:$0xff]
    %v1640 = vld [vmem:[%s2 + $0xa88] sm:$0xff]
    %v1641 = vld [vmem:[%s2 + $0xa90] sm:$0xff]
    %v1642 = vld [vmem:[%s2 + $0xa98] sm:$0xff]
    %v1643 = vld [vmem:[%s2 + $0xaa0] sm:$0xff]
    %v1644 = vld [vmem:[%s2 + $0xaa8] sm:$0xff]
    %v1645 = vld [vmem:[%s2 + $0xab0] sm:$0xff]
    %v1646 = vld [vmem:[%s2 + $0xab8] sm:$0xff]
    %v1647 = vld [vmem:[%s2 + $0xac0] sm:$0xff]
    %v1648 = vld [vmem:[%s2 + $0xac8] sm:$0xff]
    %v1649 = vld [vmem:[%s2 + $0xad0] sm:$0xff]
    %v1650 = vld [vmem:[%s2 + $0xad8] sm:$0xff]
    %v1651 = vld [vmem:[%s2 + $0xae0] sm:$0xff]
    %v1652 = vld [vmem:[%s2 + $0xae8] sm:$0xff]
    %v1653 = vld [vmem:[%s2 + $0xaf0] sm:$0xff]
    %v1654 = vld [vmem:[%s2 + $0xaf8] sm:$0xff]
    %v1655 = vld [vmem:[%s2 + $0xb00] sm:$0xff]
    %v1656 = vld [vmem:[%s2 + $0xb08] sm:$0xff]
    %v1657 = vld [vmem:[%s2 + $0xb10] sm:$0xff]
    %v1658 = vld [vmem:[%s2 + $0xb18] sm:$0xff]
    %v1659 = vld [vmem:[%s2 + $0xb20] sm:$0xff]
    %v1660 = vld [vmem:[%s2 + $0xb28] sm:$0xff]
    %v1661 = vld [vmem:[%s2 + $0xb30] sm:$0xff]
    %v1662 = vld [vmem:[%s2 + $0xb38] sm:$0xff]
    %v1663 = vld [vmem:[%s2 + $0xb40] sm:$0xff]
    %v1664 = vld [vmem:[%s2 + $0xb48] sm:$0xff]
    %v1665 = vld [vmem:[%s2 + $0xb50] sm:$0xff]
    %v1666 = vld [vmem:[%s2 + $0xb58] sm:$0xff]
    %v1667 = vld [vmem:[%s2 + $0xb60] sm:$0xff]
    %v1668 = vld [vmem:[%s2 + $0xb68] sm:$0xff]
    %v1669 = vld [vmem:[%s2 + $0xb70] sm:$0xff]
    %v1670 = vld [vmem:[%s2 + $0xb78] sm:$0xff]
    %v1671 = vld [vmem:[%s2 + $0xb80] sm:$0xff]
    %v1672 = vld [vmem:[%s2 + $0xb88] sm:$0xff]
    %v1673 = vld [vmem:[%s2 + $0xb90] sm:$0xff]
    %v1674 = vld [vmem:[%s2 + $0xb98] sm:$0xff]
    %v1675 = vld [vmem:[%s2 + $0xba0] sm:$0xff]
    %v1676 = vld [vmem:[%s2 + $0xba8] sm:$0xff]
    %v1677 = vld [vmem:[%s2 + $0xbb0] sm:$0xff]
    %v1678 = vld [vmem:[%s2 + $0xbb8] sm:$0xff]
    %v1679 = vld [vmem:[%s2 + $0xbc0] sm:$0xff]
    %v1680 = vld [vmem:[%s2 + $0xbc8] sm:$0xff]
    %v1681 = vld [vmem:[%s2 + $0xbd0] sm:$0xff]
    %v1682 = vld [vmem:[%s2 + $0xbd8] sm:$0xff]
    %v1683 = vld [vmem:[%s2 + $0xbe0] sm:$0xff]
    %v1684 = vld [vmem:[%s2 + $0xbe8] sm:$0xff]
    %v1685 = vld [vmem:[%s2 + $0xbf0] sm:$0xff]
    %v1686 = vld [vmem:[%s2 + $0xbf8] sm:$0xff]
    %v1687 = vld [vmem:[%s2 + $0xc00] sm:$0xff]
    %v1688 = vld [vmem:[%s2 + $0xc08] sm:$0xff]
    %v1689 = vld [vmem:[%s2 + $0xc10] sm:$0xff]
    %v1690 = vld [vmem:[%s2 + $0xc18] sm:$0xff]
    %v1691 = vld [vmem:[%s2 + $0xc20] sm:$0xff]
    %v1692 = vld [vmem:[%s2 + $0xc28] sm:$0xff]
    %v1693 = vld [vmem:[%s2 + $0xc30] sm:$0xff]
    %v1694 = vld [vmem:[%s2 + $0xc38] sm:$0xff]
    %v1695 = vld [vmem:[%s2 + $0xc40] sm:$0xff]
    %v1696 = vld [vmem:[%s2 + $0xc48] sm:$0xff]
    %v1697 = vld [vmem:[%s2 + $0xc50] sm:$0xff]
    %v1698 = vld [vmem:[%s2 + $0xc58] sm:$0xff]
    %v1699 = vld [vmem:[%s2 + $0xc60] sm:$0xff]
    %v1700 = vld [vmem:[%s2 + $0xc68] sm:$0xff]
    %v1701 = vld [vmem:[%s2 + $0xc70] sm:$0xff]
    %v1702 = vld [vmem:[%s2 + $0xc78] sm:$0xff]
    %v1703 = vld [vmem:[%s2 + $0xc80] sm:$0xff]
    %v1704 = vld [vmem:[%s2 + $0xc88] sm:$0xff]
    %v1705 = vld [vmem:[%s2 + $0xc90] sm:$0xff]
    %v1706 = vld [vmem:[%s2 + $0xc98] sm:$0xff]
    %v1707 = vld [vmem:[%s2 + $0xca0] sm:$0xff]
    %v1708 = vld [vmem:[%s2 + $0xca8] sm:$0xff]
    %v1709 = vld [vmem:[%s2 + $0xcb0] sm:$0xff]
    %v1710 = vld [vmem:[%s2 + $0xcb8] sm:$0xff]
    %v1711 = vld [vmem:[%s2 + $0xcc0] sm:$0xff]
    %v1712 = vld [vmem:[%s2 + $0xcc8] sm:$0xff]
    %v1713 = vld [vmem:[%s2 + $0xcd0] sm:$0xff]
    %v1714 = vld [vmem:[%s2 + $0xcd8] sm:$0xff]
    %v1715 = vld [vmem:[%s2 + $0xce0] sm:$0xff]
    %v1716 = vld [vmem:[%s2 + $0xce8] sm:$0xff]
    %v1717 = vld [vmem:[%s2 + $0xcf0] sm:$0xff]
    %v1718 = vld [vmem:[%s2 + $0xcf8] sm:$0xff]
    %v1719 = vld [vmem:[%s2 + $0xd00] sm:$0xff]
    %v1720 = vld [vmem:[%s2 + $0xd08] sm:$0xff]
    %v1721 = vld [vmem:[%s2 + $0xd10] sm:$0xff]
    %v1722 = vld [vmem:[%s2 + $0xd18] sm:$0xff]
    %v1723 = vld [vmem:[%s2 + $0xd20] sm:$0xff]
    %v1724 = vld [vmem:[%s2 + $0xd28] sm:$0xff]
    %v1725 = vld [vmem:[%s2 + $0xd30] sm:$0xff]
    %v1726 = vld [vmem:[%s2 + $0xd38] sm:$0xff]
    %v1727 = vld [vmem:[%s2 + $0xd40] sm:$0xff]
    %v1728 = vld [vmem:[%s2 + $0xd48] sm:$0xff]
    %v1729 = vld [vmem:[%s2 + $0xd50] sm:$0xff]
    %v1730 = vld [vmem:[%s2 + $0xd58] sm:$0xff]
    %v1731 = vld [vmem:[%s2 + $0xd60] sm:$0xff]
    %v1732 = vld [vmem:[%s2 + $0xd68] sm:$0xff]
    %v1733 = vld [vmem:[%s2 + $0xd70] sm:$0xff]
    %v1734 = vld [vmem:[%s2 + $0xd78] sm:$0xff]
    %v1735 = vld [vmem:[%s2 + $0xd80] sm:$0xff]
    %v1736 = vld [vmem:[%s2 + $0xd88] sm:$0xff]
    %v1737 = vld [vmem:[%s2 + $0xd90] sm:$0xff]
    %v1738 = vld [vmem:[%s2 + $0xd98] sm:$0xff]
    %v1739 = vld [vmem:[%s2 + $0xda0] sm:$0xff]
    %v1740 = vld [vmem:[%s2 + $0xda8] sm:$0xff]
    %v1741 = vld [vmem:[%s2 + $0xdb0] sm:$0xff]
    %v1742 = vld [vmem:[%s2 + $0xdb8] sm:$0xff]
    %v1743 = vld [vmem:[%s2 + $0xdc0] sm:$0xff]
    %v1744 = vld [vmem:[%s2 + $0xdc8] sm:$0xff]
    %v1745 = vld [vmem:[%s2 + $0xdd0] sm:$0xff]
    %v1746 = vld [vmem:[%s2 + $0xdd8] sm:$0xff]
    %v1747 = vld [vmem:[%s2 + $0xde0] sm:$0xff]
    %v1748 = vld [vmem:[%s2 + $0xde8] sm:$0xff]
    %v1749 = vld [vmem:[%s2 + $0xdf0] sm:$0xff]
    %v1750 = vld [vmem:[%s2 + $0xdf8] sm:$0xff]
    %v1751 = vld [vmem:[%s2 + $0xe00] sm:$0xff]
    %v1752 = vld [vmem:[%s2 + $0xe08] sm:$0xff]
    %v1753 = vld [vmem:[%s2 + $0xe10] sm:$0xff]
    %v1754 = vld [vmem:[%s2 + $0xe18] sm:$0xff]
    %v1755 = vld [vmem:[%s2 + $0xe20] sm:$0xff]
    %v1756 = vld [vmem:[%s2 + $0xe28] sm:$0xff]
    %v1757 = vld [vmem:[%s2 + $0xe30] sm:$0xff]
    %v1758 = vld [vmem:[%s2 + $0xe38] sm:$0xff]
    %v1759 = vld [vmem:[%s2 + $0xe40] sm:$0xff]
    %v1760 = vld [vmem:[%s2 + $0xe48] sm:$0xff]
    %v1761 = vld [vmem:[%s2 + $0xe50] sm:$0xff]
    %v1762 = vld [vmem:[%s2 + $0xe58] sm:$0xff]
    %v1763 = vld [vmem:[%s2 + $0xe60] sm:$0xff]
    %v1764 = vld [vmem:[%s2 + $0xe68] sm:$0xff]
    %v1765 = vld [vmem:[%s2 + $0xe70] sm:$0xff]
    %v1766 = vld [vmem:[%s2 + $0xe78] sm:$0xff]
    %v1767 = vld [vmem:[%s2 + $0xe80] sm:$0xff]
    %v1768 = vld [vmem:[%s2 + $0xe88] sm:$0xff]
    %v1769 = vld [vmem:[%s2 + $0xe90] sm:$0xff]
    %v1770 = vld [vmem:[%s2 + $0xe98] sm:$0xff]
    %v1771 = vld [vmem:[%s2 + $0xea0] sm:$0xff]
    %v1772 = vld [vmem:[%s2 + $0xea8] sm:$0xff]
    %v1773 = vld [vmem:[%s2 + $0xeb0] sm:$0xff]
    %v1774 = vld [vmem:[%s2 + $0xeb8] sm:$0xff]
    %v1775 = vld [vmem:[%s2 + $0xec0] sm:$0xff]
    %v1776 = vld [vmem:[%s2 + $0xec8] sm:$0xff]
    %v1777 = vld [vmem:[%s2 + $0xed0] sm:$0xff]
    %v1778 = vld [vmem:[%s2 + $0xed8] sm:$0xff]
    %v1779 = vld [vmem:[%s2 + $0xee0] sm:$0xff]
    %v1780 = vld [vmem:[%s2 + $0xee8] sm:$0xff]
    %v1781 = vld [vmem:[%s2 + $0xef0] sm:$0xff]
    %v1782 = vld [vmem:[%s2 + $0xef8] sm:$0xff]
    %v1783 = vld [vmem:[%s2 + $0xf00] sm:$0xff]
    %v1784 = vld [vmem:[%s2 + $0xf08] sm:$0xff]
    %v1785 = vld [vmem:[%s2 + $0xf10] sm:$0xff]
    %v1786 = vld [vmem:[%s2 + $0xf18] sm:$0xff]
    %v1787 = vld [vmem:[%s2 + $0xf20] sm:$0xff]
    %v1788 = vld [vmem:[%s2 + $0xf28] sm:$0xff]
    %v1789 = vld [vmem:[%s2 + $0xf30] sm:$0xff]
    %v1790 = vld [vmem:[%s2 + $0xf38] sm:$0xff]
    %v1791 = vld [vmem:[%s2 + $0xf40] sm:$0xff]
    %v1792 = vld [vmem:[%s2 + $0xf48] sm:$0xff]
    %v1793 = vld [vmem:[%s2 + $0xf50] sm:$0xff]
    %v1794 = vld [vmem:[%s2 + $0xf58] sm:$0xff]
    %v1795 = vld [vmem:[%s2 + $0xf60] sm:$0xff]
    %v1796 = vld [vmem:[%s2 + $0xf68] sm:$0xff]
    %v1797 = vld [vmem:[%s2 + $0xf70] sm:$0xff]
    %v1798 = vld [vmem:[%s2 + $0xf78] sm:$0xff]
    %v1799 = vld [vmem:[%s2 + $0xf80] sm:$0xff]
    %v1800 = vld [vmem:[%s2 + $0xf88] sm:$0xff]
    %v1801 = vld [vmem:[%s2 + $0xf90] sm:$0xff]
    %v1802 = vld [vmem:[%s2 + $0xf98] sm:$0xff]
    %v1803 = vld [vmem:[%s2 + $0xfa0] sm:$0xff]
    %v1804 = vld [vmem:[%s2 + $0xfa8] sm:$0xff]
    %v1805 = vld [vmem:[%s2 + $0xfb0] sm:$0xff]
    %v1806 = vld [vmem:[%s2 + $0xfb8] sm:$0xff]
    %v1807 = vld [vmem:[%s2 + $0xfc0] sm:$0xff]
    %v1808 = vld [vmem:[%s2 + $0xfc8] sm:$0xff]
    %v1809 = vld [vmem:[%s2 + $0xfd0] sm:$0xff]
    %v1810 = vld [vmem:[%s2 + $0xfd8] sm:$0xff]
    %v1811 = vld [vmem:[%s2 + $0xfe0] sm:$0xff]
    %v1812 = vld [vmem:[%s2 + $0xfe8] sm:$0xff]
    %v1813 = vld [vmem:[%s2 + $0xff0] sm:$0xff]
    %v1814 = vld [vmem:[%s2 + $0xff8] sm:$0xff]
    %v2327 = vunpack.c.l.b16 %v1303
    %v2328 = vunpack.c.h.b16 %v1303
    %v2329 = vunpack.c.l.b16 %v1304
    %v2330 = vunpack.c.h.b16 %v1304
    %v2331 = vunpack.c.l.b16 %v1305
    %v2332 = vunpack.c.h.b16 %v1305
    %v2333 = vunpack.c.l.b16 %v1306
    %v2334 = vunpack.c.h.b16 %v1306
    %v2335 = vunpack.c.l.b16 %v1307
    %v2336 = vunpack.c.h.b16 %v1307
    %v2337 = vunpack.c.l.b16 %v1308
    %v2338 = vunpack.c.h.b16 %v1308
    %v2339 = vunpack.c.l.b16 %v1309
    %v2340 = vunpack.c.h.b16 %v1309
    %v2341 = vunpack.c.l.b16 %v1310
    %v2342 = vunpack.c.h.b16 %v1310
    %v2343 = vunpack.c.l.b16 %v1311
    %v2344 = vunpack.c.h.b16 %v1311
    %v2345 = vunpack.c.l.b16 %v1312
    %v2346 = vunpack.c.h.b16 %v1312
    %v2347 = vunpack.c.l.b16 %v1313
    %v2348 = vunpack.c.h.b16 %v1313
    %v2349 = vunpack.c.l.b16 %v1314
    %v2350 = vunpack.c.h.b16 %v1314
    %v2351 = vunpack.c.l.b16 %v1315
    %v2352 = vunpack.c.h.b16 %v1315
    %v2353 = vunpack.c.l.b16 %v1316
    %v2354 = vunpack.c.h.b16 %v1316
    %v2355 = vunpack.c.l.b16 %v1317
    %v2356 = vunpack.c.h.b16 %v1317
    %v2357 = vunpack.c.l.b16 %v1318
    %v2358 = vunpack.c.h.b16 %v1318
    %v2359 = vunpack.c.l.b16 %v1319
    %v2360 = vunpack.c.h.b16 %v1319
    %v2361 = vunpack.c.l.b16 %v1320
    %v2362 = vunpack.c.h.b16 %v1320
    %v2363 = vunpack.c.l.b16 %v1321
    %v2364 = vunpack.c.h.b16 %v1321
    %v2365 = vunpack.c.l.b16 %v1322
    %v2366 = vunpack.c.h.b16 %v1322
    %v2367 = vunpack.c.l.b16 %v1323
    %v2368 = vunpack.c.h.b16 %v1323
    %v2369 = vunpack.c.l.b16 %v1324
    %v2370 = vunpack.c.h.b16 %v1324
    %v2371 = vunpack.c.l.b16 %v1325
    %v2372 = vunpack.c.h.b16 %v1325
    %v2373 = vunpack.c.l.b16 %v1326
    %v2374 = vunpack.c.h.b16 %v1326
    %v2375 = vunpack.c.l.b16 %v1327
    %v2376 = vunpack.c.h.b16 %v1327
    %v2377 = vunpack.c.l.b16 %v1328
    %v2378 = vunpack.c.h.b16 %v1328
    %v2379 = vunpack.c.l.b16 %v1329
    %v2380 = vunpack.c.h.b16 %v1329
    %v2381 = vunpack.c.l.b16 %v1330
    %v2382 = vunpack.c.h.b16 %v1330
    %v2383 = vunpack.c.l.b16 %v1331
    %v2384 = vunpack.c.h.b16 %v1331
    %v2385 = vunpack.c.l.b16 %v1332
    %v2386 = vunpack.c.h.b16 %v1332
    %v2387 = vunpack.c.l.b16 %v1333
    %v2388 = vunpack.c.h.b16 %v1333
    %v2389 = vunpack.c.l.b16 %v1334
    %v2390 = vunpack.c.h.b16 %v1334
    %v2391 = vunpack.c.l.b16 %v1335
    %v2392 = vunpack.c.h.b16 %v1335
    %v2393 = vunpack.c.l.b16 %v1336
    %v2394 = vunpack.c.h.b16 %v1336
    %v2395 = vunpack.c.l.b16 %v1337
    %v2396 = vunpack.c.h.b16 %v1337
    %v2397 = vunpack.c.l.b16 %v1338
    %v2398 = vunpack.c.h.b16 %v1338
    %v2399 = vunpack.c.l.b16 %v1339
    %v2400 = vunpack.c.h.b16 %v1339
    %v2401 = vunpack.c.l.b16 %v1340
    %v2402 = vunpack.c.h.b16 %v1340
    %v2403 = vunpack.c.l.b16 %v1341
    %v2404 = vunpack.c.h.b16 %v1341
    %v2405 = vunpack.c.l.b16 %v1342
    %v2406 = vunpack.c.h.b16 %v1342
    %v2407 = vunpack.c.l.b16 %v1343
    %v2408 = vunpack.c.h.b16 %v1343
    %v2409 = vunpack.c.l.b16 %v1344
    %v2410 = vunpack.c.h.b16 %v1344
    %v2411 = vunpack.c.l.b16 %v1345
    %v2412 = vunpack.c.h.b16 %v1345
    %v2413 = vunpack.c.l.b16 %v1346
    %v2414 = vunpack.c.h.b16 %v1346
    %v2415 = vunpack.c.l.b16 %v1347
    %v2416 = vunpack.c.h.b16 %v1347
    %v2417 = vunpack.c.l.b16 %v1348
    %v2418 = vunpack.c.h.b16 %v1348
    %v2419 = vunpack.c.l.b16 %v1349
    %v2420 = vunpack.c.h.b16 %v1349
    %v2421 = vunpack.c.l.b16 %v1350
    %v2422 = vunpack.c.h.b16 %v1350
    %v2423 = vunpack.c.l.b16 %v1351
    %v2424 = vunpack.c.h.b16 %v1351
    %v2425 = vunpack.c.l.b16 %v1352
    %v2426 = vunpack.c.h.b16 %v1352
    %v2427 = vunpack.c.l.b16 %v1353
    %v2428 = vunpack.c.h.b16 %v1353
    %v2429 = vunpack.c.l.b16 %v1354
    %v2430 = vunpack.c.h.b16 %v1354
    %v2431 = vunpack.c.l.b16 %v1355
    %v2432 = vunpack.c.h.b16 %v1355
    %v2433 = vunpack.c.l.b16 %v1356
    %v2434 = vunpack.c.h.b16 %v1356
    %v2435 = vunpack.c.l.b16 %v1357
    %v2436 = vunpack.c.h.b16 %v1357
    %v2437 = vunpack.c.l.b16 %v1358
    %v2438 = vunpack.c.h.b16 %v1358
    %v2439 = vunpack.c.l.b16 %v1359
    %v2440 = vunpack.c.h.b16 %v1359
    %v2441 = vunpack.c.l.b16 %v1360
    %v2442 = vunpack.c.h.b16 %v1360
    %v2443 = vunpack.c.l.b16 %v1361
    %v2444 = vunpack.c.h.b16 %v1361
    %v2445 = vunpack.c.l.b16 %v1362
    %v2446 = vunpack.c.h.b16 %v1362
    %v2447 = vunpack.c.l.b16 %v1363
    %v2448 = vunpack.c.h.b16 %v1363
    %v2449 = vunpack.c.l.b16 %v1364
    %v2450 = vunpack.c.h.b16 %v1364
    %v2451 = vunpack.c.l.b16 %v1365
    %v2452 = vunpack.c.h.b16 %v1365
    %v2453 = vunpack.c.l.b16 %v1366
    %v2454 = vunpack.c.h.b16 %v1366
    %v2455 = vunpack.c.l.b16 %v1367
    %v2456 = vunpack.c.h.b16 %v1367
    %v2457 = vunpack.c.l.b16 %v1368
    %v2458 = vunpack.c.h.b16 %v1368
    %v2459 = vunpack.c.l.b16 %v1369
    %v2460 = vunpack.c.h.b16 %v1369
    %v2461 = vunpack.c.l.b16 %v1370
    %v2462 = vunpack.c.h.b16 %v1370
    %v2463 = vunpack.c.l.b16 %v1371
    %v2464 = vunpack.c.h.b16 %v1371
    %v2465 = vunpack.c.l.b16 %v1372
    %v2466 = vunpack.c.h.b16 %v1372
    %v2467 = vunpack.c.l.b16 %v1373
    %v2468 = vunpack.c.h.b16 %v1373
    %v2469 = vunpack.c.l.b16 %v1374
    %v2470 = vunpack.c.h.b16 %v1374
    %v2471 = vunpack.c.l.b16 %v1375
    %v2472 = vunpack.c.h.b16 %v1375
    %v2473 = vunpack.c.l.b16 %v1376
    %v2474 = vunpack.c.h.b16 %v1376
    %v2475 = vunpack.c.l.b16 %v1377
    %v2476 = vunpack.c.h.b16 %v1377
    %v2477 = vunpack.c.l.b16 %v1378
    %v2478 = vunpack.c.h.b16 %v1378
    %v2479 = vunpack.c.l.b16 %v1379
    %v2480 = vunpack.c.h.b16 %v1379
    %v2481 = vunpack.c.l.b16 %v1380
    %v2482 = vunpack.c.h.b16 %v1380
    %v2483 = vunpack.c.l.b16 %v1381
    %v2484 = vunpack.c.h.b16 %v1381
    %v2485 = vunpack.c.l.b16 %v1382
    %v2486 = vunpack.c.h.b16 %v1382
    %v2487 = vunpack.c.l.b16 %v1383
    %v2488 = vunpack.c.h.b16 %v1383
    %v2489 = vunpack.c.l.b16 %v1384
    %v2490 = vunpack.c.h.b16 %v1384
    %v2491 = vunpack.c.l.b16 %v1385
    %v2492 = vunpack.c.h.b16 %v1385
    %v2493 = vunpack.c.l.b16 %v1386
    %v2494 = vunpack.c.h.b16 %v1386
    %v2495 = vunpack.c.l.b16 %v1387
    %v2496 = vunpack.c.h.b16 %v1387
    %v2497 = vunpack.c.l.b16 %v1388
    %v2498 = vunpack.c.h.b16 %v1388
    %v2499 = vunpack.c.l.b16 %v1389
    %v2500 = vunpack.c.h.b16 %v1389
    %v2501 = vunpack.c.l.b16 %v1390
    %v2502 = vunpack.c.h.b16 %v1390
    %v2503 = vunpack.c.l.b16 %v1391
    %v2504 = vunpack.c.h.b16 %v1391
    %v2505 = vunpack.c.l.b16 %v1392
    %v2506 = vunpack.c.h.b16 %v1392
    %v2507 = vunpack.c.l.b16 %v1393
    %v2508 = vunpack.c.h.b16 %v1393
    %v2509 = vunpack.c.l.b16 %v1394
    %v2510 = vunpack.c.h.b16 %v1394
    %v2511 = vunpack.c.l.b16 %v1395
    %v2512 = vunpack.c.h.b16 %v1395
    %v2513 = vunpack.c.l.b16 %v1396
    %v2514 = vunpack.c.h.b16 %v1396
    %v2515 = vunpack.c.l.b16 %v1397
    %v2516 = vunpack.c.h.b16 %v1397
    %v2517 = vunpack.c.l.b16 %v1398
    %v2518 = vunpack.c.h.b16 %v1398
    %v2519 = vunpack.c.l.b16 %v1399
    %v2520 = vunpack.c.h.b16 %v1399
    %v2521 = vunpack.c.l.b16 %v1400
    %v2522 = vunpack.c.h.b16 %v1400
    %v2523 = vunpack.c.l.b16 %v1401
    %v2524 = vunpack.c.h.b16 %v1401
    %v2525 = vunpack.c.l.b16 %v1402
    %v2526 = vunpack.c.h.b16 %v1402
    %v2527 = vunpack.c.l.b16 %v1403
    %v2528 = vunpack.c.h.b16 %v1403
    %v2529 = vunpack.c.l.b16 %v1404
    %v2530 = vunpack.c.h.b16 %v1404
    %v2531 = vunpack.c.l.b16 %v1405
    %v2532 = vunpack.c.h.b16 %v1405
    %v2533 = vunpack.c.l.b16 %v1406
    %v2534 = vunpack.c.h.b16 %v1406
    %v2535 = vunpack.c.l.b16 %v1407
    %v2536 = vunpack.c.h.b16 %v1407
    %v2537 = vunpack.c.l.b16 %v1408
    %v2538 = vunpack.c.h.b16 %v1408
    %v2539 = vunpack.c.l.b16 %v1409
    %v2540 = vunpack.c.h.b16 %v1409
    %v2541 = vunpack.c.l.b16 %v1410
    %v2542 = vunpack.c.h.b16 %v1410
    %v2543 = vunpack.c.l.b16 %v1411
    %v2544 = vunpack.c.h.b16 %v1411
    %v2545 = vunpack.c.l.b16 %v1412
    %v2546 = vunpack.c.h.b16 %v1412
    %v2547 = vunpack.c.l.b16 %v1413
    %v2548 = vunpack.c.h.b16 %v1413
    %v2549 = vunpack.c.l.b16 %v1414
    %v2550 = vunpack.c.h.b16 %v1414
    %v2551 = vunpack.c.l.b16 %v1415
    %v2552 = vunpack.c.h.b16 %v1415
    %v2553 = vunpack.c.l.b16 %v1416
    %v2554 = vunpack.c.h.b16 %v1416
    %v2555 = vunpack.c.l.b16 %v1417
    %v2556 = vunpack.c.h.b16 %v1417
    %v2557 = vunpack.c.l.b16 %v1418
    %v2558 = vunpack.c.h.b16 %v1418
    %v2559 = vunpack.c.l.b16 %v1419
    %v2560 = vunpack.c.h.b16 %v1419
    %v2561 = vunpack.c.l.b16 %v1420
    %v2562 = vunpack.c.h.b16 %v1420
    %v2563 = vunpack.c.l.b16 %v1421
    %v2564 = vunpack.c.h.b16 %v1421
    %v2565 = vunpack.c.l.b16 %v1422
    %v2566 = vunpack.c.h.b16 %v1422
    %v2567 = vunpack.c.l.b16 %v1423
    %v2568 = vunpack.c.h.b16 %v1423
    %v2569 = vunpack.c.l.b16 %v1424
    %v2570 = vunpack.c.h.b16 %v1424
    %v2571 = vunpack.c.l.b16 %v1425
    %v2572 = vunpack.c.h.b16 %v1425
    %v2573 = vunpack.c.l.b16 %v1426
    %v2574 = vunpack.c.h.b16 %v1426
    %v2575 = vunpack.c.l.b16 %v1427
    %v2576 = vunpack.c.h.b16 %v1427
    %v2577 = vunpack.c.l.b16 %v1428
    %v2578 = vunpack.c.h.b16 %v1428
    %v2579 = vunpack.c.l.b16 %v1429
    %v2580 = vunpack.c.h.b16 %v1429
    %v2581 = vunpack.c.l.b16 %v1430
    %v2582 = vunpack.c.h.b16 %v1430
    %v2583 = vunpack.c.l.b16 %v1431
    %v2584 = vunpack.c.h.b16 %v1431
    %v2585 = vunpack.c.l.b16 %v1432
    %v2586 = vunpack.c.h.b16 %v1432
    %v2587 = vunpack.c.l.b16 %v1433
    %v2588 = vunpack.c.h.b16 %v1433
    %v2589 = vunpack.c.l.b16 %v1434
    %v2590 = vunpack.c.h.b16 %v1434
    %v2591 = vunpack.c.l.b16 %v1435
    %v2592 = vunpack.c.h.b16 %v1435
    %v2593 = vunpack.c.l.b16 %v1436
    %v2594 = vunpack.c.h.b16 %v1436
    %v2595 = vunpack.c.l.b16 %v1437
    %v2596 = vunpack.c.h.b16 %v1437
    %v2597 = vunpack.c.l.b16 %v1438
    %v2598 = vunpack.c.h.b16 %v1438
    %v2599 = vunpack.c.l.b16 %v1439
    %v2600 = vunpack.c.h.b16 %v1439
    %v2601 = vunpack.c.l.b16 %v1440
    %v2602 = vunpack.c.h.b16 %v1440
    %v2603 = vunpack.c.l.b16 %v1441
    %v2604 = vunpack.c.h.b16 %v1441
    %v2605 = vunpack.c.l.b16 %v1442
    %v2606 = vunpack.c.h.b16 %v1442
    %v2607 = vunpack.c.l.b16 %v1443
    %v2608 = vunpack.c.h.b16 %v1443
    %v2609 = vunpack.c.l.b16 %v1444
    %v2610 = vunpack.c.h.b16 %v1444
    %v2611 = vunpack.c.l.b16 %v1445
    %v2612 = vunpack.c.h.b16 %v1445
    %v2613 = vunpack.c.l.b16 %v1446
    %v2614 = vunpack.c.h.b16 %v1446
    %v2615 = vunpack.c.l.b16 %v1447
    %v2616 = vunpack.c.h.b16 %v1447
    %v2617 = vunpack.c.l.b16 %v1448
    %v2618 = vunpack.c.h.b16 %v1448
    %v2619 = vunpack.c.l.b16 %v1449
    %v2620 = vunpack.c.h.b16 %v1449
    %v2621 = vunpack.c.l.b16 %v1450
    %v2622 = vunpack.c.h.b16 %v1450
    %v2623 = vunpack.c.l.b16 %v1451
    %v2624 = vunpack.c.h.b16 %v1451
    %v2625 = vunpack.c.l.b16 %v1452
    %v2626 = vunpack.c.h.b16 %v1452
    %v2627 = vunpack.c.l.b16 %v1453
    %v2628 = vunpack.c.h.b16 %v1453
    %v2629 = vunpack.c.l.b16 %v1454
    %v2630 = vunpack.c.h.b16 %v1454
    %v2631 = vunpack.c.l.b16 %v1455
    %v2632 = vunpack.c.h.b16 %v1455
    %v2633 = vunpack.c.l.b16 %v1456
    %v2634 = vunpack.c.h.b16 %v1456
    %v2635 = vunpack.c.l.b16 %v1457
    %v2636 = vunpack.c.h.b16 %v1457
    %v2637 = vunpack.c.l.b16 %v1458
    %v2638 = vunpack.c.h.b16 %v1458
    %v2639 = vunpack.c.l.b16 %v1459
    %v2640 = vunpack.c.h.b16 %v1459
    %v2641 = vunpack.c.l.b16 %v1460
    %v2642 = vunpack.c.h.b16 %v1460
    %v2643 = vunpack.c.l.b16 %v1461
    %v2644 = vunpack.c.h.b16 %v1461
    %v2645 = vunpack.c.l.b16 %v1462
    %v2646 = vunpack.c.h.b16 %v1462
    %v2647 = vunpack.c.l.b16 %v1463
    %v2648 = vunpack.c.h.b16 %v1463
    %v2649 = vunpack.c.l.b16 %v1464
    %v2650 = vunpack.c.h.b16 %v1464
    %v2651 = vunpack.c.l.b16 %v1465
    %v2652 = vunpack.c.h.b16 %v1465
    %v2653 = vunpack.c.l.b16 %v1466
    %v2654 = vunpack.c.h.b16 %v1466
    %v2655 = vunpack.c.l.b16 %v1467
    %v2656 = vunpack.c.h.b16 %v1467
    %v2657 = vunpack.c.l.b16 %v1468
    %v2658 = vunpack.c.h.b16 %v1468
    %v2659 = vunpack.c.l.b16 %v1469
    %v2660 = vunpack.c.h.b16 %v1469
    %v2661 = vunpack.c.l.b16 %v1470
    %v2662 = vunpack.c.h.b16 %v1470
    %v2663 = vunpack.c.l.b16 %v1471
    %v2664 = vunpack.c.h.b16 %v1471
    %v2665 = vunpack.c.l.b16 %v1472
    %v2666 = vunpack.c.h.b16 %v1472
    %v2667 = vunpack.c.l.b16 %v1473
    %v2668 = vunpack.c.h.b16 %v1473
    %v2669 = vunpack.c.l.b16 %v1474
    %v2670 = vunpack.c.h.b16 %v1474
    %v2671 = vunpack.c.l.b16 %v1475
    %v2672 = vunpack.c.h.b16 %v1475
    %v2673 = vunpack.c.l.b16 %v1476
    %v2674 = vunpack.c.h.b16 %v1476
    %v2675 = vunpack.c.l.b16 %v1477
    %v2676 = vunpack.c.h.b16 %v1477
    %v2677 = vunpack.c.l.b16 %v1478
    %v2678 = vunpack.c.h.b16 %v1478
    %v2679 = vunpack.c.l.b16 %v1479
    %v2680 = vunpack.c.h.b16 %v1479
    %v2681 = vunpack.c.l.b16 %v1480
    %v2682 = vunpack.c.h.b16 %v1480
    %v2683 = vunpack.c.l.b16 %v1481
    %v2684 = vunpack.c.h.b16 %v1481
    %v2685 = vunpack.c.l.b16 %v1482
    %v2686 = vunpack.c.h.b16 %v1482
    %v2687 = vunpack.c.l.b16 %v1483
    %v2688 = vunpack.c.h.b16 %v1483
    %v2689 = vunpack.c.l.b16 %v1484
    %v2690 = vunpack.c.h.b16 %v1484
    %v2691 = vunpack.c.l.b16 %v1485
    %v2692 = vunpack.c.h.b16 %v1485
    %v2693 = vunpack.c.l.b16 %v1486
    %v2694 = vunpack.c.h.b16 %v1486
    %v2695 = vunpack.c.l.b16 %v1487
    %v2696 = vunpack.c.h.b16 %v1487
    %v2697 = vunpack.c.l.b16 %v1488
    %v2698 = vunpack.c.h.b16 %v1488
    %v2699 = vunpack.c.l.b16 %v1489
    %v2700 = vunpack.c.h.b16 %v1489
    %v2701 = vunpack.c.l.b16 %v1490
    %v2702 = vunpack.c.h.b16 %v1490
    %v2703 = vunpack.c.l.b16 %v1491
    %v2704 = vunpack.c.h.b16 %v1491
    %v2705 = vunpack.c.l.b16 %v1492
    %v2706 = vunpack.c.h.b16 %v1492
    %v2707 = vunpack.c.l.b16 %v1493
    %v2708 = vunpack.c.h.b16 %v1493
    %v2709 = vunpack.c.l.b16 %v1494
    %v2710 = vunpack.c.h.b16 %v1494
    %v2711 = vunpack.c.l.b16 %v1495
    %v2712 = vunpack.c.h.b16 %v1495
    %v2713 = vunpack.c.l.b16 %v1496
    %v2714 = vunpack.c.h.b16 %v1496
    %v2715 = vunpack.c.l.b16 %v1497
    %v2716 = vunpack.c.h.b16 %v1497
    %v2717 = vunpack.c.l.b16 %v1498
    %v2718 = vunpack.c.h.b16 %v1498
    %v2719 = vunpack.c.l.b16 %v1499
    %v2720 = vunpack.c.h.b16 %v1499
    %v2721 = vunpack.c.l.b16 %v1500
    %v2722 = vunpack.c.h.b16 %v1500
    %v2723 = vunpack.c.l.b16 %v1501
    %v2724 = vunpack.c.h.b16 %v1501
    %v2725 = vunpack.c.l.b16 %v1502
    %v2726 = vunpack.c.h.b16 %v1502
    %v2727 = vunpack.c.l.b16 %v1503
    %v2728 = vunpack.c.h.b16 %v1503
    %v2729 = vunpack.c.l.b16 %v1504
    %v2730 = vunpack.c.h.b16 %v1504
    %v2731 = vunpack.c.l.b16 %v1505
    %v2732 = vunpack.c.h.b16 %v1505
    %v2733 = vunpack.c.l.b16 %v1506
    %v2734 = vunpack.c.h.b16 %v1506
    %v2735 = vunpack.c.l.b16 %v1507
    %v2736 = vunpack.c.h.b16 %v1507
    %v2737 = vunpack.c.l.b16 %v1508
    %v2738 = vunpack.c.h.b16 %v1508
    %v2739 = vunpack.c.l.b16 %v1509
    %v2740 = vunpack.c.h.b16 %v1509
    %v2741 = vunpack.c.l.b16 %v1510
    %v2742 = vunpack.c.h.b16 %v1510
    %v2743 = vunpack.c.l.b16 %v1511
    %v2744 = vunpack.c.h.b16 %v1511
    %v2745 = vunpack.c.l.b16 %v1512
    %v2746 = vunpack.c.h.b16 %v1512
    %v2747 = vunpack.c.l.b16 %v1513
    %v2748 = vunpack.c.h.b16 %v1513
    %v2749 = vunpack.c.l.b16 %v1514
    %v2750 = vunpack.c.h.b16 %v1514
    %v2751 = vunpack.c.l.b16 %v1515
    %v2752 = vunpack.c.h.b16 %v1515
    %v2753 = vunpack.c.l.b16 %v1516
    %v2754 = vunpack.c.h.b16 %v1516
    %v2755 = vunpack.c.l.b16 %v1517
    %v2756 = vunpack.c.h.b16 %v1517
    %v2757 = vunpack.c.l.b16 %v1518
    %v2758 = vunpack.c.h.b16 %v1518
    %v2759 = vunpack.c.l.b16 %v1519
    %v2760 = vunpack.c.h.b16 %v1519
    %v2761 = vunpack.c.l.b16 %v1520
    %v2762 = vunpack.c.h.b16 %v1520
    %v2763 = vunpack.c.l.b16 %v1521
    %v2764 = vunpack.c.h.b16 %v1521
    %v2765 = vunpack.c.l.b16 %v1522
    %v2766 = vunpack.c.h.b16 %v1522
    %v2767 = vunpack.c.l.b16 %v1523
    %v2768 = vunpack.c.h.b16 %v1523
    %v2769 = vunpack.c.l.b16 %v1524
    %v2770 = vunpack.c.h.b16 %v1524
    %v2771 = vunpack.c.l.b16 %v1525
    %v2772 = vunpack.c.h.b16 %v1525
    %v2773 = vunpack.c.l.b16 %v1526
    %v2774 = vunpack.c.h.b16 %v1526
    %v2775 = vunpack.c.l.b16 %v1527
    %v2776 = vunpack.c.h.b16 %v1527
    %v2777 = vunpack.c.l.b16 %v1528
    %v2778 = vunpack.c.h.b16 %v1528
    %v2779 = vunpack.c.l.b16 %v1529
    %v2780 = vunpack.c.h.b16 %v1529
    %v2781 = vunpack.c.l.b16 %v1530
    %v2782 = vunpack.c.h.b16 %v1530
    %v2783 = vunpack.c.l.b16 %v1531
    %v2784 = vunpack.c.h.b16 %v1531
    %v2785 = vunpack.c.l.b16 %v1532
    %v2786 = vunpack.c.h.b16 %v1532
    %v2787 = vunpack.c.l.b16 %v1533
    %v2788 = vunpack.c.h.b16 %v1533
    %v2789 = vunpack.c.l.b16 %v1534
    %v2790 = vunpack.c.h.b16 %v1534
    %v2791 = vunpack.c.l.b16 %v1535
    %v2792 = vunpack.c.h.b16 %v1535
    %v2793 = vunpack.c.l.b16 %v1536
    %v2794 = vunpack.c.h.b16 %v1536
    %v2795 = vunpack.c.l.b16 %v1537
    %v2796 = vunpack.c.h.b16 %v1537
    %v2797 = vunpack.c.l.b16 %v1538
    %v2798 = vunpack.c.h.b16 %v1538
    %v2799 = vunpack.c.l.b16 %v1539
    %v2800 = vunpack.c.h.b16 %v1539
    %v2801 = vunpack.c.l.b16 %v1540
    %v2802 = vunpack.c.h.b16 %v1540
    %v2803 = vunpack.c.l.b16 %v1541
    %v2804 = vunpack.c.h.b16 %v1541
    %v2805 = vunpack.c.l.b16 %v1542
    %v2806 = vunpack.c.h.b16 %v1542
    %v2807 = vunpack.c.l.b16 %v1543
    %v2808 = vunpack.c.h.b16 %v1543
    %v2809 = vunpack.c.l.b16 %v1544
    %v2810 = vunpack.c.h.b16 %v1544
    %v2811 = vunpack.c.l.b16 %v1545
    %v2812 = vunpack.c.h.b16 %v1545
    %v2813 = vunpack.c.l.b16 %v1546
    %v2814 = vunpack.c.h.b16 %v1546
    %v2815 = vunpack.c.l.b16 %v1547
    %v2816 = vunpack.c.h.b16 %v1547
    %v2817 = vunpack.c.l.b16 %v1548
    %v2818 = vunpack.c.h.b16 %v1548
    %v2819 = vunpack.c.l.b16 %v1549
    %v2820 = vunpack.c.h.b16 %v1549
    %v2821 = vunpack.c.l.b16 %v1550
    %v2822 = vunpack.c.h.b16 %v1550
    %v2823 = vunpack.c.l.b16 %v1551
    %v2824 = vunpack.c.h.b16 %v1551
    %v2825 = vunpack.c.l.b16 %v1552
    %v2826 = vunpack.c.h.b16 %v1552
    %v2827 = vunpack.c.l.b16 %v1553
    %v2828 = vunpack.c.h.b16 %v1553
    %v2829 = vunpack.c.l.b16 %v1554
    %v2830 = vunpack.c.h.b16 %v1554
    %v2831 = vunpack.c.l.b16 %v1555
    %v2832 = vunpack.c.h.b16 %v1555
    %v2833 = vunpack.c.l.b16 %v1556
    %v2834 = vunpack.c.h.b16 %v1556
    %v2835 = vunpack.c.l.b16 %v1557
    %v2836 = vunpack.c.h.b16 %v1557
    %v2837 = vunpack.c.l.b16 %v1558
    %v2838 = vunpack.c.h.b16 %v1558
    %v2839 = vunpack.c.l.b16 %v1559
    %v2840 = vunpack.c.h.b16 %v1559
    %v2841 = vunpack.c.l.b16 %v1560
    %v2842 = vunpack.c.h.b16 %v1560
    %v2843 = vunpack.c.l.b16 %v1561
    %v2844 = vunpack.c.h.b16 %v1561
    %v2845 = vunpack.c.l.b16 %v1562
    %v2846 = vunpack.c.h.b16 %v1562
    %v2847 = vunpack.c.l.b16 %v1563
    %v2848 = vunpack.c.h.b16 %v1563
    %v2849 = vunpack.c.l.b16 %v1564
    %v2850 = vunpack.c.h.b16 %v1564
    %v2851 = vunpack.c.l.b16 %v1565
    %v2852 = vunpack.c.h.b16 %v1565
    %v2853 = vunpack.c.l.b16 %v1566
    %v2854 = vunpack.c.h.b16 %v1566
    %v2855 = vunpack.c.l.b16 %v1567
    %v2856 = vunpack.c.h.b16 %v1567
    %v2857 = vunpack.c.l.b16 %v1568
    %v2858 = vunpack.c.h.b16 %v1568
    %v2859 = vunpack.c.l.b16 %v1569
    %v2860 = vunpack.c.h.b16 %v1569
    %v2861 = vunpack.c.l.b16 %v1570
    %v2862 = vunpack.c.h.b16 %v1570
    %v2863 = vunpack.c.l.b16 %v1571
    %v2864 = vunpack.c.h.b16 %v1571
    %v2865 = vunpack.c.l.b16 %v1572
    %v2866 = vunpack.c.h.b16 %v1572
    %v2867 = vunpack.c.l.b16 %v1573
    %v2868 = vunpack.c.h.b16 %v1573
    %v2869 = vunpack.c.l.b16 %v1574
    %v2870 = vunpack.c.h.b16 %v1574
    %v2871 = vunpack.c.l.b16 %v1575
    %v2872 = vunpack.c.h.b16 %v1575
    %v2873 = vunpack.c.l.b16 %v1576
    %v2874 = vunpack.c.h.b16 %v1576
    %v2875 = vunpack.c.l.b16 %v1577
    %v2876 = vunpack.c.h.b16 %v1577
    %v2877 = vunpack.c.l.b16 %v1578
    %v2878 = vunpack.c.h.b16 %v1578
    %v2879 = vunpack.c.l.b16 %v1579
    %v2880 = vunpack.c.h.b16 %v1579
    %v2881 = vunpack.c.l.b16 %v1580
    %v2882 = vunpack.c.h.b16 %v1580
    %v2883 = vunpack.c.l.b16 %v1581
    %v2884 = vunpack.c.h.b16 %v1581
    %v2885 = vunpack.c.l.b16 %v1582
    %v2886 = vunpack.c.h.b16 %v1582
    %v2887 = vunpack.c.l.b16 %v1583
    %v2888 = vunpack.c.h.b16 %v1583
    %v2889 = vunpack.c.l.b16 %v1584
    %v2890 = vunpack.c.h.b16 %v1584
    %v2891 = vunpack.c.l.b16 %v1585
    %v2892 = vunpack.c.h.b16 %v1585
    %v2893 = vunpack.c.l.b16 %v1586
    %v2894 = vunpack.c.h.b16 %v1586
    %v2895 = vunpack.c.l.b16 %v1587
    %v2896 = vunpack.c.h.b16 %v1587
    %v2897 = vunpack.c.l.b16 %v1588
    %v2898 = vunpack.c.h.b16 %v1588
    %v2899 = vunpack.c.l.b16 %v1589
    %v2900 = vunpack.c.h.b16 %v1589
    %v2901 = vunpack.c.l.b16 %v1590
    %v2902 = vunpack.c.h.b16 %v1590
    %v2903 = vunpack.c.l.b16 %v1591
    %v2904 = vunpack.c.h.b16 %v1591
    %v2905 = vunpack.c.l.b16 %v1592
    %v2906 = vunpack.c.h.b16 %v1592
    %v2907 = vunpack.c.l.b16 %v1593
    %v2908 = vunpack.c.h.b16 %v1593
    %v2909 = vunpack.c.l.b16 %v1594
    %v2910 = vunpack.c.h.b16 %v1594
    %v2911 = vunpack.c.l.b16 %v1595
    %v2912 = vunpack.c.h.b16 %v1595
    %v2913 = vunpack.c.l.b16 %v1596
    %v2914 = vunpack.c.h.b16 %v1596
    %v2915 = vunpack.c.l.b16 %v1597
    %v2916 = vunpack.c.h.b16 %v1597
    %v2917 = vunpack.c.l.b16 %v1598
    %v2918 = vunpack.c.h.b16 %v1598
    %v2919 = vunpack.c.l.b16 %v1599
    %v2920 = vunpack.c.h.b16 %v1599
    %v2921 = vunpack.c.l.b16 %v1600
    %v2922 = vunpack.c.h.b16 %v1600
    %v2923 = vunpack.c.l.b16 %v1601
    %v2924 = vunpack.c.h.b16 %v1601
    %v2925 = vunpack.c.l.b16 %v1602
    %v2926 = vunpack.c.h.b16 %v1602
    %v2927 = vunpack.c.l.b16 %v1603
    %v2928 = vunpack.c.h.b16 %v1603
    %v2929 = vunpack.c.l.b16 %v1604
    %v2930 = vunpack.c.h.b16 %v1604
    %v2931 = vunpack.c.l.b16 %v1605
    %v2932 = vunpack.c.h.b16 %v1605
    %v2933 = vunpack.c.l.b16 %v1606
    %v2934 = vunpack.c.h.b16 %v1606
    %v2935 = vunpack.c.l.b16 %v1607
    %v2936 = vunpack.c.h.b16 %v1607
    %v2937 = vunpack.c.l.b16 %v1608
    %v2938 = vunpack.c.h.b16 %v1608
    %v2939 = vunpack.c.l.b16 %v1609
    %v2940 = vunpack.c.h.b16 %v1609
    %v2941 = vunpack.c.l.b16 %v1610
    %v2942 = vunpack.c.h.b16 %v1610
    %v2943 = vunpack.c.l.b16 %v1611
    %v2944 = vunpack.c.h.b16 %v1611
    %v2945 = vunpack.c.l.b16 %v1612
    %v2946 = vunpack.c.h.b16 %v1612
    %v2947 = vunpack.c.l.b16 %v1613
    %v2948 = vunpack.c.h.b16 %v1613
    %v2949 = vunpack.c.l.b16 %v1614
    %v2950 = vunpack.c.h.b16 %v1614
    %v2951 = vunpack.c.l.b16 %v1615
    %v2952 = vunpack.c.h.b16 %v1615
    %v2953 = vunpack.c.l.b16 %v1616
    %v2954 = vunpack.c.h.b16 %v1616
    %v2955 = vunpack.c.l.b16 %v1617
    %v2956 = vunpack.c.h.b16 %v1617
    %v2957 = vunpack.c.l.b16 %v1618
    %v2958 = vunpack.c.h.b16 %v1618
    %v2959 = vunpack.c.l.b16 %v1619
    %v2960 = vunpack.c.h.b16 %v1619
    %v2961 = vunpack.c.l.b16 %v1620
    %v2962 = vunpack.c.h.b16 %v1620
    %v2963 = vunpack.c.l.b16 %v1621
    %v2964 = vunpack.c.h.b16 %v1621
    %v2965 = vunpack.c.l.b16 %v1622
    %v2966 = vunpack.c.h.b16 %v1622
    %v2967 = vunpack.c.l.b16 %v1623
    %v2968 = vunpack.c.h.b16 %v1623
    %v2969 = vunpack.c.l.b16 %v1624
    %v2970 = vunpack.c.h.b16 %v1624
    %v2971 = vunpack.c.l.b16 %v1625
    %v2972 = vunpack.c.h.b16 %v1625
    %v2973 = vunpack.c.l.b16 %v1626
    %v2974 = vunpack.c.h.b16 %v1626
    %v2975 = vunpack.c.l.b16 %v1627
    %v2976 = vunpack.c.h.b16 %v1627
    %v2977 = vunpack.c.l.b16 %v1628
    %v2978 = vunpack.c.h.b16 %v1628
    %v2979 = vunpack.c.l.b16 %v1629
    %v2980 = vunpack.c.h.b16 %v1629
    %v2981 = vunpack.c.l.b16 %v1630
    %v2982 = vunpack.c.h.b16 %v1630
    %v2983 = vunpack.c.l.b16 %v1631
    %v2984 = vunpack.c.h.b16 %v1631
    %v2985 = vunpack.c.l.b16 %v1632
    %v2986 = vunpack.c.h.b16 %v1632
    %v2987 = vunpack.c.l.b16 %v1633
    %v2988 = vunpack.c.h.b16 %v1633
    %v2989 = vunpack.c.l.b16 %v1634
    %v2990 = vunpack.c.h.b16 %v1634
    %v2991 = vunpack.c.l.b16 %v1635
    %v2992 = vunpack.c.h.b16 %v1635
    %v2993 = vunpack.c.l.b16 %v1636
    %v2994 = vunpack.c.h.b16 %v1636
    %v2995 = vunpack.c.l.b16 %v1637
    %v2996 = vunpack.c.h.b16 %v1637
    %v2997 = vunpack.c.l.b16 %v1638
    %v2998 = vunpack.c.h.b16 %v1638
    %v2999 = vunpack.c.l.b16 %v1639
    %v3000 = vunpack.c.h.b16 %v1639
    %v3001 = vunpack.c.l.b16 %v1640
    %v3002 = vunpack.c.h.b16 %v1640
    %v3003 = vunpack.c.l.b16 %v1641
    %v3004 = vunpack.c.h.b16 %v1641
    %v3005 = vunpack.c.l.b16 %v1642
    %v3006 = vunpack.c.h.b16 %v1642
    %v3007 = vunpack.c.l.b16 %v1643
    %v3008 = vunpack.c.h.b16 %v1643
    %v3009 = vunpack.c.l.b16 %v1644
    %v3010 = vunpack.c.h.b16 %v1644
    %v3011 = vunpack.c.l.b16 %v1645
    %v3012 = vunpack.c.h.b16 %v1645
    %v3013 = vunpack.c.l.b16 %v1646
    %v3014 = vunpack.c.h.b16 %v1646
    %v3015 = vunpack.c.l.b16 %v1647
    %v3016 = vunpack.c.h.b16 %v1647
    %v3017 = vunpack.c.l.b16 %v1648
    %v3018 = vunpack.c.h.b16 %v1648
    %v3019 = vunpack.c.l.b16 %v1649
    %v3020 = vunpack.c.h.b16 %v1649
    %v3021 = vunpack.c.l.b16 %v1650
    %v3022 = vunpack.c.h.b16 %v1650
    %v3023 = vunpack.c.l.b16 %v1651
    %v3024 = vunpack.c.h.b16 %v1651
    %v3025 = vunpack.c.l.b16 %v1652
    %v3026 = vunpack.c.h.b16 %v1652
    %v3027 = vunpack.c.l.b16 %v1653
    %v3028 = vunpack.c.h.b16 %v1653
    %v3029 = vunpack.c.l.b16 %v1654
    %v3030 = vunpack.c.h.b16 %v1654
    %v3031 = vunpack.c.l.b16 %v1655
    %v3032 = vunpack.c.h.b16 %v1655
    %v3033 = vunpack.c.l.b16 %v1656
    %v3034 = vunpack.c.h.b16 %v1656
    %v3035 = vunpack.c.l.b16 %v1657
    %v3036 = vunpack.c.h.b16 %v1657
    %v3037 = vunpack.c.l.b16 %v1658
    %v3038 = vunpack.c.h.b16 %v1658
    %v3039 = vunpack.c.l.b16 %v1659
    %v3040 = vunpack.c.h.b16 %v1659
    %v3041 = vunpack.c.l.b16 %v1660
    %v3042 = vunpack.c.h.b16 %v1660
    %v3043 = vunpack.c.l.b16 %v1661
    %v3044 = vunpack.c.h.b16 %v1661
    %v3045 = vunpack.c.l.b16 %v1662
    %v3046 = vunpack.c.h.b16 %v1662
    %v3047 = vunpack.c.l.b16 %v1663
    %v3048 = vunpack.c.h.b16 %v1663
    %v3049 = vunpack.c.l.b16 %v1664
    %v3050 = vunpack.c.h.b16 %v1664
    %v3051 = vunpack.c.l.b16 %v1665
    %v3052 = vunpack.c.h.b16 %v1665
    %v3053 = vunpack.c.l.b16 %v1666
    %v3054 = vunpack.c.h.b16 %v1666
    %v3055 = vunpack.c.l.b16 %v1667
    %v3056 = vunpack.c.h.b16 %v1667
    %v3057 = vunpack.c.l.b16 %v1668
    %v3058 = vunpack.c.h.b16 %v1668
    %v3059 = vunpack.c.l.b16 %v1669
    %v3060 = vunpack.c.h.b16 %v1669
    %v3061 = vunpack.c.l.b16 %v1670
    %v3062 = vunpack.c.h.b16 %v1670
    %v3063 = vunpack.c.l.b16 %v1671
    %v3064 = vunpack.c.h.b16 %v1671
    %v3065 = vunpack.c.l.b16 %v1672
    %v3066 = vunpack.c.h.b16 %v1672
    %v3067 = vunpack.c.l.b16 %v1673
    %v3068 = vunpack.c.h.b16 %v1673
    %v3069 = vunpack.c.l.b16 %v1674
    %v3070 = vunpack.c.h.b16 %v1674
    %v3071 = vunpack.c.l.b16 %v1675
    %v3072 = vunpack.c.h.b16 %v1675
    %v3073 = vunpack.c.l.b16 %v1676
    %v3074 = vunpack.c.h.b16 %v1676
    %v3075 = vunpack.c.l.b16 %v1677
    %v3076 = vunpack.c.h.b16 %v1677
    %v3077 = vunpack.c.l.b16 %v1678
    %v3078 = vunpack.c.h.b16 %v1678
    %v3079 = vunpack.c.l.b16 %v1679
    %v3080 = vunpack.c.h.b16 %v1679
    %v3081 = vunpack.c.l.b16 %v1680
    %v3082 = vunpack.c.h.b16 %v1680
    %v3083 = vunpack.c.l.b16 %v1681
    %v3084 = vunpack.c.h.b16 %v1681
    %v3085 = vunpack.c.l.b16 %v1682
    %v3086 = vunpack.c.h.b16 %v1682
    %v3087 = vunpack.c.l.b16 %v1683
    %v3088 = vunpack.c.h.b16 %v1683
    %v3089 = vunpack.c.l.b16 %v1684
    %v3090 = vunpack.c.h.b16 %v1684
    %v3091 = vunpack.c.l.b16 %v1685
    %v3092 = vunpack.c.h.b16 %v1685
    %v3093 = vunpack.c.l.b16 %v1686
    %v3094 = vunpack.c.h.b16 %v1686
    %v3095 = vunpack.c.l.b16 %v1687
    %v3096 = vunpack.c.h.b16 %v1687
    %v3097 = vunpack.c.l.b16 %v1688
    %v3098 = vunpack.c.h.b16 %v1688
    %v3099 = vunpack.c.l.b16 %v1689
    %v3100 = vunpack.c.h.b16 %v1689
    %v3101 = vunpack.c.l.b16 %v1690
    %v3102 = vunpack.c.h.b16 %v1690
    %v3103 = vunpack.c.l.b16 %v1691
    %v3104 = vunpack.c.h.b16 %v1691
    %v3105 = vunpack.c.l.b16 %v1692
    %v3106 = vunpack.c.h.b16 %v1692
    %v3107 = vunpack.c.l.b16 %v1693
    %v3108 = vunpack.c.h.b16 %v1693
    %v3109 = vunpack.c.l.b16 %v1694
    %v3110 = vunpack.c.h.b16 %v1694
    %v3111 = vunpack.c.l.b16 %v1695
    %v3112 = vunpack.c.h.b16 %v1695
    %v3113 = vunpack.c.l.b16 %v1696
    %v3114 = vunpack.c.h.b16 %v1696
    %v3115 = vunpack.c.l.b16 %v1697
    %v3116 = vunpack.c.h.b16 %v1697
    %v3117 = vunpack.c.l.b16 %v1698
    %v3118 = vunpack.c.h.b16 %v1698
    %v3119 = vunpack.c.l.b16 %v1699
    %v3120 = vunpack.c.h.b16 %v1699
    %v3121 = vunpack.c.l.b16 %v1700
    %v3122 = vunpack.c.h.b16 %v1700
    %v3123 = vunpack.c.l.b16 %v1701
    %v3124 = vunpack.c.h.b16 %v1701
    %v3125 = vunpack.c.l.b16 %v1702
    %v3126 = vunpack.c.h.b16 %v1702
    %v3127 = vunpack.c.l.b16 %v1703
    %v3128 = vunpack.c.h.b16 %v1703
    %v3129 = vunpack.c.l.b16 %v1704
    %v3130 = vunpack.c.h.b16 %v1704
    %v3131 = vunpack.c.l.b16 %v1705
    %v3132 = vunpack.c.h.b16 %v1705
    %v3133 = vunpack.c.l.b16 %v1706
    %v3134 = vunpack.c.h.b16 %v1706
    %v3135 = vunpack.c.l.b16 %v1707
    %v3136 = vunpack.c.h.b16 %v1707
    %v3137 = vunpack.c.l.b16 %v1708
    %v3138 = vunpack.c.h.b16 %v1708
    %v3139 = vunpack.c.l.b16 %v1709
    %v3140 = vunpack.c.h.b16 %v1709
    %v3141 = vunpack.c.l.b16 %v1710
    %v3142 = vunpack.c.h.b16 %v1710
    %v3143 = vunpack.c.l.b16 %v1711
    %v3144 = vunpack.c.h.b16 %v1711
    %v3145 = vunpack.c.l.b16 %v1712
    %v3146 = vunpack.c.h.b16 %v1712
    %v3147 = vunpack.c.l.b16 %v1713
    %v3148 = vunpack.c.h.b16 %v1713
    %v3149 = vunpack.c.l.b16 %v1714
    %v3150 = vunpack.c.h.b16 %v1714
    %v3151 = vunpack.c.l.b16 %v1715
    %v3152 = vunpack.c.h.b16 %v1715
    %v3153 = vunpack.c.l.b16 %v1716
    %v3154 = vunpack.c.h.b16 %v1716
    %v3155 = vunpack.c.l.b16 %v1717
    %v3156 = vunpack.c.h.b16 %v1717
    %v3157 = vunpack.c.l.b16 %v1718
    %v3158 = vunpack.c.h.b16 %v1718
    %v3159 = vunpack.c.l.b16 %v1719
    %v3160 = vunpack.c.h.b16 %v1719
    %v3161 = vunpack.c.l.b16 %v1720
    %v3162 = vunpack.c.h.b16 %v1720
    %v3163 = vunpack.c.l.b16 %v1721
    %v3164 = vunpack.c.h.b16 %v1721
    %v3165 = vunpack.c.l.b16 %v1722
    %v3166 = vunpack.c.h.b16 %v1722
    %v3167 = vunpack.c.l.b16 %v1723
    %v3168 = vunpack.c.h.b16 %v1723
    %v3169 = vunpack.c.l.b16 %v1724
    %v3170 = vunpack.c.h.b16 %v1724
    %v3171 = vunpack.c.l.b16 %v1725
    %v3172 = vunpack.c.h.b16 %v1725
    %v3173 = vunpack.c.l.b16 %v1726
    %v3174 = vunpack.c.h.b16 %v1726
    %v3175 = vunpack.c.l.b16 %v1727
    %v3176 = vunpack.c.h.b16 %v1727
    %v3177 = vunpack.c.l.b16 %v1728
    %v3178 = vunpack.c.h.b16 %v1728
    %v3179 = vunpack.c.l.b16 %v1729
    %v3180 = vunpack.c.h.b16 %v1729
    %v3181 = vunpack.c.l.b16 %v1730
    %v3182 = vunpack.c.h.b16 %v1730
    %v3183 = vunpack.c.l.b16 %v1731
    %v3184 = vunpack.c.h.b16 %v1731
    %v3185 = vunpack.c.l.b16 %v1732
    %v3186 = vunpack.c.h.b16 %v1732
    %v3187 = vunpack.c.l.b16 %v1733
    %v3188 = vunpack.c.h.b16 %v1733
    %v3189 = vunpack.c.l.b16 %v1734
    %v3190 = vunpack.c.h.b16 %v1734
    %v3191 = vunpack.c.l.b16 %v1735
    %v3192 = vunpack.c.h.b16 %v1735
    %v3193 = vunpack.c.l.b16 %v1736
    %v3194 = vunpack.c.h.b16 %v1736
    %v3195 = vunpack.c.l.b16 %v1737
    %v3196 = vunpack.c.h.b16 %v1737
    %v3197 = vunpack.c.l.b16 %v1738
    %v3198 = vunpack.c.h.b16 %v1738
    %v3199 = vunpack.c.l.b16 %v1739
    %v3200 = vunpack.c.h.b16 %v1739
    %v3201 = vunpack.c.l.b16 %v1740
    %v3202 = vunpack.c.h.b16 %v1740
    %v3203 = vunpack.c.l.b16 %v1741
    %v3204 = vunpack.c.h.b16 %v1741
    %v3205 = vunpack.c.l.b16 %v1742
    %v3206 = vunpack.c.h.b16 %v1742
    %v3207 = vunpack.c.l.b16 %v1743
    %v3208 = vunpack.c.h.b16 %v1743
    %v3209 = vunpack.c.l.b16 %v1744
    %v3210 = vunpack.c.h.b16 %v1744
    %v3211 = vunpack.c.l.b16 %v1745
    %v3212 = vunpack.c.h.b16 %v1745
    %v3213 = vunpack.c.l.b16 %v1746
    %v3214 = vunpack.c.h.b16 %v1746
    %v3215 = vunpack.c.l.b16 %v1747
    %v3216 = vunpack.c.h.b16 %v1747
    %v3217 = vunpack.c.l.b16 %v1748
    %v3218 = vunpack.c.h.b16 %v1748
    %v3219 = vunpack.c.l.b16 %v1749
    %v3220 = vunpack.c.h.b16 %v1749
    %v3221 = vunpack.c.l.b16 %v1750
    %v3222 = vunpack.c.h.b16 %v1750
    %v3223 = vunpack.c.l.b16 %v1751
    %v3224 = vunpack.c.h.b16 %v1751
    %v3225 = vunpack.c.l.b16 %v1752
    %v3226 = vunpack.c.h.b16 %v1752
    %v3227 = vunpack.c.l.b16 %v1753
    %v3228 = vunpack.c.h.b16 %v1753
    %v3229 = vunpack.c.l.b16 %v1754
    %v3230 = vunpack.c.h.b16 %v1754
    %v3231 = vunpack.c.l.b16 %v1755
    %v3232 = vunpack.c.h.b16 %v1755
    %v3233 = vunpack.c.l.b16 %v1756
    %v3234 = vunpack.c.h.b16 %v1756
    %v3235 = vunpack.c.l.b16 %v1757
    %v3236 = vunpack.c.h.b16 %v1757
    %v3237 = vunpack.c.l.b16 %v1758
    %v3238 = vunpack.c.h.b16 %v1758
    %v3239 = vunpack.c.l.b16 %v1759
    %v3240 = vunpack.c.h.b16 %v1759
    %v3241 = vunpack.c.l.b16 %v1760
    %v3242 = vunpack.c.h.b16 %v1760
    %v3243 = vunpack.c.l.b16 %v1761
    %v3244 = vunpack.c.h.b16 %v1761
    %v3245 = vunpack.c.l.b16 %v1762
    %v3246 = vunpack.c.h.b16 %v1762
    %v3247 = vunpack.c.l.b16 %v1763
    %v3248 = vunpack.c.h.b16 %v1763
    %v3249 = vunpack.c.l.b16 %v1764
    %v3250 = vunpack.c.h.b16 %v1764
    %v3251 = vunpack.c.l.b16 %v1765
    %v3252 = vunpack.c.h.b16 %v1765
    %v3253 = vunpack.c.l.b16 %v1766
    %v3254 = vunpack.c.h.b16 %v1766
    %v3255 = vunpack.c.l.b16 %v1767
    %v3256 = vunpack.c.h.b16 %v1767
    %v3257 = vunpack.c.l.b16 %v1768
    %v3258 = vunpack.c.h.b16 %v1768
    %v3259 = vunpack.c.l.b16 %v1769
    %v3260 = vunpack.c.h.b16 %v1769
    %v3261 = vunpack.c.l.b16 %v1770
    %v3262 = vunpack.c.h.b16 %v1770
    %v3263 = vunpack.c.l.b16 %v1771
    %v3264 = vunpack.c.h.b16 %v1771
    %v3265 = vunpack.c.l.b16 %v1772
    %v3266 = vunpack.c.h.b16 %v1772
    %v3267 = vunpack.c.l.b16 %v1773
    %v3268 = vunpack.c.h.b16 %v1773
    %v3269 = vunpack.c.l.b16 %v1774
    %v3270 = vunpack.c.h.b16 %v1774
    %v3271 = vunpack.c.l.b16 %v1775
    %v3272 = vunpack.c.h.b16 %v1775
    %v3273 = vunpack.c.l.b16 %v1776
    %v3274 = vunpack.c.h.b16 %v1776
    %v3275 = vunpack.c.l.b16 %v1777
    %v3276 = vunpack.c.h.b16 %v1777
    %v3277 = vunpack.c.l.b16 %v1778
    %v3278 = vunpack.c.h.b16 %v1778
    %v3279 = vunpack.c.l.b16 %v1779
    %v3280 = vunpack.c.h.b16 %v1779
    %v3281 = vunpack.c.l.b16 %v1780
    %v3282 = vunpack.c.h.b16 %v1780
    %v3283 = vunpack.c.l.b16 %v1781
    %v3284 = vunpack.c.h.b16 %v1781
    %v3285 = vunpack.c.l.b16 %v1782
    %v3286 = vunpack.c.h.b16 %v1782
    %v3287 = vunpack.c.l.b16 %v1783
    %v3288 = vunpack.c.h.b16 %v1783
    %v3289 = vunpack.c.l.b16 %v1784
    %v3290 = vunpack.c.h.b16 %v1784
    %v3291 = vunpack.c.l.b16 %v1785
    %v3292 = vunpack.c.h.b16 %v1785
    %v3293 = vunpack.c.l.b16 %v1786
    %v3294 = vunpack.c.h.b16 %v1786
    %v3295 = vunpack.c.l.b16 %v1787
    %v3296 = vunpack.c.h.b16 %v1787
    %v3297 = vunpack.c.l.b16 %v1788
    %v3298 = vunpack.c.h.b16 %v1788
    %v3299 = vunpack.c.l.b16 %v1789
    %v3300 = vunpack.c.h.b16 %v1789
    %v3301 = vunpack.c.l.b16 %v1790
    %v3302 = vunpack.c.h.b16 %v1790
    %v3303 = vunpack.c.l.b16 %v1791
    %v3304 = vunpack.c.h.b16 %v1791
    %v3305 = vunpack.c.l.b16 %v1792
    %v3306 = vunpack.c.h.b16 %v1792
    %v3307 = vunpack.c.l.b16 %v1793
    %v3308 = vunpack.c.h.b16 %v1793
    %v3309 = vunpack.c.l.b16 %v1794
    %v3310 = vunpack.c.h.b16 %v1794
    %v3311 = vunpack.c.l.b16 %v1795
    %v3312 = vunpack.c.h.b16 %v1795
    %v3313 = vunpack.c.l.b16 %v1796
    %v3314 = vunpack.c.h.b16 %v1796
    %v3315 = vunpack.c.l.b16 %v1797
    %v3316 = vunpack.c.h.b16 %v1797
    %v3317 = vunpack.c.l.b16 %v1798
    %v3318 = vunpack.c.h.b16 %v1798
    %v3319 = vunpack.c.l.b16 %v1799
    %v3320 = vunpack.c.h.b16 %v1799
    %v3321 = vunpack.c.l.b16 %v1800
    %v3322 = vunpack.c.h.b16 %v1800
    %v3323 = vunpack.c.l.b16 %v1801
    %v3324 = vunpack.c.h.b16 %v1801
    %v3325 = vunpack.c.l.b16 %v1802
    %v3326 = vunpack.c.h.b16 %v1802
    %v3327 = vunpack.c.l.b16 %v1803
    %v3328 = vunpack.c.h.b16 %v1803
    %v3329 = vunpack.c.l.b16 %v1804
    %v3330 = vunpack.c.h.b16 %v1804
    %v3331 = vunpack.c.l.b16 %v1805
    %v3332 = vunpack.c.h.b16 %v1805
    %v3333 = vunpack.c.l.b16 %v1806
    %v3334 = vunpack.c.h.b16 %v1806
    %v3335 = vunpack.c.l.b16 %v1807
    %v3336 = vunpack.c.h.b16 %v1807
    %v3337 = vunpack.c.l.b16 %v1808
    %v3338 = vunpack.c.h.b16 %v1808
    %v3339 = vunpack.c.l.b16 %v1809
    %v3340 = vunpack.c.h.b16 %v1809
    %v3341 = vunpack.c.l.b16 %v1810
    %v3342 = vunpack.c.h.b16 %v1810
    %v3343 = vunpack.c.l.b16 %v1811
    %v3344 = vunpack.c.h.b16 %v1811
    %v3345 = vunpack.c.l.b16 %v1812
    %v3346 = vunpack.c.h.b16 %v1812
    %v3347 = vunpack.c.l.b16 %v1813
    %v3348 = vunpack.c.h.b16 %v1813
    %v3349 = vunpack.c.l.b16 %v1814
    %v3350 = vunpack.c.h.b16 %v1814
    %v3351 = vpack.c.b16 %v2331, %v2327
    %v3352 = vpack.c.b16 %v2332, %v2328
    %v3353 = vpack.c.b16 %v2333, %v2329
    %v3354 = vpack.c.b16 %v2334, %v2330
    %v3355 = vpack.c.b16 %v2339, %v2335
    %v3356 = vpack.c.b16 %v2340, %v2336
    %v3357 = vpack.c.b16 %v2341, %v2337
    %v3358 = vpack.c.b16 %v2342, %v2338
    %v3359 = vpack.c.b16 %v2347, %v2343
    %v3360 = vpack.c.b16 %v2348, %v2344
    %v3361 = vpack.c.b16 %v2349, %v2345
    %v3362 = vpack.c.b16 %v2350, %v2346
    %v3363 = vpack.c.b16 %v2355, %v2351
    %v3364 = vpack.c.b16 %v2356, %v2352
    %v3365 = vpack.c.b16 %v2357, %v2353
    %v3366 = vpack.c.b16 %v2358, %v2354
    %v3367 = vpack.c.b16 %v2363, %v2359
    %v3368 = vpack.c.b16 %v2364, %v2360
    %v3369 = vpack.c.b16 %v2365, %v2361
    %v3370 = vpack.c.b16 %v2366, %v2362
    %v3371 = vpack.c.b16 %v2371, %v2367
    %v3372 = vpack.c.b16 %v2372, %v2368
    %v3373 = vpack.c.b16 %v2373, %v2369
    %v3374 = vpack.c.b16 %v2374, %v2370
    %v3375 = vpack.c.b16 %v2379, %v2375
    %v3376 = vpack.c.b16 %v2380, %v2376
    %v3377 = vpack.c.b16 %v2381, %v2377
    %v3378 = vpack.c.b16 %v2382, %v2378
    %v3379 = vpack.c.b16 %v2387, %v2383
    %v3380 = vpack.c.b16 %v2388, %v2384
    %v3381 = vpack.c.b16 %v2389, %v2385
    %v3382 = vpack.c.b16 %v2390, %v2386
    %v3383 = vpack.c.b16 %v2395, %v2391
    %v3384 = vpack.c.b16 %v2396, %v2392
    %v3385 = vpack.c.b16 %v2397, %v2393
    %v3386 = vpack.c.b16 %v2398, %v2394
    %v3387 = vpack.c.b16 %v2403, %v2399
    %v3388 = vpack.c.b16 %v2404, %v2400
    %v3389 = vpack.c.b16 %v2405, %v2401
    %v3390 = vpack.c.b16 %v2406, %v2402
    %v3391 = vpack.c.b16 %v2411, %v2407
    %v3392 = vpack.c.b16 %v2412, %v2408
    %v3393 = vpack.c.b16 %v2413, %v2409
    %v3394 = vpack.c.b16 %v2414, %v2410
    %v3395 = vpack.c.b16 %v2419, %v2415
    %v3396 = vpack.c.b16 %v2420, %v2416
    %v3397 = vpack.c.b16 %v2421, %v2417
    %v3398 = vpack.c.b16 %v2422, %v2418
    %v3399 = vpack.c.b16 %v2427, %v2423
    %v3400 = vpack.c.b16 %v2428, %v2424
    %v3401 = vpack.c.b16 %v2429, %v2425
    %v3402 = vpack.c.b16 %v2430, %v2426
    %v3403 = vpack.c.b16 %v2435, %v2431
    %v3404 = vpack.c.b16 %v2436, %v2432
    %v3405 = vpack.c.b16 %v2437, %v2433
    %v3406 = vpack.c.b16 %v2438, %v2434
    %v3407 = vpack.c.b16 %v2443, %v2439
    %v3408 = vpack.c.b16 %v2444, %v2440
    %v3409 = vpack.c.b16 %v2445, %v2441
    %v3410 = vpack.c.b16 %v2446, %v2442
    %v3411 = vpack.c.b16 %v2451, %v2447
    %v3412 = vpack.c.b16 %v2452, %v2448
    %v3413 = vpack.c.b16 %v2453, %v2449
    %v3414 = vpack.c.b16 %v2454, %v2450
    %v3415 = vpack.c.b16 %v2459, %v2455
    %v3416 = vpack.c.b16 %v2460, %v2456
    %v3417 = vpack.c.b16 %v2461, %v2457
    %v3418 = vpack.c.b16 %v2462, %v2458
    %v3419 = vpack.c.b16 %v2467, %v2463
    %v3420 = vpack.c.b16 %v2468, %v2464
    %v3421 = vpack.c.b16 %v2469, %v2465
    %v3422 = vpack.c.b16 %v2470, %v2466
    %v3423 = vpack.c.b16 %v2475, %v2471
    %v3424 = vpack.c.b16 %v2476, %v2472
    %v3425 = vpack.c.b16 %v2477, %v2473
    %v3426 = vpack.c.b16 %v2478, %v2474
    %v3427 = vpack.c.b16 %v2483, %v2479
    %v3428 = vpack.c.b16 %v2484, %v2480
    %v3429 = vpack.c.b16 %v2485, %v2481
    %v3430 = vpack.c.b16 %v2486, %v2482
    %v3431 = vpack.c.b16 %v2491, %v2487
    %v3432 = vpack.c.b16 %v2492, %v2488
    %v3433 = vpack.c.b16 %v2493, %v2489
    %v3434 = vpack.c.b16 %v2494, %v2490
    %v3435 = vpack.c.b16 %v2499, %v2495
    %v3436 = vpack.c.b16 %v2500, %v2496
    %v3437 = vpack.c.b16 %v2501, %v2497
    %v3438 = vpack.c.b16 %v2502, %v2498
    %v3439 = vpack.c.b16 %v2507, %v2503
    %v3440 = vpack.c.b16 %v2508, %v2504
    %v3441 = vpack.c.b16 %v2509, %v2505
    %v3442 = vpack.c.b16 %v2510, %v2506
    %v3443 = vpack.c.b16 %v2515, %v2511
    %v3444 = vpack.c.b16 %v2516, %v2512
    %v3445 = vpack.c.b16 %v2517, %v2513
    %v3446 = vpack.c.b16 %v2518, %v2514
    %v3447 = vpack.c.b16 %v2523, %v2519
    %v3448 = vpack.c.b16 %v2524, %v2520
    %v3449 = vpack.c.b16 %v2525, %v2521
    %v3450 = vpack.c.b16 %v2526, %v2522
    %v3451 = vpack.c.b16 %v2531, %v2527
    %v3452 = vpack.c.b16 %v2532, %v2528
    %v3453 = vpack.c.b16 %v2533, %v2529
    %v3454 = vpack.c.b16 %v2534, %v2530
    %v3455 = vpack.c.b16 %v2539, %v2535
    %v3456 = vpack.c.b16 %v2540, %v2536
    %v3457 = vpack.c.b16 %v2541, %v2537
    %v3458 = vpack.c.b16 %v2542, %v2538
    %v3459 = vpack.c.b16 %v2547, %v2543
    %v3460 = vpack.c.b16 %v2548, %v2544
    %v3461 = vpack.c.b16 %v2549, %v2545
    %v3462 = vpack.c.b16 %v2550, %v2546
    %v3463 = vpack.c.b16 %v2555, %v2551
    %v3464 = vpack.c.b16 %v2556, %v2552
    %v3465 = vpack.c.b16 %v2557, %v2553
    %v3466 = vpack.c.b16 %v2558, %v2554
    %v3467 = vpack.c.b16 %v2563, %v2559
    %v3468 = vpack.c.b16 %v2564, %v2560
    %v3469 = vpack.c.b16 %v2565, %v2561
    %v3470 = vpack.c.b16 %v2566, %v2562
    %v3471 = vpack.c.b16 %v2571, %v2567
    %v3472 = vpack.c.b16 %v2572, %v2568
    %v3473 = vpack.c.b16 %v2573, %v2569
    %v3474 = vpack.c.b16 %v2574, %v2570
    %v3475 = vpack.c.b16 %v2579, %v2575
    %v3476 = vpack.c.b16 %v2580, %v2576
    %v3477 = vpack.c.b16 %v2581, %v2577
    %v3478 = vpack.c.b16 %v2582, %v2578
    %v3479 = vpack.c.b16 %v2587, %v2583
    %v3480 = vpack.c.b16 %v2588, %v2584
    %v3481 = vpack.c.b16 %v2589, %v2585
    %v3482 = vpack.c.b16 %v2590, %v2586
    %v3483 = vpack.c.b16 %v2595, %v2591
    %v3484 = vpack.c.b16 %v2596, %v2592
    %v3485 = vpack.c.b16 %v2597, %v2593
    %v3486 = vpack.c.b16 %v2598, %v2594
    %v3487 = vpack.c.b16 %v2603, %v2599
    %v3488 = vpack.c.b16 %v2604, %v2600
    %v3489 = vpack.c.b16 %v2605, %v2601
    %v3490 = vpack.c.b16 %v2606, %v2602
    %v3491 = vpack.c.b16 %v2611, %v2607
    %v3492 = vpack.c.b16 %v2612, %v2608
    %v3493 = vpack.c.b16 %v2613, %v2609
    %v3494 = vpack.c.b16 %v2614, %v2610
    %v3495 = vpack.c.b16 %v2619, %v2615
    %v3496 = vpack.c.b16 %v2620, %v2616
    %v3497 = vpack.c.b16 %v2621, %v2617
    %v3498 = vpack.c.b16 %v2622, %v2618
    %v3499 = vpack.c.b16 %v2627, %v2623
    %v3500 = vpack.c.b16 %v2628, %v2624
    %v3501 = vpack.c.b16 %v2629, %v2625
    %v3502 = vpack.c.b16 %v2630, %v2626
    %v3503 = vpack.c.b16 %v2635, %v2631
    %v3504 = vpack.c.b16 %v2636, %v2632
    %v3505 = vpack.c.b16 %v2637, %v2633
    %v3506 = vpack.c.b16 %v2638, %v2634
    %v3507 = vpack.c.b16 %v2643, %v2639
    %v3508 = vpack.c.b16 %v2644, %v2640
    %v3509 = vpack.c.b16 %v2645, %v2641
    %v3510 = vpack.c.b16 %v2646, %v2642
    %v3511 = vpack.c.b16 %v2651, %v2647
    %v3512 = vpack.c.b16 %v2652, %v2648
    %v3513 = vpack.c.b16 %v2653, %v2649
    %v3514 = vpack.c.b16 %v2654, %v2650
    %v3515 = vpack.c.b16 %v2659, %v2655
    %v3516 = vpack.c.b16 %v2660, %v2656
    %v3517 = vpack.c.b16 %v2661, %v2657
    %v3518 = vpack.c.b16 %v2662, %v2658
    %v3519 = vpack.c.b16 %v2667, %v2663
    %v3520 = vpack.c.b16 %v2668, %v2664
    %v3521 = vpack.c.b16 %v2669, %v2665
    %v3522 = vpack.c.b16 %v2670, %v2666
    %v3523 = vpack.c.b16 %v2675, %v2671
    %v3524 = vpack.c.b16 %v2676, %v2672
    %v3525 = vpack.c.b16 %v2677, %v2673
    %v3526 = vpack.c.b16 %v2678, %v2674
    %v3527 = vpack.c.b16 %v2683, %v2679
    %v3528 = vpack.c.b16 %v2684, %v2680
    %v3529 = vpack.c.b16 %v2685, %v2681
    %v3530 = vpack.c.b16 %v2686, %v2682
    %v3531 = vpack.c.b16 %v2691, %v2687
    %v3532 = vpack.c.b16 %v2692, %v2688
    %v3533 = vpack.c.b16 %v2693, %v2689
    %v3534 = vpack.c.b16 %v2694, %v2690
    %v3535 = vpack.c.b16 %v2699, %v2695
    %v3536 = vpack.c.b16 %v2700, %v2696
    %v3537 = vpack.c.b16 %v2701, %v2697
    %v3538 = vpack.c.b16 %v2702, %v2698
    %v3539 = vpack.c.b16 %v2707, %v2703
    %v3540 = vpack.c.b16 %v2708, %v2704
    %v3541 = vpack.c.b16 %v2709, %v2705
    %v3542 = vpack.c.b16 %v2710, %v2706
    %v3543 = vpack.c.b16 %v2715, %v2711
    %v3544 = vpack.c.b16 %v2716, %v2712
    %v3545 = vpack.c.b16 %v2717, %v2713
    %v3546 = vpack.c.b16 %v2718, %v2714
    %v3547 = vpack.c.b16 %v2723, %v2719
    %v3548 = vpack.c.b16 %v2724, %v2720
    %v3549 = vpack.c.b16 %v2725, %v2721
    %v3550 = vpack.c.b16 %v2726, %v2722
    %v3551 = vpack.c.b16 %v2731, %v2727
    %v3552 = vpack.c.b16 %v2732, %v2728
    %v3553 = vpack.c.b16 %v2733, %v2729
    %v3554 = vpack.c.b16 %v2734, %v2730
    %v3555 = vpack.c.b16 %v2739, %v2735
    %v3556 = vpack.c.b16 %v2740, %v2736
    %v3557 = vpack.c.b16 %v2741, %v2737
    %v3558 = vpack.c.b16 %v2742, %v2738
    %v3559 = vpack.c.b16 %v2747, %v2743
    %v3560 = vpack.c.b16 %v2748, %v2744
    %v3561 = vpack.c.b16 %v2749, %v2745
    %v3562 = vpack.c.b16 %v2750, %v2746
    %v3563 = vpack.c.b16 %v2755, %v2751
    %v3564 = vpack.c.b16 %v2756, %v2752
    %v3565 = vpack.c.b16 %v2757, %v2753
    %v3566 = vpack.c.b16 %v2758, %v2754
    %v3567 = vpack.c.b16 %v2763, %v2759
    %v3568 = vpack.c.b16 %v2764, %v2760
    %v3569 = vpack.c.b16 %v2765, %v2761
    %v3570 = vpack.c.b16 %v2766, %v2762
    %v3571 = vpack.c.b16 %v2771, %v2767
    %v3572 = vpack.c.b16 %v2772, %v2768
    %v3573 = vpack.c.b16 %v2773, %v2769
    %v3574 = vpack.c.b16 %v2774, %v2770
    %v3575 = vpack.c.b16 %v2779, %v2775
    %v3576 = vpack.c.b16 %v2780, %v2776
    %v3577 = vpack.c.b16 %v2781, %v2777
    %v3578 = vpack.c.b16 %v2782, %v2778
    %v3579 = vpack.c.b16 %v2787, %v2783
    %v3580 = vpack.c.b16 %v2788, %v2784
    %v3581 = vpack.c.b16 %v2789, %v2785
    %v3582 = vpack.c.b16 %v2790, %v2786
    %v3583 = vpack.c.b16 %v2795, %v2791
    %v3584 = vpack.c.b16 %v2796, %v2792
    %v3585 = vpack.c.b16 %v2797, %v2793
    %v3586 = vpack.c.b16 %v2798, %v2794
    %v3587 = vpack.c.b16 %v2803, %v2799
    %v3588 = vpack.c.b16 %v2804, %v2800
    %v3589 = vpack.c.b16 %v2805, %v2801
    %v3590 = vpack.c.b16 %v2806, %v2802
    %v3591 = vpack.c.b16 %v2811, %v2807
    %v3592 = vpack.c.b16 %v2812, %v2808
    %v3593 = vpack.c.b16 %v2813, %v2809
    %v3594 = vpack.c.b16 %v2814, %v2810
    %v3595 = vpack.c.b16 %v2819, %v2815
    %v3596 = vpack.c.b16 %v2820, %v2816
    %v3597 = vpack.c.b16 %v2821, %v2817
    %v3598 = vpack.c.b16 %v2822, %v2818
    %v3599 = vpack.c.b16 %v2827, %v2823
    %v3600 = vpack.c.b16 %v2828, %v2824
    %v3601 = vpack.c.b16 %v2829, %v2825
    %v3602 = vpack.c.b16 %v2830, %v2826
    %v3603 = vpack.c.b16 %v2835, %v2831
    %v3604 = vpack.c.b16 %v2836, %v2832
    %v3605 = vpack.c.b16 %v2837, %v2833
    %v3606 = vpack.c.b16 %v2838, %v2834
    %v3607 = vpack.c.b16 %v2843, %v2839
    %v3608 = vpack.c.b16 %v2844, %v2840
    %v3609 = vpack.c.b16 %v2845, %v2841
    %v3610 = vpack.c.b16 %v2846, %v2842
    %v3611 = vpack.c.b16 %v2851, %v2847
    %v3612 = vpack.c.b16 %v2852, %v2848
    %v3613 = vpack.c.b16 %v2853, %v2849
    %v3614 = vpack.c.b16 %v2854, %v2850
    %v3615 = vpack.c.b16 %v2859, %v2855
    %v3616 = vpack.c.b16 %v2860, %v2856
    %v3617 = vpack.c.b16 %v2861, %v2857
    %v3618 = vpack.c.b16 %v2862, %v2858
    %v3619 = vpack.c.b16 %v2867, %v2863
    %v3620 = vpack.c.b16 %v2868, %v2864
    %v3621 = vpack.c.b16 %v2869, %v2865
    %v3622 = vpack.c.b16 %v2870, %v2866
    %v3623 = vpack.c.b16 %v2875, %v2871
    %v3624 = vpack.c.b16 %v2876, %v2872
    %v3625 = vpack.c.b16 %v2877, %v2873
    %v3626 = vpack.c.b16 %v2878, %v2874
    %v3627 = vpack.c.b16 %v2883, %v2879
    %v3628 = vpack.c.b16 %v2884, %v2880
    %v3629 = vpack.c.b16 %v2885, %v2881
    %v3630 = vpack.c.b16 %v2886, %v2882
    %v3631 = vpack.c.b16 %v2891, %v2887
    %v3632 = vpack.c.b16 %v2892, %v2888
    %v3633 = vpack.c.b16 %v2893, %v2889
    %v3634 = vpack.c.b16 %v2894, %v2890
    %v3635 = vpack.c.b16 %v2899, %v2895
    %v3636 = vpack.c.b16 %v2900, %v2896
    %v3637 = vpack.c.b16 %v2901, %v2897
    %v3638 = vpack.c.b16 %v2902, %v2898
    %v3639 = vpack.c.b16 %v2907, %v2903
    %v3640 = vpack.c.b16 %v2908, %v2904
    %v3641 = vpack.c.b16 %v2909, %v2905
    %v3642 = vpack.c.b16 %v2910, %v2906
    %v3643 = vpack.c.b16 %v2915, %v2911
    %v3644 = vpack.c.b16 %v2916, %v2912
    %v3645 = vpack.c.b16 %v2917, %v2913
    %v3646 = vpack.c.b16 %v2918, %v2914
    %v3647 = vpack.c.b16 %v2923, %v2919
    %v3648 = vpack.c.b16 %v2924, %v2920
    %v3649 = vpack.c.b16 %v2925, %v2921
    %v3650 = vpack.c.b16 %v2926, %v2922
    %v3651 = vpack.c.b16 %v2931, %v2927
    %v3652 = vpack.c.b16 %v2932, %v2928
    %v3653 = vpack.c.b16 %v2933, %v2929
    %v3654 = vpack.c.b16 %v2934, %v2930
    %v3655 = vpack.c.b16 %v2939, %v2935
    %v3656 = vpack.c.b16 %v2940, %v2936
    %v3657 = vpack.c.b16 %v2941, %v2937
    %v3658 = vpack.c.b16 %v2942, %v2938
    %v3659 = vpack.c.b16 %v2947, %v2943
    %v3660 = vpack.c.b16 %v2948, %v2944
    %v3661 = vpack.c.b16 %v2949, %v2945
    %v3662 = vpack.c.b16 %v2950, %v2946
    %v3663 = vpack.c.b16 %v2955, %v2951
    %v3664 = vpack.c.b16 %v2956, %v2952
    %v3665 = vpack.c.b16 %v2957, %v2953
    %v3666 = vpack.c.b16 %v2958, %v2954
    %v3667 = vpack.c.b16 %v2963, %v2959
    %v3668 = vpack.c.b16 %v2964, %v2960
    %v3669 = vpack.c.b16 %v2965, %v2961
    %v3670 = vpack.c.b16 %v2966, %v2962
    %v3671 = vpack.c.b16 %v2971, %v2967
    %v3672 = vpack.c.b16 %v2972, %v2968
    %v3673 = vpack.c.b16 %v2973, %v2969
    %v3674 = vpack.c.b16 %v2974, %v2970
    %v3675 = vpack.c.b16 %v2979, %v2975
    %v3676 = vpack.c.b16 %v2980, %v2976
    %v3677 = vpack.c.b16 %v2981, %v2977
    %v3678 = vpack.c.b16 %v2982, %v2978
    %v3679 = vpack.c.b16 %v2987, %v2983
    %v3680 = vpack.c.b16 %v2988, %v2984
    %v3681 = vpack.c.b16 %v2989, %v2985
    %v3682 = vpack.c.b16 %v2990, %v2986
    %v3683 = vpack.c.b16 %v2995, %v2991
    %v3684 = vpack.c.b16 %v2996, %v2992
    %v3685 = vpack.c.b16 %v2997, %v2993
    %v3686 = vpack.c.b16 %v2998, %v2994
    %v3687 = vpack.c.b16 %v3003, %v2999
    %v3688 = vpack.c.b16 %v3004, %v3000
    %v3689 = vpack.c.b16 %v3005, %v3001
    %v3690 = vpack.c.b16 %v3006, %v3002
    %v3691 = vpack.c.b16 %v3011, %v3007
    %v3692 = vpack.c.b16 %v3012, %v3008
    %v3693 = vpack.c.b16 %v3013, %v3009
    %v3694 = vpack.c.b16 %v3014, %v3010
    %v3695 = vpack.c.b16 %v3019, %v3015
    %v3696 = vpack.c.b16 %v3020, %v3016
    %v3697 = vpack.c.b16 %v3021, %v3017
    %v3698 = vpack.c.b16 %v3022, %v3018
    %v3699 = vpack.c.b16 %v3027, %v3023
    %v3700 = vpack.c.b16 %v3028, %v3024
    %v3701 = vpack.c.b16 %v3029, %v3025
    %v3702 = vpack.c.b16 %v3030, %v3026
    %v3703 = vpack.c.b16 %v3035, %v3031
    %v3704 = vpack.c.b16 %v3036, %v3032
    %v3705 = vpack.c.b16 %v3037, %v3033
    %v3706 = vpack.c.b16 %v3038, %v3034
    %v3707 = vpack.c.b16 %v3043, %v3039
    %v3708 = vpack.c.b16 %v3044, %v3040
    %v3709 = vpack.c.b16 %v3045, %v3041
    %v3710 = vpack.c.b16 %v3046, %v3042
    %v3711 = vpack.c.b16 %v3051, %v3047
    %v3712 = vpack.c.b16 %v3052, %v3048
    %v3713 = vpack.c.b16 %v3053, %v3049
    %v3714 = vpack.c.b16 %v3054, %v3050
    %v3715 = vpack.c.b16 %v3059, %v3055
    %v3716 = vpack.c.b16 %v3060, %v3056
    %v3717 = vpack.c.b16 %v3061, %v3057
    %v3718 = vpack.c.b16 %v3062, %v3058
    %v3719 = vpack.c.b16 %v3067, %v3063
    %v3720 = vpack.c.b16 %v3068, %v3064
    %v3721 = vpack.c.b16 %v3069, %v3065
    %v3722 = vpack.c.b16 %v3070, %v3066
    %v3723 = vpack.c.b16 %v3075, %v3071
    %v3724 = vpack.c.b16 %v3076, %v3072
    %v3725 = vpack.c.b16 %v3077, %v3073
    %v3726 = vpack.c.b16 %v3078, %v3074
    %v3727 = vpack.c.b16 %v3083, %v3079
    %v3728 = vpack.c.b16 %v3084, %v3080
    %v3729 = vpack.c.b16 %v3085, %v3081
    %v3730 = vpack.c.b16 %v3086, %v3082
    %v3731 = vpack.c.b16 %v3091, %v3087
    %v3732 = vpack.c.b16 %v3092, %v3088
    %v3733 = vpack.c.b16 %v3093, %v3089
    %v3734 = vpack.c.b16 %v3094, %v3090
    %v3735 = vpack.c.b16 %v3099, %v3095
    %v3736 = vpack.c.b16 %v3100, %v3096
    %v3737 = vpack.c.b16 %v3101, %v3097
    %v3738 = vpack.c.b16 %v3102, %v3098
    %v3739 = vpack.c.b16 %v3107, %v3103
    %v3740 = vpack.c.b16 %v3108, %v3104
    %v3741 = vpack.c.b16 %v3109, %v3105
    %v3742 = vpack.c.b16 %v3110, %v3106
    %v3743 = vpack.c.b16 %v3115, %v3111
    %v3744 = vpack.c.b16 %v3116, %v3112
    %v3745 = vpack.c.b16 %v3117, %v3113
    %v3746 = vpack.c.b16 %v3118, %v3114
    %v3747 = vpack.c.b16 %v3123, %v3119
    %v3748 = vpack.c.b16 %v3124, %v3120
    %v3749 = vpack.c.b16 %v3125, %v3121
    %v3750 = vpack.c.b16 %v3126, %v3122
    %v3751 = vpack.c.b16 %v3131, %v3127
    %v3752 = vpack.c.b16 %v3132, %v3128
    %v3753 = vpack.c.b16 %v3133, %v3129
    %v3754 = vpack.c.b16 %v3134, %v3130
    %v3755 = vpack.c.b16 %v3139, %v3135
    %v3756 = vpack.c.b16 %v3140, %v3136
    %v3757 = vpack.c.b16 %v3141, %v3137
    %v3758 = vpack.c.b16 %v3142, %v3138
    %v3759 = vpack.c.b16 %v3147, %v3143
    %v3760 = vpack.c.b16 %v3148, %v3144
    %v3761 = vpack.c.b16 %v3149, %v3145
    %v3762 = vpack.c.b16 %v3150, %v3146
    %v3763 = vpack.c.b16 %v3155, %v3151
    %v3764 = vpack.c.b16 %v3156, %v3152
    %v3765 = vpack.c.b16 %v3157, %v3153
    %v3766 = vpack.c.b16 %v3158, %v3154
    %v3767 = vpack.c.b16 %v3163, %v3159
    %v3768 = vpack.c.b16 %v3164, %v3160
    %v3769 = vpack.c.b16 %v3165, %v3161
    %v3770 = vpack.c.b16 %v3166, %v3162
    %v3771 = vpack.c.b16 %v3171, %v3167
    %v3772 = vpack.c.b16 %v3172, %v3168
    %v3773 = vpack.c.b16 %v3173, %v3169
    %v3774 = vpack.c.b16 %v3174, %v3170
    %v3775 = vpack.c.b16 %v3179, %v3175
    %v3776 = vpack.c.b16 %v3180, %v3176
    %v3777 = vpack.c.b16 %v3181, %v3177
    %v3778 = vpack.c.b16 %v3182, %v3178
    %v3779 = vpack.c.b16 %v3187, %v3183
    %v3780 = vpack.c.b16 %v3188, %v3184
    %v3781 = vpack.c.b16 %v3189, %v3185
    %v3782 = vpack.c.b16 %v3190, %v3186
    %v3783 = vpack.c.b16 %v3195, %v3191
    %v3784 = vpack.c.b16 %v3196, %v3192
    %v3785 = vpack.c.b16 %v3197, %v3193
    %v3786 = vpack.c.b16 %v3198, %v3194
    %v3787 = vpack.c.b16 %v3203, %v3199
    %v3788 = vpack.c.b16 %v3204, %v3200
    %v3789 = vpack.c.b16 %v3205, %v3201
    %v3790 = vpack.c.b16 %v3206, %v3202
    %v3791 = vpack.c.b16 %v3211, %v3207
    %v3792 = vpack.c.b16 %v3212, %v3208
    %v3793 = vpack.c.b16 %v3213, %v3209
    %v3794 = vpack.c.b16 %v3214, %v3210
    %v3795 = vpack.c.b16 %v3219, %v3215
    %v3796 = vpack.c.b16 %v3220, %v3216
    %v3797 = vpack.c.b16 %v3221, %v3217
    %v3798 = vpack.c.b16 %v3222, %v3218
    %v3799 = vpack.c.b16 %v3227, %v3223
    %v3800 = vpack.c.b16 %v3228, %v3224
    %v3801 = vpack.c.b16 %v3229, %v3225
    %v3802 = vpack.c.b16 %v3230, %v3226
    %v3803 = vpack.c.b16 %v3235, %v3231
    %v3804 = vpack.c.b16 %v3236, %v3232
    %v3805 = vpack.c.b16 %v3237, %v3233
    %v3806 = vpack.c.b16 %v3238, %v3234
    %v3807 = vpack.c.b16 %v3243, %v3239
    %v3808 = vpack.c.b16 %v3244, %v3240
    %v3809 = vpack.c.b16 %v3245, %v3241
    %v3810 = vpack.c.b16 %v3246, %v3242
    %v3811 = vpack.c.b16 %v3251, %v3247
    %v3812 = vpack.c.b16 %v3252, %v3248
    %v3813 = vpack.c.b16 %v3253, %v3249
    %v3814 = vpack.c.b16 %v3254, %v3250
    %v3815 = vpack.c.b16 %v3259, %v3255
    %v3816 = vpack.c.b16 %v3260, %v3256
    %v3817 = vpack.c.b16 %v3261, %v3257
    %v3818 = vpack.c.b16 %v3262, %v3258
    %v3819 = vpack.c.b16 %v3267, %v3263
    %v3820 = vpack.c.b16 %v3268, %v3264
    %v3821 = vpack.c.b16 %v3269, %v3265
    %v3822 = vpack.c.b16 %v3270, %v3266
    %v3823 = vpack.c.b16 %v3275, %v3271
    %v3824 = vpack.c.b16 %v3276, %v3272
    %v3825 = vpack.c.b16 %v3277, %v3273
    %v3826 = vpack.c.b16 %v3278, %v3274
    %v3827 = vpack.c.b16 %v3283, %v3279
    %v3828 = vpack.c.b16 %v3284, %v3280
    %v3829 = vpack.c.b16 %v3285, %v3281
    %v3830 = vpack.c.b16 %v3286, %v3282
    %v3831 = vpack.c.b16 %v3291, %v3287
    %v3832 = vpack.c.b16 %v3292, %v3288
    %v3833 = vpack.c.b16 %v3293, %v3289
    %v3834 = vpack.c.b16 %v3294, %v3290
    %v3835 = vpack.c.b16 %v3299, %v3295
    %v3836 = vpack.c.b16 %v3300, %v3296
    %v3837 = vpack.c.b16 %v3301, %v3297
    %v3838 = vpack.c.b16 %v3302, %v3298
    %v3839 = vpack.c.b16 %v3307, %v3303
    %v3840 = vpack.c.b16 %v3308, %v3304
    %v3841 = vpack.c.b16 %v3309, %v3305
    %v3842 = vpack.c.b16 %v3310, %v3306
    %v3843 = vpack.c.b16 %v3315, %v3311
    %v3844 = vpack.c.b16 %v3316, %v3312
    %v3845 = vpack.c.b16 %v3317, %v3313
    %v3846 = vpack.c.b16 %v3318, %v3314
    %v3847 = vpack.c.b16 %v3323, %v3319
    %v3848 = vpack.c.b16 %v3324, %v3320
    %v3849 = vpack.c.b16 %v3325, %v3321
    %v3850 = vpack.c.b16 %v3326, %v3322
    %v3851 = vpack.c.b16 %v3331, %v3327
    %v3852 = vpack.c.b16 %v3332, %v3328
    %v3853 = vpack.c.b16 %v3333, %v3329
    %v3854 = vpack.c.b16 %v3334, %v3330
    %v3855 = vpack.c.b16 %v3339, %v3335
    %v3856 = vpack.c.b16 %v3340, %v3336
    %v3857 = vpack.c.b16 %v3341, %v3337
    %v3858 = vpack.c.b16 %v3342, %v3338
    %v3859 = vpack.c.b16 %v3347, %v3343
    %v3860 = vpack.c.b16 %v3348, %v3344
    %v3861 = vpack.c.b16 %v3349, %v3345
    %v3862 = vpack.c.b16 %v3350, %v3346
    %4375 = vmatpush.bf16.msra.mxu0 %v3379
    %4376 = vmatpush.bf16.msra.mxu0 %v3375
    %4377 = vmatpush.bf16.msra.mxu0 %v3371
    %4378 = vmatpush.bf16.msra.mxu0 %v3367
    %4379 = vmatpush.bf16.msra.mxu0 %v3363
    %4380 = vmatpush.bf16.msra.mxu0 %v3359
    %4381 = vmatpush.bf16.msra.mxu0 %v3355
    %4382 = vmatpush.bf16.msra.mxu0 %v3351
    %4383 = vmatmul.bf16.gmra.mxu0 0
    %v4384 = vpop.f32.mrf.mxu0
    %v4385 = vadd.f32 0.0, %v4384
    %v4386 = vpop.f32.mrf.mxu0
    %v4387 = vadd.f32 0.0, %v4386
    %4388 = vmatmul.bf16.gmra.mxu0 %v1055
    %v4389 = vpop.f32.mrf.mxu0
    %v4390 = vadd.f32 0.0, %v4389
    %v4391 = vpop.f32.mrf.mxu0
    %v4392 = vadd.f32 0.0, %v4391
    %4393 = vmatmul.bf16.gmra.mxu0 %v1095
    %v4394 = vpop.f32.mrf.mxu0
    %v4395 = vadd.f32 0.0, %v4394
    %v4396 = vpop.f32.mrf.mxu0
    %v4397 = vadd.f32 0.0, %v4396
    %4398 = vmatmul.bf16.gmra.mxu0 %v1135
    %v4399 = vpop.f32.mrf.mxu0
    %v4400 = vadd.f32 0.0, %v4399
    %v4401 = vpop.f32.mrf.mxu0
    %v4402 = vadd.f32 0.0, %v4401
    %4403 = vmatmul.bf16.gmra.mxu0 %v1175
    %v4404 = vpop.f32.mrf.mxu0
    %v4405 = vadd.f32 0.0, %v4404
    %v4406 = vpop.f32.mrf.mxu0
    %v4407 = vadd.f32 0.0, %v4406
    %4408 = vmatmul.bf16.gmra.mxu0 %v1215
    %v4409 = vpop.f32.mrf.mxu0
    %v4410 = vadd.f32 0.0, %v4409
    %v4411 = vpop.f32.mrf.mxu0
    %v4412 = vadd.f32 0.0, %v4411
    %4413 = vmatmul.bf16.gmra.mxu0 %v1255
    %v4414 = vpop.f32.mrf.mxu0
    %v4415 = vadd.f32 0.0, %v4414
    %v4416 = vpop.f32.mrf.mxu0
    %v4417 = vadd.f32 0.0, %v4416
    %4418 = vdwg.mxu0
    %4419 = vmatpush.bf16.msra.mxu0 %v3411
    %4420 = vmatpush.bf16.msra.mxu0 %v3407
    %4421 = vmatpush.bf16.msra.mxu0 %v3403
    %4422 = vmatpush.bf16.msra.mxu0 %v3399
    %4423 = vmatpush.bf16.msra.mxu0 %v3395
    %4424 = vmatpush.bf16.msra.mxu0 %v3391
    %4425 = vmatpush.bf16.msra.mxu0 %v3387
    %4426 = vmatpush.bf16.msra.mxu0 %v3383
    %4427 = vmatmul.bf16.gmra.mxu0 0
    %v4428 = vpop.f32.mrf.mxu0
    %v4429 = vadd.f32 %v4385, %v4428
    %v4430 = vpop.f32.mrf.mxu0
    %v4431 = vadd.f32 %v4387, %v4430
    %4432 = vmatmul.bf16.gmra.mxu0 %v1056
    %v4433 = vpop.f32.mrf.mxu0
    %v4434 = vadd.f32 %v4390, %v4433
    %v4435 = vpop.f32.mrf.mxu0
    %v4436 = vadd.f32 %v4392, %v4435
    %4437 = vmatmul.bf16.gmra.mxu0 %v1096
    %v4438 = vpop.f32.mrf.mxu0
    %v4439 = vadd.f32 %v4395, %v4438
    %v4440 = vpop.f32.mrf.mxu0
    %v4441 = vadd.f32 %v4397, %v4440
    %4442 = vmatmul.bf16.gmra.mxu0 %v1136
    %v4443 = vpop.f32.mrf.mxu0
    %v4444 = vadd.f32 %v4400, %v4443
    %v4445 = vpop.f32.mrf.mxu0
    %v4446 = vadd.f32 %v4402, %v4445
    %4447 = vmatmul.bf16.gmra.mxu0 %v1176
    %v4448 = vpop.f32.mrf.mxu0
    %v4449 = vadd.f32 %v4405, %v4448
    %v4450 = vpop.f32.mrf.mxu0
    %v4451 = vadd.f32 %v4407, %v4450
    %4452 = vmatmul.bf16.gmra.mxu0 %v1216
    %v4453 = vpop.f32.mrf.mxu0
    %v4454 = vadd.f32 %v4410, %v4453
    %v4455 = vpop.f32.mrf.mxu0
    %v4456 = vadd.f32 %v4412, %v4455
    %4457 = vmatmul.bf16.gmra.mxu0 %v1256
    %v4458 = vpop.f32.mrf.mxu0
    %v4459 = vadd.f32 %v4415, %v4458
    %v4460 = vpop.f32.mrf.mxu0
    %v4461 = vadd.f32 %v4417, %v4460
    %4462 = vdwg.mxu0
    %4463 = vmatpush.bf16.msra.mxu0 %v3443
    %4464 = vmatpush.bf16.msra.mxu0 %v3439
    %4465 = vmatpush.bf16.msra.mxu0 %v3435
    %4466 = vmatpush.bf16.msra.mxu0 %v3431
    %4467 = vmatpush.bf16.msra.mxu0 %v3427
    %4468 = vmatpush.bf16.msra.mxu0 %v3423
    %4469 = vmatpush.bf16.msra.mxu0 %v3419
    %4470 = vmatpush.bf16.msra.mxu0 %v3415
    %4471 = vmatmul.bf16.gmra.mxu0 0
    %v4472 = vpop.f32.mrf.mxu0
    %v4473 = vadd.f32 %v4429, %v4472
    %v4474 = vpop.f32.mrf.mxu0
    %v4475 = vadd.f32 %v4431, %v4474
    %4476 = vmatmul.bf16.gmra.mxu0 %v1057
    %v4477 = vpop.f32.mrf.mxu0
    %v4478 = vadd.f32 %v4434, %v4477
    %v4479 = vpop.f32.mrf.mxu0
    %v4480 = vadd.f32 %v4436, %v4479
    %4481 = vmatmul.bf16.gmra.mxu0 %v1097
    %v4482 = vpop.f32.mrf.mxu0
    %v4483 = vadd.f32 %v4439, %v4482
    %v4484 = vpop.f32.mrf.mxu0
    %v4485 = vadd.f32 %v4441, %v4484
    %4486 = vmatmul.bf16.gmra.mxu0 %v1137
    %v4487 = vpop.f32.mrf.mxu0
    %v4488 = vadd.f32 %v4444, %v4487
    %v4489 = vpop.f32.mrf.mxu0
    %v4490 = vadd.f32 %v4446, %v4489
    %4491 = vmatmul.bf16.gmra.mxu0 %v1177
    %v4492 = vpop.f32.mrf.mxu0
    %v4493 = vadd.f32 %v4449, %v4492
    %v4494 = vpop.f32.mrf.mxu0
    %v4495 = vadd.f32 %v4451, %v4494
    %4496 = vmatmul.bf16.gmra.mxu0 %v1217
    %v4497 = vpop.f32.mrf.mxu0
    %v4498 = vadd.f32 %v4454, %v4497
    %v4499 = vpop.f32.mrf.mxu0
    %v4500 = vadd.f32 %v4456, %v4499
    %4501 = vmatmul.bf16.gmra.mxu0 %v1257
    %v4502 = vpop.f32.mrf.mxu0
    %v4503 = vadd.f32 %v4459, %v4502
    %v4504 = vpop.f32.mrf.mxu0
    %v4505 = vadd.f32 %v4461, %v4504
    %4506 = vdwg.mxu0
    %4507 = vmatpush.bf16.msra.mxu0 %v3475
    %4508 = vmatpush.bf16.msra.mxu0 %v3471
    %4509 = vmatpush.bf16.msra.mxu0 %v3467
    %4510 = vmatpush.bf16.msra.mxu0 %v3463
    %4511 = vmatpush.bf16.msra.mxu0 %v3459
    %4512 = vmatpush.bf16.msra.mxu0 %v3455
    %4513 = vmatpush.bf16.msra.mxu0 %v3451
    %4514 = vmatpush.bf16.msra.mxu0 %v3447
    %4515 = vmatmul.bf16.gmra.mxu0 0
    %v4516 = vpop.f32.mrf.mxu0
    %v4517 = vadd.f32 %v4473, %v4516
    %v4518 = vpop.f32.mrf.mxu0
    %v4519 = vadd.f32 %v4475, %v4518
    %4520 = vmatmul.bf16.gmra.mxu0 %v1058
    %v4521 = vpop.f32.mrf.mxu0
    %v4522 = vadd.f32 %v4478, %v4521
    %v4523 = vpop.f32.mrf.mxu0
    %v4524 = vadd.f32 %v4480, %v4523
    %4525 = vmatmul.bf16.gmra.mxu0 %v1098
    %v4526 = vpop.f32.mrf.mxu0
    %v4527 = vadd.f32 %v4483, %v4526
    %v4528 = vpop.f32.mrf.mxu0
    %v4529 = vadd.f32 %v4485, %v4528
    %4530 = vmatmul.bf16.gmra.mxu0 %v1138
    %v4531 = vpop.f32.mrf.mxu0
    %v4532 = vadd.f32 %v4488, %v4531
    %v4533 = vpop.f32.mrf.mxu0
    %v4534 = vadd.f32 %v4490, %v4533
    %4535 = vmatmul.bf16.gmra.mxu0 %v1178
    %v4536 = vpop.f32.mrf.mxu0
    %v4537 = vadd.f32 %v4493, %v4536
    %v4538 = vpop.f32.mrf.mxu0
    %v4539 = vadd.f32 %v4495, %v4538
    %4540 = vmatmul.bf16.gmra.mxu0 %v1218
    %v4541 = vpop.f32.mrf.mxu0
    %v4542 = vadd.f32 %v4498, %v4541
    %v4543 = vpop.f32.mrf.mxu0
    %v4544 = vadd.f32 %v4500, %v4543
    %4545 = vmatmul.bf16.gmra.mxu0 %v1258
    %v4546 = vpop.f32.mrf.mxu0
    %v4547 = vadd.f32 %v4503, %v4546
    %v4548 = vpop.f32.mrf.mxu0
    %v4549 = vadd.f32 %v4505, %v4548
    %4550 = vdwg.mxu0
    %4551 = vmatpush.bf16.msra.mxu0 %v3507
    %4552 = vmatpush.bf16.msra.mxu0 %v3503
    %4553 = vmatpush.bf16.msra.mxu0 %v3499
    %4554 = vmatpush.bf16.msra.mxu0 %v3495
    %4555 = vmatpush.bf16.msra.mxu0 %v3491
    %4556 = vmatpush.bf16.msra.mxu0 %v3487
    %4557 = vmatpush.bf16.msra.mxu0 %v3483
    %4558 = vmatpush.bf16.msra.mxu0 %v3479
    %4559 = vmatmul.bf16.gmra.mxu0 %v1035
    %v4560 = vpop.f32.mrf.mxu0
    %v4561 = vadd.f32 %v4517, %v4560
    %v4562 = vpop.f32.mrf.mxu0
    %v4563 = vadd.f32 %v4519, %v4562
    %4564 = vmatmul.bf16.gmra.mxu0 %v1075
    %v4565 = vpop.f32.mrf.mxu0
    %v4566 = vadd.f32 %v4522, %v4565
    %v4567 = vpop.f32.mrf.mxu0
    %v4568 = vadd.f32 %v4524, %v4567
    %4569 = vmatmul.bf16.gmra.mxu0 %v1115
    %v4570 = vpop.f32.mrf.mxu0
    %v4571 = vadd.f32 %v4527, %v4570
    %v4572 = vpop.f32.mrf.mxu0
    %v4573 = vadd.f32 %v4529, %v4572
    %4574 = vmatmul.bf16.gmra.mxu0 %v1155
    %v4575 = vpop.f32.mrf.mxu0
    %v4576 = vadd.f32 %v4532, %v4575
    %v4577 = vpop.f32.mrf.mxu0
    %v4578 = vadd.f32 %v4534, %v4577
    %4579 = vmatmul.bf16.gmra.mxu0 %v1195
    %v4580 = vpop.f32.mrf.mxu0
    %v4581 = vadd.f32 %v4537, %v4580
    %v4582 = vpop.f32.mrf.mxu0
    %v4583 = vadd.f32 %v4539, %v4582
    %4584 = vmatmul.bf16.gmra.mxu0 %v1235
    %v4585 = vpop.f32.mrf.mxu0
    %v4586 = vadd.f32 %v4542, %v4585
    %v4587 = vpop.f32.mrf.mxu0
    %v4588 = vadd.f32 %v4544, %v4587
    %4589 = vmatmul.bf16.gmra.mxu0 %v1275
    %v4590 = vpop.f32.mrf.mxu0
    %v4591 = vadd.f32 %v4547, %v4590
    %v4592 = vpop.f32.mrf.mxu0
    %v4593 = vadd.f32 %v4549, %v4592
    %4594 = vdwg.mxu0
    %4595 = vmatpush.bf16.msra.mxu0 %v3539
    %4596 = vmatpush.bf16.msra.mxu0 %v3535
    %4597 = vmatpush.bf16.msra.mxu0 %v3531
    %4598 = vmatpush.bf16.msra.mxu0 %v3527
    %4599 = vmatpush.bf16.msra.mxu0 %v3523
    %4600 = vmatpush.bf16.msra.mxu0 %v3519
    %4601 = vmatpush.bf16.msra.mxu0 %v3515
    %4602 = vmatpush.bf16.msra.mxu0 %v3511
    %4603 = vmatmul.bf16.gmra.mxu0 %v1036
    %v4604 = vpop.f32.mrf.mxu0
    %v4605 = vadd.f32 %v4561, %v4604
    %v4606 = vpop.f32.mrf.mxu0
    %v4607 = vadd.f32 %v4563, %v4606
    %4608 = vmatmul.bf16.gmra.mxu0 %v1076
    %v4609 = vpop.f32.mrf.mxu0
    %v4610 = vadd.f32 %v4566, %v4609
    %v4611 = vpop.f32.mrf.mxu0
    %v4612 = vadd.f32 %v4568, %v4611
    %4613 = vmatmul.bf16.gmra.mxu0 %v1116
    %v4614 = vpop.f32.mrf.mxu0
    %v4615 = vadd.f32 %v4571, %v4614
    %v4616 = vpop.f32.mrf.mxu0
    %v4617 = vadd.f32 %v4573, %v4616
    %4618 = vmatmul.bf16.gmra.mxu0 %v1156
    %v4619 = vpop.f32.mrf.mxu0
    %v4620 = vadd.f32 %v4576, %v4619
    %v4621 = vpop.f32.mrf.mxu0
    %v4622 = vadd.f32 %v4578, %v4621
    %4623 = vmatmul.bf16.gmra.mxu0 %v1196
    %v4624 = vpop.f32.mrf.mxu0
    %v4625 = vadd.f32 %v4581, %v4624
    %v4626 = vpop.f32.mrf.mxu0
    %v4627 = vadd.f32 %v4583, %v4626
    %4628 = vmatmul.bf16.gmra.mxu0 %v1236
    %v4629 = vpop.f32.mrf.mxu0
    %v4630 = vadd.f32 %v4586, %v4629
    %v4631 = vpop.f32.mrf.mxu0
    %v4632 = vadd.f32 %v4588, %v4631
    %4633 = vmatmul.bf16.gmra.mxu0 %v1276
    %v4634 = vpop.f32.mrf.mxu0
    %v4635 = vadd.f32 %v4591, %v4634
    %v4636 = vpop.f32.mrf.mxu0
    %v4637 = vadd.f32 %v4593, %v4636
    %4638 = vdwg.mxu0
    %4639 = vmatpush.bf16.msra.mxu0 %v3571
    %4640 = vmatpush.bf16.msra.mxu0 %v3567
    %4641 = vmatpush.bf16.msra.mxu0 %v3563
    %4642 = vmatpush.bf16.msra.mxu0 %v3559
    %4643 = vmatpush.bf16.msra.mxu0 %v3555
    %4644 = vmatpush.bf16.msra.mxu0 %v3551
    %4645 = vmatpush.bf16.msra.mxu0 %v3547
    %4646 = vmatpush.bf16.msra.mxu0 %v3543
    %4647 = vmatmul.bf16.gmra.mxu0 %v1037
    %v4648 = vpop.f32.mrf.mxu0
    %v4649 = vadd.f32 %v4605, %v4648
    %v4650 = vpop.f32.mrf.mxu0
    %v4651 = vadd.f32 %v4607, %v4650
    %4652 = vmatmul.bf16.gmra.mxu0 %v1077
    %v4653 = vpop.f32.mrf.mxu0
    %v4654 = vadd.f32 %v4610, %v4653
    %v4655 = vpop.f32.mrf.mxu0
    %v4656 = vadd.f32 %v4612, %v4655
    %4657 = vmatmul.bf16.gmra.mxu0 %v1117
    %v4658 = vpop.f32.mrf.mxu0
    %v4659 = vadd.f32 %v4615, %v4658
    %v4660 = vpop.f32.mrf.mxu0
    %v4661 = vadd.f32 %v4617, %v4660
    %4662 = vmatmul.bf16.gmra.mxu0 %v1157
    %v4663 = vpop.f32.mrf.mxu0
    %v4664 = vadd.f32 %v4620, %v4663
    %v4665 = vpop.f32.mrf.mxu0
    %v4666 = vadd.f32 %v4622, %v4665
    %4667 = vmatmul.bf16.gmra.mxu0 %v1197
    %v4668 = vpop.f32.mrf.mxu0
    %v4669 = vadd.f32 %v4625, %v4668
    %v4670 = vpop.f32.mrf.mxu0
    %v4671 = vadd.f32 %v4627, %v4670
    %4672 = vmatmul.bf16.gmra.mxu0 %v1237
    %v4673 = vpop.f32.mrf.mxu0
    %v4674 = vadd.f32 %v4630, %v4673
    %v4675 = vpop.f32.mrf.mxu0
    %v4676 = vadd.f32 %v4632, %v4675
    %4677 = vmatmul.bf16.gmra.mxu0 %v1277
    %v4678 = vpop.f32.mrf.mxu0
    %v4679 = vadd.f32 %v4635, %v4678
    %v4680 = vpop.f32.mrf.mxu0
    %v4681 = vadd.f32 %v4637, %v4680
    %4682 = vdwg.mxu0
    %4683 = vmatpush.bf16.msra.mxu0 %v3603
    %4684 = vmatpush.bf16.msra.mxu0 %v3599
    %4685 = vmatpush.bf16.msra.mxu0 %v3595
    %4686 = vmatpush.bf16.msra.mxu0 %v3591
    %4687 = vmatpush.bf16.msra.mxu0 %v3587
    %4688 = vmatpush.bf16.msra.mxu0 %v3583
    %4689 = vmatpush.bf16.msra.mxu0 %v3579
    %4690 = vmatpush.bf16.msra.mxu0 %v3575
    %4691 = vmatmul.bf16.gmra.mxu0 %v1038
    %v4692 = vpop.f32.mrf.mxu0
    %v4693 = vadd.f32 %v4649, %v4692
    %v4694 = vpop.f32.mrf.mxu0
    %v4695 = vadd.f32 %v4651, %v4694
    %4696 = vmatmul.bf16.gmra.mxu0 %v1078
    %v4697 = vpop.f32.mrf.mxu0
    %v4698 = vadd.f32 %v4654, %v4697
    %v4699 = vpop.f32.mrf.mxu0
    %v4700 = vadd.f32 %v4656, %v4699
    %4701 = vmatmul.bf16.gmra.mxu0 %v1118
    %v4702 = vpop.f32.mrf.mxu0
    %v4703 = vadd.f32 %v4659, %v4702
    %v4704 = vpop.f32.mrf.mxu0
    %v4705 = vadd.f32 %v4661, %v4704
    %4706 = vmatmul.bf16.gmra.mxu0 %v1158
    %v4707 = vpop.f32.mrf.mxu0
    %v4708 = vadd.f32 %v4664, %v4707
    %v4709 = vpop.f32.mrf.mxu0
    %v4710 = vadd.f32 %v4666, %v4709
    %4711 = vmatmul.bf16.gmra.mxu0 %v1198
    %v4712 = vpop.f32.mrf.mxu0
    %v4713 = vadd.f32 %v4669, %v4712
    %v4714 = vpop.f32.mrf.mxu0
    %v4715 = vadd.f32 %v4671, %v4714
    %4716 = vmatmul.bf16.gmra.mxu0 %v1238
    %v4717 = vpop.f32.mrf.mxu0
    %v4718 = vadd.f32 %v4674, %v4717
    %v4719 = vpop.f32.mrf.mxu0
    %v4720 = vadd.f32 %v4676, %v4719
    %4721 = vmatmul.bf16.gmra.mxu0 %v1278
    %v4722 = vpop.f32.mrf.mxu0
    %v4723 = vadd.f32 %v4679, %v4722
    %v4724 = vpop.f32.mrf.mxu0
    %v4725 = vadd.f32 %v4681, %v4724
    %4726 = vdwg.mxu0
    %4727 = vmatpush.bf16.msra.mxu0 %v3635
    %4728 = vmatpush.bf16.msra.mxu0 %v3631
    %4729 = vmatpush.bf16.msra.mxu0 %v3627
    %4730 = vmatpush.bf16.msra.mxu0 %v3623
    %4731 = vmatpush.bf16.msra.mxu0 %v3619
    %4732 = vmatpush.bf16.msra.mxu0 %v3615
    %4733 = vmatpush.bf16.msra.mxu0 %v3611
    %4734 = vmatpush.bf16.msra.mxu0 %v3607
    %4735 = vmatmul.bf16.gmra.mxu0 %v1055
    %v4736 = vpop.f32.mrf.mxu0
    %v4737 = vadd.f32 %v4693, %v4736
    %v4738 = vpop.f32.mrf.mxu0
    %v4739 = vadd.f32 %v4695, %v4738
    %4740 = vmatmul.bf16.gmra.mxu0 %v1095
    %v4741 = vpop.f32.mrf.mxu0
    %v4742 = vadd.f32 %v4698, %v4741
    %v4743 = vpop.f32.mrf.mxu0
    %v4744 = vadd.f32 %v4700, %v4743
    %4745 = vmatmul.bf16.gmra.mxu0 %v1135
    %v4746 = vpop.f32.mrf.mxu0
    %v4747 = vadd.f32 %v4703, %v4746
    %v4748 = vpop.f32.mrf.mxu0
    %v4749 = vadd.f32 %v4705, %v4748
    %4750 = vmatmul.bf16.gmra.mxu0 %v1175
    %v4751 = vpop.f32.mrf.mxu0
    %v4752 = vadd.f32 %v4708, %v4751
    %v4753 = vpop.f32.mrf.mxu0
    %v4754 = vadd.f32 %v4710, %v4753
    %4755 = vmatmul.bf16.gmra.mxu0 %v1215
    %v4756 = vpop.f32.mrf.mxu0
    %v4757 = vadd.f32 %v4713, %v4756
    %v4758 = vpop.f32.mrf.mxu0
    %v4759 = vadd.f32 %v4715, %v4758
    %4760 = vmatmul.bf16.gmra.mxu0 %v1255
    %v4761 = vpop.f32.mrf.mxu0
    %v4762 = vadd.f32 %v4718, %v4761
    %v4763 = vpop.f32.mrf.mxu0
    %v4764 = vadd.f32 %v4720, %v4763
    %4765 = vmatmul.bf16.gmra.mxu0 %v1295
    %v4766 = vpop.f32.mrf.mxu0
    %v4767 = vadd.f32 %v4723, %v4766
    %v4768 = vpop.f32.mrf.mxu0
    %v4769 = vadd.f32 %v4725, %v4768
    %4770 = vdwg.mxu0
    %4771 = vmatpush.bf16.msra.mxu0 %v3667
    %4772 = vmatpush.bf16.msra.mxu0 %v3663
    %4773 = vmatpush.bf16.msra.mxu0 %v3659
    %4774 = vmatpush.bf16.msra.mxu0 %v3655
    %4775 = vmatpush.bf16.msra.mxu0 %v3651
    %4776 = vmatpush.bf16.msra.mxu0 %v3647
    %4777 = vmatpush.bf16.msra.mxu0 %v3643
    %4778 = vmatpush.bf16.msra.mxu0 %v3639
    %4779 = vmatmul.bf16.gmra.mxu0 %v1056
    %v4780 = vpop.f32.mrf.mxu0
    %v4781 = vadd.f32 %v4737, %v4780
    %v4782 = vpop.f32.mrf.mxu0
    %v4783 = vadd.f32 %v4739, %v4782
    %4784 = vmatmul.bf16.gmra.mxu0 %v1096
    %v4785 = vpop.f32.mrf.mxu0
    %v4786 = vadd.f32 %v4742, %v4785
    %v4787 = vpop.f32.mrf.mxu0
    %v4788 = vadd.f32 %v4744, %v4787
    %4789 = vmatmul.bf16.gmra.mxu0 %v1136
    %v4790 = vpop.f32.mrf.mxu0
    %v4791 = vadd.f32 %v4747, %v4790
    %v4792 = vpop.f32.mrf.mxu0
    %v4793 = vadd.f32 %v4749, %v4792
    %4794 = vmatmul.bf16.gmra.mxu0 %v1176
    %v4795 = vpop.f32.mrf.mxu0
    %v4796 = vadd.f32 %v4752, %v4795
    %v4797 = vpop.f32.mrf.mxu0
    %v4798 = vadd.f32 %v4754, %v4797
    %4799 = vmatmul.bf16.gmra.mxu0 %v1216
    %v4800 = vpop.f32.mrf.mxu0
    %v4801 = vadd.f32 %v4757, %v4800
    %v4802 = vpop.f32.mrf.mxu0
    %v4803 = vadd.f32 %v4759, %v4802
    %4804 = vmatmul.bf16.gmra.mxu0 %v1256
    %v4805 = vpop.f32.mrf.mxu0
    %v4806 = vadd.f32 %v4762, %v4805
    %v4807 = vpop.f32.mrf.mxu0
    %v4808 = vadd.f32 %v4764, %v4807
    %4809 = vmatmul.bf16.gmra.mxu0 %v1296
    %v4810 = vpop.f32.mrf.mxu0
    %v4811 = vadd.f32 %v4767, %v4810
    %v4812 = vpop.f32.mrf.mxu0
    %v4813 = vadd.f32 %v4769, %v4812
    %4814 = vdwg.mxu0
    %4815 = vmatpush.bf16.msra.mxu0 %v3699
    %4816 = vmatpush.bf16.msra.mxu0 %v3695
    %4817 = vmatpush.bf16.msra.mxu0 %v3691
    %4818 = vmatpush.bf16.msra.mxu0 %v3687
    %4819 = vmatpush.bf16.msra.mxu0 %v3683
    %4820 = vmatpush.bf16.msra.mxu0 %v3679
    %4821 = vmatpush.bf16.msra.mxu0 %v3675
    %4822 = vmatpush.bf16.msra.mxu0 %v3671
    %4823 = vmatmul.bf16.gmra.mxu0 %v1057
    %v4824 = vpop.f32.mrf.mxu0
    %v4825 = vadd.f32 %v4781, %v4824
    %v4826 = vpop.f32.mrf.mxu0
    %v4827 = vadd.f32 %v4783, %v4826
    %4828 = vmatmul.bf16.gmra.mxu0 %v1097
    %v4829 = vpop.f32.mrf.mxu0
    %v4830 = vadd.f32 %v4786, %v4829
    %v4831 = vpop.f32.mrf.mxu0
    %v4832 = vadd.f32 %v4788, %v4831
    %4833 = vmatmul.bf16.gmra.mxu0 %v1137
    %v4834 = vpop.f32.mrf.mxu0
    %v4835 = vadd.f32 %v4791, %v4834
    %v4836 = vpop.f32.mrf.mxu0
    %v4837 = vadd.f32 %v4793, %v4836
    %4838 = vmatmul.bf16.gmra.mxu0 %v1177
    %v4839 = vpop.f32.mrf.mxu0
    %v4840 = vadd.f32 %v4796, %v4839
    %v4841 = vpop.f32.mrf.mxu0
    %v4842 = vadd.f32 %v4798, %v4841
    %4843 = vmatmul.bf16.gmra.mxu0 %v1217
    %v4844 = vpop.f32.mrf.mxu0
    %v4845 = vadd.f32 %v4801, %v4844
    %v4846 = vpop.f32.mrf.mxu0
    %v4847 = vadd.f32 %v4803, %v4846
    %4848 = vmatmul.bf16.gmra.mxu0 %v1257
    %v4849 = vpop.f32.mrf.mxu0
    %v4850 = vadd.f32 %v4806, %v4849
    %v4851 = vpop.f32.mrf.mxu0
    %v4852 = vadd.f32 %v4808, %v4851
    %4853 = vmatmul.bf16.gmra.mxu0 %v1297
    %v4854 = vpop.f32.mrf.mxu0
    %v4855 = vadd.f32 %v4811, %v4854
    %v4856 = vpop.f32.mrf.mxu0
    %v4857 = vadd.f32 %v4813, %v4856
    %4858 = vdwg.mxu0
    %4859 = vmatpush.bf16.msra.mxu0 %v3731
    %4860 = vmatpush.bf16.msra.mxu0 %v3727
    %4861 = vmatpush.bf16.msra.mxu0 %v3723
    %4862 = vmatpush.bf16.msra.mxu0 %v3719
    %4863 = vmatpush.bf16.msra.mxu0 %v3715
    %4864 = vmatpush.bf16.msra.mxu0 %v3711
    %4865 = vmatpush.bf16.msra.mxu0 %v3707
    %4866 = vmatpush.bf16.msra.mxu0 %v3703
    %4867 = vmatmul.bf16.gmra.mxu0 %v1058
    %v4868 = vpop.f32.mrf.mxu0
    %v4869 = vadd.f32 %v4825, %v4868
    %v4870 = vpop.f32.mrf.mxu0
    %v4871 = vadd.f32 %v4827, %v4870
    %4872 = vmatmul.bf16.gmra.mxu0 %v1098
    %v4873 = vpop.f32.mrf.mxu0
    %v4874 = vadd.f32 %v4830, %v4873
    %v4875 = vpop.f32.mrf.mxu0
    %v4876 = vadd.f32 %v4832, %v4875
    %4877 = vmatmul.bf16.gmra.mxu0 %v1138
    %v4878 = vpop.f32.mrf.mxu0
    %v4879 = vadd.f32 %v4835, %v4878
    %v4880 = vpop.f32.mrf.mxu0
    %v4881 = vadd.f32 %v4837, %v4880
    %4882 = vmatmul.bf16.gmra.mxu0 %v1178
    %v4883 = vpop.f32.mrf.mxu0
    %v4884 = vadd.f32 %v4840, %v4883
    %v4885 = vpop.f32.mrf.mxu0
    %v4886 = vadd.f32 %v4842, %v4885
    %4887 = vmatmul.bf16.gmra.mxu0 %v1218
    %v4888 = vpop.f32.mrf.mxu0
    %v4889 = vadd.f32 %v4845, %v4888
    %v4890 = vpop.f32.mrf.mxu0
    %v4891 = vadd.f32 %v4847, %v4890
    %4892 = vmatmul.bf16.gmra.mxu0 %v1258
    %v4893 = vpop.f32.mrf.mxu0
    %v4894 = vadd.f32 %v4850, %v4893
    %v4895 = vpop.f32.mrf.mxu0
    %v4896 = vadd.f32 %v4852, %v4895
    %4897 = vmatmul.bf16.gmra.mxu0 %v1298
    %v4898 = vpop.f32.mrf.mxu0
    %v4899 = vadd.f32 %v4855, %v4898
    %v4900 = vpop.f32.mrf.mxu0
    %v4901 = vadd.f32 %v4857, %v4900
    %4902 = vdwg.mxu0
    %4903 = vmatpush.bf16.msra.mxu0 %v3763
    %4904 = vmatpush.bf16.msra.mxu0 %v3759
    %4905 = vmatpush.bf16.msra.mxu0 %v3755
    %4906 = vmatpush.bf16.msra.mxu0 %v3751
    %4907 = vmatpush.bf16.msra.mxu0 %v3747
    %4908 = vmatpush.bf16.msra.mxu0 %v3743
    %4909 = vmatpush.bf16.msra.mxu0 %v3739
    %4910 = vmatpush.bf16.msra.mxu0 %v3735
    %4911 = vmatmul.bf16.gmra.mxu0 %v1075
    %v4912 = vpop.f32.mrf.mxu0
    %v4913 = vadd.f32 %v4869, %v4912
    %v4914 = vpop.f32.mrf.mxu0
    %v4915 = vadd.f32 %v4871, %v4914
    %4916 = vmatmul.bf16.gmra.mxu0 %v1115
    %v4917 = vpop.f32.mrf.mxu0
    %v4918 = vadd.f32 %v4874, %v4917
    %v4919 = vpop.f32.mrf.mxu0
    %v4920 = vadd.f32 %v4876, %v4919
    %4921 = vmatmul.bf16.gmra.mxu0 %v1155
    %v4922 = vpop.f32.mrf.mxu0
    %v4923 = vadd.f32 %v4879, %v4922
    %v4924 = vpop.f32.mrf.mxu0
    %v4925 = vadd.f32 %v4881, %v4924
    %4926 = vmatmul.bf16.gmra.mxu0 %v1195
    %v4927 = vpop.f32.mrf.mxu0
    %v4928 = vadd.f32 %v4884, %v4927
    %v4929 = vpop.f32.mrf.mxu0
    %v4930 = vadd.f32 %v4886, %v4929
    %4931 = vmatmul.bf16.gmra.mxu0 %v1235
    %v4932 = vpop.f32.mrf.mxu0
    %v4933 = vadd.f32 %v4889, %v4932
    %v4934 = vpop.f32.mrf.mxu0
    %v4935 = vadd.f32 %v4891, %v4934
    %4936 = vmatmul.bf16.gmra.mxu0 %v1275
    %v4937 = vpop.f32.mrf.mxu0
    %v4938 = vadd.f32 %v4894, %v4937
    %v4939 = vpop.f32.mrf.mxu0
    %v4940 = vadd.f32 %v4896, %v4939
    %4941 = vmatmul.bf16.gmra.mxu0 0
    %v4942 = vpop.f32.mrf.mxu0
    %v4943 = vadd.f32 %v4899, %v4942
    %v4944 = vpop.f32.mrf.mxu0
    %v4945 = vadd.f32 %v4901, %v4944
    %4946 = vdwg.mxu0
    %4947 = vmatpush.bf16.msra.mxu0 %v3795
    %4948 = vmatpush.bf16.msra.mxu0 %v3791
    %4949 = vmatpush.bf16.msra.mxu0 %v3787
    %4950 = vmatpush.bf16.msra.mxu0 %v3783
    %4951 = vmatpush.bf16.msra.mxu0 %v3779
    %4952 = vmatpush.bf16.msra.mxu0 %v3775
    %4953 = vmatpush.bf16.msra.mxu0 %v3771
    %4954 = vmatpush.bf16.msra.mxu0 %v3767
    %4955 = vmatmul.bf16.gmra.mxu0 %v1076
    %v4956 = vpop.f32.mrf.mxu0
    %v4957 = vadd.f32 %v4913, %v4956
    %v4958 = vpop.f32.mrf.mxu0
    %v4959 = vadd.f32 %v4915, %v4958
    %4960 = vmatmul.bf16.gmra.mxu0 %v1116
    %v4961 = vpop.f32.mrf.mxu0
    %v4962 = vadd.f32 %v4918, %v4961
    %v4963 = vpop.f32.mrf.mxu0
    %v4964 = vadd.f32 %v4920, %v4963
    %4965 = vmatmul.bf16.gmra.mxu0 %v1156
    %v4966 = vpop.f32.mrf.mxu0
    %v4967 = vadd.f32 %v4923, %v4966
    %v4968 = vpop.f32.mrf.mxu0
    %v4969 = vadd.f32 %v4925, %v4968
    %4970 = vmatmul.bf16.gmra.mxu0 %v1196
    %v4971 = vpop.f32.mrf.mxu0
    %v4972 = vadd.f32 %v4928, %v4971
    %v4973 = vpop.f32.mrf.mxu0
    %v4974 = vadd.f32 %v4930, %v4973
    %4975 = vmatmul.bf16.gmra.mxu0 %v1236
    %v4976 = vpop.f32.mrf.mxu0
    %v4977 = vadd.f32 %v4933, %v4976
    %v4978 = vpop.f32.mrf.mxu0
    %v4979 = vadd.f32 %v4935, %v4978
    %4980 = vmatmul.bf16.gmra.mxu0 %v1276
    %v4981 = vpop.f32.mrf.mxu0
    %v4982 = vadd.f32 %v4938, %v4981
    %v4983 = vpop.f32.mrf.mxu0
    %v4984 = vadd.f32 %v4940, %v4983
    %4985 = vmatmul.bf16.gmra.mxu0 0
    %v4986 = vpop.f32.mrf.mxu0
    %v4987 = vadd.f32 %v4943, %v4986
    %v4988 = vpop.f32.mrf.mxu0
    %v4989 = vadd.f32 %v4945, %v4988
    %4990 = vdwg.mxu0
    %4991 = vmatpush.bf16.msra.mxu0 %v3827
    %4992 = vmatpush.bf16.msra.mxu0 %v3823
    %4993 = vmatpush.bf16.msra.mxu0 %v3819
    %4994 = vmatpush.bf16.msra.mxu0 %v3815
    %4995 = vmatpush.bf16.msra.mxu0 %v3811
    %4996 = vmatpush.bf16.msra.mxu0 %v3807
    %4997 = vmatpush.bf16.msra.mxu0 %v3803
    %4998 = vmatpush.bf16.msra.mxu0 %v3799
    %4999 = vmatmul.bf16.gmra.mxu0 %v1077
    %v5000 = vpop.f32.mrf.mxu0
    %v5001 = vadd.f32 %v4957, %v5000
    %v5002 = vpop.f32.mrf.mxu0
    %v5003 = vadd.f32 %v4959, %v5002
    %5004 = vmatmul.bf16.gmra.mxu0 %v1117
    %v5005 = vpop.f32.mrf.mxu0
    %v5006 = vadd.f32 %v4962, %v5005
    %v5007 = vpop.f32.mrf.mxu0
    %v5008 = vadd.f32 %v4964, %v5007
    %5009 = vmatmul.bf16.gmra.mxu0 %v1157
    %v5010 = vpop.f32.mrf.mxu0
    %v5011 = vadd.f32 %v4967, %v5010
    %v5012 = vpop.f32.mrf.mxu0
    %v5013 = vadd.f32 %v4969, %v5012
    %5014 = vmatmul.bf16.gmra.mxu0 %v1197
    %v5015 = vpop.f32.mrf.mxu0
    %v5016 = vadd.f32 %v4972, %v5015
    %v5017 = vpop.f32.mrf.mxu0
    %v5018 = vadd.f32 %v4974, %v5017
    %5019 = vmatmul.bf16.gmra.mxu0 %v1237
    %v5020 = vpop.f32.mrf.mxu0
    %v5021 = vadd.f32 %v4977, %v5020
    %v5022 = vpop.f32.mrf.mxu0
    %v5023 = vadd.f32 %v4979, %v5022
    %5024 = vmatmul.bf16.gmra.mxu0 %v1277
    %v5025 = vpop.f32.mrf.mxu0
    %v5026 = vadd.f32 %v4982, %v5025
    %v5027 = vpop.f32.mrf.mxu0
    %v5028 = vadd.f32 %v4984, %v5027
    %5029 = vmatmul.bf16.gmra.mxu0 0
    %v5030 = vpop.f32.mrf.mxu0
    %v5031 = vadd.f32 %v4987, %v5030
    %v5032 = vpop.f32.mrf.mxu0
    %v5033 = vadd.f32 %v4989, %v5032
    %5034 = vdwg.mxu0
    %5035 = vmatpush.bf16.msra.mxu0 %v3859
    %5036 = vmatpush.bf16.msra.mxu0 %v3855
    %5037 = vmatpush.bf16.msra.mxu0 %v3851
    %5038 = vmatpush.bf16.msra.mxu0 %v3847
    %5039 = vmatpush.bf16.msra.mxu0 %v3843
    %5040 = vmatpush.bf16.msra.mxu0 %v3839
    %5041 = vmatpush.bf16.msra.mxu0 %v3835
    %5042 = vmatpush.bf16.msra.mxu0 %v3831
    %5043 = vmatmul.bf16.gmra.mxu0 %v1078
    %v5044 = vpop.f32.mrf.mxu0
    %v5045 = vadd.f32 %v5001, %v5044
    %v5046 = vpop.f32.mrf.mxu0
    %v5047 = vadd.f32 %v5003, %v5046
    %5048 = vmatmul.bf16.gmra.mxu0 %v1118
    %v5049 = vpop.f32.mrf.mxu0
    %v5050 = vadd.f32 %v5006, %v5049
    %v5051 = vpop.f32.mrf.mxu0
    %v5052 = vadd.f32 %v5008, %v5051
    %5053 = vmatmul.bf16.gmra.mxu0 %v1158
    %v5054 = vpop.f32.mrf.mxu0
    %v5055 = vadd.f32 %v5011, %v5054
    %v5056 = vpop.f32.mrf.mxu0
    %v5057 = vadd.f32 %v5013, %v5056
    %5058 = vmatmul.bf16.gmra.mxu0 %v1198
    %v5059 = vpop.f32.mrf.mxu0
    %v5060 = vadd.f32 %v5016, %v5059
    %v5061 = vpop.f32.mrf.mxu0
    %v5062 = vadd.f32 %v5018, %v5061
    %5063 = vmatmul.bf16.gmra.mxu0 %v1238
    %v5064 = vpop.f32.mrf.mxu0
    %v5065 = vadd.f32 %v5021, %v5064
    %v5066 = vpop.f32.mrf.mxu0
    %v5067 = vadd.f32 %v5023, %v5066
    %5068 = vmatmul.bf16.gmra.mxu0 %v1278
    %v5069 = vpop.f32.mrf.mxu0
    %v5070 = vadd.f32 %v5026, %v5069
    %v5071 = vpop.f32.mrf.mxu0
    %v5072 = vadd.f32 %v5028, %v5071
    %5073 = vmatmul.bf16.gmra.mxu0 0
    %v5074 = vpop.f32.mrf.mxu0
    %v5075 = vadd.f32 %v5031, %v5074
    %v5076 = vpop.f32.mrf.mxu0
    %v5077 = vadd.f32 %v5033, %v5076
    %5078 = vdwg.mxu0
    %5079 = vmatpush.bf16.msra.mxu0 %v3380
    %5080 = vmatpush.bf16.msra.mxu0 %v3376
    %5081 = vmatpush.bf16.msra.mxu0 %v3372
    %5082 = vmatpush.bf16.msra.mxu0 %v3368
    %5083 = vmatpush.bf16.msra.mxu0 %v3364
    %5084 = vmatpush.bf16.msra.mxu0 %v3360
    %5085 = vmatpush.bf16.msra.mxu0 %v3356
    %5086 = vmatpush.bf16.msra.mxu0 %v3352
    %5087 = vmatmul.bf16.gmra.mxu0 0
    %v5088 = vpop.f32.mrf.mxu0
    %v5089 = vadd.f32 0.0, %v5088
    %v5090 = vpop.f32.mrf.mxu0
    %v5091 = vadd.f32 0.0, %v5090
    %5092 = vmatmul.bf16.gmra.mxu0 %v1055
    %v5093 = vpop.f32.mrf.mxu0
    %v5094 = vadd.f32 0.0, %v5093
    %v5095 = vpop.f32.mrf.mxu0
    %v5096 = vadd.f32 0.0, %v5095
    %5097 = vmatmul.bf16.gmra.mxu0 %v1095
    %v5098 = vpop.f32.mrf.mxu0
    %v5099 = vadd.f32 0.0, %v5098
    %v5100 = vpop.f32.mrf.mxu0
    %v5101 = vadd.f32 0.0, %v5100
    %5102 = vmatmul.bf16.gmra.mxu0 %v1135
    %v5103 = vpop.f32.mrf.mxu0
    %v5104 = vadd.f32 0.0, %v5103
    %v5105 = vpop.f32.mrf.mxu0
    %v5106 = vadd.f32 0.0, %v5105
    %5107 = vmatmul.bf16.gmra.mxu0 %v1175
    %v5108 = vpop.f32.mrf.mxu0
    %v5109 = vadd.f32 0.0, %v5108
    %v5110 = vpop.f32.mrf.mxu0
    %v5111 = vadd.f32 0.0, %v5110
    %5112 = vmatmul.bf16.gmra.mxu0 %v1215
    %v5113 = vpop.f32.mrf.mxu0
    %v5114 = vadd.f32 0.0, %v5113
    %v5115 = vpop.f32.mrf.mxu0
    %v5116 = vadd.f32 0.0, %v5115
    %5117 = vmatmul.bf16.gmra.mxu0 %v1255
    %v5118 = vpop.f32.mrf.mxu0
    %v5119 = vadd.f32 0.0, %v5118
    %v5120 = vpop.f32.mrf.mxu0
    %v5121 = vadd.f32 0.0, %v5120
    %5122 = vdwg.mxu0
    %5123 = vmatpush.bf16.msra.mxu0 %v3412
    %5124 = vmatpush.bf16.msra.mxu0 %v3408
    %5125 = vmatpush.bf16.msra.mxu0 %v3404
    %5126 = vmatpush.bf16.msra.mxu0 %v3400
    %5127 = vmatpush.bf16.msra.mxu0 %v3396
    %5128 = vmatpush.bf16.msra.mxu0 %v3392
    %5129 = vmatpush.bf16.msra.mxu0 %v3388
    %5130 = vmatpush.bf16.msra.mxu0 %v3384
    %5131 = vmatmul.bf16.gmra.mxu0 0
    %v5132 = vpop.f32.mrf.mxu0
    %v5133 = vadd.f32 %v5089, %v5132
    %v5134 = vpop.f32.mrf.mxu0
    %v5135 = vadd.f32 %v5091, %v5134
    %5136 = vmatmul.bf16.gmra.mxu0 %v1056
    %v5137 = vpop.f32.mrf.mxu0
    %v5138 = vadd.f32 %v5094, %v5137
    %v5139 = vpop.f32.mrf.mxu0
    %v5140 = vadd.f32 %v5096, %v5139
    %5141 = vmatmul.bf16.gmra.mxu0 %v1096
    %v5142 = vpop.f32.mrf.mxu0
    %v5143 = vadd.f32 %v5099, %v5142
    %v5144 = vpop.f32.mrf.mxu0
    %v5145 = vadd.f32 %v5101, %v5144
    %5146 = vmatmul.bf16.gmra.mxu0 %v1136
    %v5147 = vpop.f32.mrf.mxu0
    %v5148 = vadd.f32 %v5104, %v5147
    %v5149 = vpop.f32.mrf.mxu0
    %v5150 = vadd.f32 %v5106, %v5149
    %5151 = vmatmul.bf16.gmra.mxu0 %v1176
    %v5152 = vpop.f32.mrf.mxu0
    %v5153 = vadd.f32 %v5109, %v5152
    %v5154 = vpop.f32.mrf.mxu0
    %v5155 = vadd.f32 %v5111, %v5154
    %5156 = vmatmul.bf16.gmra.mxu0 %v1216
    %v5157 = vpop.f32.mrf.mxu0
    %v5158 = vadd.f32 %v5114, %v5157
    %v5159 = vpop.f32.mrf.mxu0
    %v5160 = vadd.f32 %v5116, %v5159
    %5161 = vmatmul.bf16.gmra.mxu0 %v1256
    %v5162 = vpop.f32.mrf.mxu0
    %v5163 = vadd.f32 %v5119, %v5162
    %v5164 = vpop.f32.mrf.mxu0
    %v5165 = vadd.f32 %v5121, %v5164
    %5166 = vdwg.mxu0
    %5167 = vmatpush.bf16.msra.mxu0 %v3444
    %5168 = vmatpush.bf16.msra.mxu0 %v3440
    %5169 = vmatpush.bf16.msra.mxu0 %v3436
    %5170 = vmatpush.bf16.msra.mxu0 %v3432
    %5171 = vmatpush.bf16.msra.mxu0 %v3428
    %5172 = vmatpush.bf16.msra.mxu0 %v3424
    %5173 = vmatpush.bf16.msra.mxu0 %v3420
    %5174 = vmatpush.bf16.msra.mxu0 %v3416
    %5175 = vmatmul.bf16.gmra.mxu0 0
    %v5176 = vpop.f32.mrf.mxu0
    %v5177 = vadd.f32 %v5133, %v5176
    %v5178 = vpop.f32.mrf.mxu0
    %v5179 = vadd.f32 %v5135, %v5178
    %5180 = vmatmul.bf16.gmra.mxu0 %v1057
    %v5181 = vpop.f32.mrf.mxu0
    %v5182 = vadd.f32 %v5138, %v5181
    %v5183 = vpop.f32.mrf.mxu0
    %v5184 = vadd.f32 %v5140, %v5183
    %5185 = vmatmul.bf16.gmra.mxu0 %v1097
    %v5186 = vpop.f32.mrf.mxu0
    %v5187 = vadd.f32 %v5143, %v5186
    %v5188 = vpop.f32.mrf.mxu0
    %v5189 = vadd.f32 %v5145, %v5188
    %5190 = vmatmul.bf16.gmra.mxu0 %v1137
    %v5191 = vpop.f32.mrf.mxu0
    %v5192 = vadd.f32 %v5148, %v5191
    %v5193 = vpop.f32.mrf.mxu0
    %v5194 = vadd.f32 %v5150, %v5193
    %5195 = vmatmul.bf16.gmra.mxu0 %v1177
    %v5196 = vpop.f32.mrf.mxu0
    %v5197 = vadd.f32 %v5153, %v5196
    %v5198 = vpop.f32.mrf.mxu0
    %v5199 = vadd.f32 %v5155, %v5198
    %5200 = vmatmul.bf16.gmra.mxu0 %v1217
    %v5201 = vpop.f32.mrf.mxu0
    %v5202 = vadd.f32 %v5158, %v5201
    %v5203 = vpop.f32.mrf.mxu0
    %v5204 = vadd.f32 %v5160, %v5203
    %5205 = vmatmul.bf16.gmra.mxu0 %v1257
    %v5206 = vpop.f32.mrf.mxu0
    %v5207 = vadd.f32 %v5163, %v5206
    %v5208 = vpop.f32.mrf.mxu0
    %v5209 = vadd.f32 %v5165, %v5208
    %5210 = vdwg.mxu0
    %5211 = vmatpush.bf16.msra.mxu0 %v3476
    %5212 = vmatpush.bf16.msra.mxu0 %v3472
    %5213 = vmatpush.bf16.msra.mxu0 %v3468
    %5214 = vmatpush.bf16.msra.mxu0 %v3464
    %5215 = vmatpush.bf16.msra.mxu0 %v3460
    %5216 = vmatpush.bf16.msra.mxu0 %v3456
    %5217 = vmatpush.bf16.msra.mxu0 %v3452
    %5218 = vmatpush.bf16.msra.mxu0 %v3448
    %5219 = vmatmul.bf16.gmra.mxu0 0
    %v5220 = vpop.f32.mrf.mxu0
    %v5221 = vadd.f32 %v5177, %v5220
    %v5222 = vpop.f32.mrf.mxu0
    %v5223 = vadd.f32 %v5179, %v5222
    %5224 = vmatmul.bf16.gmra.mxu0 %v1058
    %v5225 = vpop.f32.mrf.mxu0
    %v5226 = vadd.f32 %v5182, %v5225
    %v5227 = vpop.f32.mrf.mxu0
    %v5228 = vadd.f32 %v5184, %v5227
    %5229 = vmatmul.bf16.gmra.mxu0 %v1098
    %v5230 = vpop.f32.mrf.mxu0
    %v5231 = vadd.f32 %v5187, %v5230
    %v5232 = vpop.f32.mrf.mxu0
    %v5233 = vadd.f32 %v5189, %v5232
    %5234 = vmatmul.bf16.gmra.mxu0 %v1138
    %v5235 = vpop.f32.mrf.mxu0
    %v5236 = vadd.f32 %v5192, %v5235
    %v5237 = vpop.f32.mrf.mxu0
    %v5238 = vadd.f32 %v5194, %v5237
    %5239 = vmatmul.bf16.gmra.mxu0 %v1178
    %v5240 = vpop.f32.mrf.mxu0
    %v5241 = vadd.f32 %v5197, %v5240
    %v5242 = vpop.f32.mrf.mxu0
    %v5243 = vadd.f32 %v5199, %v5242
    %5244 = vmatmul.bf16.gmra.mxu0 %v1218
    %v5245 = vpop.f32.mrf.mxu0
    %v5246 = vadd.f32 %v5202, %v5245
    %v5247 = vpop.f32.mrf.mxu0
    %v5248 = vadd.f32 %v5204, %v5247
    %5249 = vmatmul.bf16.gmra.mxu0 %v1258
    %v5250 = vpop.f32.mrf.mxu0
    %v5251 = vadd.f32 %v5207, %v5250
    %v5252 = vpop.f32.mrf.mxu0
    %v5253 = vadd.f32 %v5209, %v5252
    %5254 = vdwg.mxu0
    %5255 = vmatpush.bf16.msra.mxu0 %v3508
    %5256 = vmatpush.bf16.msra.mxu0 %v3504
    %5257 = vmatpush.bf16.msra.mxu0 %v3500
    %5258 = vmatpush.bf16.msra.mxu0 %v3496
    %5259 = vmatpush.bf16.msra.mxu0 %v3492
    %5260 = vmatpush.bf16.msra.mxu0 %v3488
    %5261 = vmatpush.bf16.msra.mxu0 %v3484
    %5262 = vmatpush.bf16.msra.mxu0 %v3480
    %5263 = vmatmul.bf16.gmra.mxu0 %v1035
    %v5264 = vpop.f32.mrf.mxu0
    %v5265 = vadd.f32 %v5221, %v5264
    %v5266 = vpop.f32.mrf.mxu0
    %v5267 = vadd.f32 %v5223, %v5266
    %5268 = vmatmul.bf16.gmra.mxu0 %v1075
    %v5269 = vpop.f32.mrf.mxu0
    %v5270 = vadd.f32 %v5226, %v5269
    %v5271 = vpop.f32.mrf.mxu0
    %v5272 = vadd.f32 %v5228, %v5271
    %5273 = vmatmul.bf16.gmra.mxu0 %v1115
    %v5274 = vpop.f32.mrf.mxu0
    %v5275 = vadd.f32 %v5231, %v5274
    %v5276 = vpop.f32.mrf.mxu0
    %v5277 = vadd.f32 %v5233, %v5276
    %5278 = vmatmul.bf16.gmra.mxu0 %v1155
    %v5279 = vpop.f32.mrf.mxu0
    %v5280 = vadd.f32 %v5236, %v5279
    %v5281 = vpop.f32.mrf.mxu0
    %v5282 = vadd.f32 %v5238, %v5281
    %5283 = vmatmul.bf16.gmra.mxu0 %v1195
    %v5284 = vpop.f32.mrf.mxu0
    %v5285 = vadd.f32 %v5241, %v5284
    %v5286 = vpop.f32.mrf.mxu0
    %v5287 = vadd.f32 %v5243, %v5286
    %5288 = vmatmul.bf16.gmra.mxu0 %v1235
    %v5289 = vpop.f32.mrf.mxu0
    %v5290 = vadd.f32 %v5246, %v5289
    %v5291 = vpop.f32.mrf.mxu0
    %v5292 = vadd.f32 %v5248, %v5291
    %5293 = vmatmul.bf16.gmra.mxu0 %v1275
    %v5294 = vpop.f32.mrf.mxu0
    %v5295 = vadd.f32 %v5251, %v5294
    %v5296 = vpop.f32.mrf.mxu0
    %v5297 = vadd.f32 %v5253, %v5296
    %5298 = vdwg.mxu0
    %5299 = vmatpush.bf16.msra.mxu0 %v3540
    %5300 = vmatpush.bf16.msra.mxu0 %v3536
    %5301 = vmatpush.bf16.msra.mxu0 %v3532
    %5302 = vmatpush.bf16.msra.mxu0 %v3528
    %5303 = vmatpush.bf16.msra.mxu0 %v3524
    %5304 = vmatpush.bf16.msra.mxu0 %v3520
    %5305 = vmatpush.bf16.msra.mxu0 %v3516
    %5306 = vmatpush.bf16.msra.mxu0 %v3512
    %5307 = vmatmul.bf16.gmra.mxu0 %v1036
    %v5308 = vpop.f32.mrf.mxu0
    %v5309 = vadd.f32 %v5265, %v5308
    %v5310 = vpop.f32.mrf.mxu0
    %v5311 = vadd.f32 %v5267, %v5310
    %5312 = vmatmul.bf16.gmra.mxu0 %v1076
    %v5313 = vpop.f32.mrf.mxu0
    %v5314 = vadd.f32 %v5270, %v5313
    %v5315 = vpop.f32.mrf.mxu0
    %v5316 = vadd.f32 %v5272, %v5315
    %5317 = vmatmul.bf16.gmra.mxu0 %v1116
    %v5318 = vpop.f32.mrf.mxu0
    %v5319 = vadd.f32 %v5275, %v5318
    %v5320 = vpop.f32.mrf.mxu0
    %v5321 = vadd.f32 %v5277, %v5320
    %5322 = vmatmul.bf16.gmra.mxu0 %v1156
    %v5323 = vpop.f32.mrf.mxu0
    %v5324 = vadd.f32 %v5280, %v5323
    %v5325 = vpop.f32.mrf.mxu0
    %v5326 = vadd.f32 %v5282, %v5325
    %5327 = vmatmul.bf16.gmra.mxu0 %v1196
    %v5328 = vpop.f32.mrf.mxu0
    %v5329 = vadd.f32 %v5285, %v5328
    %v5330 = vpop.f32.mrf.mxu0
    %v5331 = vadd.f32 %v5287, %v5330
    %5332 = vmatmul.bf16.gmra.mxu0 %v1236
    %v5333 = vpop.f32.mrf.mxu0
    %v5334 = vadd.f32 %v5290, %v5333
    %v5335 = vpop.f32.mrf.mxu0
    %v5336 = vadd.f32 %v5292, %v5335
    %5337 = vmatmul.bf16.gmra.mxu0 %v1276
    %v5338 = vpop.f32.mrf.mxu0
    %v5339 = vadd.f32 %v5295, %v5338
    %v5340 = vpop.f32.mrf.mxu0
    %v5341 = vadd.f32 %v5297, %v5340
    %5342 = vdwg.mxu0
    %5343 = vmatpush.bf16.msra.mxu0 %v3572
    %5344 = vmatpush.bf16.msra.mxu0 %v3568
    %5345 = vmatpush.bf16.msra.mxu0 %v3564
    %5346 = vmatpush.bf16.msra.mxu0 %v3560
    %5347 = vmatpush.bf16.msra.mxu0 %v3556
    %5348 = vmatpush.bf16.msra.mxu0 %v3552
    %5349 = vmatpush.bf16.msra.mxu0 %v3548
    %5350 = vmatpush.bf16.msra.mxu0 %v3544
    %5351 = vmatmul.bf16.gmra.mxu0 %v1037
    %v5352 = vpop.f32.mrf.mxu0
    %v5353 = vadd.f32 %v5309, %v5352
    %v5354 = vpop.f32.mrf.mxu0
    %v5355 = vadd.f32 %v5311, %v5354
    %5356 = vmatmul.bf16.gmra.mxu0 %v1077
    %v5357 = vpop.f32.mrf.mxu0
    %v5358 = vadd.f32 %v5314, %v5357
    %v5359 = vpop.f32.mrf.mxu0
    %v5360 = vadd.f32 %v5316, %v5359
    %5361 = vmatmul.bf16.gmra.mxu0 %v1117
    %v5362 = vpop.f32.mrf.mxu0
    %v5363 = vadd.f32 %v5319, %v5362
    %v5364 = vpop.f32.mrf.mxu0
    %v5365 = vadd.f32 %v5321, %v5364
    %5366 = vmatmul.bf16.gmra.mxu0 %v1157
    %v5367 = vpop.f32.mrf.mxu0
    %v5368 = vadd.f32 %v5324, %v5367
    %v5369 = vpop.f32.mrf.mxu0
    %v5370 = vadd.f32 %v5326, %v5369
    %5371 = vmatmul.bf16.gmra.mxu0 %v1197
    %v5372 = vpop.f32.mrf.mxu0
    %v5373 = vadd.f32 %v5329, %v5372
    %v5374 = vpop.f32.mrf.mxu0
    %v5375 = vadd.f32 %v5331, %v5374
    %5376 = vmatmul.bf16.gmra.mxu0 %v1237
    %v5377 = vpop.f32.mrf.mxu0
    %v5378 = vadd.f32 %v5334, %v5377
    %v5379 = vpop.f32.mrf.mxu0
    %v5380 = vadd.f32 %v5336, %v5379
    %5381 = vmatmul.bf16.gmra.mxu0 %v1277
    %v5382 = vpop.f32.mrf.mxu0
    %v5383 = vadd.f32 %v5339, %v5382
    %v5384 = vpop.f32.mrf.mxu0
    %v5385 = vadd.f32 %v5341, %v5384
    %5386 = vdwg.mxu0
    %5387 = vmatpush.bf16.msra.mxu0 %v3604
    %5388 = vmatpush.bf16.msra.mxu0 %v3600
    %5389 = vmatpush.bf16.msra.mxu0 %v3596
    %5390 = vmatpush.bf16.msra.mxu0 %v3592
    %5391 = vmatpush.bf16.msra.mxu0 %v3588
    %5392 = vmatpush.bf16.msra.mxu0 %v3584
    %5393 = vmatpush.bf16.msra.mxu0 %v3580
    %5394 = vmatpush.bf16.msra.mxu0 %v3576
    %5395 = vmatmul.bf16.gmra.mxu0 %v1038
    %v5396 = vpop.f32.mrf.mxu0
    %v5397 = vadd.f32 %v5353, %v5396
    %v5398 = vpop.f32.mrf.mxu0
    %v5399 = vadd.f32 %v5355, %v5398
    %5400 = vmatmul.bf16.gmra.mxu0 %v1078
    %v5401 = vpop.f32.mrf.mxu0
    %v5402 = vadd.f32 %v5358, %v5401
    %v5403 = vpop.f32.mrf.mxu0
    %v5404 = vadd.f32 %v5360, %v5403
    %5405 = vmatmul.bf16.gmra.mxu0 %v1118
    %v5406 = vpop.f32.mrf.mxu0
    %v5407 = vadd.f32 %v5363, %v5406
    %v5408 = vpop.f32.mrf.mxu0
    %v5409 = vadd.f32 %v5365, %v5408
    %5410 = vmatmul.bf16.gmra.mxu0 %v1158
    %v5411 = vpop.f32.mrf.mxu0
    %v5412 = vadd.f32 %v5368, %v5411
    %v5413 = vpop.f32.mrf.mxu0
    %v5414 = vadd.f32 %v5370, %v5413
    %5415 = vmatmul.bf16.gmra.mxu0 %v1198
    %v5416 = vpop.f32.mrf.mxu0
    %v5417 = vadd.f32 %v5373, %v5416
    %v5418 = vpop.f32.mrf.mxu0
    %v5419 = vadd.f32 %v5375, %v5418
    %5420 = vmatmul.bf16.gmra.mxu0 %v1238
    %v5421 = vpop.f32.mrf.mxu0
    %v5422 = vadd.f32 %v5378, %v5421
    %v5423 = vpop.f32.mrf.mxu0
    %v5424 = vadd.f32 %v5380, %v5423
    %5425 = vmatmul.bf16.gmra.mxu0 %v1278
    %v5426 = vpop.f32.mrf.mxu0
    %v5427 = vadd.f32 %v5383, %v5426
    %v5428 = vpop.f32.mrf.mxu0
    %v5429 = vadd.f32 %v5385, %v5428
    %5430 = vdwg.mxu0
    %5431 = vmatpush.bf16.msra.mxu0 %v3636
    %5432 = vmatpush.bf16.msra.mxu0 %v3632
    %5433 = vmatpush.bf16.msra.mxu0 %v3628
    %5434 = vmatpush.bf16.msra.mxu0 %v3624
    %5435 = vmatpush.bf16.msra.mxu0 %v3620
    %5436 = vmatpush.bf16.msra.mxu0 %v3616
    %5437 = vmatpush.bf16.msra.mxu0 %v3612
    %5438 = vmatpush.bf16.msra.mxu0 %v3608
    %5439 = vmatmul.bf16.gmra.mxu0 %v1055
    %v5440 = vpop.f32.mrf.mxu0
    %v5441 = vadd.f32 %v5397, %v5440
    %v5442 = vpop.f32.mrf.mxu0
    %v5443 = vadd.f32 %v5399, %v5442
    %5444 = vmatmul.bf16.gmra.mxu0 %v1095
    %v5445 = vpop.f32.mrf.mxu0
    %v5446 = vadd.f32 %v5402, %v5445
    %v5447 = vpop.f32.mrf.mxu0
    %v5448 = vadd.f32 %v5404, %v5447
    %5449 = vmatmul.bf16.gmra.mxu0 %v1135
    %v5450 = vpop.f32.mrf.mxu0
    %v5451 = vadd.f32 %v5407, %v5450
    %v5452 = vpop.f32.mrf.mxu0
    %v5453 = vadd.f32 %v5409, %v5452
    %5454 = vmatmul.bf16.gmra.mxu0 %v1175
    %v5455 = vpop.f32.mrf.mxu0
    %v5456 = vadd.f32 %v5412, %v5455
    %v5457 = vpop.f32.mrf.mxu0
    %v5458 = vadd.f32 %v5414, %v5457
    %5459 = vmatmul.bf16.gmra.mxu0 %v1215
    %v5460 = vpop.f32.mrf.mxu0
    %v5461 = vadd.f32 %v5417, %v5460
    %v5462 = vpop.f32.mrf.mxu0
    %v5463 = vadd.f32 %v5419, %v5462
    %5464 = vmatmul.bf16.gmra.mxu0 %v1255
    %v5465 = vpop.f32.mrf.mxu0
    %v5466 = vadd.f32 %v5422, %v5465
    %v5467 = vpop.f32.mrf.mxu0
    %v5468 = vadd.f32 %v5424, %v5467
    %5469 = vmatmul.bf16.gmra.mxu0 %v1295
    %v5470 = vpop.f32.mrf.mxu0
    %v5471 = vadd.f32 %v5427, %v5470
    %v5472 = vpop.f32.mrf.mxu0
    %v5473 = vadd.f32 %v5429, %v5472
    %5474 = vdwg.mxu0
    %5475 = vmatpush.bf16.msra.mxu0 %v3668
    %5476 = vmatpush.bf16.msra.mxu0 %v3664
    %5477 = vmatpush.bf16.msra.mxu0 %v3660
    %5478 = vmatpush.bf16.msra.mxu0 %v3656
    %5479 = vmatpush.bf16.msra.mxu0 %v3652
    %5480 = vmatpush.bf16.msra.mxu0 %v3648
    %5481 = vmatpush.bf16.msra.mxu0 %v3644
    %5482 = vmatpush.bf16.msra.mxu0 %v3640
    %5483 = vmatmul.bf16.gmra.mxu0 %v1056
    %v5484 = vpop.f32.mrf.mxu0
    %v5485 = vadd.f32 %v5441, %v5484
    %v5486 = vpop.f32.mrf.mxu0
    %v5487 = vadd.f32 %v5443, %v5486
    %5488 = vmatmul.bf16.gmra.mxu0 %v1096
    %v5489 = vpop.f32.mrf.mxu0
    %v5490 = vadd.f32 %v5446, %v5489
    %v5491 = vpop.f32.mrf.mxu0
    %v5492 = vadd.f32 %v5448, %v5491
    %5493 = vmatmul.bf16.gmra.mxu0 %v1136
    %v5494 = vpop.f32.mrf.mxu0
    %v5495 = vadd.f32 %v5451, %v5494
    %v5496 = vpop.f32.mrf.mxu0
    %v5497 = vadd.f32 %v5453, %v5496
    %5498 = vmatmul.bf16.gmra.mxu0 %v1176
    %v5499 = vpop.f32.mrf.mxu0
    %v5500 = vadd.f32 %v5456, %v5499
    %v5501 = vpop.f32.mrf.mxu0
    %v5502 = vadd.f32 %v5458, %v5501
    %5503 = vmatmul.bf16.gmra.mxu0 %v1216
    %v5504 = vpop.f32.mrf.mxu0
    %v5505 = vadd.f32 %v5461, %v5504
    %v5506 = vpop.f32.mrf.mxu0
    %v5507 = vadd.f32 %v5463, %v5506
    %5508 = vmatmul.bf16.gmra.mxu0 %v1256
    %v5509 = vpop.f32.mrf.mxu0
    %v5510 = vadd.f32 %v5466, %v5509
    %v5511 = vpop.f32.mrf.mxu0
    %v5512 = vadd.f32 %v5468, %v5511
    %5513 = vmatmul.bf16.gmra.mxu0 %v1296
    %v5514 = vpop.f32.mrf.mxu0
    %v5515 = vadd.f32 %v5471, %v5514
    %v5516 = vpop.f32.mrf.mxu0
    %v5517 = vadd.f32 %v5473, %v5516
    %5518 = vdwg.mxu0
    %5519 = vmatpush.bf16.msra.mxu0 %v3700
    %5520 = vmatpush.bf16.msra.mxu0 %v3696
    %5521 = vmatpush.bf16.msra.mxu0 %v3692
    %5522 = vmatpush.bf16.msra.mxu0 %v3688
    %5523 = vmatpush.bf16.msra.mxu0 %v3684
    %5524 = vmatpush.bf16.msra.mxu0 %v3680
    %5525 = vmatpush.bf16.msra.mxu0 %v3676
    %5526 = vmatpush.bf16.msra.mxu0 %v3672
    %5527 = vmatmul.bf16.gmra.mxu0 %v1057
    %v5528 = vpop.f32.mrf.mxu0
    %v5529 = vadd.f32 %v5485, %v5528
    %v5530 = vpop.f32.mrf.mxu0
    %v5531 = vadd.f32 %v5487, %v5530
    %5532 = vmatmul.bf16.gmra.mxu0 %v1097
    %v5533 = vpop.f32.mrf.mxu0
    %v5534 = vadd.f32 %v5490, %v5533
    %v5535 = vpop.f32.mrf.mxu0
    %v5536 = vadd.f32 %v5492, %v5535
    %5537 = vmatmul.bf16.gmra.mxu0 %v1137
    %v5538 = vpop.f32.mrf.mxu0
    %v5539 = vadd.f32 %v5495, %v5538
    %v5540 = vpop.f32.mrf.mxu0
    %v5541 = vadd.f32 %v5497, %v5540
    %5542 = vmatmul.bf16.gmra.mxu0 %v1177
    %v5543 = vpop.f32.mrf.mxu0
    %v5544 = vadd.f32 %v5500, %v5543
    %v5545 = vpop.f32.mrf.mxu0
    %v5546 = vadd.f32 %v5502, %v5545
    %5547 = vmatmul.bf16.gmra.mxu0 %v1217
    %v5548 = vpop.f32.mrf.mxu0
    %v5549 = vadd.f32 %v5505, %v5548
    %v5550 = vpop.f32.mrf.mxu0
    %v5551 = vadd.f32 %v5507, %v5550
    %5552 = vmatmul.bf16.gmra.mxu0 %v1257
    %v5553 = vpop.f32.mrf.mxu0
    %v5554 = vadd.f32 %v5510, %v5553
    %v5555 = vpop.f32.mrf.mxu0
    %v5556 = vadd.f32 %v5512, %v5555
    %5557 = vmatmul.bf16.gmra.mxu0 %v1297
    %v5558 = vpop.f32.mrf.mxu0
    %v5559 = vadd.f32 %v5515, %v5558
    %v5560 = vpop.f32.mrf.mxu0
    %v5561 = vadd.f32 %v5517, %v5560
    %5562 = vdwg.mxu0
    %5563 = vmatpush.bf16.msra.mxu0 %v3732
    %5564 = vmatpush.bf16.msra.mxu0 %v3728
    %5565 = vmatpush.bf16.msra.mxu0 %v3724
    %5566 = vmatpush.bf16.msra.mxu0 %v3720
    %5567 = vmatpush.bf16.msra.mxu0 %v3716
    %5568 = vmatpush.bf16.msra.mxu0 %v3712
    %5569 = vmatpush.bf16.msra.mxu0 %v3708
    %5570 = vmatpush.bf16.msra.mxu0 %v3704
    %5571 = vmatmul.bf16.gmra.mxu0 %v1058
    %v5572 = vpop.f32.mrf.mxu0
    %v5573 = vadd.f32 %v5529, %v5572
    %v5574 = vpop.f32.mrf.mxu0
    %v5575 = vadd.f32 %v5531, %v5574
    %5576 = vmatmul.bf16.gmra.mxu0 %v1098
    %v5577 = vpop.f32.mrf.mxu0
    %v5578 = vadd.f32 %v5534, %v5577
    %v5579 = vpop.f32.mrf.mxu0
    %v5580 = vadd.f32 %v5536, %v5579
    %5581 = vmatmul.bf16.gmra.mxu0 %v1138
    %v5582 = vpop.f32.mrf.mxu0
    %v5583 = vadd.f32 %v5539, %v5582
    %v5584 = vpop.f32.mrf.mxu0
    %v5585 = vadd.f32 %v5541, %v5584
    %5586 = vmatmul.bf16.gmra.mxu0 %v1178
    %v5587 = vpop.f32.mrf.mxu0
    %v5588 = vadd.f32 %v5544, %v5587
    %v5589 = vpop.f32.mrf.mxu0
    %v5590 = vadd.f32 %v5546, %v5589
    %5591 = vmatmul.bf16.gmra.mxu0 %v1218
    %v5592 = vpop.f32.mrf.mxu0
    %v5593 = vadd.f32 %v5549, %v5592
    %v5594 = vpop.f32.mrf.mxu0
    %v5595 = vadd.f32 %v5551, %v5594
    %5596 = vmatmul.bf16.gmra.mxu0 %v1258
    %v5597 = vpop.f32.mrf.mxu0
    %v5598 = vadd.f32 %v5554, %v5597
    %v5599 = vpop.f32.mrf.mxu0
    %v5600 = vadd.f32 %v5556, %v5599
    %5601 = vmatmul.bf16.gmra.mxu0 %v1298
    %v5602 = vpop.f32.mrf.mxu0
    %v5603 = vadd.f32 %v5559, %v5602
    %v5604 = vpop.f32.mrf.mxu0
    %v5605 = vadd.f32 %v5561, %v5604
    %5606 = vdwg.mxu0
    %5607 = vmatpush.bf16.msra.mxu0 %v3764
    %5608 = vmatpush.bf16.msra.mxu0 %v3760
    %5609 = vmatpush.bf16.msra.mxu0 %v3756
    %5610 = vmatpush.bf16.msra.mxu0 %v3752
    %5611 = vmatpush.bf16.msra.mxu0 %v3748
    %5612 = vmatpush.bf16.msra.mxu0 %v3744
    %5613 = vmatpush.bf16.msra.mxu0 %v3740
    %5614 = vmatpush.bf16.msra.mxu0 %v3736
    %5615 = vmatmul.bf16.gmra.mxu0 %v1075
    %v5616 = vpop.f32.mrf.mxu0
    %v5617 = vadd.f32 %v5573, %v5616
    %v5618 = vpop.f32.mrf.mxu0
    %v5619 = vadd.f32 %v5575, %v5618
    %5620 = vmatmul.bf16.gmra.mxu0 %v1115
    %v5621 = vpop.f32.mrf.mxu0
    %v5622 = vadd.f32 %v5578, %v5621
    %v5623 = vpop.f32.mrf.mxu0
    %v5624 = vadd.f32 %v5580, %v5623
    %5625 = vmatmul.bf16.gmra.mxu0 %v1155
    %v5626 = vpop.f32.mrf.mxu0
    %v5627 = vadd.f32 %v5583, %v5626
    %v5628 = vpop.f32.mrf.mxu0
    %v5629 = vadd.f32 %v5585, %v5628
    %5630 = vmatmul.bf16.gmra.mxu0 %v1195
    %v5631 = vpop.f32.mrf.mxu0
    %v5632 = vadd.f32 %v5588, %v5631
    %v5633 = vpop.f32.mrf.mxu0
    %v5634 = vadd.f32 %v5590, %v5633
    %5635 = vmatmul.bf16.gmra.mxu0 %v1235
    %v5636 = vpop.f32.mrf.mxu0
    %v5637 = vadd.f32 %v5593, %v5636
    %v5638 = vpop.f32.mrf.mxu0
    %v5639 = vadd.f32 %v5595, %v5638
    %5640 = vmatmul.bf16.gmra.mxu0 %v1275
    %v5641 = vpop.f32.mrf.mxu0
    %v5642 = vadd.f32 %v5598, %v5641
    %v5643 = vpop.f32.mrf.mxu0
    %v5644 = vadd.f32 %v5600, %v5643
    %5645 = vmatmul.bf16.gmra.mxu0 0
    %v5646 = vpop.f32.mrf.mxu0
    %v5647 = vadd.f32 %v5603, %v5646
    %v5648 = vpop.f32.mrf.mxu0
    %v5649 = vadd.f32 %v5605, %v5648
    %5650 = vdwg.mxu0
    %5651 = vmatpush.bf16.msra.mxu0 %v3796
    %5652 = vmatpush.bf16.msra.mxu0 %v3792
    %5653 = vmatpush.bf16.msra.mxu0 %v3788
    %5654 = vmatpush.bf16.msra.mxu0 %v3784
    %5655 = vmatpush.bf16.msra.mxu0 %v3780
    %5656 = vmatpush.bf16.msra.mxu0 %v3776
    %5657 = vmatpush.bf16.msra.mxu0 %v3772
    %5658 = vmatpush.bf16.msra.mxu0 %v3768
    %5659 = vmatmul.bf16.gmra.mxu0 %v1076
    %v5660 = vpop.f32.mrf.mxu0
    %v5661 = vadd.f32 %v5617, %v5660
    %v5662 = vpop.f32.mrf.mxu0
    %v5663 = vadd.f32 %v5619, %v5662
    %5664 = vmatmul.bf16.gmra.mxu0 %v1116
    %v5665 = vpop.f32.mrf.mxu0
    %v5666 = vadd.f32 %v5622, %v5665
    %v5667 = vpop.f32.mrf.mxu0
    %v5668 = vadd.f32 %v5624, %v5667
    %5669 = vmatmul.bf16.gmra.mxu0 %v1156
    %v5670 = vpop.f32.mrf.mxu0
    %v5671 = vadd.f32 %v5627, %v5670
    %v5672 = vpop.f32.mrf.mxu0
    %v5673 = vadd.f32 %v5629, %v5672
    %5674 = vmatmul.bf16.gmra.mxu0 %v1196
    %v5675 = vpop.f32.mrf.mxu0
    %v5676 = vadd.f32 %v5632, %v5675
    %v5677 = vpop.f32.mrf.mxu0
    %v5678 = vadd.f32 %v5634, %v5677
    %5679 = vmatmul.bf16.gmra.mxu0 %v1236
    %v5680 = vpop.f32.mrf.mxu0
    %v5681 = vadd.f32 %v5637, %v5680
    %v5682 = vpop.f32.mrf.mxu0
    %v5683 = vadd.f32 %v5639, %v5682
    %5684 = vmatmul.bf16.gmra.mxu0 %v1276
    %v5685 = vpop.f32.mrf.mxu0
    %v5686 = vadd.f32 %v5642, %v5685
    %v5687 = vpop.f32.mrf.mxu0
    %v5688 = vadd.f32 %v5644, %v5687
    %5689 = vmatmul.bf16.gmra.mxu0 0
    %v5690 = vpop.f32.mrf.mxu0
    %v5691 = vadd.f32 %v5647, %v5690
    %v5692 = vpop.f32.mrf.mxu0
    %v5693 = vadd.f32 %v5649, %v5692
    %5694 = vdwg.mxu0
    %5695 = vmatpush.bf16.msra.mxu0 %v3828
    %5696 = vmatpush.bf16.msra.mxu0 %v3824
    %5697 = vmatpush.bf16.msra.mxu0 %v3820
    %5698 = vmatpush.bf16.msra.mxu0 %v3816
    %5699 = vmatpush.bf16.msra.mxu0 %v3812
    %5700 = vmatpush.bf16.msra.mxu0 %v3808
    %5701 = vmatpush.bf16.msra.mxu0 %v3804
    %5702 = vmatpush.bf16.msra.mxu0 %v3800
    %5703 = vmatmul.bf16.gmra.mxu0 %v1077
    %v5704 = vpop.f32.mrf.mxu0
    %v5705 = vadd.f32 %v5661, %v5704
    %v5706 = vpop.f32.mrf.mxu0
    %v5707 = vadd.f32 %v5663, %v5706
    %5708 = vmatmul.bf16.gmra.mxu0 %v1117
    %v5709 = vpop.f32.mrf.mxu0
    %v5710 = vadd.f32 %v5666, %v5709
    %v5711 = vpop.f32.mrf.mxu0
    %v5712 = vadd.f32 %v5668, %v5711
    %5713 = vmatmul.bf16.gmra.mxu0 %v1157
    %v5714 = vpop.f32.mrf.mxu0
    %v5715 = vadd.f32 %v5671, %v5714
    %v5716 = vpop.f32.mrf.mxu0
    %v5717 = vadd.f32 %v5673, %v5716
    %5718 = vmatmul.bf16.gmra.mxu0 %v1197
    %v5719 = vpop.f32.mrf.mxu0
    %v5720 = vadd.f32 %v5676, %v5719
    %v5721 = vpop.f32.mrf.mxu0
    %v5722 = vadd.f32 %v5678, %v5721
    %5723 = vmatmul.bf16.gmra.mxu0 %v1237
    %v5724 = vpop.f32.mrf.mxu0
    %v5725 = vadd.f32 %v5681, %v5724
    %v5726 = vpop.f32.mrf.mxu0
    %v5727 = vadd.f32 %v5683, %v5726
    %5728 = vmatmul.bf16.gmra.mxu0 %v1277
    %v5729 = vpop.f32.mrf.mxu0
    %v5730 = vadd.f32 %v5686, %v5729
    %v5731 = vpop.f32.mrf.mxu0
    %v5732 = vadd.f32 %v5688, %v5731
    %5733 = vmatmul.bf16.gmra.mxu0 0
    %v5734 = vpop.f32.mrf.mxu0
    %v5735 = vadd.f32 %v5691, %v5734
    %v5736 = vpop.f32.mrf.mxu0
    %v5737 = vadd.f32 %v5693, %v5736
    %5738 = vdwg.mxu0
    %5739 = vmatpush.bf16.msra.mxu0 %v3860
    %5740 = vmatpush.bf16.msra.mxu0 %v3856
    %5741 = vmatpush.bf16.msra.mxu0 %v3852
    %5742 = vmatpush.bf16.msra.mxu0 %v3848
    %5743 = vmatpush.bf16.msra.mxu0 %v3844
    %5744 = vmatpush.bf16.msra.mxu0 %v3840
    %5745 = vmatpush.bf16.msra.mxu0 %v3836
    %5746 = vmatpush.bf16.msra.mxu0 %v3832
    %5747 = vmatmul.bf16.gmra.mxu0 %v1078
    %v5748 = vpop.f32.mrf.mxu0
    %v5749 = vadd.f32 %v5705, %v5748
    %v5750 = vpop.f32.mrf.mxu0
    %v5751 = vadd.f32 %v5707, %v5750
    %5752 = vmatmul.bf16.gmra.mxu0 %v1118
    %v5753 = vpop.f32.mrf.mxu0
    %v5754 = vadd.f32 %v5710, %v5753
    %v5755 = vpop.f32.mrf.mxu0
    %v5756 = vadd.f32 %v5712, %v5755
    %5757 = vmatmul.bf16.gmra.mxu0 %v1158
    %v5758 = vpop.f32.mrf.mxu0
    %v5759 = vadd.f32 %v5715, %v5758
    %v5760 = vpop.f32.mrf.mxu0
    %v5761 = vadd.f32 %v5717, %v5760
    %5762 = vmatmul.bf16.gmra.mxu0 %v1198
    %v5763 = vpop.f32.mrf.mxu0
    %v5764 = vadd.f32 %v5720, %v5763
    %v5765 = vpop.f32.mrf.mxu0
    %v5766 = vadd.f32 %v5722, %v5765
    %5767 = vmatmul.bf16.gmra.mxu0 %v1238
    %v5768 = vpop.f32.mrf.mxu0
    %v5769 = vadd.f32 %v5725, %v5768
    %v5770 = vpop.f32.mrf.mxu0
    %v5771 = vadd.f32 %v5727, %v5770
    %5772 = vmatmul.bf16.gmra.mxu0 %v1278
    %v5773 = vpop.f32.mrf.mxu0
    %v5774 = vadd.f32 %v5730, %v5773
    %v5775 = vpop.f32.mrf.mxu0
    %v5776 = vadd.f32 %v5732, %v5775
    %5777 = vmatmul.bf16.gmra.mxu0 0
    %v5778 = vpop.f32.mrf.mxu0
    %v5779 = vadd.f32 %v5735, %v5778
    %v5780 = vpop.f32.mrf.mxu0
    %v5781 = vadd.f32 %v5737, %v5780
    %5782 = vdwg.mxu0
    %5783 = vmatpush.bf16.msra.mxu0 %v3381
    %5784 = vmatpush.bf16.msra.mxu0 %v3377
    %5785 = vmatpush.bf16.msra.mxu0 %v3373
    %5786 = vmatpush.bf16.msra.mxu0 %v3369
    %5787 = vmatpush.bf16.msra.mxu0 %v3365
    %5788 = vmatpush.bf16.msra.mxu0 %v3361
    %5789 = vmatpush.bf16.msra.mxu0 %v3357
    %5790 = vmatpush.bf16.msra.mxu0 %v3353
    %5791 = vmatmul.bf16.gmra.mxu0 0
    %v5792 = vpop.f32.mrf.mxu0
    %v5793 = vadd.f32 0.0, %v5792
    %v5794 = vpop.f32.mrf.mxu0
    %v5795 = vadd.f32 0.0, %v5794
    %5796 = vmatmul.bf16.gmra.mxu0 %v1055
    %v5797 = vpop.f32.mrf.mxu0
    %v5798 = vadd.f32 0.0, %v5797
    %v5799 = vpop.f32.mrf.mxu0
    %v5800 = vadd.f32 0.0, %v5799
    %5801 = vmatmul.bf16.gmra.mxu0 %v1095
    %v5802 = vpop.f32.mrf.mxu0
    %v5803 = vadd.f32 0.0, %v5802
    %v5804 = vpop.f32.mrf.mxu0
    %v5805 = vadd.f32 0.0, %v5804
    %5806 = vmatmul.bf16.gmra.mxu0 %v1135
    %v5807 = vpop.f32.mrf.mxu0
    %v5808 = vadd.f32 0.0, %v5807
    %v5809 = vpop.f32.mrf.mxu0
    %v5810 = vadd.f32 0.0, %v5809
    %5811 = vmatmul.bf16.gmra.mxu0 %v1175
    %v5812 = vpop.f32.mrf.mxu0
    %v5813 = vadd.f32 0.0, %v5812
    %v5814 = vpop.f32.mrf.mxu0
    %v5815 = vadd.f32 0.0, %v5814
    %5816 = vmatmul.bf16.gmra.mxu0 %v1215
    %v5817 = vpop.f32.mrf.mxu0
    %v5818 = vadd.f32 0.0, %v5817
    %v5819 = vpop.f32.mrf.mxu0
    %v5820 = vadd.f32 0.0, %v5819
    %5821 = vmatmul.bf16.gmra.mxu0 %v1255
    %v5822 = vpop.f32.mrf.mxu0
    %v5823 = vadd.f32 0.0, %v5822
    %v5824 = vpop.f32.mrf.mxu0
    %v5825 = vadd.f32 0.0, %v5824
    %5826 = vdwg.mxu0
    %5827 = vmatpush.bf16.msra.mxu0 %v3413
    %5828 = vmatpush.bf16.msra.mxu0 %v3409
    %5829 = vmatpush.bf16.msra.mxu0 %v3405
    %5830 = vmatpush.bf16.msra.mxu0 %v3401
    %5831 = vmatpush.bf16.msra.mxu0 %v3397
    %5832 = vmatpush.bf16.msra.mxu0 %v3393
    %5833 = vmatpush.bf16.msra.mxu0 %v3389
    %5834 = vmatpush.bf16.msra.mxu0 %v3385
    %5835 = vmatmul.bf16.gmra.mxu0 0
    %v5836 = vpop.f32.mrf.mxu0
    %v5837 = vadd.f32 %v5793, %v5836
    %v5838 = vpop.f32.mrf.mxu0
    %v5839 = vadd.f32 %v5795, %v5838
    %5840 = vmatmul.bf16.gmra.mxu0 %v1056
    %v5841 = vpop.f32.mrf.mxu0
    %v5842 = vadd.f32 %v5798, %v5841
    %v5843 = vpop.f32.mrf.mxu0
    %v5844 = vadd.f32 %v5800, %v5843
    %5845 = vmatmul.bf16.gmra.mxu0 %v1096
    %v5846 = vpop.f32.mrf.mxu0
    %v5847 = vadd.f32 %v5803, %v5846
    %v5848 = vpop.f32.mrf.mxu0
    %v5849 = vadd.f32 %v5805, %v5848
    %5850 = vmatmul.bf16.gmra.mxu0 %v1136
    %v5851 = vpop.f32.mrf.mxu0
    %v5852 = vadd.f32 %v5808, %v5851
    %v5853 = vpop.f32.mrf.mxu0
    %v5854 = vadd.f32 %v5810, %v5853
    %5855 = vmatmul.bf16.gmra.mxu0 %v1176
    %v5856 = vpop.f32.mrf.mxu0
    %v5857 = vadd.f32 %v5813, %v5856
    %v5858 = vpop.f32.mrf.mxu0
    %v5859 = vadd.f32 %v5815, %v5858
    %5860 = vmatmul.bf16.gmra.mxu0 %v1216
    %v5861 = vpop.f32.mrf.mxu0
    %v5862 = vadd.f32 %v5818, %v5861
    %v5863 = vpop.f32.mrf.mxu0
    %v5864 = vadd.f32 %v5820, %v5863
    %5865 = vmatmul.bf16.gmra.mxu0 %v1256
    %v5866 = vpop.f32.mrf.mxu0
    %v5867 = vadd.f32 %v5823, %v5866
    %v5868 = vpop.f32.mrf.mxu0
    %v5869 = vadd.f32 %v5825, %v5868
    %5870 = vdwg.mxu0
    %5871 = vmatpush.bf16.msra.mxu0 %v3445
    %5872 = vmatpush.bf16.msra.mxu0 %v3441
    %5873 = vmatpush.bf16.msra.mxu0 %v3437
    %5874 = vmatpush.bf16.msra.mxu0 %v3433
    %5875 = vmatpush.bf16.msra.mxu0 %v3429
    %5876 = vmatpush.bf16.msra.mxu0 %v3425
    %5877 = vmatpush.bf16.msra.mxu0 %v3421
    %5878 = vmatpush.bf16.msra.mxu0 %v3417
    %5879 = vmatmul.bf16.gmra.mxu0 0
    %v5880 = vpop.f32.mrf.mxu0
    %v5881 = vadd.f32 %v5837, %v5880
    %v5882 = vpop.f32.mrf.mxu0
    %v5883 = vadd.f32 %v5839, %v5882
    %5884 = vmatmul.bf16.gmra.mxu0 %v1057
    %v5885 = vpop.f32.mrf.mxu0
    %v5886 = vadd.f32 %v5842, %v5885
    %v5887 = vpop.f32.mrf.mxu0
    %v5888 = vadd.f32 %v5844, %v5887
    %5889 = vmatmul.bf16.gmra.mxu0 %v1097
    %v5890 = vpop.f32.mrf.mxu0
    %v5891 = vadd.f32 %v5847, %v5890
    %v5892 = vpop.f32.mrf.mxu0
    %v5893 = vadd.f32 %v5849, %v5892
    %5894 = vmatmul.bf16.gmra.mxu0 %v1137
    %v5895 = vpop.f32.mrf.mxu0
    %v5896 = vadd.f32 %v5852, %v5895
    %v5897 = vpop.f32.mrf.mxu0
    %v5898 = vadd.f32 %v5854, %v5897
    %5899 = vmatmul.bf16.gmra.mxu0 %v1177
    %v5900 = vpop.f32.mrf.mxu0
    %v5901 = vadd.f32 %v5857, %v5900
    %v5902 = vpop.f32.mrf.mxu0
    %v5903 = vadd.f32 %v5859, %v5902
    %5904 = vmatmul.bf16.gmra.mxu0 %v1217
    %v5905 = vpop.f32.mrf.mxu0
    %v5906 = vadd.f32 %v5862, %v5905
    %v5907 = vpop.f32.mrf.mxu0
    %v5908 = vadd.f32 %v5864, %v5907
    %5909 = vmatmul.bf16.gmra.mxu0 %v1257
    %v5910 = vpop.f32.mrf.mxu0
    %v5911 = vadd.f32 %v5867, %v5910
    %v5912 = vpop.f32.mrf.mxu0
    %v5913 = vadd.f32 %v5869, %v5912
    %5914 = vdwg.mxu0
    %5915 = vmatpush.bf16.msra.mxu0 %v3477
    %5916 = vmatpush.bf16.msra.mxu0 %v3473
    %5917 = vmatpush.bf16.msra.mxu0 %v3469
    %5918 = vmatpush.bf16.msra.mxu0 %v3465
    %5919 = vmatpush.bf16.msra.mxu0 %v3461
    %5920 = vmatpush.bf16.msra.mxu0 %v3457
    %5921 = vmatpush.bf16.msra.mxu0 %v3453
    %5922 = vmatpush.bf16.msra.mxu0 %v3449
    %5923 = vmatmul.bf16.gmra.mxu0 0
    %v5924 = vpop.f32.mrf.mxu0
    %v5925 = vadd.f32 %v5881, %v5924
    %v5926 = vpop.f32.mrf.mxu0
    %v5927 = vadd.f32 %v5883, %v5926
    %5928 = vmatmul.bf16.gmra.mxu0 %v1058
    %v5929 = vpop.f32.mrf.mxu0
    %v5930 = vadd.f32 %v5886, %v5929
    %v5931 = vpop.f32.mrf.mxu0
    %v5932 = vadd.f32 %v5888, %v5931
    %5933 = vmatmul.bf16.gmra.mxu0 %v1098
    %v5934 = vpop.f32.mrf.mxu0
    %v5935 = vadd.f32 %v5891, %v5934
    %v5936 = vpop.f32.mrf.mxu0
    %v5937 = vadd.f32 %v5893, %v5936
    %5938 = vmatmul.bf16.gmra.mxu0 %v1138
    %v5939 = vpop.f32.mrf.mxu0
    %v5940 = vadd.f32 %v5896, %v5939
    %v5941 = vpop.f32.mrf.mxu0
    %v5942 = vadd.f32 %v5898, %v5941
    %5943 = vmatmul.bf16.gmra.mxu0 %v1178
    %v5944 = vpop.f32.mrf.mxu0
    %v5945 = vadd.f32 %v5901, %v5944
    %v5946 = vpop.f32.mrf.mxu0
    %v5947 = vadd.f32 %v5903, %v5946
    %5948 = vmatmul.bf16.gmra.mxu0 %v1218
    %v5949 = vpop.f32.mrf.mxu0
    %v5950 = vadd.f32 %v5906, %v5949
    %v5951 = vpop.f32.mrf.mxu0
    %v5952 = vadd.f32 %v5908, %v5951
    %5953 = vmatmul.bf16.gmra.mxu0 %v1258
    %v5954 = vpop.f32.mrf.mxu0
    %v5955 = vadd.f32 %v5911, %v5954
    %v5956 = vpop.f32.mrf.mxu0
    %v5957 = vadd.f32 %v5913, %v5956
    %5958 = vdwg.mxu0
    %5959 = vmatpush.bf16.msra.mxu0 %v3509
    %5960 = vmatpush.bf16.msra.mxu0 %v3505
    %5961 = vmatpush.bf16.msra.mxu0 %v3501
    %5962 = vmatpush.bf16.msra.mxu0 %v3497
    %5963 = vmatpush.bf16.msra.mxu0 %v3493
    %5964 = vmatpush.bf16.msra.mxu0 %v3489
    %5965 = vmatpush.bf16.msra.mxu0 %v3485
    %5966 = vmatpush.bf16.msra.mxu0 %v3481
    %5967 = vmatmul.bf16.gmra.mxu0 %v1035
    %v5968 = vpop.f32.mrf.mxu0
    %v5969 = vadd.f32 %v5925, %v5968
    %v5970 = vpop.f32.mrf.mxu0
    %v5971 = vadd.f32 %v5927, %v5970
    %5972 = vmatmul.bf16.gmra.mxu0 %v1075
    %v5973 = vpop.f32.mrf.mxu0
    %v5974 = vadd.f32 %v5930, %v5973
    %v5975 = vpop.f32.mrf.mxu0
    %v5976 = vadd.f32 %v5932, %v5975
    %5977 = vmatmul.bf16.gmra.mxu0 %v1115
    %v5978 = vpop.f32.mrf.mxu0
    %v5979 = vadd.f32 %v5935, %v5978
    %v5980 = vpop.f32.mrf.mxu0
    %v5981 = vadd.f32 %v5937, %v5980
    %5982 = vmatmul.bf16.gmra.mxu0 %v1155
    %v5983 = vpop.f32.mrf.mxu0
    %v5984 = vadd.f32 %v5940, %v5983
    %v5985 = vpop.f32.mrf.mxu0
    %v5986 = vadd.f32 %v5942, %v5985
    %5987 = vmatmul.bf16.gmra.mxu0 %v1195
    %v5988 = vpop.f32.mrf.mxu0
    %v5989 = vadd.f32 %v5945, %v5988
    %v5990 = vpop.f32.mrf.mxu0
    %v5991 = vadd.f32 %v5947, %v5990
    %5992 = vmatmul.bf16.gmra.mxu0 %v1235
    %v5993 = vpop.f32.mrf.mxu0
    %v5994 = vadd.f32 %v5950, %v5993
    %v5995 = vpop.f32.mrf.mxu0
    %v5996 = vadd.f32 %v5952, %v5995
    %5997 = vmatmul.bf16.gmra.mxu0 %v1275
    %v5998 = vpop.f32.mrf.mxu0
    %v5999 = vadd.f32 %v5955, %v5998
    %v6000 = vpop.f32.mrf.mxu0
    %v6001 = vadd.f32 %v5957, %v6000
    %6002 = vdwg.mxu0
    %6003 = vmatpush.bf16.msra.mxu0 %v3541
    %6004 = vmatpush.bf16.msra.mxu0 %v3537
    %6005 = vmatpush.bf16.msra.mxu0 %v3533
    %6006 = vmatpush.bf16.msra.mxu0 %v3529
    %6007 = vmatpush.bf16.msra.mxu0 %v3525
    %6008 = vmatpush.bf16.msra.mxu0 %v3521
    %6009 = vmatpush.bf16.msra.mxu0 %v3517
    %6010 = vmatpush.bf16.msra.mxu0 %v3513
    %6011 = vmatmul.bf16.gmra.mxu0 %v1036
    %v6012 = vpop.f32.mrf.mxu0
    %v6013 = vadd.f32 %v5969, %v6012
    %v6014 = vpop.f32.mrf.mxu0
    %v6015 = vadd.f32 %v5971, %v6014
    %6016 = vmatmul.bf16.gmra.mxu0 %v1076
    %v6017 = vpop.f32.mrf.mxu0
    %v6018 = vadd.f32 %v5974, %v6017
    %v6019 = vpop.f32.mrf.mxu0
    %v6020 = vadd.f32 %v5976, %v6019
    %6021 = vmatmul.bf16.gmra.mxu0 %v1116
    %v6022 = vpop.f32.mrf.mxu0
    %v6023 = vadd.f32 %v5979, %v6022
    %v6024 = vpop.f32.mrf.mxu0
    %v6025 = vadd.f32 %v5981, %v6024
    %6026 = vmatmul.bf16.gmra.mxu0 %v1156
    %v6027 = vpop.f32.mrf.mxu0
    %v6028 = vadd.f32 %v5984, %v6027
    %v6029 = vpop.f32.mrf.mxu0
    %v6030 = vadd.f32 %v5986, %v6029
    %6031 = vmatmul.bf16.gmra.mxu0 %v1196
    %v6032 = vpop.f32.mrf.mxu0
    %v6033 = vadd.f32 %v5989, %v6032
    %v6034 = vpop.f32.mrf.mxu0
    %v6035 = vadd.f32 %v5991, %v6034
    %6036 = vmatmul.bf16.gmra.mxu0 %v1236
    %v6037 = vpop.f32.mrf.mxu0
    %v6038 = vadd.f32 %v5994, %v6037
    %v6039 = vpop.f32.mrf.mxu0
    %v6040 = vadd.f32 %v5996, %v6039
    %6041 = vmatmul.bf16.gmra.mxu0 %v1276
    %v6042 = vpop.f32.mrf.mxu0
    %v6043 = vadd.f32 %v5999, %v6042
    %v6044 = vpop.f32.mrf.mxu0
    %v6045 = vadd.f32 %v6001, %v6044
    %6046 = vdwg.mxu0
    %6047 = vmatpush.bf16.msra.mxu0 %v3573
    %6048 = vmatpush.bf16.msra.mxu0 %v3569
    %6049 = vmatpush.bf16.msra.mxu0 %v3565
    %6050 = vmatpush.bf16.msra.mxu0 %v3561
    %6051 = vmatpush.bf16.msra.mxu0 %v3557
    %6052 = vmatpush.bf16.msra.mxu0 %v3553
    %6053 = vmatpush.bf16.msra.mxu0 %v3549
    %6054 = vmatpush.bf16.msra.mxu0 %v3545
    %6055 = vmatmul.bf16.gmra.mxu0 %v1037
    %v6056 = vpop.f32.mrf.mxu0
    %v6057 = vadd.f32 %v6013, %v6056
    %v6058 = vpop.f32.mrf.mxu0
    %v6059 = vadd.f32 %v6015, %v6058
    %6060 = vmatmul.bf16.gmra.mxu0 %v1077
    %v6061 = vpop.f32.mrf.mxu0
    %v6062 = vadd.f32 %v6018, %v6061
    %v6063 = vpop.f32.mrf.mxu0
    %v6064 = vadd.f32 %v6020, %v6063
    %6065 = vmatmul.bf16.gmra.mxu0 %v1117
    %v6066 = vpop.f32.mrf.mxu0
    %v6067 = vadd.f32 %v6023, %v6066
    %v6068 = vpop.f32.mrf.mxu0
    %v6069 = vadd.f32 %v6025, %v6068
    %6070 = vmatmul.bf16.gmra.mxu0 %v1157
    %v6071 = vpop.f32.mrf.mxu0
    %v6072 = vadd.f32 %v6028, %v6071
    %v6073 = vpop.f32.mrf.mxu0
    %v6074 = vadd.f32 %v6030, %v6073
    %6075 = vmatmul.bf16.gmra.mxu0 %v1197
    %v6076 = vpop.f32.mrf.mxu0
    %v6077 = vadd.f32 %v6033, %v6076
    %v6078 = vpop.f32.mrf.mxu0
    %v6079 = vadd.f32 %v6035, %v6078
    %6080 = vmatmul.bf16.gmra.mxu0 %v1237
    %v6081 = vpop.f32.mrf.mxu0
    %v6082 = vadd.f32 %v6038, %v6081
    %v6083 = vpop.f32.mrf.mxu0
    %v6084 = vadd.f32 %v6040, %v6083
    %6085 = vmatmul.bf16.gmra.mxu0 %v1277
    %v6086 = vpop.f32.mrf.mxu0
    %v6087 = vadd.f32 %v6043, %v6086
    %v6088 = vpop.f32.mrf.mxu0
    %v6089 = vadd.f32 %v6045, %v6088
    %6090 = vdwg.mxu0
    %6091 = vmatpush.bf16.msra.mxu0 %v3605
    %6092 = vmatpush.bf16.msra.mxu0 %v3601
    %6093 = vmatpush.bf16.msra.mxu0 %v3597
    %6094 = vmatpush.bf16.msra.mxu0 %v3593
    %6095 = vmatpush.bf16.msra.mxu0 %v3589
    %6096 = vmatpush.bf16.msra.mxu0 %v3585
    %6097 = vmatpush.bf16.msra.mxu0 %v3581
    %6098 = vmatpush.bf16.msra.mxu0 %v3577
    %6099 = vmatmul.bf16.gmra.mxu0 %v1038
    %v6100 = vpop.f32.mrf.mxu0
    %v6101 = vadd.f32 %v6057, %v6100
    %v6102 = vpop.f32.mrf.mxu0
    %v6103 = vadd.f32 %v6059, %v6102
    %6104 = vmatmul.bf16.gmra.mxu0 %v1078
    %v6105 = vpop.f32.mrf.mxu0
    %v6106 = vadd.f32 %v6062, %v6105
    %v6107 = vpop.f32.mrf.mxu0
    %v6108 = vadd.f32 %v6064, %v6107
    %6109 = vmatmul.bf16.gmra.mxu0 %v1118
    %v6110 = vpop.f32.mrf.mxu0
    %v6111 = vadd.f32 %v6067, %v6110
    %v6112 = vpop.f32.mrf.mxu0
    %v6113 = vadd.f32 %v6069, %v6112
    %6114 = vmatmul.bf16.gmra.mxu0 %v1158
    %v6115 = vpop.f32.mrf.mxu0
    %v6116 = vadd.f32 %v6072, %v6115
    %v6117 = vpop.f32.mrf.mxu0
    %v6118 = vadd.f32 %v6074, %v6117
    %6119 = vmatmul.bf16.gmra.mxu0 %v1198
    %v6120 = vpop.f32.mrf.mxu0
    %v6121 = vadd.f32 %v6077, %v6120
    %v6122 = vpop.f32.mrf.mxu0
    %v6123 = vadd.f32 %v6079, %v6122
    %6124 = vmatmul.bf16.gmra.mxu0 %v1238
    %v6125 = vpop.f32.mrf.mxu0
    %v6126 = vadd.f32 %v6082, %v6125
    %v6127 = vpop.f32.mrf.mxu0
    %v6128 = vadd.f32 %v6084, %v6127
    %6129 = vmatmul.bf16.gmra.mxu0 %v1278
    %v6130 = vpop.f32.mrf.mxu0
    %v6131 = vadd.f32 %v6087, %v6130
    %v6132 = vpop.f32.mrf.mxu0
    %v6133 = vadd.f32 %v6089, %v6132
    %6134 = vdwg.mxu0
    %6135 = vmatpush.bf16.msra.mxu0 %v3637
    %6136 = vmatpush.bf16.msra.mxu0 %v3633
    %6137 = vmatpush.bf16.msra.mxu0 %v3629
    %6138 = vmatpush.bf16.msra.mxu0 %v3625
    %6139 = vmatpush.bf16.msra.mxu0 %v3621
    %6140 = vmatpush.bf16.msra.mxu0 %v3617
    %6141 = vmatpush.bf16.msra.mxu0 %v3613
    %6142 = vmatpush.bf16.msra.mxu0 %v3609
    %6143 = vmatmul.bf16.gmra.mxu0 %v1055
    %v6144 = vpop.f32.mrf.mxu0
    %v6145 = vadd.f32 %v6101, %v6144
    %v6146 = vpop.f32.mrf.mxu0
    %v6147 = vadd.f32 %v6103, %v6146
    %6148 = vmatmul.bf16.gmra.mxu0 %v1095
    %v6149 = vpop.f32.mrf.mxu0
    %v6150 = vadd.f32 %v6106, %v6149
    %v6151 = vpop.f32.mrf.mxu0
    %v6152 = vadd.f32 %v6108, %v6151
    %6153 = vmatmul.bf16.gmra.mxu0 %v1135
    %v6154 = vpop.f32.mrf.mxu0
    %v6155 = vadd.f32 %v6111, %v6154
    %v6156 = vpop.f32.mrf.mxu0
    %v6157 = vadd.f32 %v6113, %v6156
    %6158 = vmatmul.bf16.gmra.mxu0 %v1175
    %v6159 = vpop.f32.mrf.mxu0
    %v6160 = vadd.f32 %v6116, %v6159
    %v6161 = vpop.f32.mrf.mxu0
    %v6162 = vadd.f32 %v6118, %v6161
    %6163 = vmatmul.bf16.gmra.mxu0 %v1215
    %v6164 = vpop.f32.mrf.mxu0
    %v6165 = vadd.f32 %v6121, %v6164
    %v6166 = vpop.f32.mrf.mxu0
    %v6167 = vadd.f32 %v6123, %v6166
    %6168 = vmatmul.bf16.gmra.mxu0 %v1255
    %v6169 = vpop.f32.mrf.mxu0
    %v6170 = vadd.f32 %v6126, %v6169
    %v6171 = vpop.f32.mrf.mxu0
    %v6172 = vadd.f32 %v6128, %v6171
    %6173 = vmatmul.bf16.gmra.mxu0 %v1295
    %v6174 = vpop.f32.mrf.mxu0
    %v6175 = vadd.f32 %v6131, %v6174
    %v6176 = vpop.f32.mrf.mxu0
    %v6177 = vadd.f32 %v6133, %v6176
    %6178 = vdwg.mxu0
    %6179 = vmatpush.bf16.msra.mxu0 %v3669
    %6180 = vmatpush.bf16.msra.mxu0 %v3665
    %6181 = vmatpush.bf16.msra.mxu0 %v3661
    %6182 = vmatpush.bf16.msra.mxu0 %v3657
    %6183 = vmatpush.bf16.msra.mxu0 %v3653
    %6184 = vmatpush.bf16.msra.mxu0 %v3649
    %6185 = vmatpush.bf16.msra.mxu0 %v3645
    %6186 = vmatpush.bf16.msra.mxu0 %v3641
    %6187 = vmatmul.bf16.gmra.mxu0 %v1056
    %v6188 = vpop.f32.mrf.mxu0
    %v6189 = vadd.f32 %v6145, %v6188
    %v6190 = vpop.f32.mrf.mxu0
    %v6191 = vadd.f32 %v6147, %v6190
    %6192 = vmatmul.bf16.gmra.mxu0 %v1096
    %v6193 = vpop.f32.mrf.mxu0
    %v6194 = vadd.f32 %v6150, %v6193
    %v6195 = vpop.f32.mrf.mxu0
    %v6196 = vadd.f32 %v6152, %v6195
    %6197 = vmatmul.bf16.gmra.mxu0 %v1136
    %v6198 = vpop.f32.mrf.mxu0
    %v6199 = vadd.f32 %v6155, %v6198
    %v6200 = vpop.f32.mrf.mxu0
    %v6201 = vadd.f32 %v6157, %v6200
    %6202 = vmatmul.bf16.gmra.mxu0 %v1176
    %v6203 = vpop.f32.mrf.mxu0
    %v6204 = vadd.f32 %v6160, %v6203
    %v6205 = vpop.f32.mrf.mxu0
    %v6206 = vadd.f32 %v6162, %v6205
    %6207 = vmatmul.bf16.gmra.mxu0 %v1216
    %v6208 = vpop.f32.mrf.mxu0
    %v6209 = vadd.f32 %v6165, %v6208
    %v6210 = vpop.f32.mrf.mxu0
    %v6211 = vadd.f32 %v6167, %v6210
    %6212 = vmatmul.bf16.gmra.mxu0 %v1256
    %v6213 = vpop.f32.mrf.mxu0
    %v6214 = vadd.f32 %v6170, %v6213
    %v6215 = vpop.f32.mrf.mxu0
    %v6216 = vadd.f32 %v6172, %v6215
    %6217 = vmatmul.bf16.gmra.mxu0 %v1296
    %v6218 = vpop.f32.mrf.mxu0
    %v6219 = vadd.f32 %v6175, %v6218
    %v6220 = vpop.f32.mrf.mxu0
    %v6221 = vadd.f32 %v6177, %v6220
    %6222 = vdwg.mxu0
    %6223 = vmatpush.bf16.msra.mxu0 %v3701
    %6224 = vmatpush.bf16.msra.mxu0 %v3697
    %6225 = vmatpush.bf16.msra.mxu0 %v3693
    %6226 = vmatpush.bf16.msra.mxu0 %v3689
    %6227 = vmatpush.bf16.msra.mxu0 %v3685
    %6228 = vmatpush.bf16.msra.mxu0 %v3681
    %6229 = vmatpush.bf16.msra.mxu0 %v3677
    %6230 = vmatpush.bf16.msra.mxu0 %v3673
    %6231 = vmatmul.bf16.gmra.mxu0 %v1057
    %v6232 = vpop.f32.mrf.mxu0
    %v6233 = vadd.f32 %v6189, %v6232
    %v6234 = vpop.f32.mrf.mxu0
    %v6235 = vadd.f32 %v6191, %v6234
    %6236 = vmatmul.bf16.gmra.mxu0 %v1097
    %v6237 = vpop.f32.mrf.mxu0
    %v6238 = vadd.f32 %v6194, %v6237
    %v6239 = vpop.f32.mrf.mxu0
    %v6240 = vadd.f32 %v6196, %v6239
    %6241 = vmatmul.bf16.gmra.mxu0 %v1137
    %v6242 = vpop.f32.mrf.mxu0
    %v6243 = vadd.f32 %v6199, %v6242
    %v6244 = vpop.f32.mrf.mxu0
    %v6245 = vadd.f32 %v6201, %v6244
    %6246 = vmatmul.bf16.gmra.mxu0 %v1177
    %v6247 = vpop.f32.mrf.mxu0
    %v6248 = vadd.f32 %v6204, %v6247
    %v6249 = vpop.f32.mrf.mxu0
    %v6250 = vadd.f32 %v6206, %v6249
    %6251 = vmatmul.bf16.gmra.mxu0 %v1217
    %v6252 = vpop.f32.mrf.mxu0
    %v6253 = vadd.f32 %v6209, %v6252
    %v6254 = vpop.f32.mrf.mxu0
    %v6255 = vadd.f32 %v6211, %v6254
    %6256 = vmatmul.bf16.gmra.mxu0 %v1257
    %v6257 = vpop.f32.mrf.mxu0
    %v6258 = vadd.f32 %v6214, %v6257
    %v6259 = vpop.f32.mrf.mxu0
    %v6260 = vadd.f32 %v6216, %v6259
    %6261 = vmatmul.bf16.gmra.mxu0 %v1297
    %v6262 = vpop.f32.mrf.mxu0
    %v6263 = vadd.f32 %v6219, %v6262
    %v6264 = vpop.f32.mrf.mxu0
    %v6265 = vadd.f32 %v6221, %v6264
    %6266 = vdwg.mxu0
    %6267 = vmatpush.bf16.msra.mxu0 %v3733
    %6268 = vmatpush.bf16.msra.mxu0 %v3729
    %6269 = vmatpush.bf16.msra.mxu0 %v3725
    %6270 = vmatpush.bf16.msra.mxu0 %v3721
    %6271 = vmatpush.bf16.msra.mxu0 %v3717
    %6272 = vmatpush.bf16.msra.mxu0 %v3713
    %6273 = vmatpush.bf16.msra.mxu0 %v3709
    %6274 = vmatpush.bf16.msra.mxu0 %v3705
    %6275 = vmatmul.bf16.gmra.mxu0 %v1058
    %v6276 = vpop.f32.mrf.mxu0
    %v6277 = vadd.f32 %v6233, %v6276
    %v6278 = vpop.f32.mrf.mxu0
    %v6279 = vadd.f32 %v6235, %v6278
    %6280 = vmatmul.bf16.gmra.mxu0 %v1098
    %v6281 = vpop.f32.mrf.mxu0
    %v6282 = vadd.f32 %v6238, %v6281
    %v6283 = vpop.f32.mrf.mxu0
    %v6284 = vadd.f32 %v6240, %v6283
    %6285 = vmatmul.bf16.gmra.mxu0 %v1138
    %v6286 = vpop.f32.mrf.mxu0
    %v6287 = vadd.f32 %v6243, %v6286
    %v6288 = vpop.f32.mrf.mxu0
    %v6289 = vadd.f32 %v6245, %v6288
    %6290 = vmatmul.bf16.gmra.mxu0 %v1178
    %v6291 = vpop.f32.mrf.mxu0
    %v6292 = vadd.f32 %v6248, %v6291
    %v6293 = vpop.f32.mrf.mxu0
    %v6294 = vadd.f32 %v6250, %v6293
    %6295 = vmatmul.bf16.gmra.mxu0 %v1218
    %v6296 = vpop.f32.mrf.mxu0
    %v6297 = vadd.f32 %v6253, %v6296
    %v6298 = vpop.f32.mrf.mxu0
    %v6299 = vadd.f32 %v6255, %v6298
    %6300 = vmatmul.bf16.gmra.mxu0 %v1258
    %v6301 = vpop.f32.mrf.mxu0
    %v6302 = vadd.f32 %v6258, %v6301
    %v6303 = vpop.f32.mrf.mxu0
    %v6304 = vadd.f32 %v6260, %v6303
    %6305 = vmatmul.bf16.gmra.mxu0 %v1298
    %v6306 = vpop.f32.mrf.mxu0
    %v6307 = vadd.f32 %v6263, %v6306
    %v6308 = vpop.f32.mrf.mxu0
    %v6309 = vadd.f32 %v6265, %v6308
    %6310 = vdwg.mxu0
    %6311 = vmatpush.bf16.msra.mxu0 %v3765
    %6312 = vmatpush.bf16.msra.mxu0 %v3761
    %6313 = vmatpush.bf16.msra.mxu0 %v3757
    %6314 = vmatpush.bf16.msra.mxu0 %v3753
    %6315 = vmatpush.bf16.msra.mxu0 %v3749
    %6316 = vmatpush.bf16.msra.mxu0 %v3745
    %6317 = vmatpush.bf16.msra.mxu0 %v3741
    %6318 = vmatpush.bf16.msra.mxu0 %v3737
    %6319 = vmatmul.bf16.gmra.mxu0 %v1075
    %v6320 = vpop.f32.mrf.mxu0
    %v6321 = vadd.f32 %v6277, %v6320
    %v6322 = vpop.f32.mrf.mxu0
    %v6323 = vadd.f32 %v6279, %v6322
    %6324 = vmatmul.bf16.gmra.mxu0 %v1115
    %v6325 = vpop.f32.mrf.mxu0
    %v6326 = vadd.f32 %v6282, %v6325
    %v6327 = vpop.f32.mrf.mxu0
    %v6328 = vadd.f32 %v6284, %v6327
    %6329 = vmatmul.bf16.gmra.mxu0 %v1155
    %v6330 = vpop.f32.mrf.mxu0
    %v6331 = vadd.f32 %v6287, %v6330
    %v6332 = vpop.f32.mrf.mxu0
    %v6333 = vadd.f32 %v6289, %v6332
    %6334 = vmatmul.bf16.gmra.mxu0 %v1195
    %v6335 = vpop.f32.mrf.mxu0
    %v6336 = vadd.f32 %v6292, %v6335
    %v6337 = vpop.f32.mrf.mxu0
    %v6338 = vadd.f32 %v6294, %v6337
    %6339 = vmatmul.bf16.gmra.mxu0 %v1235
    %v6340 = vpop.f32.mrf.mxu0
    %v6341 = vadd.f32 %v6297, %v6340
    %v6342 = vpop.f32.mrf.mxu0
    %v6343 = vadd.f32 %v6299, %v6342
    %6344 = vmatmul.bf16.gmra.mxu0 %v1275
    %v6345 = vpop.f32.mrf.mxu0
    %v6346 = vadd.f32 %v6302, %v6345
    %v6347 = vpop.f32.mrf.mxu0
    %v6348 = vadd.f32 %v6304, %v6347
    %6349 = vmatmul.bf16.gmra.mxu0 0
    %v6350 = vpop.f32.mrf.mxu0
    %v6351 = vadd.f32 %v6307, %v6350
    %v6352 = vpop.f32.mrf.mxu0
    %v6353 = vadd.f32 %v6309, %v6352
    %6354 = vdwg.mxu0
    %6355 = vmatpush.bf16.msra.mxu0 %v3797
    %6356 = vmatpush.bf16.msra.mxu0 %v3793
    %6357 = vmatpush.bf16.msra.mxu0 %v3789
    %6358 = vmatpush.bf16.msra.mxu0 %v3785
    %6359 = vmatpush.bf16.msra.mxu0 %v3781
    %6360 = vmatpush.bf16.msra.mxu0 %v3777
    %6361 = vmatpush.bf16.msra.mxu0 %v3773
    %6362 = vmatpush.bf16.msra.mxu0 %v3769
    %6363 = vmatmul.bf16.gmra.mxu0 %v1076
    %v6364 = vpop.f32.mrf.mxu0
    %v6365 = vadd.f32 %v6321, %v6364
    %v6366 = vpop.f32.mrf.mxu0
    %v6367 = vadd.f32 %v6323, %v6366
    %6368 = vmatmul.bf16.gmra.mxu0 %v1116
    %v6369 = vpop.f32.mrf.mxu0
    %v6370 = vadd.f32 %v6326, %v6369
    %v6371 = vpop.f32.mrf.mxu0
    %v6372 = vadd.f32 %v6328, %v6371
    %6373 = vmatmul.bf16.gmra.mxu0 %v1156
    %v6374 = vpop.f32.mrf.mxu0
    %v6375 = vadd.f32 %v6331, %v6374
    %v6376 = vpop.f32.mrf.mxu0
    %v6377 = vadd.f32 %v6333, %v6376
    %6378 = vmatmul.bf16.gmra.mxu0 %v1196
    %v6379 = vpop.f32.mrf.mxu0
    %v6380 = vadd.f32 %v6336, %v6379
    %v6381 = vpop.f32.mrf.mxu0
    %v6382 = vadd.f32 %v6338, %v6381
    %6383 = vmatmul.bf16.gmra.mxu0 %v1236
    %v6384 = vpop.f32.mrf.mxu0
    %v6385 = vadd.f32 %v6341, %v6384
    %v6386 = vpop.f32.mrf.mxu0
    %v6387 = vadd.f32 %v6343, %v6386
    %6388 = vmatmul.bf16.gmra.mxu0 %v1276
    %v6389 = vpop.f32.mrf.mxu0
    %v6390 = vadd.f32 %v6346, %v6389
    %v6391 = vpop.f32.mrf.mxu0
    %v6392 = vadd.f32 %v6348, %v6391
    %6393 = vmatmul.bf16.gmra.mxu0 0
    %v6394 = vpop.f32.mrf.mxu0
    %v6395 = vadd.f32 %v6351, %v6394
    %v6396 = vpop.f32.mrf.mxu0
    %v6397 = vadd.f32 %v6353, %v6396
    %6398 = vdwg.mxu0
    %6399 = vmatpush.bf16.msra.mxu0 %v3829
    %6400 = vmatpush.bf16.msra.mxu0 %v3825
    %6401 = vmatpush.bf16.msra.mxu0 %v3821
    %6402 = vmatpush.bf16.msra.mxu0 %v3817
    %6403 = vmatpush.bf16.msra.mxu0 %v3813
    %6404 = vmatpush.bf16.msra.mxu0 %v3809
    %6405 = vmatpush.bf16.msra.mxu0 %v3805
    %6406 = vmatpush.bf16.msra.mxu0 %v3801
    %6407 = vmatmul.bf16.gmra.mxu0 %v1077
    %v6408 = vpop.f32.mrf.mxu0
    %v6409 = vadd.f32 %v6365, %v6408
    %v6410 = vpop.f32.mrf.mxu0
    %v6411 = vadd.f32 %v6367, %v6410
    %6412 = vmatmul.bf16.gmra.mxu0 %v1117
    %v6413 = vpop.f32.mrf.mxu0
    %v6414 = vadd.f32 %v6370, %v6413
    %v6415 = vpop.f32.mrf.mxu0
    %v6416 = vadd.f32 %v6372, %v6415
    %6417 = vmatmul.bf16.gmra.mxu0 %v1157
    %v6418 = vpop.f32.mrf.mxu0
    %v6419 = vadd.f32 %v6375, %v6418
    %v6420 = vpop.f32.mrf.mxu0
    %v6421 = vadd.f32 %v6377, %v6420
    %6422 = vmatmul.bf16.gmra.mxu0 %v1197
    %v6423 = vpop.f32.mrf.mxu0
    %v6424 = vadd.f32 %v6380, %v6423
    %v6425 = vpop.f32.mrf.mxu0
    %v6426 = vadd.f32 %v6382, %v6425
    %6427 = vmatmul.bf16.gmra.mxu0 %v1237
    %v6428 = vpop.f32.mrf.mxu0
    %v6429 = vadd.f32 %v6385, %v6428
    %v6430 = vpop.f32.mrf.mxu0
    %v6431 = vadd.f32 %v6387, %v6430
    %6432 = vmatmul.bf16.gmra.mxu0 %v1277
    %v6433 = vpop.f32.mrf.mxu0
    %v6434 = vadd.f32 %v6390, %v6433
    %v6435 = vpop.f32.mrf.mxu0
    %v6436 = vadd.f32 %v6392, %v6435
    %6437 = vmatmul.bf16.gmra.mxu0 0
    %v6438 = vpop.f32.mrf.mxu0
    %v6439 = vadd.f32 %v6395, %v6438
    %v6440 = vpop.f32.mrf.mxu0
    %v6441 = vadd.f32 %v6397, %v6440
    %6442 = vdwg.mxu0
    %6443 = vmatpush.bf16.msra.mxu0 %v3861
    %6444 = vmatpush.bf16.msra.mxu0 %v3857
    %6445 = vmatpush.bf16.msra.mxu0 %v3853
    %6446 = vmatpush.bf16.msra.mxu0 %v3849
    %6447 = vmatpush.bf16.msra.mxu0 %v3845
    %6448 = vmatpush.bf16.msra.mxu0 %v3841
    %6449 = vmatpush.bf16.msra.mxu0 %v3837
    %6450 = vmatpush.bf16.msra.mxu0 %v3833
    %6451 = vmatmul.bf16.gmra.mxu0 %v1078
    %v6452 = vpop.f32.mrf.mxu0
    %v6453 = vadd.f32 %v6409, %v6452
    %v6454 = vpop.f32.mrf.mxu0
    %v6455 = vadd.f32 %v6411, %v6454
    %6456 = vmatmul.bf16.gmra.mxu0 %v1118
    %v6457 = vpop.f32.mrf.mxu0
    %v6458 = vadd.f32 %v6414, %v6457
    %v6459 = vpop.f32.mrf.mxu0
    %v6460 = vadd.f32 %v6416, %v6459
    %6461 = vmatmul.bf16.gmra.mxu0 %v1158
    %v6462 = vpop.f32.mrf.mxu0
    %v6463 = vadd.f32 %v6419, %v6462
    %v6464 = vpop.f32.mrf.mxu0
    %v6465 = vadd.f32 %v6421, %v6464
    %6466 = vmatmul.bf16.gmra.mxu0 %v1198
    %v6467 = vpop.f32.mrf.mxu0
    %v6468 = vadd.f32 %v6424, %v6467
    %v6469 = vpop.f32.mrf.mxu0
    %v6470 = vadd.f32 %v6426, %v6469
    %6471 = vmatmul.bf16.gmra.mxu0 %v1238
    %v6472 = vpop.f32.mrf.mxu0
    %v6473 = vadd.f32 %v6429, %v6472
    %v6474 = vpop.f32.mrf.mxu0
    %v6475 = vadd.f32 %v6431, %v6474
    %6476 = vmatmul.bf16.gmra.mxu0 %v1278
    %v6477 = vpop.f32.mrf.mxu0
    %v6478 = vadd.f32 %v6434, %v6477
    %v6479 = vpop.f32.mrf.mxu0
    %v6480 = vadd.f32 %v6436, %v6479
    %6481 = vmatmul.bf16.gmra.mxu0 0
    %v6482 = vpop.f32.mrf.mxu0
    %v6483 = vadd.f32 %v6439, %v6482
    %v6484 = vpop.f32.mrf.mxu0
    %v6485 = vadd.f32 %v6441, %v6484
    %6486 = vdwg.mxu0
    %6487 = vmatpush.bf16.msra.mxu0 %v3382
    %6488 = vmatpush.bf16.msra.mxu0 %v3378
    %6489 = vmatpush.bf16.msra.mxu0 %v3374
    %6490 = vmatpush.bf16.msra.mxu0 %v3370
    %6491 = vmatpush.bf16.msra.mxu0 %v3366
    %6492 = vmatpush.bf16.msra.mxu0 %v3362
    %6493 = vmatpush.bf16.msra.mxu0 %v3358
    %6494 = vmatpush.bf16.msra.mxu0 %v3354
    %6495 = vmatmul.bf16.gmra.mxu0 0
    %v6496 = vpop.f32.mrf.mxu0
    %v6497 = vadd.f32 0.0, %v6496
    %v6498 = vpop.f32.mrf.mxu0
    %v6499 = vadd.f32 0.0, %v6498
    %6500 = vmatmul.bf16.gmra.mxu0 %v1055
    %v6501 = vpop.f32.mrf.mxu0
    %v6502 = vadd.f32 0.0, %v6501
    %v6503 = vpop.f32.mrf.mxu0
    %v6504 = vadd.f32 0.0, %v6503
    %6505 = vmatmul.bf16.gmra.mxu0 %v1095
    %v6506 = vpop.f32.mrf.mxu0
    %v6507 = vadd.f32 0.0, %v6506
    %v6508 = vpop.f32.mrf.mxu0
    %v6509 = vadd.f32 0.0, %v6508
    %6510 = vmatmul.bf16.gmra.mxu0 %v1135
    %v6511 = vpop.f32.mrf.mxu0
    %v6512 = vadd.f32 0.0, %v6511
    %v6513 = vpop.f32.mrf.mxu0
    %v6514 = vadd.f32 0.0, %v6513
    %6515 = vmatmul.bf16.gmra.mxu0 %v1175
    %v6516 = vpop.f32.mrf.mxu0
    %v6517 = vadd.f32 0.0, %v6516
    %v6518 = vpop.f32.mrf.mxu0
    %v6519 = vadd.f32 0.0, %v6518
    %6520 = vmatmul.bf16.gmra.mxu0 %v1215
    %v6521 = vpop.f32.mrf.mxu0
    %v6522 = vadd.f32 0.0, %v6521
    %v6523 = vpop.f32.mrf.mxu0
    %v6524 = vadd.f32 0.0, %v6523
    %6525 = vmatmul.bf16.gmra.mxu0 %v1255
    %v6526 = vpop.f32.mrf.mxu0
    %v6527 = vadd.f32 0.0, %v6526
    %v6528 = vpop.f32.mrf.mxu0
    %v6529 = vadd.f32 0.0, %v6528
    %6530 = vdwg.mxu0
    %6531 = vmatpush.bf16.msra.mxu0 %v3414
    %6532 = vmatpush.bf16.msra.mxu0 %v3410
    %6533 = vmatpush.bf16.msra.mxu0 %v3406
    %6534 = vmatpush.bf16.msra.mxu0 %v3402
    %6535 = vmatpush.bf16.msra.mxu0 %v3398
    %6536 = vmatpush.bf16.msra.mxu0 %v3394
    %6537 = vmatpush.bf16.msra.mxu0 %v3390
    %6538 = vmatpush.bf16.msra.mxu0 %v3386
    %6539 = vmatmul.bf16.gmra.mxu0 0
    %v6540 = vpop.f32.mrf.mxu0
    %v6541 = vadd.f32 %v6497, %v6540
    %v6542 = vpop.f32.mrf.mxu0
    %v6543 = vadd.f32 %v6499, %v6542
    %6544 = vmatmul.bf16.gmra.mxu0 %v1056
    %v6545 = vpop.f32.mrf.mxu0
    %v6546 = vadd.f32 %v6502, %v6545
    %v6547 = vpop.f32.mrf.mxu0
    %v6548 = vadd.f32 %v6504, %v6547
    %6549 = vmatmul.bf16.gmra.mxu0 %v1096
    %v6550 = vpop.f32.mrf.mxu0
    %v6551 = vadd.f32 %v6507, %v6550
    %v6552 = vpop.f32.mrf.mxu0
    %v6553 = vadd.f32 %v6509, %v6552
    %6554 = vmatmul.bf16.gmra.mxu0 %v1136
    %v6555 = vpop.f32.mrf.mxu0
    %v6556 = vadd.f32 %v6512, %v6555
    %v6557 = vpop.f32.mrf.mxu0
    %v6558 = vadd.f32 %v6514, %v6557
    %6559 = vmatmul.bf16.gmra.mxu0 %v1176
    %v6560 = vpop.f32.mrf.mxu0
    %v6561 = vadd.f32 %v6517, %v6560
    %v6562 = vpop.f32.mrf.mxu0
    %v6563 = vadd.f32 %v6519, %v6562
    %6564 = vmatmul.bf16.gmra.mxu0 %v1216
    %v6565 = vpop.f32.mrf.mxu0
    %v6566 = vadd.f32 %v6522, %v6565
    %v6567 = vpop.f32.mrf.mxu0
    %v6568 = vadd.f32 %v6524, %v6567
    %6569 = vmatmul.bf16.gmra.mxu0 %v1256
    %v6570 = vpop.f32.mrf.mxu0
    %v6571 = vadd.f32 %v6527, %v6570
    %v6572 = vpop.f32.mrf.mxu0
    %v6573 = vadd.f32 %v6529, %v6572
    %6574 = vdwg.mxu0
    %6575 = vmatpush.bf16.msra.mxu0 %v3446
    %6576 = vmatpush.bf16.msra.mxu0 %v3442
    %6577 = vmatpush.bf16.msra.mxu0 %v3438
    %6578 = vmatpush.bf16.msra.mxu0 %v3434
    %6579 = vmatpush.bf16.msra.mxu0 %v3430
    %6580 = vmatpush.bf16.msra.mxu0 %v3426
    %6581 = vmatpush.bf16.msra.mxu0 %v3422
    %6582 = vmatpush.bf16.msra.mxu0 %v3418
    %6583 = vmatmul.bf16.gmra.mxu0 0
    %v6584 = vpop.f32.mrf.mxu0
    %v6585 = vadd.f32 %v6541, %v6584
    %v6586 = vpop.f32.mrf.mxu0
    %v6587 = vadd.f32 %v6543, %v6586
    %6588 = vmatmul.bf16.gmra.mxu0 %v1057
    %v6589 = vpop.f32.mrf.mxu0
    %v6590 = vadd.f32 %v6546, %v6589
    %v6591 = vpop.f32.mrf.mxu0
    %v6592 = vadd.f32 %v6548, %v6591
    %6593 = vmatmul.bf16.gmra.mxu0 %v1097
    %v6594 = vpop.f32.mrf.mxu0
    %v6595 = vadd.f32 %v6551, %v6594
    %v6596 = vpop.f32.mrf.mxu0
    %v6597 = vadd.f32 %v6553, %v6596
    %6598 = vmatmul.bf16.gmra.mxu0 %v1137
    %v6599 = vpop.f32.mrf.mxu0
    %v6600 = vadd.f32 %v6556, %v6599
    %v6601 = vpop.f32.mrf.mxu0
    %v6602 = vadd.f32 %v6558, %v6601
    %6603 = vmatmul.bf16.gmra.mxu0 %v1177
    %v6604 = vpop.f32.mrf.mxu0
    %v6605 = vadd.f32 %v6561, %v6604
    %v6606 = vpop.f32.mrf.mxu0
    %v6607 = vadd.f32 %v6563, %v6606
    %6608 = vmatmul.bf16.gmra.mxu0 %v1217
    %v6609 = vpop.f32.mrf.mxu0
    %v6610 = vadd.f32 %v6566, %v6609
    %v6611 = vpop.f32.mrf.mxu0
    %v6612 = vadd.f32 %v6568, %v6611
    %6613 = vmatmul.bf16.gmra.mxu0 %v1257
    %v6614 = vpop.f32.mrf.mxu0
    %v6615 = vadd.f32 %v6571, %v6614
    %v6616 = vpop.f32.mrf.mxu0
    %v6617 = vadd.f32 %v6573, %v6616
    %6618 = vdwg.mxu0
    %6619 = vmatpush.bf16.msra.mxu0 %v3478
    %6620 = vmatpush.bf16.msra.mxu0 %v3474
    %6621 = vmatpush.bf16.msra.mxu0 %v3470
    %6622 = vmatpush.bf16.msra.mxu0 %v3466
    %6623 = vmatpush.bf16.msra.mxu0 %v3462
    %6624 = vmatpush.bf16.msra.mxu0 %v3458
    %6625 = vmatpush.bf16.msra.mxu0 %v3454
    %6626 = vmatpush.bf16.msra.mxu0 %v3450
    %6627 = vmatmul.bf16.gmra.mxu0 0
    %v6628 = vpop.f32.mrf.mxu0
    %v6629 = vadd.f32 %v6585, %v6628
    %v6630 = vpop.f32.mrf.mxu0
    %v6631 = vadd.f32 %v6587, %v6630
    %6632 = vmatmul.bf16.gmra.mxu0 %v1058
    %v6633 = vpop.f32.mrf.mxu0
    %v6634 = vadd.f32 %v6590, %v6633
    %v6635 = vpop.f32.mrf.mxu0
    %v6636 = vadd.f32 %v6592, %v6635
    %6637 = vmatmul.bf16.gmra.mxu0 %v1098
    %v6638 = vpop.f32.mrf.mxu0
    %v6639 = vadd.f32 %v6595, %v6638
    %v6640 = vpop.f32.mrf.mxu0
    %v6641 = vadd.f32 %v6597, %v6640
    %6642 = vmatmul.bf16.gmra.mxu0 %v1138
    %v6643 = vpop.f32.mrf.mxu0
    %v6644 = vadd.f32 %v6600, %v6643
    %v6645 = vpop.f32.mrf.mxu0
    %v6646 = vadd.f32 %v6602, %v6645
    %6647 = vmatmul.bf16.gmra.mxu0 %v1178
    %v6648 = vpop.f32.mrf.mxu0
    %v6649 = vadd.f32 %v6605, %v6648
    %v6650 = vpop.f32.mrf.mxu0
    %v6651 = vadd.f32 %v6607, %v6650
    %6652 = vmatmul.bf16.gmra.mxu0 %v1218
    %v6653 = vpop.f32.mrf.mxu0
    %v6654 = vadd.f32 %v6610, %v6653
    %v6655 = vpop.f32.mrf.mxu0
    %v6656 = vadd.f32 %v6612, %v6655
    %6657 = vmatmul.bf16.gmra.mxu0 %v1258
    %v6658 = vpop.f32.mrf.mxu0
    %v6659 = vadd.f32 %v6615, %v6658
    %v6660 = vpop.f32.mrf.mxu0
    %v6661 = vadd.f32 %v6617, %v6660
    %6662 = vdwg.mxu0
    %6663 = vmatpush.bf16.msra.mxu0 %v3510
    %6664 = vmatpush.bf16.msra.mxu0 %v3506
    %6665 = vmatpush.bf16.msra.mxu0 %v3502
    %6666 = vmatpush.bf16.msra.mxu0 %v3498
    %6667 = vmatpush.bf16.msra.mxu0 %v3494
    %6668 = vmatpush.bf16.msra.mxu0 %v3490
    %6669 = vmatpush.bf16.msra.mxu0 %v3486
    %6670 = vmatpush.bf16.msra.mxu0 %v3482
    %6671 = vmatmul.bf16.gmra.mxu0 %v1035
    %v6672 = vpop.f32.mrf.mxu0
    %v6673 = vadd.f32 %v6629, %v6672
    %v6674 = vpop.f32.mrf.mxu0
    %v6675 = vadd.f32 %v6631, %v6674
    %6676 = vmatmul.bf16.gmra.mxu0 %v1075
    %v6677 = vpop.f32.mrf.mxu0
    %v6678 = vadd.f32 %v6634, %v6677
    %v6679 = vpop.f32.mrf.mxu0
    %v6680 = vadd.f32 %v6636, %v6679
    %6681 = vmatmul.bf16.gmra.mxu0 %v1115
    %v6682 = vpop.f32.mrf.mxu0
    %v6683 = vadd.f32 %v6639, %v6682
    %v6684 = vpop.f32.mrf.mxu0
    %v6685 = vadd.f32 %v6641, %v6684
    %6686 = vmatmul.bf16.gmra.mxu0 %v1155
    %v6687 = vpop.f32.mrf.mxu0
    %v6688 = vadd.f32 %v6644, %v6687
    %v6689 = vpop.f32.mrf.mxu0
    %v6690 = vadd.f32 %v6646, %v6689
    %6691 = vmatmul.bf16.gmra.mxu0 %v1195
    %v6692 = vpop.f32.mrf.mxu0
    %v6693 = vadd.f32 %v6649, %v6692
    %v6694 = vpop.f32.mrf.mxu0
    %v6695 = vadd.f32 %v6651, %v6694
    %6696 = vmatmul.bf16.gmra.mxu0 %v1235
    %v6697 = vpop.f32.mrf.mxu0
    %v6698 = vadd.f32 %v6654, %v6697
    %v6699 = vpop.f32.mrf.mxu0
    %v6700 = vadd.f32 %v6656, %v6699
    %6701 = vmatmul.bf16.gmra.mxu0 %v1275
    %v6702 = vpop.f32.mrf.mxu0
    %v6703 = vadd.f32 %v6659, %v6702
    %v6704 = vpop.f32.mrf.mxu0
    %v6705 = vadd.f32 %v6661, %v6704
    %6706 = vdwg.mxu0
    %6707 = vmatpush.bf16.msra.mxu0 %v3542
    %6708 = vmatpush.bf16.msra.mxu0 %v3538
    %6709 = vmatpush.bf16.msra.mxu0 %v3534
    %6710 = vmatpush.bf16.msra.mxu0 %v3530
    %6711 = vmatpush.bf16.msra.mxu0 %v3526
    %6712 = vmatpush.bf16.msra.mxu0 %v3522
    %6713 = vmatpush.bf16.msra.mxu0 %v3518
    %6714 = vmatpush.bf16.msra.mxu0 %v3514
    %6715 = vmatmul.bf16.gmra.mxu0 %v1036
    %v6716 = vpop.f32.mrf.mxu0
    %v6717 = vadd.f32 %v6673, %v6716
    %v6718 = vpop.f32.mrf.mxu0
    %v6719 = vadd.f32 %v6675, %v6718
    %6720 = vmatmul.bf16.gmra.mxu0 %v1076
    %v6721 = vpop.f32.mrf.mxu0
    %v6722 = vadd.f32 %v6678, %v6721
    %v6723 = vpop.f32.mrf.mxu0
    %v6724 = vadd.f32 %v6680, %v6723
    %6725 = vmatmul.bf16.gmra.mxu0 %v1116
    %v6726 = vpop.f32.mrf.mxu0
    %v6727 = vadd.f32 %v6683, %v6726
    %v6728 = vpop.f32.mrf.mxu0
    %v6729 = vadd.f32 %v6685, %v6728
    %6730 = vmatmul.bf16.gmra.mxu0 %v1156
    %v6731 = vpop.f32.mrf.mxu0
    %v6732 = vadd.f32 %v6688, %v6731
    %v6733 = vpop.f32.mrf.mxu0
    %v6734 = vadd.f32 %v6690, %v6733
    %6735 = vmatmul.bf16.gmra.mxu0 %v1196
    %v6736 = vpop.f32.mrf.mxu0
    %v6737 = vadd.f32 %v6693, %v6736
    %v6738 = vpop.f32.mrf.mxu0
    %v6739 = vadd.f32 %v6695, %v6738
    %6740 = vmatmul.bf16.gmra.mxu0 %v1236
    %v6741 = vpop.f32.mrf.mxu0
    %v6742 = vadd.f32 %v6698, %v6741
    %v6743 = vpop.f32.mrf.mxu0
    %v6744 = vadd.f32 %v6700, %v6743
    %6745 = vmatmul.bf16.gmra.mxu0 %v1276
    %v6746 = vpop.f32.mrf.mxu0
    %v6747 = vadd.f32 %v6703, %v6746
    %v6748 = vpop.f32.mrf.mxu0
    %v6749 = vadd.f32 %v6705, %v6748
    %6750 = vdwg.mxu0
    %6751 = vmatpush.bf16.msra.mxu0 %v3574
    %6752 = vmatpush.bf16.msra.mxu0 %v3570
    %6753 = vmatpush.bf16.msra.mxu0 %v3566
    %6754 = vmatpush.bf16.msra.mxu0 %v3562
    %6755 = vmatpush.bf16.msra.mxu0 %v3558
    %6756 = vmatpush.bf16.msra.mxu0 %v3554
    %6757 = vmatpush.bf16.msra.mxu0 %v3550
    %6758 = vmatpush.bf16.msra.mxu0 %v3546
    %6759 = vmatmul.bf16.gmra.mxu0 %v1037
    %v6760 = vpop.f32.mrf.mxu0
    %v6761 = vadd.f32 %v6717, %v6760
    %v6762 = vpop.f32.mrf.mxu0
    %v6763 = vadd.f32 %v6719, %v6762
    %6764 = vmatmul.bf16.gmra.mxu0 %v1077
    %v6765 = vpop.f32.mrf.mxu0
    %v6766 = vadd.f32 %v6722, %v6765
    %v6767 = vpop.f32.mrf.mxu0
    %v6768 = vadd.f32 %v6724, %v6767
    %6769 = vmatmul.bf16.gmra.mxu0 %v1117
    %v6770 = vpop.f32.mrf.mxu0
    %v6771 = vadd.f32 %v6727, %v6770
    %v6772 = vpop.f32.mrf.mxu0
    %v6773 = vadd.f32 %v6729, %v6772
    %6774 = vmatmul.bf16.gmra.mxu0 %v1157
    %v6775 = vpop.f32.mrf.mxu0
    %v6776 = vadd.f32 %v6732, %v6775
    %v6777 = vpop.f32.mrf.mxu0
    %v6778 = vadd.f32 %v6734, %v6777
    %6779 = vmatmul.bf16.gmra.mxu0 %v1197
    %v6780 = vpop.f32.mrf.mxu0
    %v6781 = vadd.f32 %v6737, %v6780
    %v6782 = vpop.f32.mrf.mxu0
    %v6783 = vadd.f32 %v6739, %v6782
    %6784 = vmatmul.bf16.gmra.mxu0 %v1237
    %v6785 = vpop.f32.mrf.mxu0
    %v6786 = vadd.f32 %v6742, %v6785
    %v6787 = vpop.f32.mrf.mxu0
    %v6788 = vadd.f32 %v6744, %v6787
    %6789 = vmatmul.bf16.gmra.mxu0 %v1277
    %v6790 = vpop.f32.mrf.mxu0
    %v6791 = vadd.f32 %v6747, %v6790
    %v6792 = vpop.f32.mrf.mxu0
    %v6793 = vadd.f32 %v6749, %v6792
    %6794 = vdwg.mxu0
    %6795 = vmatpush.bf16.msra.mxu0 %v3606
    %6796 = vmatpush.bf16.msra.mxu0 %v3602
    %6797 = vmatpush.bf16.msra.mxu0 %v3598
    %6798 = vmatpush.bf16.msra.mxu0 %v3594
    %6799 = vmatpush.bf16.msra.mxu0 %v3590
    %6800 = vmatpush.bf16.msra.mxu0 %v3586
    %6801 = vmatpush.bf16.msra.mxu0 %v3582
    %6802 = vmatpush.bf16.msra.mxu0 %v3578
    %6803 = vmatmul.bf16.gmra.mxu0 %v1038
    %v6804 = vpop.f32.mrf.mxu0
    %v6805 = vadd.f32 %v6761, %v6804
    %v6806 = vpop.f32.mrf.mxu0
    %v6807 = vadd.f32 %v6763, %v6806
    %6808 = vmatmul.bf16.gmra.mxu0 %v1078
    %v6809 = vpop.f32.mrf.mxu0
    %v6810 = vadd.f32 %v6766, %v6809
    %v6811 = vpop.f32.mrf.mxu0
    %v6812 = vadd.f32 %v6768, %v6811
    %6813 = vmatmul.bf16.gmra.mxu0 %v1118
    %v6814 = vpop.f32.mrf.mxu0
    %v6815 = vadd.f32 %v6771, %v6814
    %v6816 = vpop.f32.mrf.mxu0
    %v6817 = vadd.f32 %v6773, %v6816
    %6818 = vmatmul.bf16.gmra.mxu0 %v1158
    %v6819 = vpop.f32.mrf.mxu0
    %v6820 = vadd.f32 %v6776, %v6819
    %v6821 = vpop.f32.mrf.mxu0
    %v6822 = vadd.f32 %v6778, %v6821
    %6823 = vmatmul.bf16.gmra.mxu0 %v1198
    %v6824 = vpop.f32.mrf.mxu0
    %v6825 = vadd.f32 %v6781, %v6824
    %v6826 = vpop.f32.mrf.mxu0
    %v6827 = vadd.f32 %v6783, %v6826
    %6828 = vmatmul.bf16.gmra.mxu0 %v1238
    %v6829 = vpop.f32.mrf.mxu0
    %v6830 = vadd.f32 %v6786, %v6829
    %v6831 = vpop.f32.mrf.mxu0
    %v6832 = vadd.f32 %v6788, %v6831
    %6833 = vmatmul.bf16.gmra.mxu0 %v1278
    %v6834 = vpop.f32.mrf.mxu0
    %v6835 = vadd.f32 %v6791, %v6834
    %v6836 = vpop.f32.mrf.mxu0
    %v6837 = vadd.f32 %v6793, %v6836
    %6838 = vdwg.mxu0
    %6839 = vmatpush.bf16.msra.mxu0 %v3638
    %6840 = vmatpush.bf16.msra.mxu0 %v3634
    %6841 = vmatpush.bf16.msra.mxu0 %v3630
    %6842 = vmatpush.bf16.msra.mxu0 %v3626
    %6843 = vmatpush.bf16.msra.mxu0 %v3622
    %6844 = vmatpush.bf16.msra.mxu0 %v3618
    %6845 = vmatpush.bf16.msra.mxu0 %v3614
    %6846 = vmatpush.bf16.msra.mxu0 %v3610
    %6847 = vmatmul.bf16.gmra.mxu0 %v1055
    %v6848 = vpop.f32.mrf.mxu0
    %v6849 = vadd.f32 %v6805, %v6848
    %v6850 = vpop.f32.mrf.mxu0
    %v6851 = vadd.f32 %v6807, %v6850
    %6852 = vmatmul.bf16.gmra.mxu0 %v1095
    %v6853 = vpop.f32.mrf.mxu0
    %v6854 = vadd.f32 %v6810, %v6853
    %v6855 = vpop.f32.mrf.mxu0
    %v6856 = vadd.f32 %v6812, %v6855
    %6857 = vmatmul.bf16.gmra.mxu0 %v1135
    %v6858 = vpop.f32.mrf.mxu0
    %v6859 = vadd.f32 %v6815, %v6858
    %v6860 = vpop.f32.mrf.mxu0
    %v6861 = vadd.f32 %v6817, %v6860
    %6862 = vmatmul.bf16.gmra.mxu0 %v1175
    %v6863 = vpop.f32.mrf.mxu0
    %v6864 = vadd.f32 %v6820, %v6863
    %v6865 = vpop.f32.mrf.mxu0
    %v6866 = vadd.f32 %v6822, %v6865
    %6867 = vmatmul.bf16.gmra.mxu0 %v1215
    %v6868 = vpop.f32.mrf.mxu0
    %v6869 = vadd.f32 %v6825, %v6868
    %v6870 = vpop.f32.mrf.mxu0
    %v6871 = vadd.f32 %v6827, %v6870
    %6872 = vmatmul.bf16.gmra.mxu0 %v1255
    %v6873 = vpop.f32.mrf.mxu0
    %v6874 = vadd.f32 %v6830, %v6873
    %v6875 = vpop.f32.mrf.mxu0
    %v6876 = vadd.f32 %v6832, %v6875
    %6877 = vmatmul.bf16.gmra.mxu0 %v1295
    %v6878 = vpop.f32.mrf.mxu0
    %v6879 = vadd.f32 %v6835, %v6878
    %v6880 = vpop.f32.mrf.mxu0
    %v6881 = vadd.f32 %v6837, %v6880
    %6882 = vdwg.mxu0
    %6883 = vmatpush.bf16.msra.mxu0 %v3670
    %6884 = vmatpush.bf16.msra.mxu0 %v3666
    %6885 = vmatpush.bf16.msra.mxu0 %v3662
    %6886 = vmatpush.bf16.msra.mxu0 %v3658
    %6887 = vmatpush.bf16.msra.mxu0 %v3654
    %6888 = vmatpush.bf16.msra.mxu0 %v3650
    %6889 = vmatpush.bf16.msra.mxu0 %v3646
    %6890 = vmatpush.bf16.msra.mxu0 %v3642
    %6891 = vmatmul.bf16.gmra.mxu0 %v1056
    %v6892 = vpop.f32.mrf.mxu0
    %v6893 = vadd.f32 %v6849, %v6892
    %v6894 = vpop.f32.mrf.mxu0
    %v6895 = vadd.f32 %v6851, %v6894
    %6896 = vmatmul.bf16.gmra.mxu0 %v1096
    %v6897 = vpop.f32.mrf.mxu0
    %v6898 = vadd.f32 %v6854, %v6897
    %v6899 = vpop.f32.mrf.mxu0
    %v6900 = vadd.f32 %v6856, %v6899
    %6901 = vmatmul.bf16.gmra.mxu0 %v1136
    %v6902 = vpop.f32.mrf.mxu0
    %v6903 = vadd.f32 %v6859, %v6902
    %v6904 = vpop.f32.mrf.mxu0
    %v6905 = vadd.f32 %v6861, %v6904
    %6906 = vmatmul.bf16.gmra.mxu0 %v1176
    %v6907 = vpop.f32.mrf.mxu0
    %v6908 = vadd.f32 %v6864, %v6907
    %v6909 = vpop.f32.mrf.mxu0
    %v6910 = vadd.f32 %v6866, %v6909
    %6911 = vmatmul.bf16.gmra.mxu0 %v1216
    %v6912 = vpop.f32.mrf.mxu0
    %v6913 = vadd.f32 %v6869, %v6912
    %v6914 = vpop.f32.mrf.mxu0
    %v6915 = vadd.f32 %v6871, %v6914
    %6916 = vmatmul.bf16.gmra.mxu0 %v1256
    %v6917 = vpop.f32.mrf.mxu0
    %v6918 = vadd.f32 %v6874, %v6917
    %v6919 = vpop.f32.mrf.mxu0
    %v6920 = vadd.f32 %v6876, %v6919
    %6921 = vmatmul.bf16.gmra.mxu0 %v1296
    %v6922 = vpop.f32.mrf.mxu0
    %v6923 = vadd.f32 %v6879, %v6922
    %v6924 = vpop.f32.mrf.mxu0
    %v6925 = vadd.f32 %v6881, %v6924
    %6926 = vdwg.mxu0
    %6927 = vmatpush.bf16.msra.mxu0 %v3702
    %6928 = vmatpush.bf16.msra.mxu0 %v3698
    %6929 = vmatpush.bf16.msra.mxu0 %v3694
    %6930 = vmatpush.bf16.msra.mxu0 %v3690
    %6931 = vmatpush.bf16.msra.mxu0 %v3686
    %6932 = vmatpush.bf16.msra.mxu0 %v3682
    %6933 = vmatpush.bf16.msra.mxu0 %v3678
    %6934 = vmatpush.bf16.msra.mxu0 %v3674
    %6935 = vmatmul.bf16.gmra.mxu0 %v1057
    %v6936 = vpop.f32.mrf.mxu0
    %v6937 = vadd.f32 %v6893, %v6936
    %v6938 = vpop.f32.mrf.mxu0
    %v6939 = vadd.f32 %v6895, %v6938
    %6940 = vmatmul.bf16.gmra.mxu0 %v1097
    %v6941 = vpop.f32.mrf.mxu0
    %v6942 = vadd.f32 %v6898, %v6941
    %v6943 = vpop.f32.mrf.mxu0
    %v6944 = vadd.f32 %v6900, %v6943
    %6945 = vmatmul.bf16.gmra.mxu0 %v1137
    %v6946 = vpop.f32.mrf.mxu0
    %v6947 = vadd.f32 %v6903, %v6946
    %v6948 = vpop.f32.mrf.mxu0
    %v6949 = vadd.f32 %v6905, %v6948
    %6950 = vmatmul.bf16.gmra.mxu0 %v1177
    %v6951 = vpop.f32.mrf.mxu0
    %v6952 = vadd.f32 %v6908, %v6951
    %v6953 = vpop.f32.mrf.mxu0
    %v6954 = vadd.f32 %v6910, %v6953
    %6955 = vmatmul.bf16.gmra.mxu0 %v1217
    %v6956 = vpop.f32.mrf.mxu0
    %v6957 = vadd.f32 %v6913, %v6956
    %v6958 = vpop.f32.mrf.mxu0
    %v6959 = vadd.f32 %v6915, %v6958
    %6960 = vmatmul.bf16.gmra.mxu0 %v1257
    %v6961 = vpop.f32.mrf.mxu0
    %v6962 = vadd.f32 %v6918, %v6961
    %v6963 = vpop.f32.mrf.mxu0
    %v6964 = vadd.f32 %v6920, %v6963
    %6965 = vmatmul.bf16.gmra.mxu0 %v1297
    %v6966 = vpop.f32.mrf.mxu0
    %v6967 = vadd.f32 %v6923, %v6966
    %v6968 = vpop.f32.mrf.mxu0
    %v6969 = vadd.f32 %v6925, %v6968
    %6970 = vdwg.mxu0
    %6971 = vmatpush.bf16.msra.mxu0 %v3734
    %6972 = vmatpush.bf16.msra.mxu0 %v3730
    %6973 = vmatpush.bf16.msra.mxu0 %v3726
    %6974 = vmatpush.bf16.msra.mxu0 %v3722
    %6975 = vmatpush.bf16.msra.mxu0 %v3718
    %6976 = vmatpush.bf16.msra.mxu0 %v3714
    %6977 = vmatpush.bf16.msra.mxu0 %v3710
    %6978 = vmatpush.bf16.msra.mxu0 %v3706
    %6979 = vmatmul.bf16.gmra.mxu0 %v1058
    %v6980 = vpop.f32.mrf.mxu0
    %v6981 = vadd.f32 %v6937, %v6980
    %v6982 = vpop.f32.mrf.mxu0
    %v6983 = vadd.f32 %v6939, %v6982
    %6984 = vmatmul.bf16.gmra.mxu0 %v1098
    %v6985 = vpop.f32.mrf.mxu0
    %v6986 = vadd.f32 %v6942, %v6985
    %v6987 = vpop.f32.mrf.mxu0
    %v6988 = vadd.f32 %v6944, %v6987
    %6989 = vmatmul.bf16.gmra.mxu0 %v1138
    %v6990 = vpop.f32.mrf.mxu0
    %v6991 = vadd.f32 %v6947, %v6990
    %v6992 = vpop.f32.mrf.mxu0
    %v6993 = vadd.f32 %v6949, %v6992
    %6994 = vmatmul.bf16.gmra.mxu0 %v1178
    %v6995 = vpop.f32.mrf.mxu0
    %v6996 = vadd.f32 %v6952, %v6995
    %v6997 = vpop.f32.mrf.mxu0
    %v6998 = vadd.f32 %v6954, %v6997
    %6999 = vmatmul.bf16.gmra.mxu0 %v1218
    %v7000 = vpop.f32.mrf.mxu0
    %v7001 = vadd.f32 %v6957, %v7000
    %v7002 = vpop.f32.mrf.mxu0
    %v7003 = vadd.f32 %v6959, %v7002
    %7004 = vmatmul.bf16.gmra.mxu0 %v1258
    %v7005 = vpop.f32.mrf.mxu0
    %v7006 = vadd.f32 %v6962, %v7005
    %v7007 = vpop.f32.mrf.mxu0
    %v7008 = vadd.f32 %v6964, %v7007
    %7009 = vmatmul.bf16.gmra.mxu0 %v1298
    %v7010 = vpop.f32.mrf.mxu0
    %v7011 = vadd.f32 %v6967, %v7010
    %v7012 = vpop.f32.mrf.mxu0
    %v7013 = vadd.f32 %v6969, %v7012
    %7014 = vdwg.mxu0
    %7015 = vmatpush.bf16.msra.mxu0 %v3766
    %7016 = vmatpush.bf16.msra.mxu0 %v3762
    %7017 = vmatpush.bf16.msra.mxu0 %v3758
    %7018 = vmatpush.bf16.msra.mxu0 %v3754
    %7019 = vmatpush.bf16.msra.mxu0 %v3750
    %7020 = vmatpush.bf16.msra.mxu0 %v3746
    %7021 = vmatpush.bf16.msra.mxu0 %v3742
    %7022 = vmatpush.bf16.msra.mxu0 %v3738
    %7023 = vmatmul.bf16.gmra.mxu0 %v1075
    %v7024 = vpop.f32.mrf.mxu0
    %v7025 = vadd.f32 %v6981, %v7024
    %v7026 = vpop.f32.mrf.mxu0
    %v7027 = vadd.f32 %v6983, %v7026
    %7028 = vmatmul.bf16.gmra.mxu0 %v1115
    %v7029 = vpop.f32.mrf.mxu0
    %v7030 = vadd.f32 %v6986, %v7029
    %v7031 = vpop.f32.mrf.mxu0
    %v7032 = vadd.f32 %v6988, %v7031
    %7033 = vmatmul.bf16.gmra.mxu0 %v1155
    %v7034 = vpop.f32.mrf.mxu0
    %v7035 = vadd.f32 %v6991, %v7034
    %v7036 = vpop.f32.mrf.mxu0
    %v7037 = vadd.f32 %v6993, %v7036
    %7038 = vmatmul.bf16.gmra.mxu0 %v1195
    %v7039 = vpop.f32.mrf.mxu0
    %v7040 = vadd.f32 %v6996, %v7039
    %v7041 = vpop.f32.mrf.mxu0
    %v7042 = vadd.f32 %v6998, %v7041
    %7043 = vmatmul.bf16.gmra.mxu0 %v1235
    %v7044 = vpop.f32.mrf.mxu0
    %v7045 = vadd.f32 %v7001, %v7044
    %v7046 = vpop.f32.mrf.mxu0
    %v7047 = vadd.f32 %v7003, %v7046
    %7048 = vmatmul.bf16.gmra.mxu0 %v1275
    %v7049 = vpop.f32.mrf.mxu0
    %v7050 = vadd.f32 %v7006, %v7049
    %v7051 = vpop.f32.mrf.mxu0
    %v7052 = vadd.f32 %v7008, %v7051
    %7053 = vmatmul.bf16.gmra.mxu0 0
    %v7054 = vpop.f32.mrf.mxu0
    %v7055 = vadd.f32 %v7011, %v7054
    %v7056 = vpop.f32.mrf.mxu0
    %v7057 = vadd.f32 %v7013, %v7056
    %7058 = vdwg.mxu0
    %7059 = vmatpush.bf16.msra.mxu0 %v3798
    %7060 = vmatpush.bf16.msra.mxu0 %v3794
    %7061 = vmatpush.bf16.msra.mxu0 %v3790
    %7062 = vmatpush.bf16.msra.mxu0 %v3786
    %7063 = vmatpush.bf16.msra.mxu0 %v3782
    %7064 = vmatpush.bf16.msra.mxu0 %v3778
    %7065 = vmatpush.bf16.msra.mxu0 %v3774
    %7066 = vmatpush.bf16.msra.mxu0 %v3770
    %7067 = vmatmul.bf16.gmra.mxu0 %v1076
    %v7068 = vpop.f32.mrf.mxu0
    %v7069 = vadd.f32 %v7025, %v7068
    %v7070 = vpop.f32.mrf.mxu0
    %v7071 = vadd.f32 %v7027, %v7070
    %7072 = vmatmul.bf16.gmra.mxu0 %v1116
    %v7073 = vpop.f32.mrf.mxu0
    %v7074 = vadd.f32 %v7030, %v7073
    %v7075 = vpop.f32.mrf.mxu0
    %v7076 = vadd.f32 %v7032, %v7075
    %7077 = vmatmul.bf16.gmra.mxu0 %v1156
    %v7078 = vpop.f32.mrf.mxu0
    %v7079 = vadd.f32 %v7035, %v7078
    %v7080 = vpop.f32.mrf.mxu0
    %v7081 = vadd.f32 %v7037, %v7080
    %7082 = vmatmul.bf16.gmra.mxu0 %v1196
    %v7083 = vpop.f32.mrf.mxu0
    %v7084 = vadd.f32 %v7040, %v7083
    %v7085 = vpop.f32.mrf.mxu0
    %v7086 = vadd.f32 %v7042, %v7085
    %7087 = vmatmul.bf16.gmra.mxu0 %v1236
    %v7088 = vpop.f32.mrf.mxu0
    %v7089 = vadd.f32 %v7045, %v7088
    %v7090 = vpop.f32.mrf.mxu0
    %v7091 = vadd.f32 %v7047, %v7090
    %7092 = vmatmul.bf16.gmra.mxu0 %v1276
    %v7093 = vpop.f32.mrf.mxu0
    %v7094 = vadd.f32 %v7050, %v7093
    %v7095 = vpop.f32.mrf.mxu0
    %v7096 = vadd.f32 %v7052, %v7095
    %7097 = vmatmul.bf16.gmra.mxu0 0
    %v7098 = vpop.f32.mrf.mxu0
    %v7099 = vadd.f32 %v7055, %v7098
    %v7100 = vpop.f32.mrf.mxu0
    %v7101 = vadd.f32 %v7057, %v7100
    %7102 = vdwg.mxu0
    %7103 = vmatpush.bf16.msra.mxu0 %v3830
    %7104 = vmatpush.bf16.msra.mxu0 %v3826
    %7105 = vmatpush.bf16.msra.mxu0 %v3822
    %7106 = vmatpush.bf16.msra.mxu0 %v3818
    %7107 = vmatpush.bf16.msra.mxu0 %v3814
    %7108 = vmatpush.bf16.msra.mxu0 %v3810
    %7109 = vmatpush.bf16.msra.mxu0 %v3806
    %7110 = vmatpush.bf16.msra.mxu0 %v3802
    %7111 = vmatmul.bf16.gmra.mxu0 %v1077
    %v7112 = vpop.f32.mrf.mxu0
    %v7113 = vadd.f32 %v7069, %v7112
    %v7114 = vpop.f32.mrf.mxu0
    %v7115 = vadd.f32 %v7071, %v7114
    %7116 = vmatmul.bf16.gmra.mxu0 %v1117
    %v7117 = vpop.f32.mrf.mxu0
    %v7118 = vadd.f32 %v7074, %v7117
    %v7119 = vpop.f32.mrf.mxu0
    %v7120 = vadd.f32 %v7076, %v7119
    %7121 = vmatmul.bf16.gmra.mxu0 %v1157
    %v7122 = vpop.f32.mrf.mxu0
    %v7123 = vadd.f32 %v7079, %v7122
    %v7124 = vpop.f32.mrf.mxu0
    %v7125 = vadd.f32 %v7081, %v7124
    %7126 = vmatmul.bf16.gmra.mxu0 %v1197
    %v7127 = vpop.f32.mrf.mxu0
    %v7128 = vadd.f32 %v7084, %v7127
    %v7129 = vpop.f32.mrf.mxu0
    %v7130 = vadd.f32 %v7086, %v7129
    %7131 = vmatmul.bf16.gmra.mxu0 %v1237
    %v7132 = vpop.f32.mrf.mxu0
    %v7133 = vadd.f32 %v7089, %v7132
    %v7134 = vpop.f32.mrf.mxu0
    %v7135 = vadd.f32 %v7091, %v7134
    %7136 = vmatmul.bf16.gmra.mxu0 %v1277
    %v7137 = vpop.f32.mrf.mxu0
    %v7138 = vadd.f32 %v7094, %v7137
    %v7139 = vpop.f32.mrf.mxu0
    %v7140 = vadd.f32 %v7096, %v7139
    %7141 = vmatmul.bf16.gmra.mxu0 0
    %v7142 = vpop.f32.mrf.mxu0
    %v7143 = vadd.f32 %v7099, %v7142
    %v7144 = vpop.f32.mrf.mxu0
    %v7145 = vadd.f32 %v7101, %v7144
    %7146 = vdwg.mxu0
    %7147 = vmatpush.bf16.msra.mxu0 %v3862
    %7148 = vmatpush.bf16.msra.mxu0 %v3858
    %7149 = vmatpush.bf16.msra.mxu0 %v3854
    %7150 = vmatpush.bf16.msra.mxu0 %v3850
    %7151 = vmatpush.bf16.msra.mxu0 %v3846
    %7152 = vmatpush.bf16.msra.mxu0 %v3842
    %7153 = vmatpush.bf16.msra.mxu0 %v3838
    %7154 = vmatpush.bf16.msra.mxu0 %v3834
    %7155 = vmatmul.bf16.gmra.mxu0 %v1078
    %v7156 = vpop.f32.mrf.mxu0
    %v7157 = vadd.f32 %v7113, %v7156
    %v7158 = vpop.f32.mrf.mxu0
    %v7159 = vadd.f32 %v7115, %v7158
    %7160 = vmatmul.bf16.gmra.mxu0 %v1118
    %v7161 = vpop.f32.mrf.mxu0
    %v7162 = vadd.f32 %v7118, %v7161
    %v7163 = vpop.f32.mrf.mxu0
    %v7164 = vadd.f32 %v7120, %v7163
    %7165 = vmatmul.bf16.gmra.mxu0 %v1158
    %v7166 = vpop.f32.mrf.mxu0
    %v7167 = vadd.f32 %v7123, %v7166
    %v7168 = vpop.f32.mrf.mxu0
    %v7169 = vadd.f32 %v7125, %v7168
    %7170 = vmatmul.bf16.gmra.mxu0 %v1198
    %v7171 = vpop.f32.mrf.mxu0
    %v7172 = vadd.f32 %v7128, %v7171
    %v7173 = vpop.f32.mrf.mxu0
    %v7174 = vadd.f32 %v7130, %v7173
    %7175 = vmatmul.bf16.gmra.mxu0 %v1238
    %v7176 = vpop.f32.mrf.mxu0
    %v7177 = vadd.f32 %v7133, %v7176
    %v7178 = vpop.f32.mrf.mxu0
    %v7179 = vadd.f32 %v7135, %v7178
    %7180 = vmatmul.bf16.gmra.mxu0 %v1278
    %v7181 = vpop.f32.mrf.mxu0
    %v7182 = vadd.f32 %v7138, %v7181
    %v7183 = vpop.f32.mrf.mxu0
    %v7184 = vadd.f32 %v7140, %v7183
    %7185 = vmatmul.bf16.gmra.mxu0 0
    %v7186 = vpop.f32.mrf.mxu0
    %v7187 = vadd.f32 %v7143, %v7186
    %v7188 = vpop.f32.mrf.mxu0
    %v7189 = vadd.f32 %v7145, %v7188
    %7190 = vdwg.mxu0
    %v7191 = vld [vmem:[%s5] sm:$0xff]
    %v7192 = vld [vmem:[%s5 + $0x8] sm:$0xff]
    %v7193 = vld [vmem:[%s5 + $0x10] sm:$0xff]
    %v7194 = vld [vmem:[%s5 + $0x18] sm:$0xff]
    %v7195 = vld [vmem:[%s5 + $0x20] sm:$0xff]
    %v7196 = vld [vmem:[%s5 + $0x28] sm:$0xff]
    %v7197 = vld [vmem:[%s5 + $0x30] sm:$0xff]
    %v7198 = vld [vmem:[%s5 + $0x38] sm:$0xff]
    %v7199 = vld [vmem:[%s5 + $0x40] sm:$0xff]
    %v7200 = vld [vmem:[%s5 + $0x48] sm:$0xff]
    %v7201 = vld [vmem:[%s5 + $0x50] sm:$0xff]
    %v7202 = vld [vmem:[%s5 + $0x58] sm:$0xff]
    %v7203 = vld [vmem:[%s5 + $0x60] sm:$0xff]
    %v7204 = vld [vmem:[%s5 + $0x68] sm:$0xff]
    %v7205 = vld [vmem:[%s5 + $0x70] sm:$0xff]
    %v7206 = vld [vmem:[%s5 + $0x78] sm:$0xff]
    %v7207 = vld [vmem:[%s5 + $0x80] sm:$0xff]
    %v7208 = vld [vmem:[%s5 + $0x88] sm:$0xff]
    %v7209 = vld [vmem:[%s5 + $0x90] sm:$0xff]
    %v7210 = vld [vmem:[%s5 + $0x98] sm:$0xff]
    %v7211 = vld [vmem:[%s5 + $0xa0] sm:$0xff]
    %v7212 = vld [vmem:[%s5 + $0xa8] sm:$0xff]
    %v7213 = vld [vmem:[%s5 + $0xb0] sm:$0xff]
    %v7214 = vld [vmem:[%s5 + $0xb8] sm:$0xff]
    %v7215 = vld [vmem:[%s5 + $0xc0] sm:$0xff]
    %v7216 = vld [vmem:[%s5 + $0xc8] sm:$0xff]
    %v7217 = vld [vmem:[%s5 + $0xd0] sm:$0xff]
    %v7218 = vld [vmem:[%s5 + $0xd8] sm:$0xff]
    %v7219 = vld [vmem:[%s5 + $0xe0] sm:$0xff]
    %v7220 = vld [vmem:[%s5 + $0xe8] sm:$0xff]
    %v7221 = vld [vmem:[%s5 + $0xf0] sm:$0xff]
    %v7222 = vld [vmem:[%s5 + $0xf8] sm:$0xff]
    %v7223 = vld [vmem:[%s5 + $0x100] sm:$0xff]
    %v7224 = vld [vmem:[%s5 + $0x108] sm:$0xff]
    %v7225 = vld [vmem:[%s5 + $0x110] sm:$0xff]
    %v7226 = vld [vmem:[%s5 + $0x118] sm:$0xff]
    %v7227 = vld [vmem:[%s5 + $0x120] sm:$0xff]
    %v7228 = vld [vmem:[%s5 + $0x128] sm:$0xff]
    %v7229 = vld [vmem:[%s5 + $0x130] sm:$0xff]
    %v7230 = vld [vmem:[%s5 + $0x138] sm:$0xff]
    %v7231 = vld [vmem:[%s5 + $0x140] sm:$0xff]
    %v7232 = vld [vmem:[%s5 + $0x148] sm:$0xff]
    %v7233 = vld [vmem:[%s5 + $0x150] sm:$0xff]
    %v7234 = vld [vmem:[%s5 + $0x158] sm:$0xff]
    %v7235 = vld [vmem:[%s5 + $0x160] sm:$0xff]
    %v7236 = vld [vmem:[%s5 + $0x168] sm:$0xff]
    %v7237 = vld [vmem:[%s5 + $0x170] sm:$0xff]
    %v7238 = vld [vmem:[%s5 + $0x178] sm:$0xff]
    %v7239 = vld [vmem:[%s5 + $0x180] sm:$0xff]
    %v7240 = vld [vmem:[%s5 + $0x188] sm:$0xff]
    %v7241 = vld [vmem:[%s5 + $0x190] sm:$0xff]
    %v7242 = vld [vmem:[%s5 + $0x198] sm:$0xff]
    %v7243 = vld [vmem:[%s5 + $0x1a0] sm:$0xff]
    %v7244 = vld [vmem:[%s5 + $0x1a8] sm:$0xff]
    %v7245 = vld [vmem:[%s5 + $0x1b0] sm:$0xff]
    %v7246 = vld [vmem:[%s5 + $0x1b8] sm:$0xff]
    %v7247 = vld [vmem:[%s5 + $0x1c0] sm:$0xff]
    %v7248 = vld [vmem:[%s5 + $0x1c8] sm:$0xff]
    %v7249 = vld [vmem:[%s5 + $0x1d0] sm:$0xff]
    %v7250 = vld [vmem:[%s5 + $0x1d8] sm:$0xff]
    %v7251 = vld [vmem:[%s5 + $0x1e0] sm:$0xff]
    %v7252 = vld [vmem:[%s5 + $0x1e8] sm:$0xff]
    %v7253 = vld [vmem:[%s5 + $0x1f0] sm:$0xff]
    %v7254 = vld [vmem:[%s5 + $0x1f8] sm:$0xff]
    %v7255 = vld [vmem:[#allocation6] sm:$0xff]
    %v7256 = vld [vmem:[#allocation6 + $0x8] sm:$0xff]
    %v7257 = vld [vmem:[#allocation6 + $0x10] sm:$0xff]
    %v7258 = vld [vmem:[#allocation6 + $0x18] sm:$0xff]
    %v7259 = vld [vmem:[#allocation6 + $0x20] sm:$0xff]
    %v7260 = vld [vmem:[#allocation6 + $0x28] sm:$0xff]
    %v7261 = vld [vmem:[#allocation6 + $0x30] sm:$0xff]
    %v7262 = vld [vmem:[#allocation6 + $0x38] sm:$0xff]
    %v7263 = vld [vmem:[#allocation6 + $0x40] sm:$0xff]
    %v7264 = vld [vmem:[#allocation6 + $0x48] sm:$0xff]
    %v7265 = vld [vmem:[#allocation6 + $0x50] sm:$0xff]
    %v7266 = vld [vmem:[#allocation6 + $0x58] sm:$0xff]
    %v7267 = vld [vmem:[#allocation6 + $0x60] sm:$0xff]
    %v7268 = vld [vmem:[#allocation6 + $0x68] sm:$0xff]
    %v7269 = vld [vmem:[#allocation6 + $0x70] sm:$0xff]
    %v7270 = vld [vmem:[#allocation6 + $0x78] sm:$0xff]
    %v7271 = vld [vmem:[#allocation6 + $0x80] sm:$0xff]
    %v7272 = vld [vmem:[#allocation6 + $0x88] sm:$0xff]
    %v7273 = vld [vmem:[#allocation6 + $0x90] sm:$0xff]
    %v7274 = vld [vmem:[#allocation6 + $0x98] sm:$0xff]
    %v7275 = vld [vmem:[#allocation6 + $0xa0] sm:$0xff]
    %v7276 = vld [vmem:[#allocation6 + $0xa8] sm:$0xff]
    %v7277 = vld [vmem:[#allocation6 + $0xb0] sm:$0xff]
    %v7278 = vld [vmem:[#allocation6 + $0xb8] sm:$0xff]
    %v7279 = vld [vmem:[#allocation6 + $0xc0] sm:$0xff]
    %v7280 = vld [vmem:[#allocation6 + $0xc8] sm:$0xff]
    %v7281 = vld [vmem:[#allocation6 + $0xd0] sm:$0xff]
    %v7282 = vld [vmem:[#allocation6 + $0xd8] sm:$0xff]
    %v7283 = vld [vmem:[#allocation6 + $0xe0] sm:$0xff]
    %v7284 = vld [vmem:[#allocation6 + $0xe8] sm:$0xff]
    %v7285 = vld [vmem:[#allocation6 + $0xf0] sm:$0xff]
    %v7286 = vld [vmem:[#allocation6 + $0xf8] sm:$0xff]
    %v7287 = vld [vmem:[%s7] sm:$0x1]
    %v7288 = vld [vmem:[%s8] sm:$0x1]
    %v7289 = vadd.f32 %v5045, %v5047
    %v7290 = vadd.f32 %v7289, %v5050
    %v7291 = vadd.f32 %v7290, %v5052
    %v7292 = vadd.f32 %v7291, %v5055
    %v7293 = vadd.f32 %v7292, %v5057
    %v7294 = vadd.f32 %v7293, %v5060
    %v7295 = vadd.f32 %v7294, %v5062
    %v7296 = vadd.f32 %v7295, %v5065
    %v7297 = vadd.f32 %v7296, %v5067
    %v7298 = vadd.f32 %v7297, %v5070
    %v7299 = vadd.f32 %v7298, %v5072
    %v7300 = vadd.f32 %v7299, %v5075
    %v7301 = vadd.f32 %v7300, %v5077
    %v7302 = vrot.slane %v7301, 4
    %v7303 = vadd.f32 %v7301, %v7302
    %v7304 = vrot.slane %v7303, 2
    %v7305 = vadd.f32 %v7303, %v7304
    %v7306 = vrot.slane %v7305, 1
    %v7307 = vadd.f32 %v7305, %v7306
    %v7308 = vadd.f32 %v5749, %v5751
    %v7309 = vadd.f32 %v7308, %v5754
    %v7310 = vadd.f32 %v7309, %v5756
    %v7311 = vadd.f32 %v7310, %v5759
    %v7312 = vadd.f32 %v7311, %v5761
    %v7313 = vadd.f32 %v7312, %v5764
    %v7314 = vadd.f32 %v7313, %v5766
    %v7315 = vadd.f32 %v7314, %v5769
    %v7316 = vadd.f32 %v7315, %v5771
    %v7317 = vadd.f32 %v7316, %v5774
    %v7318 = vadd.f32 %v7317, %v5776
    %v7319 = vadd.f32 %v7318, %v5779
    %v7320 = vadd.f32 %v7319, %v5781
    %v7321 = vrot.slane %v7320, 4
    %v7322 = vadd.f32 %v7320, %v7321
    %v7323 = vrot.slane %v7322, 2
    %v7324 = vadd.f32 %v7322, %v7323
    %v7325 = vrot.slane %v7324, 1
    %v7326 = vadd.f32 %v7324, %v7325
    %v7327 = vadd.f32 %v6453, %v6455
    %v7328 = vadd.f32 %v7327, %v6458
    %v7329 = vadd.f32 %v7328, %v6460
    %v7330 = vadd.f32 %v7329, %v6463
    %v7331 = vadd.f32 %v7330, %v6465
    %v7332 = vadd.f32 %v7331, %v6468
    %v7333 = vadd.f32 %v7332, %v6470
    %v7334 = vadd.f32 %v7333, %v6473
    %v7335 = vadd.f32 %v7334, %v6475
    %v7336 = vadd.f32 %v7335, %v6478
    %v7337 = vadd.f32 %v7336, %v6480
    %v7338 = vadd.f32 %v7337, %v6483
    %v7339 = vadd.f32 %v7338, %v6485
    %v7340 = vrot.slane %v7339, 4
    %v7341 = vadd.f32 %v7339, %v7340
    %v7342 = vrot.slane %v7341, 2
    %v7343 = vadd.f32 %v7341, %v7342
    %v7344 = vrot.slane %v7343, 1
    %v7345 = vadd.f32 %v7343, %v7344
    %v7346 = vadd.f32 %v7157, %v7159
    %v7347 = vadd.f32 %v7346, %v7162
    %v7348 = vadd.f32 %v7347, %v7164
    %v7349 = vadd.f32 %v7348, %v7167
    %v7350 = vadd.f32 %v7349, %v7169
    %v7351 = vadd.f32 %v7350, %v7172
    %v7352 = vadd.f32 %v7351, %v7174
    %v7353 = vadd.f32 %v7352, %v7177
    %v7354 = vadd.f32 %v7353, %v7179
    %v7355 = vadd.f32 %v7354, %v7182
    %v7356 = vadd.f32 %v7355, %v7184
    %v7357 = vadd.f32 %v7356, %v7187
    %v7358 = vadd.f32 %v7357, %v7189
    %v7359 = vrot.slane %v7358, 4
    %v7360 = vadd.f32 %v7358, %v7359
    %v7361 = vrot.slane %v7360, 2
    %v7362 = vadd.f32 %v7360, %v7361
    %v7363 = vrot.slane %v7362, 1
    %v7364 = vadd.f32 %v7362, %v7363
    %v7365 = vmul.f32 %v5045, %v5045
    %v7366 = vmul.f32 %v5749, %v5749
    %v7367 = vmul.f32 %v6453, %v6453
    %v7368 = vmul.f32 %v7157, %v7157
    %v7369 = vmul.f32 %v5047, %v5047
    %v7370 = vmul.f32 %v5751, %v5751
    %v7371 = vmul.f32 %v6455, %v6455
    %v7372 = vmul.f32 %v7159, %v7159
    %v7373 = vmul.f32 %v5050, %v5050
    %v7374 = vmul.f32 %v5754, %v5754
    %v7375 = vmul.f32 %v6458, %v6458
    %v7376 = vmul.f32 %v7162, %v7162
    %v7377 = vmul.f32 %v5052, %v5052
    %v7378 = vmul.f32 %v5756, %v5756
    %v7379 = vmul.f32 %v6460, %v6460
    %v7380 = vmul.f32 %v7164, %v7164
    %v7381 = vmul.f32 %v5055, %v5055
    %v7382 = vmul.f32 %v5759, %v5759
    %v7383 = vmul.f32 %v6463, %v6463
    %v7384 = vmul.f32 %v7167, %v7167
    %v7385 = vmul.f32 %v5057, %v5057
    %v7386 = vmul.f32 %v5761, %v5761
    %v7387 = vmul.f32 %v6465, %v6465
    %v7388 = vmul.f32 %v7169, %v7169
    %v7389 = vmul.f32 %v5060, %v5060
    %v7390 = vmul.f32 %v5764, %v5764
    %v7391 = vmul.f32 %v6468, %v6468
    %v7392 = vmul.f32 %v7172, %v7172
    %v7393 = vmul.f32 %v5062, %v5062
    %v7394 = vmul.f32 %v5766, %v5766
    %v7395 = vmul.f32 %v6470, %v6470
    %v7396 = vmul.f32 %v7174, %v7174
    %v7397 = vmul.f32 %v5065, %v5065
    %v7398 = vmul.f32 %v5769, %v5769
    %v7399 = vmul.f32 %v6473, %v6473
    %v7400 = vmul.f32 %v7177, %v7177
    %v7401 = vmul.f32 %v5067, %v5067
    %v7402 = vmul.f32 %v5771, %v5771
    %v7403 = vmul.f32 %v6475, %v6475
    %v7404 = vmul.f32 %v7179, %v7179
    %v7405 = vmul.f32 %v5070, %v5070
    %v7406 = vmul.f32 %v5774, %v5774
    %v7407 = vmul.f32 %v6478, %v6478
    %v7408 = vmul.f32 %v7182, %v7182
    %v7409 = vmul.f32 %v5072, %v5072
    %v7410 = vmul.f32 %v5776, %v5776
    %v7411 = vmul.f32 %v6480, %v6480
    %v7412 = vmul.f32 %v7184, %v7184
    %v7413 = vmul.f32 %v5075, %v5075
    %v7414 = vmul.f32 %v5779, %v5779
    %v7415 = vmul.f32 %v6483, %v6483
    %v7416 = vmul.f32 %v7187, %v7187
    %v7417 = vmul.f32 %v5077, %v5077
    %v7418 = vmul.f32 %v5781, %v5781
    %v7419 = vmul.f32 %v6485, %v6485
    %v7420 = vmul.f32 %v7189, %v7189
    %v7421 = vadd.f32 %v7365, %v7369
    %v7422 = vadd.f32 %v7421, %v7373
    %v7423 = vadd.f32 %v7422, %v7377
    %v7424 = vadd.f32 %v7423, %v7381
    %v7425 = vadd.f32 %v7424, %v7385
    %v7426 = vadd.f32 %v7425, %v7389
    %v7427 = vadd.f32 %v7426, %v7393
    %v7428 = vadd.f32 %v7427, %v7397
    %v7429 = vadd.f32 %v7428, %v7401
    %v7430 = vadd.f32 %v7429, %v7405
    %v7431 = vadd.f32 %v7430, %v7409
    %v7432 = vadd.f32 %v7431, %v7413
    %v7433 = vadd.f32 %v7432, %v7417
    %v7434 = vrot.slane %v7433, 4
    %v7435 = vadd.f32 %v7433, %v7434
    %v7436 = vrot.slane %v7435, 2
    %v7437 = vadd.f32 %v7435, %v7436
    %v7438 = vrot.slane %v7437, 1
    %v7439 = vadd.f32 %v7437, %v7438
    %v7440 = vadd.f32 %v7366, %v7370
    %v7441 = vadd.f32 %v7440, %v7374
    %v7442 = vadd.f32 %v7441, %v7378
    %v7443 = vadd.f32 %v7442, %v7382
    %v7444 = vadd.f32 %v7443, %v7386
    %v7445 = vadd.f32 %v7444, %v7390
    %v7446 = vadd.f32 %v7445, %v7394
    %v7447 = vadd.f32 %v7446, %v7398
    %v7448 = vadd.f32 %v7447, %v7402
    %v7449 = vadd.f32 %v7448, %v7406
    %v7450 = vadd.f32 %v7449, %v7410
    %v7451 = vadd.f32 %v7450, %v7414
    %v7452 = vadd.f32 %v7451, %v7418
    %v7453 = vrot.slane %v7452, 4
    %v7454 = vadd.f32 %v7452, %v7453
    %v7455 = vrot.slane %v7454, 2
    %v7456 = vadd.f32 %v7454, %v7455
    %v7457 = vrot.slane %v7456, 1
    %v7458 = vadd.f32 %v7456, %v7457
    %v7459 = vadd.f32 %v7367, %v7371
    %v7460 = vadd.f32 %v7459, %v7375
    %v7461 = vadd.f32 %v7460, %v7379
    %v7462 = vadd.f32 %v7461, %v7383
    %v7463 = vadd.f32 %v7462, %v7387
    %v7464 = vadd.f32 %v7463, %v7391
    %v7465 = vadd.f32 %v7464, %v7395
    %v7466 = vadd.f32 %v7465, %v7399
    %v7467 = vadd.f32 %v7466, %v7403
    %v7468 = vadd.f32 %v7467, %v7407
    %v7469 = vadd.f32 %v7468, %v7411
    %v7470 = vadd.f32 %v7469, %v7415
    %v7471 = vadd.f32 %v7470, %v7419
    %v7472 = vrot.slane %v7471, 4
    %v7473 = vadd.f32 %v7471, %v7472
    %v7474 = vrot.slane %v7473, 2
    %v7475 = vadd.f32 %v7473, %v7474
    %v7476 = vrot.slane %v7475, 1
    %v7477 = vadd.f32 %v7475, %v7476
    %v7478 = vadd.f32 %v7368, %v7372
    %v7479 = vadd.f32 %v7478, %v7376
    %v7480 = vadd.f32 %v7479, %v7380
    %v7481 = vadd.f32 %v7480, %v7384
    %v7482 = vadd.f32 %v7481, %v7388
    %v7483 = vadd.f32 %v7482, %v7392
    %v7484 = vadd.f32 %v7483, %v7396
    %v7485 = vadd.f32 %v7484, %v7400
    %v7486 = vadd.f32 %v7485, %v7404
    %v7487 = vadd.f32 %v7486, %v7408
    %v7488 = vadd.f32 %v7487, %v7412
    %v7489 = vadd.f32 %v7488, %v7416
    %v7490 = vadd.f32 %v7489, %v7420
    %v7491 = vrot.slane %v7490, 4
    %v7492 = vadd.f32 %v7490, %v7491
    %v7493 = vrot.slane %v7492, 2
    %v7494 = vadd.f32 %v7492, %v7493
    %v7495 = vrot.slane %v7494, 1
    %v7496 = vadd.f32 %v7494, %v7495
    %vm7497 = vcmask 1040384
    %v7498 = vsel %vm7497, %v7307, %v7439
    %v7499 = vsel %vm7497, %v7326, %v7458
    %v7500 = vsel %vm7497, %v7345, %v7477
    %v7501 = vsel %vm7497, %v7364, %v7496
    %7502 = vmatpush.msra.mxu0 %v7206
    %7503 = vmatpush.msra.mxu0 %v7205
    %7504 = vmatpush.msra.mxu0 %v7204
    %7505 = vmatpush.msra.mxu0 %v7203
    %7506 = vmatpush.msra.mxu0 %v7202
    %7507 = vmatpush.msra.mxu0 %v7201
    %7508 = vmatpush.msra.mxu0 %v7200
    %7509 = vmatpush.msra.mxu0 %v7199
    %7510 = vmatpush.msra.mxu0 %v7198
    %7511 = vmatpush.msra.mxu0 %v7197
    %7512 = vmatpush.msra.mxu0 %v7196
    %7513 = vmatpush.msra.mxu0 %v7195
    %7514 = vmatpush.msra.mxu0 %v7194
    %7515 = vmatpush.msra.mxu0 %v7193
    %7516 = vmatpush.msra.mxu0 %v7192
    %7517 = vmatpush.msra.mxu0 %v7191
    %7518 = vmatmul.f32.gmra.mxu0 %v7498
    %v7519 = vpop.f32.mrf.mxu0
    %v7520 = vadd.f32 0.0, %v7519
    %7521 = vdwg.mxu0
    %7522 = vmatpush.msra.mxu0 %v7222
    %7523 = vmatpush.msra.mxu0 %v7221
    %7524 = vmatpush.msra.mxu0 %v7220
    %7525 = vmatpush.msra.mxu0 %v7219
    %7526 = vmatpush.msra.mxu0 %v7218
    %7527 = vmatpush.msra.mxu0 %v7217
    %7528 = vmatpush.msra.mxu0 %v7216
    %7529 = vmatpush.msra.mxu0 %v7215
    %7530 = vmatpush.msra.mxu0 %v7214
    %7531 = vmatpush.msra.mxu0 %v7213
    %7532 = vmatpush.msra.mxu0 %v7212
    %7533 = vmatpush.msra.mxu0 %v7211
    %7534 = vmatpush.msra.mxu0 %v7210
    %7535 = vmatpush.msra.mxu0 %v7209
    %7536 = vmatpush.msra.mxu0 %v7208
    %7537 = vmatpush.msra.mxu0 %v7207
    %7538 = vmatmul.f32.gmra.mxu0 %v7499
    %v7539 = vpop.f32.mrf.mxu0
    %v7540 = vadd.f32 %v7520, %v7539
    %7541 = vdwg.mxu0
    %7542 = vmatpush.msra.mxu0 %v7238
    %7543 = vmatpush.msra.mxu0 %v7237
    %7544 = vmatpush.msra.mxu0 %v7236
    %7545 = vmatpush.msra.mxu0 %v7235
    %7546 = vmatpush.msra.mxu0 %v7234
    %7547 = vmatpush.msra.mxu0 %v7233
    %7548 = vmatpush.msra.mxu0 %v7232
    %7549 = vmatpush.msra.mxu0 %v7231
    %7550 = vmatpush.msra.mxu0 %v7230
    %7551 = vmatpush.msra.mxu0 %v7229
    %7552 = vmatpush.msra.mxu0 %v7228
    %7553 = vmatpush.msra.mxu0 %v7227
    %7554 = vmatpush.msra.mxu0 %v7226
    %7555 = vmatpush.msra.mxu0 %v7225
    %7556 = vmatpush.msra.mxu0 %v7224
    %7557 = vmatpush.msra.mxu0 %v7223
    %7558 = vmatmul.f32.gmra.mxu0 %v7500
    %v7559 = vpop.f32.mrf.mxu0
    %v7560 = vadd.f32 %v7540, %v7559
    %7561 = vdwg.mxu0
    %7562 = vmatpush.msra.mxu0 %v7254
    %7563 = vmatpush.msra.mxu0 %v7253
    %7564 = vmatpush.msra.mxu0 %v7252
    %7565 = vmatpush.msra.mxu0 %v7251
    %7566 = vmatpush.msra.mxu0 %v7250
    %7567 = vmatpush.msra.mxu0 %v7249
    %7568 = vmatpush.msra.mxu0 %v7248
    %7569 = vmatpush.msra.mxu0 %v7247
    %7570 = vmatpush.msra.mxu0 %v7246
    %7571 = vmatpush.msra.mxu0 %v7245
    %7572 = vmatpush.msra.mxu0 %v7244
    %7573 = vmatpush.msra.mxu0 %v7243
    %7574 = vmatpush.msra.mxu0 %v7242
    %7575 = vmatpush.msra.mxu0 %v7241
    %7576 = vmatpush.msra.mxu0 %v7240
    %7577 = vmatpush.msra.mxu0 %v7239
    %7578 = vmatmul.f32.gmra.mxu0 %v7501
    %v7579 = vpop.f32.mrf.mxu0
    %v7580 = vadd.f32 %v7560, %v7579
    %7581 = vdwg.mxu0
    %v7582 = vrcp.pop 784.0
    %v7583 = vmul.f32 784.0, %v7582
    %v7584 = vsub.f32 1.0, %v7583
    %v7585 = vmul.f32 %v7582, %v7584
    %v7586 = vadd.f32 %v7582, %v7585
    %vm7587 = vweird.f32 %v7582
    %v7588 = vsel %vm7587, %v7582, %v7586
    %v7589 = vmul.f32 %v7580, %v7588
    %v7590 = vmul.f32 %v7589, %v7589
    %v7592 = vrot.slane %v7590, 7
    %v7594 = vsub.f32 %v7589, %v7592
    %v7595 = vmax.f32 %v7594, 0.0
    %v7596 = vadd.f32 %v7595, 1e-05
    %v7597 = vrsqrt.pop %v7596
    %v7598 = vmul.f32 %v7597, %v7596
    %v7599 = vmul.f32 %v7598, %v7597
    %v7600 = vmul.f32 0.5, %v7599
    %v7601 = vsub.f32 1.5, %v7600
    %v7602 = vmul.f32 %v7597, %v7601
    %vm7603 = vweird.f32 %v7596
    %vm7604 = vweird.f32 %v7597
    %vm7605 = vmor %vm7603, %vm7604
    %v7606 = vsel %vm7605, %v7597, %v7602
    %7608 = vst [vmem:[#allocation1] sm:$0xff] %v7606
    %s7609 = scalar_lea.vmem [#allocation1], 1
    %v7610 = vld [vmem:[%s7609] ss:$9 sm:$0xff]
    %v7612 = vmul.f32 %v7287, %v7610
    %v7613 = vmul.f32 %v7589, %v7612
    %v7614 = vsub.f32 %v7288, %v7613
    %v7616 = vperm.slane %v7614, 0
    %v7618 = vsel %vm7497, %v7612, %v7616
    %vm7619 = vcmask 523264
    %v7621 = vsel %vm7619, %v7618, 0
    %7623 = vmatpush.msra.mxu0 0.0
    %7624 = vmatpush.msra.mxu0 0.0
    %7625 = vmatpush.msra.mxu0 0.0
    %7626 = vmatpush.msra.mxu0 0.0
    %7627 = vmatpush.msra.mxu0 0.0
    %7628 = vmatpush.msra.mxu0 0.0
    %7629 = vmatpush.msra.mxu0 0.0
    %7630 = vmatpush.msra.mxu0 0.0
    %7631 = vmatpush.msra.mxu0 %v7283
    %7632 = vmatpush.msra.mxu0 %v7279
    %7633 = vmatpush.msra.mxu0 %v7275
    %7634 = vmatpush.msra.mxu0 %v7271
    %7635 = vmatpush.msra.mxu0 %v7267
    %7636 = vmatpush.msra.mxu0 %v7263
    %7637 = vmatpush.msra.mxu0 %v7259
    %7638 = vmatpush.msra.mxu0 %v7255
    %7639 = vmatmul.f32.gmra.mxu0 %v7621
    %v7640 = vpop.f32.mrf.mxu0
    %v7641 = vadd.f32 0.0, %v7640
    %7642 = vdwg.mxu0
    %7643 = vmatpush.msra.mxu0 0.0
    %7644 = vmatpush.msra.mxu0 0.0
    %7645 = vmatpush.msra.mxu0 0.0
    %7646 = vmatpush.msra.mxu0 0.0
    %7647 = vmatpush.msra.mxu0 0.0
    %7648 = vmatpush.msra.mxu0 0.0
    %7649 = vmatpush.msra.mxu0 0.0
    %7650 = vmatpush.msra.mxu0 0.0
    %7651 = vmatpush.msra.mxu0 %v7284
    %7652 = vmatpush.msra.mxu0 %v7280
    %7653 = vmatpush.msra.mxu0 %v7276
    %7654 = vmatpush.msra.mxu0 %v7272
    %7655 = vmatpush.msra.mxu0 %v7268
    %7656 = vmatpush.msra.mxu0 %v7264
    %7657 = vmatpush.msra.mxu0 %v7260
    %7658 = vmatpush.msra.mxu0 %v7256
    %7659 = vmatmul.f32.gmra.mxu0 %v7621
    %v7660 = vpop.f32.mrf.mxu0
    %v7661 = vadd.f32 0.0, %v7660
    %7662 = vdwg.mxu0
    %7663 = vmatpush.msra.mxu0 0.0
    %7664 = vmatpush.msra.mxu0 0.0
    %7665 = vmatpush.msra.mxu0 0.0
    %7666 = vmatpush.msra.mxu0 0.0
    %7667 = vmatpush.msra.mxu0 0.0
    %7668 = vmatpush.msra.mxu0 0.0
    %7669 = vmatpush.msra.mxu0 0.0
    %7670 = vmatpush.msra.mxu0 0.0
    %7671 = vmatpush.msra.mxu0 %v7285
    %7672 = vmatpush.msra.mxu0 %v7281
    %7673 = vmatpush.msra.mxu0 %v7277
    %7674 = vmatpush.msra.mxu0 %v7273
    %7675 = vmatpush.msra.mxu0 %v7269
    %7676 = vmatpush.msra.mxu0 %v7265
    %7677 = vmatpush.msra.mxu0 %v7261
    %7678 = vmatpush.msra.mxu0 %v7257
    %7679 = vmatmul.f32.gmra.mxu0 %v7621
    %v7680 = vpop.f32.mrf.mxu0
    %v7681 = vadd.f32 0.0, %v7680
    %7682 = vdwg.mxu0
    %7683 = vmatpush.msra.mxu0 0.0
    %7684 = vmatpush.msra.mxu0 0.0
    %7685 = vmatpush.msra.mxu0 0.0
    %7686 = vmatpush.msra.mxu0 0.0
    %7687 = vmatpush.msra.mxu0 0.0
    %7688 = vmatpush.msra.mxu0 0.0
    %7689 = vmatpush.msra.mxu0 0.0
    %7690 = vmatpush.msra.mxu0 0.0
    %7691 = vmatpush.msra.mxu0 %v7286
    %7692 = vmatpush.msra.mxu0 %v7282
    %7693 = vmatpush.msra.mxu0 %v7278
    %7694 = vmatpush.msra.mxu0 %v7274
    %7695 = vmatpush.msra.mxu0 %v7270
    %7696 = vmatpush.msra.mxu0 %v7266
    %7697 = vmatpush.msra.mxu0 %v7262
    %7698 = vmatpush.msra.mxu0 %v7258
    %7699 = vmatmul.f32.gmra.mxu0 %v7621
    %v7700 = vpop.f32.mrf.mxu0
    %v7701 = vadd.f32 0.0, %v7700
    %7702 = vdwg.mxu0
    %v7703 = vperm.slane %v7641, 0
    %v7704 = vperm.slane %v7661, 0
    %v7705 = vperm.slane %v7681, 0
    %v7706 = vperm.slane %v7701, 0
    %v7707 = vmul.f32 %v5045, %v7703
    %v7708 = vmul.f32 %v5749, %v7704
    %v7709 = vmul.f32 %v6453, %v7705
    %v7710 = vmul.f32 %v7157, %v7706
    %v7711 = vmul.f32 %v5047, %v7703
    %v7712 = vmul.f32 %v5751, %v7704
    %v7713 = vmul.f32 %v6455, %v7705
    %v7714 = vmul.f32 %v7159, %v7706
    %v7715 = vmul.f32 %v5050, %v7703
    %v7716 = vmul.f32 %v5754, %v7704
    %v7717 = vmul.f32 %v6458, %v7705
    %v7718 = vmul.f32 %v7162, %v7706
    %v7719 = vmul.f32 %v5052, %v7703
    %v7720 = vmul.f32 %v5756, %v7704
    %v7721 = vmul.f32 %v6460, %v7705
    %v7722 = vmul.f32 %v7164, %v7706
    %v7723 = vmul.f32 %v5055, %v7703
    %v7724 = vmul.f32 %v5759, %v7704
    %v7725 = vmul.f32 %v6463, %v7705
    %v7726 = vmul.f32 %v7167, %v7706
    %v7727 = vmul.f32 %v5057, %v7703
    %v7728 = vmul.f32 %v5761, %v7704
    %v7729 = vmul.f32 %v6465, %v7705
    %v7730 = vmul.f32 %v7169, %v7706
    %v7731 = vmul.f32 %v5060, %v7703
    %v7732 = vmul.f32 %v5764, %v7704
    %v7733 = vmul.f32 %v6468, %v7705
    %v7734 = vmul.f32 %v7172, %v7706
    %v7735 = vmul.f32 %v5062, %v7703
    %v7736 = vmul.f32 %v5766, %v7704
    %v7737 = vmul.f32 %v6470, %v7705
    %v7738 = vmul.f32 %v7174, %v7706
    %v7739 = vmul.f32 %v5065, %v7703
    %v7740 = vmul.f32 %v5769, %v7704
    %v7741 = vmul.f32 %v6473, %v7705
    %v7742 = vmul.f32 %v7177, %v7706
    %v7743 = vmul.f32 %v5067, %v7703
    %v7744 = vmul.f32 %v5771, %v7704
    %v7745 = vmul.f32 %v6475, %v7705
    %v7746 = vmul.f32 %v7179, %v7706
    %v7747 = vmul.f32 %v5070, %v7703
    %v7748 = vmul.f32 %v5774, %v7704
    %v7749 = vmul.f32 %v6478, %v7705
    %v7750 = vmul.f32 %v7182, %v7706
    %v7751 = vmul.f32 %v5072, %v7703
    %v7752 = vmul.f32 %v5776, %v7704
    %v7753 = vmul.f32 %v6480, %v7705
    %v7754 = vmul.f32 %v7184, %v7706
    %v7755 = vmul.f32 %v5075, %v7703
    %v7756 = vmul.f32 %v5779, %v7704
    %v7757 = vmul.f32 %v6483, %v7705
    %v7758 = vmul.f32 %v7187, %v7706
    %v7759 = vmul.f32 %v5077, %v7703
    %v7760 = vmul.f32 %v5781, %v7704
    %v7761 = vmul.f32 %v6485, %v7705
    %v7762 = vmul.f32 %v7189, %v7706
    %v7763 = vperm.slane %v7641, 1
    %v7764 = vperm.slane %v7661, 1
    %v7765 = vperm.slane %v7681, 1
    %v7766 = vperm.slane %v7701, 1
    %v7767 = vadd.f32 %v7707, %v7763
    %v7768 = vadd.f32 %v7708, %v7764
    %v7769 = vadd.f32 %v7709, %v7765
    %v7770 = vadd.f32 %v7710, %v7766
    %v7771 = vadd.f32 %v7711, %v7763
    %v7772 = vadd.f32 %v7712, %v7764
    %v7773 = vadd.f32 %v7713, %v7765
    %v7774 = vadd.f32 %v7714, %v7766
    %v7775 = vadd.f32 %v7715, %v7763
    %v7776 = vadd.f32 %v7716, %v7764
    %v7777 = vadd.f32 %v7717, %v7765
    %v7778 = vadd.f32 %v7718, %v7766
    %v7779 = vadd.f32 %v7719, %v7763
    %v7780 = vadd.f32 %v7720, %v7764
    %v7781 = vadd.f32 %v7721, %v7765
    %v7782 = vadd.f32 %v7722, %v7766
    %v7783 = vadd.f32 %v7723, %v7763
    %v7784 = vadd.f32 %v7724, %v7764
    %v7785 = vadd.f32 %v7725, %v7765
    %v7786 = vadd.f32 %v7726, %v7766
    %v7787 = vadd.f32 %v7727, %v7763
    %v7788 = vadd.f32 %v7728, %v7764
    %v7789 = vadd.f32 %v7729, %v7765
    %v7790 = vadd.f32 %v7730, %v7766
    %v7791 = vadd.f32 %v7731, %v7763
    %v7792 = vadd.f32 %v7732, %v7764
    %v7793 = vadd.f32 %v7733, %v7765
    %v7794 = vadd.f32 %v7734, %v7766
    %v7795 = vadd.f32 %v7735, %v7763
    %v7796 = vadd.f32 %v7736, %v7764
    %v7797 = vadd.f32 %v7737, %v7765
    %v7798 = vadd.f32 %v7738, %v7766
    %v7799 = vadd.f32 %v7739, %v7763
    %v7800 = vadd.f32 %v7740, %v7764
    %v7801 = vadd.f32 %v7741, %v7765
    %v7802 = vadd.f32 %v7742, %v7766
    %v7803 = vadd.f32 %v7743, %v7763
    %v7804 = vadd.f32 %v7744, %v7764
    %v7805 = vadd.f32 %v7745, %v7765
    %v7806 = vadd.f32 %v7746, %v7766
    %v7807 = vadd.f32 %v7747, %v7763
    %v7808 = vadd.f32 %v7748, %v7764
    %v7809 = vadd.f32 %v7749, %v7765
    %v7810 = vadd.f32 %v7750, %v7766
    %v7811 = vadd.f32 %v7751, %v7763
    %v7812 = vadd.f32 %v7752, %v7764
    %v7813 = vadd.f32 %v7753, %v7765
    %v7814 = vadd.f32 %v7754, %v7766
    %v7815 = vadd.f32 %v7755, %v7763
    %v7816 = vadd.f32 %v7756, %v7764
    %v7817 = vadd.f32 %v7757, %v7765
    %v7818 = vadd.f32 %v7758, %v7766
    %v7819 = vadd.f32 %v7759, %v7763
    %v7820 = vadd.f32 %v7760, %v7764
    %v7821 = vadd.f32 %v7761, %v7765
    %v7822 = vadd.f32 %v7762, %v7766
    %v7823 = vmul.f32 %v7767, 0.2
    %v7824 = vmul.f32 %v7768, 0.2
    %v7825 = vmul.f32 %v7769, 0.2
    %v7826 = vmul.f32 %v7770, 0.2
    %v7827 = vmul.f32 %v7771, 0.2
    %v7828 = vmul.f32 %v7772, 0.2
    %v7829 = vmul.f32 %v7773, 0.2
    %v7830 = vmul.f32 %v7774, 0.2
    %v7831 = vmul.f32 %v7775, 0.2
    %v7832 = vmul.f32 %v7776, 0.2
    %v7833 = vmul.f32 %v7777, 0.2
    %v7834 = vmul.f32 %v7778, 0.2
    %v7835 = vmul.f32 %v7779, 0.2
    %v7836 = vmul.f32 %v7780, 0.2
    %v7837 = vmul.f32 %v7781, 0.2
    %v7838 = vmul.f32 %v7782, 0.2
    %v7839 = vmul.f32 %v7783, 0.2
    %v7840 = vmul.f32 %v7784, 0.2
    %v7841 = vmul.f32 %v7785, 0.2
    %v7842 = vmul.f32 %v7786, 0.2
    %v7843 = vmul.f32 %v7787, 0.2
    %v7844 = vmul.f32 %v7788, 0.2
    %v7845 = vmul.f32 %v7789, 0.2
    %v7846 = vmul.f32 %v7790, 0.2
    %v7847 = vmul.f32 %v7791, 0.2
    %v7848 = vmul.f32 %v7792, 0.2
    %v7849 = vmul.f32 %v7793, 0.2
    %v7850 = vmul.f32 %v7794, 0.2
    %v7851 = vmul.f32 %v7795, 0.2
    %v7852 = vmul.f32 %v7796, 0.2
    %v7853 = vmul.f32 %v7797, 0.2
    %v7854 = vmul.f32 %v7798, 0.2
    %v7855 = vmul.f32 %v7799, 0.2
    %v7856 = vmul.f32 %v7800, 0.2
    %v7857 = vmul.f32 %v7801, 0.2
    %v7858 = vmul.f32 %v7802, 0.2
    %v7859 = vmul.f32 %v7803, 0.2
    %v7860 = vmul.f32 %v7804, 0.2
    %v7861 = vmul.f32 %v7805, 0.2
    %v7862 = vmul.f32 %v7806, 0.2
    %v7863 = vmul.f32 %v7807, 0.2
    %v7864 = vmul.f32 %v7808, 0.2
    %v7865 = vmul.f32 %v7809, 0.2
    %v7866 = vmul.f32 %v7810, 0.2
    %v7867 = vmul.f32 %v7811, 0.2
    %v7868 = vmul.f32 %v7812, 0.2
    %v7869 = vmul.f32 %v7813, 0.2
    %v7870 = vmul.f32 %v7814, 0.2
    %v7871 = vmul.f32 %v7815, 0.2
    %v7872 = vmul.f32 %v7816, 0.2
    %v7873 = vmul.f32 %v7817, 0.2
    %v7874 = vmul.f32 %v7818, 0.2
    %v7875 = vmul.f32 %v7819, 0.2
    %v7876 = vmul.f32 %v7820, 0.2
    %v7877 = vmul.f32 %v7821, 0.2
    %v7878 = vmul.f32 %v7822, 0.2
    %v7879 = vmax.f32 %v7767, %v7823
    %v7880 = vmax.f32 %v7768, %v7824
    %v7881 = vmax.f32 %v7769, %v7825
    %v7882 = vmax.f32 %v7770, %v7826
    %v7883 = vmax.f32 %v7771, %v7827
    %v7884 = vmax.f32 %v7772, %v7828
    %v7885 = vmax.f32 %v7773, %v7829
    %v7886 = vmax.f32 %v7774, %v7830
    %v7887 = vmax.f32 %v7775, %v7831
    %v7888 = vmax.f32 %v7776, %v7832
    %v7889 = vmax.f32 %v7777, %v7833
    %v7890 = vmax.f32 %v7778, %v7834
    %v7891 = vmax.f32 %v7779, %v7835
    %v7892 = vmax.f32 %v7780, %v7836
    %v7893 = vmax.f32 %v7781, %v7837
    %v7894 = vmax.f32 %v7782, %v7838
    %v7895 = vmax.f32 %v7783, %v7839
    %v7896 = vmax.f32 %v7784, %v7840
    %v7897 = vmax.f32 %v7785, %v7841
    %v7898 = vmax.f32 %v7786, %v7842
    %v7899 = vmax.f32 %v7787, %v7843
    %v7900 = vmax.f32 %v7788, %v7844
    %v7901 = vmax.f32 %v7789, %v7845
    %v7902 = vmax.f32 %v7790, %v7846
    %v7903 = vmax.f32 %v7791, %v7847
    %v7904 = vmax.f32 %v7792, %v7848
    %v7905 = vmax.f32 %v7793, %v7849
    %v7906 = vmax.f32 %v7794, %v7850
    %v7907 = vmax.f32 %v7795, %v7851
    %v7908 = vmax.f32 %v7796, %v7852
    %v7909 = vmax.f32 %v7797, %v7853
    %v7910 = vmax.f32 %v7798, %v7854
    %v7911 = vmax.f32 %v7799, %v7855
    %v7912 = vmax.f32 %v7800, %v7856
    %v7913 = vmax.f32 %v7801, %v7857
    %v7914 = vmax.f32 %v7802, %v7858
    %v7915 = vmax.f32 %v7803, %v7859
    %v7916 = vmax.f32 %v7804, %v7860
    %v7917 = vmax.f32 %v7805, %v7861
    %v7918 = vmax.f32 %v7806, %v7862
    %v7919 = vmax.f32 %v7807, %v7863
    %v7920 = vmax.f32 %v7808, %v7864
    %v7921 = vmax.f32 %v7809, %v7865
    %v7922 = vmax.f32 %v7810, %v7866
    %v7923 = vmax.f32 %v7811, %v7867
    %v7924 = vmax.f32 %v7812, %v7868
    %v7925 = vmax.f32 %v7813, %v7869
    %v7926 = vmax.f32 %v7814, %v7870
    %v7927 = vmax.f32 %v7815, %v7871
    %v7928 = vmax.f32 %v7816, %v7872
    %v7929 = vmax.f32 %v7817, %v7873
    %v7930 = vmax.f32 %v7818, %v7874
    %v7931 = vmax.f32 %v7819, %v7875
    %v7932 = vmax.f32 %v7820, %v7876
    %v7933 = vmax.f32 %v7821, %v7877
    %v7934 = vmax.f32 %v7822, %v7878
    %v7935 = vpack.c.bf16 %v7880, %v7879
    %v7936 = vpack.c.bf16 %v7882, %v7881
    %v7937 = vpack.c.bf16 %v7884, %v7883
    %v7938 = vpack.c.bf16 %v7886, %v7885
    %v7939 = vpack.c.bf16 %v7888, %v7887
    %v7940 = vpack.c.bf16 %v7890, %v7889
    %v7941 = vpack.c.bf16 %v7892, %v7891
    %v7942 = vpack.c.bf16 %v7894, %v7893
    %v7943 = vpack.c.bf16 %v7896, %v7895
    %v7944 = vpack.c.bf16 %v7898, %v7897
    %v7945 = vpack.c.bf16 %v7900, %v7899
    %v7946 = vpack.c.bf16 %v7902, %v7901
    %v7947 = vpack.c.bf16 %v7904, %v7903
    %v7948 = vpack.c.bf16 %v7906, %v7905
    %v7949 = vpack.c.bf16 %v7908, %v7907
    %v7950 = vpack.c.bf16 %v7910, %v7909
    %v7951 = vpack.c.bf16 %v7912, %v7911
    %v7952 = vpack.c.bf16 %v7914, %v7913
    %v7953 = vpack.c.bf16 %v7916, %v7915
    %v7954 = vpack.c.bf16 %v7918, %v7917
    %v7955 = vpack.c.bf16 %v7920, %v7919
    %v7956 = vpack.c.bf16 %v7922, %v7921
    %v7957 = vpack.c.bf16 %v7924, %v7923
    %v7958 = vpack.c.bf16 %v7926, %v7925
    %v7959 = vpack.c.bf16 %v7928, %v7927
    %v7960 = vpack.c.bf16 %v7930, %v7929
    %v7961 = vpack.c.bf16 %v7932, %v7931
    %v7962 = vpack.c.bf16 %v7934, %v7933
    %v7967 = vunpack.c.l.b16 %v7935
    %v7968 = vunpack.c.h.b16 %v7935
    %v7969 = vunpack.c.l.b16 %v7936
    %v7970 = vunpack.c.h.b16 %v7936
    %v7971 = vunpack.c.l.b16 %v7937
    %v7972 = vunpack.c.h.b16 %v7937
    %v7973 = vunpack.c.l.b16 %v7938
    %v7974 = vunpack.c.h.b16 %v7938
    %v7975 = vpack.c.b16 %v7971, %v7967
    %v7976 = vpack.c.b16 %v7972, %v7968
    %v7977 = vpack.c.b16 %v7973, %v7969
    %v7978 = vpack.c.b16 %v7974, %v7970
    %v7987 = vunpack.c.l.b16 %v7939
    %v7988 = vunpack.c.h.b16 %v7939
    %v7989 = vunpack.c.l.b16 %v7940
    %v7990 = vunpack.c.h.b16 %v7940
    %v7991 = vunpack.c.l.b16 %v7941
    %v7992 = vunpack.c.h.b16 %v7941
    %v7993 = vunpack.c.l.b16 %v7942
    %v7994 = vunpack.c.h.b16 %v7942
    %v7995 = vpack.c.b16 %v7991, %v7987
    %v7996 = vpack.c.b16 %v7992, %v7988
    %v7997 = vpack.c.b16 %v7993, %v7989
    %v7998 = vpack.c.b16 %v7994, %v7990
    %v8007 = vunpack.c.l.b16 %v7943
    %v8008 = vunpack.c.h.b16 %v7943
    %v8009 = vunpack.c.l.b16 %v7944
    %v8010 = vunpack.c.h.b16 %v7944
    %v8011 = vunpack.c.l.b16 %v7945
    %v8012 = vunpack.c.h.b16 %v7945
    %v8013 = vunpack.c.l.b16 %v7946
    %v8014 = vunpack.c.h.b16 %v7946
    %v8015 = vpack.c.b16 %v8011, %v8007
    %v8016 = vpack.c.b16 %v8012, %v8008
    %v8017 = vpack.c.b16 %v8013, %v8009
    %v8018 = vpack.c.b16 %v8014, %v8010
    %v8027 = vunpack.c.l.b16 %v7947
    %v8028 = vunpack.c.h.b16 %v7947
    %v8029 = vunpack.c.l.b16 %v7948
    %v8030 = vunpack.c.h.b16 %v7948
    %v8031 = vunpack.c.l.b16 %v7949
    %v8032 = vunpack.c.h.b16 %v7949
    %v8033 = vunpack.c.l.b16 %v7950
    %v8034 = vunpack.c.h.b16 %v7950
    %v8035 = vpack.c.b16 %v8031, %v8027
    %v8036 = vpack.c.b16 %v8032, %v8028
    %v8037 = vpack.c.b16 %v8033, %v8029
    %v8038 = vpack.c.b16 %v8034, %v8030
    %v8047 = vunpack.c.l.b16 %v7951
    %v8048 = vunpack.c.h.b16 %v7951
    %v8049 = vunpack.c.l.b16 %v7952
    %v8050 = vunpack.c.h.b16 %v7952
    %v8051 = vunpack.c.l.b16 %v7953
    %v8052 = vunpack.c.h.b16 %v7953
    %v8053 = vunpack.c.l.b16 %v7954
    %v8054 = vunpack.c.h.b16 %v7954
    %v8055 = vpack.c.b16 %v8051, %v8047
    %v8056 = vpack.c.b16 %v8052, %v8048
    %v8057 = vpack.c.b16 %v8053, %v8049
    %v8058 = vpack.c.b16 %v8054, %v8050
    %v8067 = vunpack.c.l.b16 %v7955
    %v8068 = vunpack.c.h.b16 %v7955
    %v8069 = vunpack.c.l.b16 %v7956
    %v8070 = vunpack.c.h.b16 %v7956
    %v8071 = vunpack.c.l.b16 %v7957
    %v8072 = vunpack.c.h.b16 %v7957
    %v8073 = vunpack.c.l.b16 %v7958
    %v8074 = vunpack.c.h.b16 %v7958
    %v8075 = vpack.c.b16 %v8071, %v8067
    %v8076 = vpack.c.b16 %v8072, %v8068
    %v8077 = vpack.c.b16 %v8073, %v8069
    %v8078 = vpack.c.b16 %v8074, %v8070
    %v8087 = vunpack.c.l.b16 %v7959
    %v8088 = vunpack.c.h.b16 %v7959
    %v8089 = vunpack.c.l.b16 %v7960
    %v8090 = vunpack.c.h.b16 %v7960
    %v8091 = vunpack.c.l.b16 %v7961
    %v8092 = vunpack.c.h.b16 %v7961
    %v8093 = vunpack.c.l.b16 %v7962
    %v8094 = vunpack.c.h.b16 %v7962
    %v8095 = vpack.c.b16 %v8091, %v8087
    %v8096 = vpack.c.b16 %v8092, %v8088
    %v8097 = vpack.c.b16 %v8093, %v8089
    %v8098 = vpack.c.b16 %v8094, %v8090
    %v8103 = vld [vmem:[#allocation4] sm:$0xff]
    %v8104 = vld [vmem:[#allocation4 + $0x8] sm:$0xff]
    %v8105 = vld [vmem:[#allocation4 + $0x10] sm:$0xff]
    %v8106 = vld [vmem:[#allocation4 + $0x18] sm:$0xff]
    %v8107 = vld [vmem:[#allocation4 + $0x20] sm:$0xff]
    %v8108 = vld [vmem:[#allocation4 + $0x28] sm:$0xff]
    %v8109 = vld [vmem:[#allocation4 + $0x30] sm:$0xff]
    %v8110 = vld [vmem:[#allocation4 + $0x38] sm:$0xff]
    %v8111 = vld [vmem:[#allocation4 + $0x40] sm:$0xff]
    %v8112 = vld [vmem:[#allocation4 + $0x48] sm:$0xff]
    %v8113 = vld [vmem:[#allocation4 + $0x50] sm:$0xff]
    %v8114 = vld [vmem:[#allocation4 + $0x58] sm:$0xff]
    %v8115 = vld [vmem:[#allocation4 + $0x60] sm:$0xff]
    %v8116 = vld [vmem:[#allocation4 + $0x68] sm:$0xff]
    %v8117 = vld [vmem:[#allocation4 + $0x70] sm:$0xff]
    %v8118 = vld [vmem:[#allocation4 + $0x78] sm:$0xff]
    %v8119 = vld [vmem:[#allocation4 + $0x80] sm:$0xff]
    %v8120 = vld [vmem:[#allocation4 + $0x88] sm:$0xff]
    %v8121 = vld [vmem:[#allocation4 + $0x90] sm:$0xff]
    %v8122 = vld [vmem:[#allocation4 + $0x98] sm:$0xff]
    %v8123 = vld [vmem:[#allocation4 + $0xa0] sm:$0xff]
    %v8124 = vld [vmem:[#allocation4 + $0xa8] sm:$0xff]
    %v8125 = vld [vmem:[#allocation4 + $0xb0] sm:$0xff]
    %v8126 = vld [vmem:[#allocation4 + $0xb8] sm:$0xff]
    %v8127 = vld [vmem:[#allocation4 + $0xc0] sm:$0xff]
    %v8128 = vld [vmem:[#allocation4 + $0xc8] sm:$0xff]
    %v8129 = vld [vmem:[#allocation4 + $0xd0] sm:$0xff]
    %v8130 = vld [vmem:[#allocation4 + $0xd8] sm:$0xff]
    %v8131 = vld [vmem:[#allocation4 + $0xe0] sm:$0xff]
    %v8132 = vld [vmem:[#allocation4 + $0xe8] sm:$0xff]
    %v8133 = vld [vmem:[#allocation4 + $0xf0] sm:$0xff]
    %v8134 = vld [vmem:[#allocation4 + $0xf8] sm:$0xff]
    %v8135 = vld [vmem:[#allocation4 + $0x100] sm:$0xff]
    %v8136 = vld [vmem:[#allocation4 + $0x108] sm:$0xff]
    %v8137 = vld [vmem:[#allocation4 + $0x110] sm:$0xff]
    %v8138 = vld [vmem:[#allocation4 + $0x118] sm:$0xff]
    %v8139 = vld [vmem:[#allocation4 + $0x120] sm:$0xff]
    %v8140 = vld [vmem:[#allocation4 + $0x128] sm:$0xff]
    %v8141 = vld [vmem:[#allocation4 + $0x130] sm:$0xff]
    %v8142 = vld [vmem:[#allocation4 + $0x138] sm:$0xff]
    %v8143 = vld [vmem:[#allocation4 + $0x140] sm:$0xff]
    %v8144 = vld [vmem:[#allocation4 + $0x148] sm:$0xff]
    %v8145 = vld [vmem:[#allocation4 + $0x150] sm:$0xff]
    %v8146 = vld [vmem:[#allocation4 + $0x158] sm:$0xff]
    %v8147 = vld [vmem:[#allocation4 + $0x160] sm:$0xff]
    %v8148 = vld [vmem:[#allocation4 + $0x168] sm:$0xff]
    %v8149 = vld [vmem:[#allocation4 + $0x170] sm:$0xff]
    %v8150 = vld [vmem:[#allocation4 + $0x178] sm:$0xff]
    %v8151 = vld [vmem:[#allocation4 + $0x180] sm:$0xff]
    %v8152 = vld [vmem:[#allocation4 + $0x188] sm:$0xff]
    %v8153 = vld [vmem:[#allocation4 + $0x190] sm:$0xff]
    %v8154 = vld [vmem:[#allocation4 + $0x198] sm:$0xff]
    %v8155 = vld [vmem:[#allocation4 + $0x1a0] sm:$0xff]
    %v8156 = vld [vmem:[#allocation4 + $0x1a8] sm:$0xff]
    %v8157 = vld [vmem:[#allocation4 + $0x1b0] sm:$0xff]
    %v8158 = vld [vmem:[#allocation4 + $0x1b8] sm:$0xff]
    %v8159 = vld [vmem:[#allocation4 + $0x1c0] sm:$0xff]
    %v8160 = vld [vmem:[#allocation4 + $0x1c8] sm:$0xff]
    %v8161 = vld [vmem:[#allocation4 + $0x1d0] sm:$0xff]
    %v8162 = vld [vmem:[#allocation4 + $0x1d8] sm:$0xff]
    %v8163 = vld [vmem:[#allocation4 + $0x1e0] sm:$0xff]
    %v8164 = vld [vmem:[#allocation4 + $0x1e8] sm:$0xff]
    %v8165 = vld [vmem:[#allocation4 + $0x1f0] sm:$0xff]
    %v8166 = vld [vmem:[#allocation4 + $0x1f8] sm:$0xff]
    %v8167 = vld [vmem:[#allocation4 + $0x200] sm:$0xff]
    %v8168 = vld [vmem:[#allocation4 + $0x208] sm:$0xff]
    %v8169 = vld [vmem:[#allocation4 + $0x210] sm:$0xff]
    %v8170 = vld [vmem:[#allocation4 + $0x218] sm:$0xff]
    %v8171 = vld [vmem:[#allocation4 + $0x220] sm:$0xff]
    %v8172 = vld [vmem:[#allocation4 + $0x228] sm:$0xff]
    %v8173 = vld [vmem:[#allocation4 + $0x230] sm:$0xff]
    %v8174 = vld [vmem:[#allocation4 + $0x238] sm:$0xff]
    %v8175 = vld [vmem:[#allocation4 + $0x240] sm:$0xff]
    %v8176 = vld [vmem:[#allocation4 + $0x248] sm:$0xff]
    %v8177 = vld [vmem:[#allocation4 + $0x250] sm:$0xff]
    %v8178 = vld [vmem:[#allocation4 + $0x258] sm:$0xff]
    %v8179 = vld [vmem:[#allocation4 + $0x260] sm:$0xff]
    %v8180 = vld [vmem:[#allocation4 + $0x268] sm:$0xff]
    %v8181 = vld [vmem:[#allocation4 + $0x270] sm:$0xff]
    %v8182 = vld [vmem:[#allocation4 + $0x278] sm:$0xff]
    %v8183 = vld [vmem:[#allocation4 + $0x280] sm:$0xff]
    %v8184 = vld [vmem:[#allocation4 + $0x288] sm:$0xff]
    %v8185 = vld [vmem:[#allocation4 + $0x290] sm:$0xff]
    %v8186 = vld [vmem:[#allocation4 + $0x298] sm:$0xff]
    %v8187 = vld [vmem:[#allocation4 + $0x2a0] sm:$0xff]
    %v8188 = vld [vmem:[#allocation4 + $0x2a8] sm:$0xff]
    %v8189 = vld [vmem:[#allocation4 + $0x2b0] sm:$0xff]
    %v8190 = vld [vmem:[#allocation4 + $0x2b8] sm:$0xff]
    %v8191 = vld [vmem:[#allocation4 + $0x2c0] sm:$0xff]
    %v8192 = vld [vmem:[#allocation4 + $0x2c8] sm:$0xff]
    %v8193 = vld [vmem:[#allocation4 + $0x2d0] sm:$0xff]
    %v8194 = vld [vmem:[#allocation4 + $0x2d8] sm:$0xff]
    %v8195 = vld [vmem:[#allocation4 + $0x2e0] sm:$0xff]
    %v8196 = vld [vmem:[#allocation4 + $0x2e8] sm:$0xff]
    %v8197 = vld [vmem:[#allocation4 + $0x2f0] sm:$0xff]
    %v8198 = vld [vmem:[#allocation4 + $0x2f8] sm:$0xff]
    %v8199 = vld [vmem:[#allocation4 + $0x300] sm:$0xff]
    %v8200 = vld [vmem:[#allocation4 + $0x308] sm:$0xff]
    %v8201 = vld [vmem:[#allocation4 + $0x310] sm:$0xff]
    %v8202 = vld [vmem:[#allocation4 + $0x318] sm:$0xff]
    %v8203 = vld [vmem:[#allocation4 + $0x320] sm:$0xff]
    %v8204 = vld [vmem:[#allocation4 + $0x328] sm:$0xff]
    %v8205 = vld [vmem:[#allocation4 + $0x330] sm:$0xff]
    %v8206 = vld [vmem:[#allocation4 + $0x338] sm:$0xff]
    %v8207 = vld [vmem:[#allocation4 + $0x340] sm:$0xff]
    %v8208 = vld [vmem:[#allocation4 + $0x348] sm:$0xff]
    %v8209 = vld [vmem:[#allocation4 + $0x350] sm:$0xff]
    %v8210 = vld [vmem:[#allocation4 + $0x358] sm:$0xff]
    %v8211 = vld [vmem:[#allocation4 + $0x360] sm:$0xff]
    %v8212 = vld [vmem:[#allocation4 + $0x368] sm:$0xff]
    %v8213 = vld [vmem:[#allocation4 + $0x370] sm:$0xff]
    %v8214 = vld [vmem:[#allocation4 + $0x378] sm:$0xff]
    %v8215 = vld [vmem:[#allocation4 + $0x380] sm:$0xff]
    %v8216 = vld [vmem:[#allocation4 + $0x388] sm:$0xff]
    %v8217 = vld [vmem:[#allocation4 + $0x390] sm:$0xff]
    %v8218 = vld [vmem:[#allocation4 + $0x398] sm:$0xff]
    %v8219 = vld [vmem:[#allocation4 + $0x3a0] sm:$0xff]
    %v8220 = vld [vmem:[#allocation4 + $0x3a8] sm:$0xff]
    %v8221 = vld [vmem:[#allocation4 + $0x3b0] sm:$0xff]
    %v8222 = vld [vmem:[#allocation4 + $0x3b8] sm:$0xff]
    %v8223 = vld [vmem:[#allocation4 + $0x3c0] sm:$0xff]
    %v8224 = vld [vmem:[#allocation4 + $0x3c8] sm:$0xff]
    %v8225 = vld [vmem:[#allocation4 + $0x3d0] sm:$0xff]
    %v8226 = vld [vmem:[#allocation4 + $0x3d8] sm:$0xff]
    %v8227 = vld [vmem:[#allocation4 + $0x3e0] sm:$0xff]
    %v8228 = vld [vmem:[#allocation4 + $0x3e8] sm:$0xff]
    %v8229 = vld [vmem:[#allocation4 + $0x3f0] sm:$0xff]
    %v8230 = vld [vmem:[#allocation4 + $0x3f8] sm:$0xff]
    %v8231 = vld [vmem:[#allocation4 + $0x400] sm:$0xff]
    %v8232 = vld [vmem:[#allocation4 + $0x408] sm:$0xff]
    %v8233 = vld [vmem:[#allocation4 + $0x410] sm:$0xff]
    %v8234 = vld [vmem:[#allocation4 + $0x418] sm:$0xff]
    %v8235 = vld [vmem:[#allocation4 + $0x420] sm:$0xff]
    %v8236 = vld [vmem:[#allocation4 + $0x428] sm:$0xff]
    %v8237 = vld [vmem:[#allocation4 + $0x430] sm:$0xff]
    %v8238 = vld [vmem:[#allocation4 + $0x438] sm:$0xff]
    %v8239 = vld [vmem:[#allocation4 + $0x440] sm:$0xff]
    %v8240 = vld [vmem:[#allocation4 + $0x448] sm:$0xff]
    %v8241 = vld [vmem:[#allocation4 + $0x450] sm:$0xff]
    %v8242 = vld [vmem:[#allocation4 + $0x458] sm:$0xff]
    %v8243 = vld [vmem:[#allocation4 + $0x460] sm:$0xff]
    %v8244 = vld [vmem:[#allocation4 + $0x468] sm:$0xff]
    %v8245 = vld [vmem:[#allocation4 + $0x470] sm:$0xff]
    %v8246 = vld [vmem:[#allocation4 + $0x478] sm:$0xff]
    %v8247 = vld [vmem:[#allocation4 + $0x480] sm:$0xff]
    %v8248 = vld [vmem:[#allocation4 + $0x488] sm:$0xff]
    %v8249 = vld [vmem:[#allocation4 + $0x490] sm:$0xff]
    %v8250 = vld [vmem:[#allocation4 + $0x498] sm:$0xff]
    %v8251 = vld [vmem:[#allocation4 + $0x4a0] sm:$0xff]
    %v8252 = vld [vmem:[#allocation4 + $0x4a8] sm:$0xff]
    %v8253 = vld [vmem:[#allocation4 + $0x4b0] sm:$0xff]
    %v8254 = vld [vmem:[#allocation4 + $0x4b8] sm:$0xff]
    %v8255 = vld [vmem:[#allocation4 + $0x4c0] sm:$0xff]
    %v8256 = vld [vmem:[#allocation4 + $0x4c8] sm:$0xff]
    %v8257 = vld [vmem:[#allocation4 + $0x4d0] sm:$0xff]
    %v8258 = vld [vmem:[#allocation4 + $0x4d8] sm:$0xff]
    %v8259 = vld [vmem:[#allocation4 + $0x4e0] sm:$0xff]
    %v8260 = vld [vmem:[#allocation4 + $0x4e8] sm:$0xff]
    %v8261 = vld [vmem:[#allocation4 + $0x4f0] sm:$0xff]
    %v8262 = vld [vmem:[#allocation4 + $0x4f8] sm:$0xff]
    %v8263 = vld [vmem:[#allocation4 + $0x500] sm:$0xff]
    %v8264 = vld [vmem:[#allocation4 + $0x508] sm:$0xff]
    %v8265 = vld [vmem:[#allocation4 + $0x510] sm:$0xff]
    %v8266 = vld [vmem:[#allocation4 + $0x518] sm:$0xff]
    %v8267 = vld [vmem:[#allocation4 + $0x520] sm:$0xff]
    %v8268 = vld [vmem:[#allocation4 + $0x528] sm:$0xff]
    %v8269 = vld [vmem:[#allocation4 + $0x530] sm:$0xff]
    %v8270 = vld [vmem:[#allocation4 + $0x538] sm:$0xff]
    %v8271 = vld [vmem:[#allocation4 + $0x540] sm:$0xff]
    %v8272 = vld [vmem:[#allocation4 + $0x548] sm:$0xff]
    %v8273 = vld [vmem:[#allocation4 + $0x550] sm:$0xff]
    %v8274 = vld [vmem:[#allocation4 + $0x558] sm:$0xff]
    %v8275 = vld [vmem:[#allocation4 + $0x560] sm:$0xff]
    %v8276 = vld [vmem:[#allocation4 + $0x568] sm:$0xff]
    %v8277 = vld [vmem:[#allocation4 + $0x570] sm:$0xff]
    %v8278 = vld [vmem:[#allocation4 + $0x578] sm:$0xff]
    %v8279 = vld [vmem:[#allocation4 + $0x580] sm:$0xff]
    %v8280 = vld [vmem:[#allocation4 + $0x588] sm:$0xff]
    %v8281 = vld [vmem:[#allocation4 + $0x590] sm:$0xff]
    %v8282 = vld [vmem:[#allocation4 + $0x598] sm:$0xff]
    %v8283 = vld [vmem:[#allocation4 + $0x5a0] sm:$0xff]
    %v8284 = vld [vmem:[#allocation4 + $0x5a8] sm:$0xff]
    %v8285 = vld [vmem:[#allocation4 + $0x5b0] sm:$0xff]
    %v8286 = vld [vmem:[#allocation4 + $0x5b8] sm:$0xff]
    %v8287 = vld [vmem:[#allocation4 + $0x5c0] sm:$0xff]
    %v8288 = vld [vmem:[#allocation4 + $0x5c8] sm:$0xff]
    %v8289 = vld [vmem:[#allocation4 + $0x5d0] sm:$0xff]
    %v8290 = vld [vmem:[#allocation4 + $0x5d8] sm:$0xff]
    %v8291 = vld [vmem:[#allocation4 + $0x5e0] sm:$0xff]
    %v8292 = vld [vmem:[#allocation4 + $0x5e8] sm:$0xff]
    %v8293 = vld [vmem:[#allocation4 + $0x5f0] sm:$0xff]
    %v8294 = vld [vmem:[#allocation4 + $0x5f8] sm:$0xff]
    %v8295 = vld [vmem:[#allocation4 + $0x600] sm:$0xff]
    %v8296 = vld [vmem:[#allocation4 + $0x608] sm:$0xff]
    %v8297 = vld [vmem:[#allocation4 + $0x610] sm:$0xff]
    %v8298 = vld [vmem:[#allocation4 + $0x618] sm:$0xff]
    %v8299 = vld [vmem:[#allocation4 + $0x620] sm:$0xff]
    %v8300 = vld [vmem:[#allocation4 + $0x628] sm:$0xff]
    %v8301 = vld [vmem:[#allocation4 + $0x630] sm:$0xff]
    %v8302 = vld [vmem:[#allocation4 + $0x638] sm:$0xff]
    %v8303 = vld [vmem:[#allocation4 + $0x640] sm:$0xff]
    %v8304 = vld [vmem:[#allocation4 + $0x648] sm:$0xff]
    %v8305 = vld [vmem:[#allocation4 + $0x650] sm:$0xff]
    %v8306 = vld [vmem:[#allocation4 + $0x658] sm:$0xff]
    %v8307 = vld [vmem:[#allocation4 + $0x660] sm:$0xff]
    %v8308 = vld [vmem:[#allocation4 + $0x668] sm:$0xff]
    %v8309 = vld [vmem:[#allocation4 + $0x670] sm:$0xff]
    %v8310 = vld [vmem:[#allocation4 + $0x678] sm:$0xff]
    %v8311 = vld [vmem:[#allocation4 + $0x680] sm:$0xff]
    %v8312 = vld [vmem:[#allocation4 + $0x688] sm:$0xff]
    %v8313 = vld [vmem:[#allocation4 + $0x690] sm:$0xff]
    %v8314 = vld [vmem:[#allocation4 + $0x698] sm:$0xff]
    %v8315 = vld [vmem:[#allocation4 + $0x6a0] sm:$0xff]
    %v8316 = vld [vmem:[#allocation4 + $0x6a8] sm:$0xff]
    %v8317 = vld [vmem:[#allocation4 + $0x6b0] sm:$0xff]
    %v8318 = vld [vmem:[#allocation4 + $0x6b8] sm:$0xff]
    %v8319 = vld [vmem:[#allocation4 + $0x6c0] sm:$0xff]
    %v8320 = vld [vmem:[#allocation4 + $0x6c8] sm:$0xff]
    %v8321 = vld [vmem:[#allocation4 + $0x6d0] sm:$0xff]
    %v8322 = vld [vmem:[#allocation4 + $0x6d8] sm:$0xff]
    %v8323 = vld [vmem:[#allocation4 + $0x6e0] sm:$0xff]
    %v8324 = vld [vmem:[#allocation4 + $0x6e8] sm:$0xff]
    %v8325 = vld [vmem:[#allocation4 + $0x6f0] sm:$0xff]
    %v8326 = vld [vmem:[#allocation4 + $0x6f8] sm:$0xff]
    %v8327 = vld [vmem:[#allocation4 + $0x700] sm:$0xff]
    %v8328 = vld [vmem:[#allocation4 + $0x708] sm:$0xff]
    %v8329 = vld [vmem:[#allocation4 + $0x710] sm:$0xff]
    %v8330 = vld [vmem:[#allocation4 + $0x718] sm:$0xff]
    %v8331 = vld [vmem:[#allocation4 + $0x720] sm:$0xff]
    %v8332 = vld [vmem:[#allocation4 + $0x728] sm:$0xff]
    %v8333 = vld [vmem:[#allocation4 + $0x730] sm:$0xff]
    %v8334 = vld [vmem:[#allocation4 + $0x738] sm:$0xff]
    %v8335 = vld [vmem:[#allocation4 + $0x740] sm:$0xff]
    %v8336 = vld [vmem:[#allocation4 + $0x748] sm:$0xff]
    %v8337 = vld [vmem:[#allocation4 + $0x750] sm:$0xff]
    %v8338 = vld [vmem:[#allocation4 + $0x758] sm:$0xff]
    %v8339 = vld [vmem:[#allocation4 + $0x760] sm:$0xff]
    %v8340 = vld [vmem:[#allocation4 + $0x768] sm:$0xff]
    %v8341 = vld [vmem:[#allocation4 + $0x770] sm:$0xff]
    %v8342 = vld [vmem:[#allocation4 + $0x778] sm:$0xff]
    %v8343 = vld [vmem:[#allocation4 + $0x780] sm:$0xff]
    %v8344 = vld [vmem:[#allocation4 + $0x788] sm:$0xff]
    %v8345 = vld [vmem:[#allocation4 + $0x790] sm:$0xff]
    %v8346 = vld [vmem:[#allocation4 + $0x798] sm:$0xff]
    %v8347 = vld [vmem:[#allocation4 + $0x7a0] sm:$0xff]
    %v8348 = vld [vmem:[#allocation4 + $0x7a8] sm:$0xff]
    %v8349 = vld [vmem:[#allocation4 + $0x7b0] sm:$0xff]
    %v8350 = vld [vmem:[#allocation4 + $0x7b8] sm:$0xff]
    %v8351 = vld [vmem:[#allocation4 + $0x7c0] sm:$0xff]
    %v8352 = vld [vmem:[#allocation4 + $0x7c8] sm:$0xff]
    %v8353 = vld [vmem:[#allocation4 + $0x7d0] sm:$0xff]
    %v8354 = vld [vmem:[#allocation4 + $0x7d8] sm:$0xff]
    %v8355 = vld [vmem:[#allocation4 + $0x7e0] sm:$0xff]
    %v8356 = vld [vmem:[#allocation4 + $0x7e8] sm:$0xff]
    %v8357 = vld [vmem:[#allocation4 + $0x7f0] sm:$0xff]
    %v8358 = vld [vmem:[#allocation4 + $0x7f8] sm:$0xff]
    %v8359 = vld [vmem:[#allocation4 + $0x800] sm:$0xff]
    %v8360 = vld [vmem:[#allocation4 + $0x808] sm:$0xff]
    %v8361 = vld [vmem:[#allocation4 + $0x810] sm:$0xff]
    %v8362 = vld [vmem:[#allocation4 + $0x818] sm:$0xff]
    %v8363 = vld [vmem:[#allocation4 + $0x820] sm:$0xff]
    %v8364 = vld [vmem:[#allocation4 + $0x828] sm:$0xff]
    %v8365 = vld [vmem:[#allocation4 + $0x830] sm:$0xff]
    %v8366 = vld [vmem:[#allocation4 + $0x838] sm:$0xff]
    %v8367 = vld [vmem:[#allocation4 + $0x840] sm:$0xff]
    %v8368 = vld [vmem:[#allocation4 + $0x848] sm:$0xff]
    %v8369 = vld [vmem:[#allocation4 + $0x850] sm:$0xff]
    %v8370 = vld [vmem:[#allocation4 + $0x858] sm:$0xff]
    %v8371 = vld [vmem:[#allocation4 + $0x860] sm:$0xff]
    %v8372 = vld [vmem:[#allocation4 + $0x868] sm:$0xff]
    %v8373 = vld [vmem:[#allocation4 + $0x870] sm:$0xff]
    %v8374 = vld [vmem:[#allocation4 + $0x878] sm:$0xff]
    %v8375 = vld [vmem:[#allocation4 + $0x880] sm:$0xff]
    %v8376 = vld [vmem:[#allocation4 + $0x888] sm:$0xff]
    %v8377 = vld [vmem:[#allocation4 + $0x890] sm:$0xff]
    %v8378 = vld [vmem:[#allocation4 + $0x898] sm:$0xff]
    %v8379 = vld [vmem:[#allocation4 + $0x8a0] sm:$0xff]
    %v8380 = vld [vmem:[#allocation4 + $0x8a8] sm:$0xff]
    %v8381 = vld [vmem:[#allocation4 + $0x8b0] sm:$0xff]
    %v8382 = vld [vmem:[#allocation4 + $0x8b8] sm:$0xff]
    %v8383 = vld [vmem:[#allocation4 + $0x8c0] sm:$0xff]
    %v8384 = vld [vmem:[#allocation4 + $0x8c8] sm:$0xff]
    %v8385 = vld [vmem:[#allocation4 + $0x8d0] sm:$0xff]
    %v8386 = vld [vmem:[#allocation4 + $0x8d8] sm:$0xff]
    %v8387 = vld [vmem:[#allocation4 + $0x8e0] sm:$0xff]
    %v8388 = vld [vmem:[#allocation4 + $0x8e8] sm:$0xff]
    %v8389 = vld [vmem:[#allocation4 + $0x8f0] sm:$0xff]
    %v8390 = vld [vmem:[#allocation4 + $0x8f8] sm:$0xff]
    %v8391 = vld [vmem:[#allocation4 + $0x900] sm:$0xff]
    %v8392 = vld [vmem:[#allocation4 + $0x908] sm:$0xff]
    %v8393 = vld [vmem:[#allocation4 + $0x910] sm:$0xff]
    %v8394 = vld [vmem:[#allocation4 + $0x918] sm:$0xff]
    %v8395 = vld [vmem:[#allocation4 + $0x920] sm:$0xff]
    %v8396 = vld [vmem:[#allocation4 + $0x928] sm:$0xff]
    %v8397 = vld [vmem:[#allocation4 + $0x930] sm:$0xff]
    %v8398 = vld [vmem:[#allocation4 + $0x938] sm:$0xff]
    %v8399 = vld [vmem:[#allocation4 + $0x940] sm:$0xff]
    %v8400 = vld [vmem:[#allocation4 + $0x948] sm:$0xff]
    %v8401 = vld [vmem:[#allocation4 + $0x950] sm:$0xff]
    %v8402 = vld [vmem:[#allocation4 + $0x958] sm:$0xff]
    %v8403 = vld [vmem:[#allocation4 + $0x960] sm:$0xff]
    %v8404 = vld [vmem:[#allocation4 + $0x968] sm:$0xff]
    %v8405 = vld [vmem:[#allocation4 + $0x970] sm:$0xff]
    %v8406 = vld [vmem:[#allocation4 + $0x978] sm:$0xff]
    %v8407 = vld [vmem:[#allocation4 + $0x980] sm:$0xff]
    %v8408 = vld [vmem:[#allocation4 + $0x988] sm:$0xff]
    %v8409 = vld [vmem:[#allocation4 + $0x990] sm:$0xff]
    %v8410 = vld [vmem:[#allocation4 + $0x998] sm:$0xff]
    %v8411 = vld [vmem:[#allocation4 + $0x9a0] sm:$0xff]
    %v8412 = vld [vmem:[#allocation4 + $0x9a8] sm:$0xff]
    %v8413 = vld [vmem:[#allocation4 + $0x9b0] sm:$0xff]
    %v8414 = vld [vmem:[#allocation4 + $0x9b8] sm:$0xff]
    %v8415 = vld [vmem:[#allocation4 + $0x9c0] sm:$0xff]
    %v8416 = vld [vmem:[#allocation4 + $0x9c8] sm:$0xff]
    %v8417 = vld [vmem:[#allocation4 + $0x9d0] sm:$0xff]
    %v8418 = vld [vmem:[#allocation4 + $0x9d8] sm:$0xff]
    %v8419 = vld [vmem:[#allocation4 + $0x9e0] sm:$0xff]
    %v8420 = vld [vmem:[#allocation4 + $0x9e8] sm:$0xff]
    %v8421 = vld [vmem:[#allocation4 + $0x9f0] sm:$0xff]
    %v8422 = vld [vmem:[#allocation4 + $0x9f8] sm:$0xff]
    %v8423 = vld [vmem:[#allocation4 + $0xa00] sm:$0xff]
    %v8424 = vld [vmem:[#allocation4 + $0xa08] sm:$0xff]
    %v8425 = vld [vmem:[#allocation4 + $0xa10] sm:$0xff]
    %v8426 = vld [vmem:[#allocation4 + $0xa18] sm:$0xff]
    %v8427 = vld [vmem:[#allocation4 + $0xa20] sm:$0xff]
    %v8428 = vld [vmem:[#allocation4 + $0xa28] sm:$0xff]
    %v8429 = vld [vmem:[#allocation4 + $0xa30] sm:$0xff]
    %v8430 = vld [vmem:[#allocation4 + $0xa38] sm:$0xff]
    %v8431 = vld [vmem:[#allocation4 + $0xa40] sm:$0xff]
    %v8432 = vld [vmem:[#allocation4 + $0xa48] sm:$0xff]
    %v8433 = vld [vmem:[#allocation4 + $0xa50] sm:$0xff]
    %v8434 = vld [vmem:[#allocation4 + $0xa58] sm:$0xff]
    %v8435 = vld [vmem:[#allocation4 + $0xa60] sm:$0xff]
    %v8436 = vld [vmem:[#allocation4 + $0xa68] sm:$0xff]
    %v8437 = vld [vmem:[#allocation4 + $0xa70] sm:$0xff]
    %v8438 = vld [vmem:[#allocation4 + $0xa78] sm:$0xff]
    %v8439 = vld [vmem:[#allocation4 + $0xa80] sm:$0xff]
    %v8440 = vld [vmem:[#allocation4 + $0xa88] sm:$0xff]
    %v8441 = vld [vmem:[#allocation4 + $0xa90] sm:$0xff]
    %v8442 = vld [vmem:[#allocation4 + $0xa98] sm:$0xff]
    %v8443 = vld [vmem:[#allocation4 + $0xaa0] sm:$0xff]
    %v8444 = vld [vmem:[#allocation4 + $0xaa8] sm:$0xff]
    %v8445 = vld [vmem:[#allocation4 + $0xab0] sm:$0xff]
    %v8446 = vld [vmem:[#allocation4 + $0xab8] sm:$0xff]
    %v8447 = vld [vmem:[#allocation4 + $0xac0] sm:$0xff]
    %v8448 = vld [vmem:[#allocation4 + $0xac8] sm:$0xff]
    %v8449 = vld [vmem:[#allocation4 + $0xad0] sm:$0xff]
    %v8450 = vld [vmem:[#allocation4 + $0xad8] sm:$0xff]
    %v8451 = vld [vmem:[#allocation4 + $0xae0] sm:$0xff]
    %v8452 = vld [vmem:[#allocation4 + $0xae8] sm:$0xff]
    %v8453 = vld [vmem:[#allocation4 + $0xaf0] sm:$0xff]
    %v8454 = vld [vmem:[#allocation4 + $0xaf8] sm:$0xff]
    %v8455 = vld [vmem:[#allocation4 + $0xb00] sm:$0xff]
    %v8456 = vld [vmem:[#allocation4 + $0xb08] sm:$0xff]
    %v8457 = vld [vmem:[#allocation4 + $0xb10] sm:$0xff]
    %v8458 = vld [vmem:[#allocation4 + $0xb18] sm:$0xff]
    %v8459 = vld [vmem:[#allocation4 + $0xb20] sm:$0xff]
    %v8460 = vld [vmem:[#allocation4 + $0xb28] sm:$0xff]
    %v8461 = vld [vmem:[#allocation4 + $0xb30] sm:$0xff]
    %v8462 = vld [vmem:[#allocation4 + $0xb38] sm:$0xff]
    %v8463 = vld [vmem:[#allocation4 + $0xb40] sm:$0xff]
    %v8464 = vld [vmem:[#allocation4 + $0xb48] sm:$0xff]
    %v8465 = vld [vmem:[#allocation4 + $0xb50] sm:$0xff]
    %v8466 = vld [vmem:[#allocation4 + $0xb58] sm:$0xff]
    %v8467 = vld [vmem:[#allocation4 + $0xb60] sm:$0xff]
    %v8468 = vld [vmem:[#allocation4 + $0xb68] sm:$0xff]
    %v8469 = vld [vmem:[#allocation4 + $0xb70] sm:$0xff]
    %v8470 = vld [vmem:[#allocation4 + $0xb78] sm:$0xff]
    %v8471 = vld [vmem:[#allocation4 + $0xb80] sm:$0xff]
    %v8472 = vld [vmem:[#allocation4 + $0xb88] sm:$0xff]
    %v8473 = vld [vmem:[#allocation4 + $0xb90] sm:$0xff]
    %v8474 = vld [vmem:[#allocation4 + $0xb98] sm:$0xff]
    %v8475 = vld [vmem:[#allocation4 + $0xba0] sm:$0xff]
    %v8476 = vld [vmem:[#allocation4 + $0xba8] sm:$0xff]
    %v8477 = vld [vmem:[#allocation4 + $0xbb0] sm:$0xff]
    %v8478 = vld [vmem:[#allocation4 + $0xbb8] sm:$0xff]
    %v8479 = vld [vmem:[#allocation4 + $0xbc0] sm:$0xff]
    %v8480 = vld [vmem:[#allocation4 + $0xbc8] sm:$0xff]
    %v8481 = vld [vmem:[#allocation4 + $0xbd0] sm:$0xff]
    %v8482 = vld [vmem:[#allocation4 + $0xbd8] sm:$0xff]
    %v8483 = vld [vmem:[#allocation4 + $0xbe0] sm:$0xff]
    %v8484 = vld [vmem:[#allocation4 + $0xbe8] sm:$0xff]
    %v8485 = vld [vmem:[#allocation4 + $0xbf0] sm:$0xff]
    %v8486 = vld [vmem:[#allocation4 + $0xbf8] sm:$0xff]
    %v8871 = vunpack.c.l.b16 %v8103
    %v8872 = vunpack.c.h.b16 %v8103
    %v8873 = vunpack.c.l.b16 %v8104
    %v8874 = vunpack.c.h.b16 %v8104
    %v8875 = vunpack.c.l.b16 %v8105
    %v8876 = vunpack.c.h.b16 %v8105
    %v8877 = vunpack.c.l.b16 %v8106
    %v8878 = vunpack.c.h.b16 %v8106
    %v8879 = vunpack.c.l.b16 %v8107
    %v8880 = vunpack.c.h.b16 %v8107
    %v8881 = vunpack.c.l.b16 %v8108
    %v8882 = vunpack.c.h.b16 %v8108
    %v8883 = vunpack.c.l.b16 %v8109
    %v8884 = vunpack.c.h.b16 %v8109
    %v8885 = vunpack.c.l.b16 %v8110
    %v8886 = vunpack.c.h.b16 %v8110
    %v8887 = vunpack.c.l.b16 %v8111
    %v8888 = vunpack.c.h.b16 %v8111
    %v8889 = vunpack.c.l.b16 %v8112
    %v8890 = vunpack.c.h.b16 %v8112
    %v8891 = vunpack.c.l.b16 %v8113
    %v8892 = vunpack.c.h.b16 %v8113
    %v8893 = vunpack.c.l.b16 %v8114
    %v8894 = vunpack.c.h.b16 %v8114
    %v8895 = vunpack.c.l.b16 %v8115
    %v8896 = vunpack.c.h.b16 %v8115
    %v8897 = vunpack.c.l.b16 %v8116
    %v8898 = vunpack.c.h.b16 %v8116
    %v8899 = vunpack.c.l.b16 %v8117
    %v8900 = vunpack.c.h.b16 %v8117
    %v8901 = vunpack.c.l.b16 %v8118
    %v8902 = vunpack.c.h.b16 %v8118
    %v8903 = vunpack.c.l.b16 %v8119
    %v8904 = vunpack.c.h.b16 %v8119
    %v8905 = vunpack.c.l.b16 %v8120
    %v8906 = vunpack.c.h.b16 %v8120
    %v8907 = vunpack.c.l.b16 %v8121
    %v8908 = vunpack.c.h.b16 %v8121
    %v8909 = vunpack.c.l.b16 %v8122
    %v8910 = vunpack.c.h.b16 %v8122
    %v8911 = vunpack.c.l.b16 %v8123
    %v8912 = vunpack.c.h.b16 %v8123
    %v8913 = vunpack.c.l.b16 %v8124
    %v8914 = vunpack.c.h.b16 %v8124
    %v8915 = vunpack.c.l.b16 %v8125
    %v8916 = vunpack.c.h.b16 %v8125
    %v8917 = vunpack.c.l.b16 %v8126
    %v8918 = vunpack.c.h.b16 %v8126
    %v8919 = vunpack.c.l.b16 %v8127
    %v8920 = vunpack.c.h.b16 %v8127
    %v8921 = vunpack.c.l.b16 %v8128
    %v8922 = vunpack.c.h.b16 %v8128
    %v8923 = vunpack.c.l.b16 %v8129
    %v8924 = vunpack.c.h.b16 %v8129
    %v8925 = vunpack.c.l.b16 %v8130
    %v8926 = vunpack.c.h.b16 %v8130
    %v8927 = vunpack.c.l.b16 %v8131
    %v8928 = vunpack.c.h.b16 %v8131
    %v8929 = vunpack.c.l.b16 %v8132
    %v8930 = vunpack.c.h.b16 %v8132
    %v8931 = vunpack.c.l.b16 %v8133
    %v8932 = vunpack.c.h.b16 %v8133
    %v8933 = vunpack.c.l.b16 %v8134
    %v8934 = vunpack.c.h.b16 %v8134
    %v8935 = vunpack.c.l.b16 %v8135
    %v8936 = vunpack.c.h.b16 %v8135
    %v8937 = vunpack.c.l.b16 %v8136
    %v8938 = vunpack.c.h.b16 %v8136
    %v8939 = vunpack.c.l.b16 %v8137
    %v8940 = vunpack.c.h.b16 %v8137
    %v8941 = vunpack.c.l.b16 %v8138
    %v8942 = vunpack.c.h.b16 %v8138
    %v8943 = vunpack.c.l.b16 %v8139
    %v8944 = vunpack.c.h.b16 %v8139
    %v8945 = vunpack.c.l.b16 %v8140
    %v8946 = vunpack.c.h.b16 %v8140
    %v8947 = vunpack.c.l.b16 %v8141
    %v8948 = vunpack.c.h.b16 %v8141
    %v8949 = vunpack.c.l.b16 %v8142
    %v8950 = vunpack.c.h.b16 %v8142
    %v8951 = vunpack.c.l.b16 %v8143
    %v8952 = vunpack.c.h.b16 %v8143
    %v8953 = vunpack.c.l.b16 %v8144
    %v8954 = vunpack.c.h.b16 %v8144
    %v8955 = vunpack.c.l.b16 %v8145
    %v8956 = vunpack.c.h.b16 %v8145
    %v8957 = vunpack.c.l.b16 %v8146
    %v8958 = vunpack.c.h.b16 %v8146
    %v8959 = vunpack.c.l.b16 %v8147
    %v8960 = vunpack.c.h.b16 %v8147
    %v8961 = vunpack.c.l.b16 %v8148
    %v8962 = vunpack.c.h.b16 %v8148
    %v8963 = vunpack.c.l.b16 %v8149
    %v8964 = vunpack.c.h.b16 %v8149
    %v8965 = vunpack.c.l.b16 %v8150
    %v8966 = vunpack.c.h.b16 %v8150
    %v8967 = vunpack.c.l.b16 %v8151
    %v8968 = vunpack.c.h.b16 %v8151
    %v8969 = vunpack.c.l.b16 %v8152
    %v8970 = vunpack.c.h.b16 %v8152
    %v8971 = vunpack.c.l.b16 %v8153
    %v8972 = vunpack.c.h.b16 %v8153
    %v8973 = vunpack.c.l.b16 %v8154
    %v8974 = vunpack.c.h.b16 %v8154
    %v8975 = vunpack.c.l.b16 %v8155
    %v8976 = vunpack.c.h.b16 %v8155
    %v8977 = vunpack.c.l.b16 %v8156
    %v8978 = vunpack.c.h.b16 %v8156
    %v8979 = vunpack.c.l.b16 %v8157
    %v8980 = vunpack.c.h.b16 %v8157
    %v8981 = vunpack.c.l.b16 %v8158
    %v8982 = vunpack.c.h.b16 %v8158
    %v8983 = vunpack.c.l.b16 %v8159
    %v8984 = vunpack.c.h.b16 %v8159
    %v8985 = vunpack.c.l.b16 %v8160
    %v8986 = vunpack.c.h.b16 %v8160
    %v8987 = vunpack.c.l.b16 %v8161
    %v8988 = vunpack.c.h.b16 %v8161
    %v8989 = vunpack.c.l.b16 %v8162
    %v8990 = vunpack.c.h.b16 %v8162
    %v8991 = vunpack.c.l.b16 %v8163
    %v8992 = vunpack.c.h.b16 %v8163
    %v8993 = vunpack.c.l.b16 %v8164
    %v8994 = vunpack.c.h.b16 %v8164
    %v8995 = vunpack.c.l.b16 %v8165
    %v8996 = vunpack.c.h.b16 %v8165
    %v8997 = vunpack.c.l.b16 %v8166
    %v8998 = vunpack.c.h.b16 %v8166
    %v8999 = vunpack.c.l.b16 %v8167
    %v9000 = vunpack.c.h.b16 %v8167
    %v9001 = vunpack.c.l.b16 %v8168
    %v9002 = vunpack.c.h.b16 %v8168
    %v9003 = vunpack.c.l.b16 %v8169
    %v9004 = vunpack.c.h.b16 %v8169
    %v9005 = vunpack.c.l.b16 %v8170
    %v9006 = vunpack.c.h.b16 %v8170
    %v9007 = vunpack.c.l.b16 %v8171
    %v9008 = vunpack.c.h.b16 %v8171
    %v9009 = vunpack.c.l.b16 %v8172
    %v9010 = vunpack.c.h.b16 %v8172
    %v9011 = vunpack.c.l.b16 %v8173
    %v9012 = vunpack.c.h.b16 %v8173
    %v9013 = vunpack.c.l.b16 %v8174
    %v9014 = vunpack.c.h.b16 %v8174
    %v9015 = vunpack.c.l.b16 %v8175
    %v9016 = vunpack.c.h.b16 %v8175
    %v9017 = vunpack.c.l.b16 %v8176
    %v9018 = vunpack.c.h.b16 %v8176
    %v9019 = vunpack.c.l.b16 %v8177
    %v9020 = vunpack.c.h.b16 %v8177
    %v9021 = vunpack.c.l.b16 %v8178
    %v9022 = vunpack.c.h.b16 %v8178
    %v9023 = vunpack.c.l.b16 %v8179
    %v9024 = vunpack.c.h.b16 %v8179
    %v9025 = vunpack.c.l.b16 %v8180
    %v9026 = vunpack.c.h.b16 %v8180
    %v9027 = vunpack.c.l.b16 %v8181
    %v9028 = vunpack.c.h.b16 %v8181
    %v9029 = vunpack.c.l.b16 %v8182
    %v9030 = vunpack.c.h.b16 %v8182
    %v9031 = vunpack.c.l.b16 %v8183
    %v9032 = vunpack.c.h.b16 %v8183
    %v9033 = vunpack.c.l.b16 %v8184
    %v9034 = vunpack.c.h.b16 %v8184
    %v9035 = vunpack.c.l.b16 %v8185
    %v9036 = vunpack.c.h.b16 %v8185
    %v9037 = vunpack.c.l.b16 %v8186
    %v9038 = vunpack.c.h.b16 %v8186
    %v9039 = vunpack.c.l.b16 %v8187
    %v9040 = vunpack.c.h.b16 %v8187
    %v9041 = vunpack.c.l.b16 %v8188
    %v9042 = vunpack.c.h.b16 %v8188
    %v9043 = vunpack.c.l.b16 %v8189
    %v9044 = vunpack.c.h.b16 %v8189
    %v9045 = vunpack.c.l.b16 %v8190
    %v9046 = vunpack.c.h.b16 %v8190
    %v9047 = vunpack.c.l.b16 %v8191
    %v9048 = vunpack.c.h.b16 %v8191
    %v9049 = vunpack.c.l.b16 %v8192
    %v9050 = vunpack.c.h.b16 %v8192
    %v9051 = vunpack.c.l.b16 %v8193
    %v9052 = vunpack.c.h.b16 %v8193
    %v9053 = vunpack.c.l.b16 %v8194
    %v9054 = vunpack.c.h.b16 %v8194
    %v9055 = vunpack.c.l.b16 %v8195
    %v9056 = vunpack.c.h.b16 %v8195
    %v9057 = vunpack.c.l.b16 %v8196
    %v9058 = vunpack.c.h.b16 %v8196
    %v9059 = vunpack.c.l.b16 %v8197
    %v9060 = vunpack.c.h.b16 %v8197
    %v9061 = vunpack.c.l.b16 %v8198
    %v9062 = vunpack.c.h.b16 %v8198
    %v9063 = vunpack.c.l.b16 %v8199
    %v9064 = vunpack.c.h.b16 %v8199
    %v9065 = vunpack.c.l.b16 %v8200
    %v9066 = vunpack.c.h.b16 %v8200
    %v9067 = vunpack.c.l.b16 %v8201
    %v9068 = vunpack.c.h.b16 %v8201
    %v9069 = vunpack.c.l.b16 %v8202
    %v9070 = vunpack.c.h.b16 %v8202
    %v9071 = vunpack.c.l.b16 %v8203
    %v9072 = vunpack.c.h.b16 %v8203
    %v9073 = vunpack.c.l.b16 %v8204
    %v9074 = vunpack.c.h.b16 %v8204
    %v9075 = vunpack.c.l.b16 %v8205
    %v9076 = vunpack.c.h.b16 %v8205
    %v9077 = vunpack.c.l.b16 %v8206
    %v9078 = vunpack.c.h.b16 %v8206
    %v9079 = vunpack.c.l.b16 %v8207
    %v9080 = vunpack.c.h.b16 %v8207
    %v9081 = vunpack.c.l.b16 %v8208
    %v9082 = vunpack.c.h.b16 %v8208
    %v9083 = vunpack.c.l.b16 %v8209
    %v9084 = vunpack.c.h.b16 %v8209
    %v9085 = vunpack.c.l.b16 %v8210
    %v9086 = vunpack.c.h.b16 %v8210
    %v9087 = vunpack.c.l.b16 %v8211
    %v9088 = vunpack.c.h.b16 %v8211
    %v9089 = vunpack.c.l.b16 %v8212
    %v9090 = vunpack.c.h.b16 %v8212
    %v9091 = vunpack.c.l.b16 %v8213
    %v9092 = vunpack.c.h.b16 %v8213
    %v9093 = vunpack.c.l.b16 %v8214
    %v9094 = vunpack.c.h.b16 %v8214
    %v9095 = vunpack.c.l.b16 %v8215
    %v9096 = vunpack.c.h.b16 %v8215
    %v9097 = vunpack.c.l.b16 %v8216
    %v9098 = vunpack.c.h.b16 %v8216
    %v9099 = vunpack.c.l.b16 %v8217
    %v9100 = vunpack.c.h.b16 %v8217
    %v9101 = vunpack.c.l.b16 %v8218
    %v9102 = vunpack.c.h.b16 %v8218
    %v9103 = vunpack.c.l.b16 %v8219
    %v9104 = vunpack.c.h.b16 %v8219
    %v9105 = vunpack.c.l.b16 %v8220
    %v9106 = vunpack.c.h.b16 %v8220
    %v9107 = vunpack.c.l.b16 %v8221
    %v9108 = vunpack.c.h.b16 %v8221
    %v9109 = vunpack.c.l.b16 %v8222
    %v9110 = vunpack.c.h.b16 %v8222
    %v9111 = vunpack.c.l.b16 %v8223
    %v9112 = vunpack.c.h.b16 %v8223
    %v9113 = vunpack.c.l.b16 %v8224
    %v9114 = vunpack.c.h.b16 %v8224
    %v9115 = vunpack.c.l.b16 %v8225
    %v9116 = vunpack.c.h.b16 %v8225
    %v9117 = vunpack.c.l.b16 %v8226
    %v9118 = vunpack.c.h.b16 %v8226
    %v9119 = vunpack.c.l.b16 %v8227
    %v9120 = vunpack.c.h.b16 %v8227
    %v9121 = vunpack.c.l.b16 %v8228
    %v9122 = vunpack.c.h.b16 %v8228
    %v9123 = vunpack.c.l.b16 %v8229
    %v9124 = vunpack.c.h.b16 %v8229
    %v9125 = vunpack.c.l.b16 %v8230
    %v9126 = vunpack.c.h.b16 %v8230
    %v9127 = vunpack.c.l.b16 %v8231
    %v9128 = vunpack.c.h.b16 %v8231
    %v9129 = vunpack.c.l.b16 %v8232
    %v9130 = vunpack.c.h.b16 %v8232
    %v9131 = vunpack.c.l.b16 %v8233
    %v9132 = vunpack.c.h.b16 %v8233
    %v9133 = vunpack.c.l.b16 %v8234
    %v9134 = vunpack.c.h.b16 %v8234
    %v9135 = vunpack.c.l.b16 %v8235
    %v9136 = vunpack.c.h.b16 %v8235
    %v9137 = vunpack.c.l.b16 %v8236
    %v9138 = vunpack.c.h.b16 %v8236
    %v9139 = vunpack.c.l.b16 %v8237
    %v9140 = vunpack.c.h.b16 %v8237
    %v9141 = vunpack.c.l.b16 %v8238
    %v9142 = vunpack.c.h.b16 %v8238
    %v9143 = vunpack.c.l.b16 %v8239
    %v9144 = vunpack.c.h.b16 %v8239
    %v9145 = vunpack.c.l.b16 %v8240
    %v9146 = vunpack.c.h.b16 %v8240
    %v9147 = vunpack.c.l.b16 %v8241
    %v9148 = vunpack.c.h.b16 %v8241
    %v9149 = vunpack.c.l.b16 %v8242
    %v9150 = vunpack.c.h.b16 %v8242
    %v9151 = vunpack.c.l.b16 %v8243
    %v9152 = vunpack.c.h.b16 %v8243
    %v9153 = vunpack.c.l.b16 %v8244
    %v9154 = vunpack.c.h.b16 %v8244
    %v9155 = vunpack.c.l.b16 %v8245
    %v9156 = vunpack.c.h.b16 %v8245
    %v9157 = vunpack.c.l.b16 %v8246
    %v9158 = vunpack.c.h.b16 %v8246
    %v9159 = vunpack.c.l.b16 %v8247
    %v9160 = vunpack.c.h.b16 %v8247
    %v9161 = vunpack.c.l.b16 %v8248
    %v9162 = vunpack.c.h.b16 %v8248
    %v9163 = vunpack.c.l.b16 %v8249
    %v9164 = vunpack.c.h.b16 %v8249
    %v9165 = vunpack.c.l.b16 %v8250
    %v9166 = vunpack.c.h.b16 %v8250
    %v9167 = vunpack.c.l.b16 %v8251
    %v9168 = vunpack.c.h.b16 %v8251
    %v9169 = vunpack.c.l.b16 %v8252
    %v9170 = vunpack.c.h.b16 %v8252
    %v9171 = vunpack.c.l.b16 %v8253
    %v9172 = vunpack.c.h.b16 %v8253
    %v9173 = vunpack.c.l.b16 %v8254
    %v9174 = vunpack.c.h.b16 %v8254
    %v9175 = vunpack.c.l.b16 %v8255
    %v9176 = vunpack.c.h.b16 %v8255
    %v9177 = vunpack.c.l.b16 %v8256
    %v9178 = vunpack.c.h.b16 %v8256
    %v9179 = vunpack.c.l.b16 %v8257
    %v9180 = vunpack.c.h.b16 %v8257
    %v9181 = vunpack.c.l.b16 %v8258
    %v9182 = vunpack.c.h.b16 %v8258
    %v9183 = vunpack.c.l.b16 %v8259
    %v9184 = vunpack.c.h.b16 %v8259
    %v9185 = vunpack.c.l.b16 %v8260
    %v9186 = vunpack.c.h.b16 %v8260
    %v9187 = vunpack.c.l.b16 %v8261
    %v9188 = vunpack.c.h.b16 %v8261
    %v9189 = vunpack.c.l.b16 %v8262
    %v9190 = vunpack.c.h.b16 %v8262
    %v9191 = vunpack.c.l.b16 %v8263
    %v9192 = vunpack.c.h.b16 %v8263
    %v9193 = vunpack.c.l.b16 %v8264
    %v9194 = vunpack.c.h.b16 %v8264
    %v9195 = vunpack.c.l.b16 %v8265
    %v9196 = vunpack.c.h.b16 %v8265
    %v9197 = vunpack.c.l.b16 %v8266
    %v9198 = vunpack.c.h.b16 %v8266
    %v9199 = vunpack.c.l.b16 %v8267
    %v9200 = vunpack.c.h.b16 %v8267
    %v9201 = vunpack.c.l.b16 %v8268
    %v9202 = vunpack.c.h.b16 %v8268
    %v9203 = vunpack.c.l.b16 %v8269
    %v9204 = vunpack.c.h.b16 %v8269
    %v9205 = vunpack.c.l.b16 %v8270
    %v9206 = vunpack.c.h.b16 %v8270
    %v9207 = vunpack.c.l.b16 %v8271
    %v9208 = vunpack.c.h.b16 %v8271
    %v9209 = vunpack.c.l.b16 %v8272
    %v9210 = vunpack.c.h.b16 %v8272
    %v9211 = vunpack.c.l.b16 %v8273
    %v9212 = vunpack.c.h.b16 %v8273
    %v9213 = vunpack.c.l.b16 %v8274
    %v9214 = vunpack.c.h.b16 %v8274
    %v9215 = vunpack.c.l.b16 %v8275
    %v9216 = vunpack.c.h.b16 %v8275
    %v9217 = vunpack.c.l.b16 %v8276
    %v9218 = vunpack.c.h.b16 %v8276
    %v9219 = vunpack.c.l.b16 %v8277
    %v9220 = vunpack.c.h.b16 %v8277
    %v9221 = vunpack.c.l.b16 %v8278
    %v9222 = vunpack.c.h.b16 %v8278
    %v9223 = vunpack.c.l.b16 %v8279
    %v9224 = vunpack.c.h.b16 %v8279
    %v9225 = vunpack.c.l.b16 %v8280
    %v9226 = vunpack.c.h.b16 %v8280
    %v9227 = vunpack.c.l.b16 %v8281
    %v9228 = vunpack.c.h.b16 %v8281
    %v9229 = vunpack.c.l.b16 %v8282
    %v9230 = vunpack.c.h.b16 %v8282
    %v9231 = vunpack.c.l.b16 %v8283
    %v9232 = vunpack.c.h.b16 %v8283
    %v9233 = vunpack.c.l.b16 %v8284
    %v9234 = vunpack.c.h.b16 %v8284
    %v9235 = vunpack.c.l.b16 %v8285
    %v9236 = vunpack.c.h.b16 %v8285
    %v9237 = vunpack.c.l.b16 %v8286
    %v9238 = vunpack.c.h.b16 %v8286
    %v9239 = vunpack.c.l.b16 %v8287
    %v9240 = vunpack.c.h.b16 %v8287
    %v9241 = vunpack.c.l.b16 %v8288
    %v9242 = vunpack.c.h.b16 %v8288
    %v9243 = vunpack.c.l.b16 %v8289
    %v9244 = vunpack.c.h.b16 %v8289
    %v9245 = vunpack.c.l.b16 %v8290
    %v9246 = vunpack.c.h.b16 %v8290
    %v9247 = vunpack.c.l.b16 %v8291
    %v9248 = vunpack.c.h.b16 %v8291
    %v9249 = vunpack.c.l.b16 %v8292
    %v9250 = vunpack.c.h.b16 %v8292
    %v9251 = vunpack.c.l.b16 %v8293
    %v9252 = vunpack.c.h.b16 %v8293
    %v9253 = vunpack.c.l.b16 %v8294
    %v9254 = vunpack.c.h.b16 %v8294
    %v9255 = vunpack.c.l.b16 %v8295
    %v9256 = vunpack.c.h.b16 %v8295
    %v9257 = vunpack.c.l.b16 %v8296
    %v9258 = vunpack.c.h.b16 %v8296
    %v9259 = vunpack.c.l.b16 %v8297
    %v9260 = vunpack.c.h.b16 %v8297
    %v9261 = vunpack.c.l.b16 %v8298
    %v9262 = vunpack.c.h.b16 %v8298
    %v9263 = vunpack.c.l.b16 %v8299
    %v9264 = vunpack.c.h.b16 %v8299
    %v9265 = vunpack.c.l.b16 %v8300
    %v9266 = vunpack.c.h.b16 %v8300
    %v9267 = vunpack.c.l.b16 %v8301
    %v9268 = vunpack.c.h.b16 %v8301
    %v9269 = vunpack.c.l.b16 %v8302
    %v9270 = vunpack.c.h.b16 %v8302
    %v9271 = vunpack.c.l.b16 %v8303
    %v9272 = vunpack.c.h.b16 %v8303
    %v9273 = vunpack.c.l.b16 %v8304
    %v9274 = vunpack.c.h.b16 %v8304
    %v9275 = vunpack.c.l.b16 %v8305
    %v9276 = vunpack.c.h.b16 %v8305
    %v9277 = vunpack.c.l.b16 %v8306
    %v9278 = vunpack.c.h.b16 %v8306
    %v9279 = vunpack.c.l.b16 %v8307
    %v9280 = vunpack.c.h.b16 %v8307
    %v9281 = vunpack.c.l.b16 %v8308
    %v9282 = vunpack.c.h.b16 %v8308
    %v9283 = vunpack.c.l.b16 %v8309
    %v9284 = vunpack.c.h.b16 %v8309
    %v9285 = vunpack.c.l.b16 %v8310
    %v9286 = vunpack.c.h.b16 %v8310
    %v9287 = vunpack.c.l.b16 %v8311
    %v9288 = vunpack.c.h.b16 %v8311
    %v9289 = vunpack.c.l.b16 %v8312
    %v9290 = vunpack.c.h.b16 %v8312
    %v9291 = vunpack.c.l.b16 %v8313
    %v9292 = vunpack.c.h.b16 %v8313
    %v9293 = vunpack.c.l.b16 %v8314
    %v9294 = vunpack.c.h.b16 %v8314
    %v9295 = vunpack.c.l.b16 %v8315
    %v9296 = vunpack.c.h.b16 %v8315
    %v9297 = vunpack.c.l.b16 %v8316
    %v9298 = vunpack.c.h.b16 %v8316
    %v9299 = vunpack.c.l.b16 %v8317
    %v9300 = vunpack.c.h.b16 %v8317
    %v9301 = vunpack.c.l.b16 %v8318
    %v9302 = vunpack.c.h.b16 %v8318
    %v9303 = vunpack.c.l.b16 %v8319
    %v9304 = vunpack.c.h.b16 %v8319
    %v9305 = vunpack.c.l.b16 %v8320
    %v9306 = vunpack.c.h.b16 %v8320
    %v9307 = vunpack.c.l.b16 %v8321
    %v9308 = vunpack.c.h.b16 %v8321
    %v9309 = vunpack.c.l.b16 %v8322
    %v9310 = vunpack.c.h.b16 %v8322
    %v9311 = vunpack.c.l.b16 %v8323
    %v9312 = vunpack.c.h.b16 %v8323
    %v9313 = vunpack.c.l.b16 %v8324
    %v9314 = vunpack.c.h.b16 %v8324
    %v9315 = vunpack.c.l.b16 %v8325
    %v9316 = vunpack.c.h.b16 %v8325
    %v9317 = vunpack.c.l.b16 %v8326
    %v9318 = vunpack.c.h.b16 %v8326
    %v9319 = vunpack.c.l.b16 %v8327
    %v9320 = vunpack.c.h.b16 %v8327
    %v9321 = vunpack.c.l.b16 %v8328
    %v9322 = vunpack.c.h.b16 %v8328
    %v9323 = vunpack.c.l.b16 %v8329
    %v9324 = vunpack.c.h.b16 %v8329
    %v9325 = vunpack.c.l.b16 %v8330
    %v9326 = vunpack.c.h.b16 %v8330
    %v9327 = vunpack.c.l.b16 %v8331
    %v9328 = vunpack.c.h.b16 %v8331
    %v9329 = vunpack.c.l.b16 %v8332
    %v9330 = vunpack.c.h.b16 %v8332
    %v9331 = vunpack.c.l.b16 %v8333
    %v9332 = vunpack.c.h.b16 %v8333
    %v9333 = vunpack.c.l.b16 %v8334
    %v9334 = vunpack.c.h.b16 %v8334
    %v9335 = vunpack.c.l.b16 %v8335
    %v9336 = vunpack.c.h.b16 %v8335
    %v9337 = vunpack.c.l.b16 %v8336
    %v9338 = vunpack.c.h.b16 %v8336
    %v9339 = vunpack.c.l.b16 %v8337
    %v9340 = vunpack.c.h.b16 %v8337
    %v9341 = vunpack.c.l.b16 %v8338
    %v9342 = vunpack.c.h.b16 %v8338
    %v9343 = vunpack.c.l.b16 %v8339
    %v9344 = vunpack.c.h.b16 %v8339
    %v9345 = vunpack.c.l.b16 %v8340
    %v9346 = vunpack.c.h.b16 %v8340
    %v9347 = vunpack.c.l.b16 %v8341
    %v9348 = vunpack.c.h.b16 %v8341
    %v9349 = vunpack.c.l.b16 %v8342
    %v9350 = vunpack.c.h.b16 %v8342
    %v9351 = vunpack.c.l.b16 %v8343
    %v9352 = vunpack.c.h.b16 %v8343
    %v9353 = vunpack.c.l.b16 %v8344
    %v9354 = vunpack.c.h.b16 %v8344
    %v9355 = vunpack.c.l.b16 %v8345
    %v9356 = vunpack.c.h.b16 %v8345
    %v9357 = vunpack.c.l.b16 %v8346
    %v9358 = vunpack.c.h.b16 %v8346
    %v9359 = vunpack.c.l.b16 %v8347
    %v9360 = vunpack.c.h.b16 %v8347
    %v9361 = vunpack.c.l.b16 %v8348
    %v9362 = vunpack.c.h.b16 %v8348
    %v9363 = vunpack.c.l.b16 %v8349
    %v9364 = vunpack.c.h.b16 %v8349
    %v9365 = vunpack.c.l.b16 %v8350
    %v9366 = vunpack.c.h.b16 %v8350
    %v9367 = vunpack.c.l.b16 %v8351
    %v9368 = vunpack.c.h.b16 %v8351
    %v9369 = vunpack.c.l.b16 %v8352
    %v9370 = vunpack.c.h.b16 %v8352
    %v9371 = vunpack.c.l.b16 %v8353
    %v9372 = vunpack.c.h.b16 %v8353
    %v9373 = vunpack.c.l.b16 %v8354
    %v9374 = vunpack.c.h.b16 %v8354
    %v9375 = vunpack.c.l.b16 %v8355
    %v9376 = vunpack.c.h.b16 %v8355
    %v9377 = vunpack.c.l.b16 %v8356
    %v9378 = vunpack.c.h.b16 %v8356
    %v9379 = vunpack.c.l.b16 %v8357
    %v9380 = vunpack.c.h.b16 %v8357
    %v9381 = vunpack.c.l.b16 %v8358
    %v9382 = vunpack.c.h.b16 %v8358
    %v9383 = vunpack.c.l.b16 %v8359
    %v9384 = vunpack.c.h.b16 %v8359
    %v9385 = vunpack.c.l.b16 %v8360
    %v9386 = vunpack.c.h.b16 %v8360
    %v9387 = vunpack.c.l.b16 %v8361
    %v9388 = vunpack.c.h.b16 %v8361
    %v9389 = vunpack.c.l.b16 %v8362
    %v9390 = vunpack.c.h.b16 %v8362
    %v9391 = vunpack.c.l.b16 %v8363
    %v9392 = vunpack.c.h.b16 %v8363
    %v9393 = vunpack.c.l.b16 %v8364
    %v9394 = vunpack.c.h.b16 %v8364
    %v9395 = vunpack.c.l.b16 %v8365
    %v9396 = vunpack.c.h.b16 %v8365
    %v9397 = vunpack.c.l.b16 %v8366
    %v9398 = vunpack.c.h.b16 %v8366
    %v9399 = vunpack.c.l.b16 %v8367
    %v9400 = vunpack.c.h.b16 %v8367
    %v9401 = vunpack.c.l.b16 %v8368
    %v9402 = vunpack.c.h.b16 %v8368
    %v9403 = vunpack.c.l.b16 %v8369
    %v9404 = vunpack.c.h.b16 %v8369
    %v9405 = vunpack.c.l.b16 %v8370
    %v9406 = vunpack.c.h.b16 %v8370
    %v9407 = vunpack.c.l.b16 %v8371
    %v9408 = vunpack.c.h.b16 %v8371
    %v9409 = vunpack.c.l.b16 %v8372
    %v9410 = vunpack.c.h.b16 %v8372
    %v9411 = vunpack.c.l.b16 %v8373
    %v9412 = vunpack.c.h.b16 %v8373
    %v9413 = vunpack.c.l.b16 %v8374
    %v9414 = vunpack.c.h.b16 %v8374
    %v9415 = vunpack.c.l.b16 %v8375
    %v9416 = vunpack.c.h.b16 %v8375
    %v9417 = vunpack.c.l.b16 %v8376
    %v9418 = vunpack.c.h.b16 %v8376
    %v9419 = vunpack.c.l.b16 %v8377
    %v9420 = vunpack.c.h.b16 %v8377
    %v9421 = vunpack.c.l.b16 %v8378
    %v9422 = vunpack.c.h.b16 %v8378
    %v9423 = vunpack.c.l.b16 %v8379
    %v9424 = vunpack.c.h.b16 %v8379
    %v9425 = vunpack.c.l.b16 %v8380
    %v9426 = vunpack.c.h.b16 %v8380
    %v9427 = vunpack.c.l.b16 %v8381
    %v9428 = vunpack.c.h.b16 %v8381
    %v9429 = vunpack.c.l.b16 %v8382
    %v9430 = vunpack.c.h.b16 %v8382
    %v9431 = vunpack.c.l.b16 %v8383
    %v9432 = vunpack.c.h.b16 %v8383
    %v9433 = vunpack.c.l.b16 %v8384
    %v9434 = vunpack.c.h.b16 %v8384
    %v9435 = vunpack.c.l.b16 %v8385
    %v9436 = vunpack.c.h.b16 %v8385
    %v9437 = vunpack.c.l.b16 %v8386
    %v9438 = vunpack.c.h.b16 %v8386
    %v9439 = vunpack.c.l.b16 %v8387
    %v9440 = vunpack.c.h.b16 %v8387
    %v9441 = vunpack.c.l.b16 %v8388
    %v9442 = vunpack.c.h.b16 %v8388
    %v9443 = vunpack.c.l.b16 %v8389
    %v9444 = vunpack.c.h.b16 %v8389
    %v9445 = vunpack.c.l.b16 %v8390
    %v9446 = vunpack.c.h.b16 %v8390
    %v9447 = vunpack.c.l.b16 %v8391
    %v9448 = vunpack.c.h.b16 %v8391
    %v9449 = vunpack.c.l.b16 %v8392
    %v9450 = vunpack.c.h.b16 %v8392
    %v9451 = vunpack.c.l.b16 %v8393
    %v9452 = vunpack.c.h.b16 %v8393
    %v9453 = vunpack.c.l.b16 %v8394
    %v9454 = vunpack.c.h.b16 %v8394
    %v9455 = vunpack.c.l.b16 %v8395
    %v9456 = vunpack.c.h.b16 %v8395
    %v9457 = vunpack.c.l.b16 %v8396
    %v9458 = vunpack.c.h.b16 %v8396
    %v9459 = vunpack.c.l.b16 %v8397
    %v9460 = vunpack.c.h.b16 %v8397
    %v9461 = vunpack.c.l.b16 %v8398
    %v9462 = vunpack.c.h.b16 %v8398
    %v9463 = vunpack.c.l.b16 %v8399
    %v9464 = vunpack.c.h.b16 %v8399
    %v9465 = vunpack.c.l.b16 %v8400
    %v9466 = vunpack.c.h.b16 %v8400
    %v9467 = vunpack.c.l.b16 %v8401
    %v9468 = vunpack.c.h.b16 %v8401
    %v9469 = vunpack.c.l.b16 %v8402
    %v9470 = vunpack.c.h.b16 %v8402
    %v9471 = vunpack.c.l.b16 %v8403
    %v9472 = vunpack.c.h.b16 %v8403
    %v9473 = vunpack.c.l.b16 %v8404
    %v9474 = vunpack.c.h.b16 %v8404
    %v9475 = vunpack.c.l.b16 %v8405
    %v9476 = vunpack.c.h.b16 %v8405
    %v9477 = vunpack.c.l.b16 %v8406
    %v9478 = vunpack.c.h.b16 %v8406
    %v9479 = vunpack.c.l.b16 %v8407
    %v9480 = vunpack.c.h.b16 %v8407
    %v9481 = vunpack.c.l.b16 %v8408
    %v9482 = vunpack.c.h.b16 %v8408
    %v9483 = vunpack.c.l.b16 %v8409
    %v9484 = vunpack.c.h.b16 %v8409
    %v9485 = vunpack.c.l.b16 %v8410
    %v9486 = vunpack.c.h.b16 %v8410
    %v9487 = vunpack.c.l.b16 %v8411
    %v9488 = vunpack.c.h.b16 %v8411
    %v9489 = vunpack.c.l.b16 %v8412
    %v9490 = vunpack.c.h.b16 %v8412
    %v9491 = vunpack.c.l.b16 %v8413
    %v9492 = vunpack.c.h.b16 %v8413
    %v9493 = vunpack.c.l.b16 %v8414
    %v9494 = vunpack.c.h.b16 %v8414
    %v9495 = vunpack.c.l.b16 %v8415
    %v9496 = vunpack.c.h.b16 %v8415
    %v9497 = vunpack.c.l.b16 %v8416
    %v9498 = vunpack.c.h.b16 %v8416
    %v9499 = vunpack.c.l.b16 %v8417
    %v9500 = vunpack.c.h.b16 %v8417
    %v9501 = vunpack.c.l.b16 %v8418
    %v9502 = vunpack.c.h.b16 %v8418
    %v9503 = vunpack.c.l.b16 %v8419
    %v9504 = vunpack.c.h.b16 %v8419
    %v9505 = vunpack.c.l.b16 %v8420
    %v9506 = vunpack.c.h.b16 %v8420
    %v9507 = vunpack.c.l.b16 %v8421
    %v9508 = vunpack.c.h.b16 %v8421
    %v9509 = vunpack.c.l.b16 %v8422
    %v9510 = vunpack.c.h.b16 %v8422
    %v9511 = vunpack.c.l.b16 %v8423
    %v9512 = vunpack.c.h.b16 %v8423
    %v9513 = vunpack.c.l.b16 %v8424
    %v9514 = vunpack.c.h.b16 %v8424
    %v9515 = vunpack.c.l.b16 %v8425
    %v9516 = vunpack.c.h.b16 %v8425
    %v9517 = vunpack.c.l.b16 %v8426
    %v9518 = vunpack.c.h.b16 %v8426
    %v9519 = vunpack.c.l.b16 %v8427
    %v9520 = vunpack.c.h.b16 %v8427
    %v9521 = vunpack.c.l.b16 %v8428
    %v9522 = vunpack.c.h.b16 %v8428
    %v9523 = vunpack.c.l.b16 %v8429
    %v9524 = vunpack.c.h.b16 %v8429
    %v9525 = vunpack.c.l.b16 %v8430
    %v9526 = vunpack.c.h.b16 %v8430
    %v9527 = vunpack.c.l.b16 %v8431
    %v9528 = vunpack.c.h.b16 %v8431
    %v9529 = vunpack.c.l.b16 %v8432
    %v9530 = vunpack.c.h.b16 %v8432
    %v9531 = vunpack.c.l.b16 %v8433
    %v9532 = vunpack.c.h.b16 %v8433
    %v9533 = vunpack.c.l.b16 %v8434
    %v9534 = vunpack.c.h.b16 %v8434
    %v9535 = vunpack.c.l.b16 %v8435
    %v9536 = vunpack.c.h.b16 %v8435
    %v9537 = vunpack.c.l.b16 %v8436
    %v9538 = vunpack.c.h.b16 %v8436
    %v9539 = vunpack.c.l.b16 %v8437
    %v9540 = vunpack.c.h.b16 %v8437
    %v9541 = vunpack.c.l.b16 %v8438
    %v9542 = vunpack.c.h.b16 %v8438
    %v9543 = vunpack.c.l.b16 %v8439
    %v9544 = vunpack.c.h.b16 %v8439
    %v9545 = vunpack.c.l.b16 %v8440
    %v9546 = vunpack.c.h.b16 %v8440
    %v9547 = vunpack.c.l.b16 %v8441
    %v9548 = vunpack.c.h.b16 %v8441
    %v9549 = vunpack.c.l.b16 %v8442
    %v9550 = vunpack.c.h.b16 %v8442
    %v9551 = vunpack.c.l.b16 %v8443
    %v9552 = vunpack.c.h.b16 %v8443
    %v9553 = vunpack.c.l.b16 %v8444
    %v9554 = vunpack.c.h.b16 %v8444
    %v9555 = vunpack.c.l.b16 %v8445
    %v9556 = vunpack.c.h.b16 %v8445
    %v9557 = vunpack.c.l.b16 %v8446
    %v9558 = vunpack.c.h.b16 %v8446
    %v9559 = vunpack.c.l.b16 %v8447
    %v9560 = vunpack.c.h.b16 %v8447
    %v9561 = vunpack.c.l.b16 %v8448
    %v9562 = vunpack.c.h.b16 %v8448
    %v9563 = vunpack.c.l.b16 %v8449
    %v9564 = vunpack.c.h.b16 %v8449
    %v9565 = vunpack.c.l.b16 %v8450
    %v9566 = vunpack.c.h.b16 %v8450
    %v9567 = vunpack.c.l.b16 %v8451
    %v9568 = vunpack.c.h.b16 %v8451
    %v9569 = vunpack.c.l.b16 %v8452
    %v9570 = vunpack.c.h.b16 %v8452
    %v9571 = vunpack.c.l.b16 %v8453
    %v9572 = vunpack.c.h.b16 %v8453
    %v9573 = vunpack.c.l.b16 %v8454
    %v9574 = vunpack.c.h.b16 %v8454
    %v9575 = vunpack.c.l.b16 %v8455
    %v9576 = vunpack.c.h.b16 %v8455
    %v9577 = vunpack.c.l.b16 %v8456
    %v9578 = vunpack.c.h.b16 %v8456
    %v9579 = vunpack.c.l.b16 %v8457
    %v9580 = vunpack.c.h.b16 %v8457
    %v9581 = vunpack.c.l.b16 %v8458
    %v9582 = vunpack.c.h.b16 %v8458
    %v9583 = vunpack.c.l.b16 %v8459
    %v9584 = vunpack.c.h.b16 %v8459
    %v9585 = vunpack.c.l.b16 %v8460
    %v9586 = vunpack.c.h.b16 %v8460
    %v9587 = vunpack.c.l.b16 %v8461
    %v9588 = vunpack.c.h.b16 %v8461
    %v9589 = vunpack.c.l.b16 %v8462
    %v9590 = vunpack.c.h.b16 %v8462
    %v9591 = vunpack.c.l.b16 %v8463
    %v9592 = vunpack.c.h.b16 %v8463
    %v9593 = vunpack.c.l.b16 %v8464
    %v9594 = vunpack.c.h.b16 %v8464
    %v9595 = vunpack.c.l.b16 %v8465
    %v9596 = vunpack.c.h.b16 %v8465
    %v9597 = vunpack.c.l.b16 %v8466
    %v9598 = vunpack.c.h.b16 %v8466
    %v9599 = vunpack.c.l.b16 %v8467
    %v9600 = vunpack.c.h.b16 %v8467
    %v9601 = vunpack.c.l.b16 %v8468
    %v9602 = vunpack.c.h.b16 %v8468
    %v9603 = vunpack.c.l.b16 %v8469
    %v9604 = vunpack.c.h.b16 %v8469
    %v9605 = vunpack.c.l.b16 %v8470
    %v9606 = vunpack.c.h.b16 %v8470
    %v9607 = vunpack.c.l.b16 %v8471
    %v9608 = vunpack.c.h.b16 %v8471
    %v9609 = vunpack.c.l.b16 %v8472
    %v9610 = vunpack.c.h.b16 %v8472
    %v9611 = vunpack.c.l.b16 %v8473
    %v9612 = vunpack.c.h.b16 %v8473
    %v9613 = vunpack.c.l.b16 %v8474
    %v9614 = vunpack.c.h.b16 %v8474
    %v9615 = vunpack.c.l.b16 %v8475
    %v9616 = vunpack.c.h.b16 %v8475
    %v9617 = vunpack.c.l.b16 %v8476
    %v9618 = vunpack.c.h.b16 %v8476
    %v9619 = vunpack.c.l.b16 %v8477
    %v9620 = vunpack.c.h.b16 %v8477
    %v9621 = vunpack.c.l.b16 %v8478
    %v9622 = vunpack.c.h.b16 %v8478
    %v9623 = vunpack.c.l.b16 %v8479
    %v9624 = vunpack.c.h.b16 %v8479
    %v9625 = vunpack.c.l.b16 %v8480
    %v9626 = vunpack.c.h.b16 %v8480
    %v9627 = vunpack.c.l.b16 %v8481
    %v9628 = vunpack.c.h.b16 %v8481
    %v9629 = vunpack.c.l.b16 %v8482
    %v9630 = vunpack.c.h.b16 %v8482
    %v9631 = vunpack.c.l.b16 %v8483
    %v9632 = vunpack.c.h.b16 %v8483
    %v9633 = vunpack.c.l.b16 %v8484
    %v9634 = vunpack.c.h.b16 %v8484
    %v9635 = vunpack.c.l.b16 %v8485
    %v9636 = vunpack.c.h.b16 %v8485
    %v9637 = vunpack.c.l.b16 %v8486
    %v9638 = vunpack.c.h.b16 %v8486
    %v9639 = vpack.c.b16 %v8875, %v8871
    %v9640 = vpack.c.b16 %v8876, %v8872
    %v9641 = vpack.c.b16 %v8877, %v8873
    %v9642 = vpack.c.b16 %v8878, %v8874
    %v9643 = vpack.c.b16 %v8883, %v8879
    %v9644 = vpack.c.b16 %v8884, %v8880
    %v9645 = vpack.c.b16 %v8885, %v8881
    %v9646 = vpack.c.b16 %v8886, %v8882
    %v9647 = vpack.c.b16 %v8891, %v8887
    %v9648 = vpack.c.b16 %v8892, %v8888
    %v9649 = vpack.c.b16 %v8893, %v8889
    %v9650 = vpack.c.b16 %v8894, %v8890
    %v9651 = vpack.c.b16 %v8899, %v8895
    %v9652 = vpack.c.b16 %v8900, %v8896
    %v9653 = vpack.c.b16 %v8901, %v8897
    %v9654 = vpack.c.b16 %v8902, %v8898
    %v9655 = vpack.c.b16 %v8907, %v8903
    %v9656 = vpack.c.b16 %v8908, %v8904
    %v9657 = vpack.c.b16 %v8909, %v8905
    %v9658 = vpack.c.b16 %v8910, %v8906
    %v9659 = vpack.c.b16 %v8915, %v8911
    %v9660 = vpack.c.b16 %v8916, %v8912
    %v9661 = vpack.c.b16 %v8917, %v8913
    %v9662 = vpack.c.b16 %v8918, %v8914
    %v9663 = vpack.c.b16 %v8923, %v8919
    %v9664 = vpack.c.b16 %v8924, %v8920
    %v9665 = vpack.c.b16 %v8925, %v8921
    %v9666 = vpack.c.b16 %v8926, %v8922
    %v9667 = vpack.c.b16 %v8931, %v8927
    %v9668 = vpack.c.b16 %v8932, %v8928
    %v9669 = vpack.c.b16 %v8933, %v8929
    %v9670 = vpack.c.b16 %v8934, %v8930
    %v9671 = vpack.c.b16 %v8939, %v8935
    %v9672 = vpack.c.b16 %v8940, %v8936
    %v9673 = vpack.c.b16 %v8941, %v8937
    %v9674 = vpack.c.b16 %v8942, %v8938
    %v9675 = vpack.c.b16 %v8947, %v8943
    %v9676 = vpack.c.b16 %v8948, %v8944
    %v9677 = vpack.c.b16 %v8949, %v8945
    %v9678 = vpack.c.b16 %v8950, %v8946
    %v9679 = vpack.c.b16 %v8955, %v8951
    %v9680 = vpack.c.b16 %v8956, %v8952
    %v9681 = vpack.c.b16 %v8957, %v8953
    %v9682 = vpack.c.b16 %v8958, %v8954
    %v9683 = vpack.c.b16 %v8963, %v8959
    %v9684 = vpack.c.b16 %v8964, %v8960
    %v9685 = vpack.c.b16 %v8965, %v8961
    %v9686 = vpack.c.b16 %v8966, %v8962
    %v9687 = vpack.c.b16 %v8971, %v8967
    %v9688 = vpack.c.b16 %v8972, %v8968
    %v9689 = vpack.c.b16 %v8973, %v8969
    %v9690 = vpack.c.b16 %v8974, %v8970
    %v9691 = vpack.c.b16 %v8979, %v8975
    %v9692 = vpack.c.b16 %v8980, %v8976
    %v9693 = vpack.c.b16 %v8981, %v8977
    %v9694 = vpack.c.b16 %v8982, %v8978
    %v9695 = vpack.c.b16 %v8987, %v8983
    %v9696 = vpack.c.b16 %v8988, %v8984
    %v9697 = vpack.c.b16 %v8989, %v8985
    %v9698 = vpack.c.b16 %v8990, %v8986
    %v9699 = vpack.c.b16 %v8995, %v8991
    %v9700 = vpack.c.b16 %v8996, %v8992
    %v9701 = vpack.c.b16 %v8997, %v8993
    %v9702 = vpack.c.b16 %v8998, %v8994
    %v9703 = vpack.c.b16 %v9003, %v8999
    %v9704 = vpack.c.b16 %v9004, %v9000
    %v9705 = vpack.c.b16 %v9005, %v9001
    %v9706 = vpack.c.b16 %v9006, %v9002
    %v9707 = vpack.c.b16 %v9011, %v9007
    %v9708 = vpack.c.b16 %v9012, %v9008
    %v9709 = vpack.c.b16 %v9013, %v9009
    %v9710 = vpack.c.b16 %v9014, %v9010
    %v9711 = vpack.c.b16 %v9019, %v9015
    %v9712 = vpack.c.b16 %v9020, %v9016
    %v9713 = vpack.c.b16 %v9021, %v9017
    %v9714 = vpack.c.b16 %v9022, %v9018
    %v9715 = vpack.c.b16 %v9027, %v9023
    %v9716 = vpack.c.b16 %v9028, %v9024
    %v9717 = vpack.c.b16 %v9029, %v9025
    %v9718 = vpack.c.b16 %v9030, %v9026
    %v9719 = vpack.c.b16 %v9035, %v9031
    %v9720 = vpack.c.b16 %v9036, %v9032
    %v9721 = vpack.c.b16 %v9037, %v9033
    %v9722 = vpack.c.b16 %v9038, %v9034
    %v9723 = vpack.c.b16 %v9043, %v9039
    %v9724 = vpack.c.b16 %v9044, %v9040
    %v9725 = vpack.c.b16 %v9045, %v9041
    %v9726 = vpack.c.b16 %v9046, %v9042
    %v9727 = vpack.c.b16 %v9051, %v9047
    %v9728 = vpack.c.b16 %v9052, %v9048
    %v9729 = vpack.c.b16 %v9053, %v9049
    %v9730 = vpack.c.b16 %v9054, %v9050
    %v9731 = vpack.c.b16 %v9059, %v9055
    %v9732 = vpack.c.b16 %v9060, %v9056
    %v9733 = vpack.c.b16 %v9061, %v9057
    %v9734 = vpack.c.b16 %v9062, %v9058
    %v9735 = vpack.c.b16 %v9067, %v9063
    %v9736 = vpack.c.b16 %v9068, %v9064
    %v9737 = vpack.c.b16 %v9069, %v9065
    %v9738 = vpack.c.b16 %v9070, %v9066
    %v9739 = vpack.c.b16 %v9075, %v9071
    %v9740 = vpack.c.b16 %v9076, %v9072
    %v9741 = vpack.c.b16 %v9077, %v9073
    %v9742 = vpack.c.b16 %v9078, %v9074
    %v9743 = vpack.c.b16 %v9083, %v9079
    %v9744 = vpack.c.b16 %v9084, %v9080
    %v9745 = vpack.c.b16 %v9085, %v9081
    %v9746 = vpack.c.b16 %v9086, %v9082
    %v9747 = vpack.c.b16 %v9091, %v9087
    %v9748 = vpack.c.b16 %v9092, %v9088
    %v9749 = vpack.c.b16 %v9093, %v9089
    %v9750 = vpack.c.b16 %v9094, %v9090
    %v9751 = vpack.c.b16 %v9099, %v9095
    %v9752 = vpack.c.b16 %v9100, %v9096
    %v9753 = vpack.c.b16 %v9101, %v9097
    %v9754 = vpack.c.b16 %v9102, %v9098
    %v9755 = vpack.c.b16 %v9107, %v9103
    %v9756 = vpack.c.b16 %v9108, %v9104
    %v9757 = vpack.c.b16 %v9109, %v9105
    %v9758 = vpack.c.b16 %v9110, %v9106
    %v9759 = vpack.c.b16 %v9115, %v9111
    %v9760 = vpack.c.b16 %v9116, %v9112
    %v9761 = vpack.c.b16 %v9117, %v9113
    %v9762 = vpack.c.b16 %v9118, %v9114
    %v9763 = vpack.c.b16 %v9123, %v9119
    %v9764 = vpack.c.b16 %v9124, %v9120
    %v9765 = vpack.c.b16 %v9125, %v9121
    %v9766 = vpack.c.b16 %v9126, %v9122
    %v9767 = vpack.c.b16 %v9131, %v9127
    %v9768 = vpack.c.b16 %v9132, %v9128
    %v9769 = vpack.c.b16 %v9133, %v9129
    %v9770 = vpack.c.b16 %v9134, %v9130
    %v9771 = vpack.c.b16 %v9139, %v9135
    %v9772 = vpack.c.b16 %v9140, %v9136
    %v9773 = vpack.c.b16 %v9141, %v9137
    %v9774 = vpack.c.b16 %v9142, %v9138
    %v9775 = vpack.c.b16 %v9147, %v9143
    %v9776 = vpack.c.b16 %v9148, %v9144
    %v9777 = vpack.c.b16 %v9149, %v9145
    %v9778 = vpack.c.b16 %v9150, %v9146
    %v9779 = vpack.c.b16 %v9155, %v9151
    %v9780 = vpack.c.b16 %v9156, %v9152
    %v9781 = vpack.c.b16 %v9157, %v9153
    %v9782 = vpack.c.b16 %v9158, %v9154
    %v9783 = vpack.c.b16 %v9163, %v9159
    %v9784 = vpack.c.b16 %v9164, %v9160
    %v9785 = vpack.c.b16 %v9165, %v9161
    %v9786 = vpack.c.b16 %v9166, %v9162
    %v9787 = vpack.c.b16 %v9171, %v9167
    %v9788 = vpack.c.b16 %v9172, %v9168
    %v9789 = vpack.c.b16 %v9173, %v9169
    %v9790 = vpack.c.b16 %v9174, %v9170
    %v9791 = vpack.c.b16 %v9179, %v9175
    %v9792 = vpack.c.b16 %v9180, %v9176
    %v9793 = vpack.c.b16 %v9181, %v9177
    %v9794 = vpack.c.b16 %v9182, %v9178
    %v9795 = vpack.c.b16 %v9187, %v9183
    %v9796 = vpack.c.b16 %v9188, %v9184
    %v9797 = vpack.c.b16 %v9189, %v9185
    %v9798 = vpack.c.b16 %v9190, %v9186
    %v9799 = vpack.c.b16 %v9195, %v9191
    %v9800 = vpack.c.b16 %v9196, %v9192
    %v9801 = vpack.c.b16 %v9197, %v9193
    %v9802 = vpack.c.b16 %v9198, %v9194
    %v9803 = vpack.c.b16 %v9203, %v9199
    %v9804 = vpack.c.b16 %v9204, %v9200
    %v9805 = vpack.c.b16 %v9205, %v9201
    %v9806 = vpack.c.b16 %v9206, %v9202
    %v9807 = vpack.c.b16 %v9211, %v9207
    %v9808 = vpack.c.b16 %v9212, %v9208
    %v9809 = vpack.c.b16 %v9213, %v9209
    %v9810 = vpack.c.b16 %v9214, %v9210
    %v9811 = vpack.c.b16 %v9219, %v9215
    %v9812 = vpack.c.b16 %v9220, %v9216
    %v9813 = vpack.c.b16 %v9221, %v9217
    %v9814 = vpack.c.b16 %v9222, %v9218
    %v9815 = vpack.c.b16 %v9227, %v9223
    %v9816 = vpack.c.b16 %v9228, %v9224
    %v9817 = vpack.c.b16 %v9229, %v9225
    %v9818 = vpack.c.b16 %v9230, %v9226
    %v9819 = vpack.c.b16 %v9235, %v9231
    %v9820 = vpack.c.b16 %v9236, %v9232
    %v9821 = vpack.c.b16 %v9237, %v9233
    %v9822 = vpack.c.b16 %v9238, %v9234
    %v9823 = vpack.c.b16 %v9243, %v9239
    %v9824 = vpack.c.b16 %v9244, %v9240
    %v9825 = vpack.c.b16 %v9245, %v9241
    %v9826 = vpack.c.b16 %v9246, %v9242
    %v9827 = vpack.c.b16 %v9251, %v9247
    %v9828 = vpack.c.b16 %v9252, %v9248
    %v9829 = vpack.c.b16 %v9253, %v9249
    %v9830 = vpack.c.b16 %v9254, %v9250
    %v9831 = vpack.c.b16 %v9259, %v9255
    %v9832 = vpack.c.b16 %v9260, %v9256
    %v9833 = vpack.c.b16 %v9261, %v9257
    %v9834 = vpack.c.b16 %v9262, %v9258
    %v9835 = vpack.c.b16 %v9267, %v9263
    %v9836 = vpack.c.b16 %v9268, %v9264
    %v9837 = vpack.c.b16 %v9269, %v9265
    %v9838 = vpack.c.b16 %v9270, %v9266
    %v9839 = vpack.c.b16 %v9275, %v9271
    %v9840 = vpack.c.b16 %v9276, %v9272
    %v9841 = vpack.c.b16 %v9277, %v9273
    %v9842 = vpack.c.b16 %v9278, %v9274
    %v9843 = vpack.c.b16 %v9283, %v9279
    %v9844 = vpack.c.b16 %v9284, %v9280
    %v9845 = vpack.c.b16 %v9285, %v9281
    %v9846 = vpack.c.b16 %v9286, %v9282
    %v9847 = vpack.c.b16 %v9291, %v9287
    %v9848 = vpack.c.b16 %v9292, %v9288
    %v9849 = vpack.c.b16 %v9293, %v9289
    %v9850 = vpack.c.b16 %v9294, %v9290
    %v9851 = vpack.c.b16 %v9299, %v9295
    %v9852 = vpack.c.b16 %v9300, %v9296
    %v9853 = vpack.c.b16 %v9301, %v9297
    %v9854 = vpack.c.b16 %v9302, %v9298
    %v9855 = vpack.c.b16 %v9307, %v9303
    %v9856 = vpack.c.b16 %v9308, %v9304
    %v9857 = vpack.c.b16 %v9309, %v9305
    %v9858 = vpack.c.b16 %v9310, %v9306
    %v9859 = vpack.c.b16 %v9315, %v9311
    %v9860 = vpack.c.b16 %v9316, %v9312
    %v9861 = vpack.c.b16 %v9317, %v9313
    %v9862 = vpack.c.b16 %v9318, %v9314
    %v9863 = vpack.c.b16 %v9323, %v9319
    %v9864 = vpack.c.b16 %v9324, %v9320
    %v9865 = vpack.c.b16 %v9325, %v9321
    %v9866 = vpack.c.b16 %v9326, %v9322
    %v9867 = vpack.c.b16 %v9331, %v9327
    %v9868 = vpack.c.b16 %v9332, %v9328
    %v9869 = vpack.c.b16 %v9333, %v9329
    %v9870 = vpack.c.b16 %v9334, %v9330
    %v9871 = vpack.c.b16 %v9339, %v9335
    %v9872 = vpack.c.b16 %v9340, %v9336
    %v9873 = vpack.c.b16 %v9341, %v9337
    %v9874 = vpack.c.b16 %v9342, %v9338
    %v9875 = vpack.c.b16 %v9347, %v9343
    %v9876 = vpack.c.b16 %v9348, %v9344
    %v9877 = vpack.c.b16 %v9349, %v9345
    %v9878 = vpack.c.b16 %v9350, %v9346
    %v9879 = vpack.c.b16 %v9355, %v9351
    %v9880 = vpack.c.b16 %v9356, %v9352
    %v9881 = vpack.c.b16 %v9357, %v9353
    %v9882 = vpack.c.b16 %v9358, %v9354
    %v9883 = vpack.c.b16 %v9363, %v9359
    %v9884 = vpack.c.b16 %v9364, %v9360
    %v9885 = vpack.c.b16 %v9365, %v9361
    %v9886 = vpack.c.b16 %v9366, %v9362
    %v9887 = vpack.c.b16 %v9371, %v9367
    %v9888 = vpack.c.b16 %v9372, %v9368
    %v9889 = vpack.c.b16 %v9373, %v9369
    %v9890 = vpack.c.b16 %v9374, %v9370
    %v9891 = vpack.c.b16 %v9379, %v9375
    %v9892 = vpack.c.b16 %v9380, %v9376
    %v9893 = vpack.c.b16 %v9381, %v9377
    %v9894 = vpack.c.b16 %v9382, %v9378
    %v9895 = vpack.c.b16 %v9387, %v9383
    %v9896 = vpack.c.b16 %v9388, %v9384
    %v9897 = vpack.c.b16 %v9389, %v9385
    %v9898 = vpack.c.b16 %v9390, %v9386
    %v9899 = vpack.c.b16 %v9395, %v9391
    %v9900 = vpack.c.b16 %v9396, %v9392
    %v9901 = vpack.c.b16 %v9397, %v9393
    %v9902 = vpack.c.b16 %v9398, %v9394
    %v9903 = vpack.c.b16 %v9403, %v9399
    %v9904 = vpack.c.b16 %v9404, %v9400
    %v9905 = vpack.c.b16 %v9405, %v9401
    %v9906 = vpack.c.b16 %v9406, %v9402
    %v9907 = vpack.c.b16 %v9411, %v9407
    %v9908 = vpack.c.b16 %v9412, %v9408
    %v9909 = vpack.c.b16 %v9413, %v9409
    %v9910 = vpack.c.b16 %v9414, %v9410
    %v9911 = vpack.c.b16 %v9419, %v9415
    %v9912 = vpack.c.b16 %v9420, %v9416
    %v9913 = vpack.c.b16 %v9421, %v9417
    %v9914 = vpack.c.b16 %v9422, %v9418
    %v9915 = vpack.c.b16 %v9427, %v9423
    %v9916 = vpack.c.b16 %v9428, %v9424
    %v9917 = vpack.c.b16 %v9429, %v9425
    %v9918 = vpack.c.b16 %v9430, %v9426
    %v9919 = vpack.c.b16 %v9435, %v9431
    %v9920 = vpack.c.b16 %v9436, %v9432
    %v9921 = vpack.c.b16 %v9437, %v9433
    %v9922 = vpack.c.b16 %v9438, %v9434
    %v9923 = vpack.c.b16 %v9443, %v9439
    %v9924 = vpack.c.b16 %v9444, %v9440
    %v9925 = vpack.c.b16 %v9445, %v9441
    %v9926 = vpack.c.b16 %v9446, %v9442
    %v9927 = vpack.c.b16 %v9451, %v9447
    %v9928 = vpack.c.b16 %v9452, %v9448
    %v9929 = vpack.c.b16 %v9453, %v9449
    %v9930 = vpack.c.b16 %v9454, %v9450
    %v9931 = vpack.c.b16 %v9459, %v9455
    %v9932 = vpack.c.b16 %v9460, %v9456
    %v9933 = vpack.c.b16 %v9461, %v9457
    %v9934 = vpack.c.b16 %v9462, %v9458
    %v9935 = vpack.c.b16 %v9467, %v9463
    %v9936 = vpack.c.b16 %v9468, %v9464
    %v9937 = vpack.c.b16 %v9469, %v9465
    %v9938 = vpack.c.b16 %v9470, %v9466
    %v9939 = vpack.c.b16 %v9475, %v9471
    %v9940 = vpack.c.b16 %v9476, %v9472
    %v9941 = vpack.c.b16 %v9477, %v9473
    %v9942 = vpack.c.b16 %v9478, %v9474
    %v9943 = vpack.c.b16 %v9483, %v9479
    %v9944 = vpack.c.b16 %v9484, %v9480
    %v9945 = vpack.c.b16 %v9485, %v9481
    %v9946 = vpack.c.b16 %v9486, %v9482
    %v9947 = vpack.c.b16 %v9491, %v9487
    %v9948 = vpack.c.b16 %v9492, %v9488
    %v9949 = vpack.c.b16 %v9493, %v9489
    %v9950 = vpack.c.b16 %v9494, %v9490
    %v9951 = vpack.c.b16 %v9499, %v9495
    %v9952 = vpack.c.b16 %v9500, %v9496
    %v9953 = vpack.c.b16 %v9501, %v9497
    %v9954 = vpack.c.b16 %v9502, %v9498
    %v9955 = vpack.c.b16 %v9507, %v9503
    %v9956 = vpack.c.b16 %v9508, %v9504
    %v9957 = vpack.c.b16 %v9509, %v9505
    %v9958 = vpack.c.b16 %v9510, %v9506
    %v9959 = vpack.c.b16 %v9515, %v9511
    %v9960 = vpack.c.b16 %v9516, %v9512
    %v9961 = vpack.c.b16 %v9517, %v9513
    %v9962 = vpack.c.b16 %v9518, %v9514
    %v9963 = vpack.c.b16 %v9523, %v9519
    %v9964 = vpack.c.b16 %v9524, %v9520
    %v9965 = vpack.c.b16 %v9525, %v9521
    %v9966 = vpack.c.b16 %v9526, %v9522
    %v9967 = vpack.c.b16 %v9531, %v9527
    %v9968 = vpack.c.b16 %v9532, %v9528
    %v9969 = vpack.c.b16 %v9533, %v9529
    %v9970 = vpack.c.b16 %v9534, %v9530
    %v9971 = vpack.c.b16 %v9539, %v9535
    %v9972 = vpack.c.b16 %v9540, %v9536
    %v9973 = vpack.c.b16 %v9541, %v9537
    %v9974 = vpack.c.b16 %v9542, %v9538
    %v9975 = vpack.c.b16 %v9547, %v9543
    %v9976 = vpack.c.b16 %v9548, %v9544
    %v9977 = vpack.c.b16 %v9549, %v9545
    %v9978 = vpack.c.b16 %v9550, %v9546
    %v9979 = vpack.c.b16 %v9555, %v9551
    %v9980 = vpack.c.b16 %v9556, %v9552
    %v9981 = vpack.c.b16 %v9557, %v9553
    %v9982 = vpack.c.b16 %v9558, %v9554
    %v9983 = vpack.c.b16 %v9563, %v9559
    %v9984 = vpack.c.b16 %v9564, %v9560
    %v9985 = vpack.c.b16 %v9565, %v9561
    %v9986 = vpack.c.b16 %v9566, %v9562
    %v9987 = vpack.c.b16 %v9571, %v9567
    %v9988 = vpack.c.b16 %v9572, %v9568
    %v9989 = vpack.c.b16 %v9573, %v9569
    %v9990 = vpack.c.b16 %v9574, %v9570
    %v9991 = vpack.c.b16 %v9579, %v9575
    %v9992 = vpack.c.b16 %v9580, %v9576
    %v9993 = vpack.c.b16 %v9581, %v9577
    %v9994 = vpack.c.b16 %v9582, %v9578
    %v9995 = vpack.c.b16 %v9587, %v9583
    %v9996 = vpack.c.b16 %v9588, %v9584
    %v9997 = vpack.c.b16 %v9589, %v9585
    %v9998 = vpack.c.b16 %v9590, %v9586
    %v9999 = vpack.c.b16 %v9595, %v9591
    %v10000 = vpack.c.b16 %v9596, %v9592
    %v10001 = vpack.c.b16 %v9597, %v9593
    %v10002 = vpack.c.b16 %v9598, %v9594
    %v10003 = vpack.c.b16 %v9603, %v9599
    %v10004 = vpack.c.b16 %v9604, %v9600
    %v10005 = vpack.c.b16 %v9605, %v9601
    %v10006 = vpack.c.b16 %v9606, %v9602
    %v10007 = vpack.c.b16 %v9611, %v9607
    %v10008 = vpack.c.b16 %v9612, %v9608
    %v10009 = vpack.c.b16 %v9613, %v9609
    %v10010 = vpack.c.b16 %v9614, %v9610
    %v10011 = vpack.c.b16 %v9619, %v9615
    %v10012 = vpack.c.b16 %v9620, %v9616
    %v10013 = vpack.c.b16 %v9621, %v9617
    %v10014 = vpack.c.b16 %v9622, %v9618
    %v10015 = vpack.c.b16 %v9627, %v9623
    %v10016 = vpack.c.b16 %v9628, %v9624
    %v10017 = vpack.c.b16 %v9629, %v9625
    %v10018 = vpack.c.b16 %v9630, %v9626
    %v10019 = vpack.c.b16 %v9635, %v9631
    %v10020 = vpack.c.b16 %v9636, %v9632
    %v10021 = vpack.c.b16 %v9637, %v9633
    %v10022 = vpack.c.b16 %v9638, %v9634
    %10407 = vmatpush.bf16.msra.mxu0 %v9667
    %10408 = vmatpush.bf16.msra.mxu0 %v9663
    %10409 = vmatpush.bf16.msra.mxu0 %v9659
    %10410 = vmatpush.bf16.msra.mxu0 %v9655
    %10411 = vmatpush.bf16.msra.mxu0 %v9651
    %10412 = vmatpush.bf16.msra.mxu0 %v9647
    %10413 = vmatpush.bf16.msra.mxu0 %v9643
    %10414 = vmatpush.bf16.msra.mxu0 %v9639
    %10415 = vmatmul.bf16.gmra.mxu0 0
    %v10416 = vpop.f32.mrf.mxu0
    %v10417 = vadd.f32 0.0, %v10416
    %v10418 = vpop.f32.mrf.mxu0
    %v10419 = vadd.f32 0.0, %v10418
    %10420 = vmatmul.bf16.gmra.mxu0 %v7995
    %v10421 = vpop.f32.mrf.mxu0
    %v10422 = vadd.f32 0.0, %v10421
    %v10423 = vpop.f32.mrf.mxu0
    %v10424 = vadd.f32 0.0, %v10423
    %10425 = vmatmul.bf16.gmra.mxu0 %v8035
    %v10426 = vpop.f32.mrf.mxu0
    %v10427 = vadd.f32 0.0, %v10426
    %v10428 = vpop.f32.mrf.mxu0
    %v10429 = vadd.f32 0.0, %v10428
    %10430 = vmatmul.bf16.gmra.mxu0 %v8075
    %v10431 = vpop.f32.mrf.mxu0
    %v10432 = vadd.f32 0.0, %v10431
    %v10433 = vpop.f32.mrf.mxu0
    %v10434 = vadd.f32 0.0, %v10433
    %10435 = vdwg.mxu0
    %10436 = vmatpush.bf16.msra.mxu0 %v9699
    %10437 = vmatpush.bf16.msra.mxu0 %v9695
    %10438 = vmatpush.bf16.msra.mxu0 %v9691
    %10439 = vmatpush.bf16.msra.mxu0 %v9687
    %10440 = vmatpush.bf16.msra.mxu0 %v9683
    %10441 = vmatpush.bf16.msra.mxu0 %v9679
    %10442 = vmatpush.bf16.msra.mxu0 %v9675
    %10443 = vmatpush.bf16.msra.mxu0 %v9671
    %10444 = vmatmul.bf16.gmra.mxu0 0
    %v10445 = vpop.f32.mrf.mxu0
    %v10446 = vadd.f32 %v10417, %v10445
    %v10447 = vpop.f32.mrf.mxu0
    %v10448 = vadd.f32 %v10419, %v10447
    %10449 = vmatmul.bf16.gmra.mxu0 %v7996
    %v10450 = vpop.f32.mrf.mxu0
    %v10451 = vadd.f32 %v10422, %v10450
    %v10452 = vpop.f32.mrf.mxu0
    %v10453 = vadd.f32 %v10424, %v10452
    %10454 = vmatmul.bf16.gmra.mxu0 %v8036
    %v10455 = vpop.f32.mrf.mxu0
    %v10456 = vadd.f32 %v10427, %v10455
    %v10457 = vpop.f32.mrf.mxu0
    %v10458 = vadd.f32 %v10429, %v10457
    %10459 = vmatmul.bf16.gmra.mxu0 %v8076
    %v10460 = vpop.f32.mrf.mxu0
    %v10461 = vadd.f32 %v10432, %v10460
    %v10462 = vpop.f32.mrf.mxu0
    %v10463 = vadd.f32 %v10434, %v10462
    %10464 = vdwg.mxu0
    %10465 = vmatpush.bf16.msra.mxu0 %v9731
    %10466 = vmatpush.bf16.msra.mxu0 %v9727
    %10467 = vmatpush.bf16.msra.mxu0 %v9723
    %10468 = vmatpush.bf16.msra.mxu0 %v9719
    %10469 = vmatpush.bf16.msra.mxu0 %v9715
    %10470 = vmatpush.bf16.msra.mxu0 %v9711
    %10471 = vmatpush.bf16.msra.mxu0 %v9707
    %10472 = vmatpush.bf16.msra.mxu0 %v9703
    %10473 = vmatmul.bf16.gmra.mxu0 0
    %v10474 = vpop.f32.mrf.mxu0
    %v10475 = vadd.f32 %v10446, %v10474
    %v10476 = vpop.f32.mrf.mxu0
    %v10477 = vadd.f32 %v10448, %v10476
    %10478 = vmatmul.bf16.gmra.mxu0 %v7997
    %v10479 = vpop.f32.mrf.mxu0
    %v10480 = vadd.f32 %v10451, %v10479
    %v10481 = vpop.f32.mrf.mxu0
    %v10482 = vadd.f32 %v10453, %v10481
    %10483 = vmatmul.bf16.gmra.mxu0 %v8037
    %v10484 = vpop.f32.mrf.mxu0
    %v10485 = vadd.f32 %v10456, %v10484
    %v10486 = vpop.f32.mrf.mxu0
    %v10487 = vadd.f32 %v10458, %v10486
    %10488 = vmatmul.bf16.gmra.mxu0 %v8077
    %v10489 = vpop.f32.mrf.mxu0
    %v10490 = vadd.f32 %v10461, %v10489
    %v10491 = vpop.f32.mrf.mxu0
    %v10492 = vadd.f32 %v10463, %v10491
    %10493 = vdwg.mxu0
    %10494 = vmatpush.bf16.msra.mxu0 %v9763
    %10495 = vmatpush.bf16.msra.mxu0 %v9759
    %10496 = vmatpush.bf16.msra.mxu0 %v9755
    %10497 = vmatpush.bf16.msra.mxu0 %v9751
    %10498 = vmatpush.bf16.msra.mxu0 %v9747
    %10499 = vmatpush.bf16.msra.mxu0 %v9743
    %10500 = vmatpush.bf16.msra.mxu0 %v9739
    %10501 = vmatpush.bf16.msra.mxu0 %v9735
    %10502 = vmatmul.bf16.gmra.mxu0 0
    %v10503 = vpop.f32.mrf.mxu0
    %v10504 = vadd.f32 %v10475, %v10503
    %v10505 = vpop.f32.mrf.mxu0
    %v10506 = vadd.f32 %v10477, %v10505
    %10507 = vmatmul.bf16.gmra.mxu0 %v7998
    %v10508 = vpop.f32.mrf.mxu0
    %v10509 = vadd.f32 %v10480, %v10508
    %v10510 = vpop.f32.mrf.mxu0
    %v10511 = vadd.f32 %v10482, %v10510
    %10512 = vmatmul.bf16.gmra.mxu0 %v8038
    %v10513 = vpop.f32.mrf.mxu0
    %v10514 = vadd.f32 %v10485, %v10513
    %v10515 = vpop.f32.mrf.mxu0
    %v10516 = vadd.f32 %v10487, %v10515
    %10517 = vmatmul.bf16.gmra.mxu0 %v8078
    %v10518 = vpop.f32.mrf.mxu0
    %v10519 = vadd.f32 %v10490, %v10518
    %v10520 = vpop.f32.mrf.mxu0
    %v10521 = vadd.f32 %v10492, %v10520
    %10522 = vdwg.mxu0
    %10523 = vmatpush.bf16.msra.mxu0 %v9795
    %10524 = vmatpush.bf16.msra.mxu0 %v9791
    %10525 = vmatpush.bf16.msra.mxu0 %v9787
    %10526 = vmatpush.bf16.msra.mxu0 %v9783
    %10527 = vmatpush.bf16.msra.mxu0 %v9779
    %10528 = vmatpush.bf16.msra.mxu0 %v9775
    %10529 = vmatpush.bf16.msra.mxu0 %v9771
    %10530 = vmatpush.bf16.msra.mxu0 %v9767
    %10531 = vmatmul.bf16.gmra.mxu0 %v7975
    %v10532 = vpop.f32.mrf.mxu0
    %v10533 = vadd.f32 %v10504, %v10532
    %v10534 = vpop.f32.mrf.mxu0
    %v10535 = vadd.f32 %v10506, %v10534
    %10536 = vmatmul.bf16.gmra.mxu0 %v8015
    %v10537 = vpop.f32.mrf.mxu0
    %v10538 = vadd.f32 %v10509, %v10537
    %v10539 = vpop.f32.mrf.mxu0
    %v10540 = vadd.f32 %v10511, %v10539
    %10541 = vmatmul.bf16.gmra.mxu0 %v8055
    %v10542 = vpop.f32.mrf.mxu0
    %v10543 = vadd.f32 %v10514, %v10542
    %v10544 = vpop.f32.mrf.mxu0
    %v10545 = vadd.f32 %v10516, %v10544
    %10546 = vmatmul.bf16.gmra.mxu0 %v8095
    %v10547 = vpop.f32.mrf.mxu0
    %v10548 = vadd.f32 %v10519, %v10547
    %v10549 = vpop.f32.mrf.mxu0
    %v10550 = vadd.f32 %v10521, %v10549
    %10551 = vdwg.mxu0
    %10552 = vmatpush.bf16.msra.mxu0 %v9827
    %10553 = vmatpush.bf16.msra.mxu0 %v9823
    %10554 = vmatpush.bf16.msra.mxu0 %v9819
    %10555 = vmatpush.bf16.msra.mxu0 %v9815
    %10556 = vmatpush.bf16.msra.mxu0 %v9811
    %10557 = vmatpush.bf16.msra.mxu0 %v9807
    %10558 = vmatpush.bf16.msra.mxu0 %v9803
    %10559 = vmatpush.bf16.msra.mxu0 %v9799
    %10560 = vmatmul.bf16.gmra.mxu0 %v7976
    %v10561 = vpop.f32.mrf.mxu0
    %v10562 = vadd.f32 %v10533, %v10561
    %v10563 = vpop.f32.mrf.mxu0
    %v10564 = vadd.f32 %v10535, %v10563
    %10565 = vmatmul.bf16.gmra.mxu0 %v8016
    %v10566 = vpop.f32.mrf.mxu0
    %v10567 = vadd.f32 %v10538, %v10566
    %v10568 = vpop.f32.mrf.mxu0
    %v10569 = vadd.f32 %v10540, %v10568
    %10570 = vmatmul.bf16.gmra.mxu0 %v8056
    %v10571 = vpop.f32.mrf.mxu0
    %v10572 = vadd.f32 %v10543, %v10571
    %v10573 = vpop.f32.mrf.mxu0
    %v10574 = vadd.f32 %v10545, %v10573
    %10575 = vmatmul.bf16.gmra.mxu0 %v8096
    %v10576 = vpop.f32.mrf.mxu0
    %v10577 = vadd.f32 %v10548, %v10576
    %v10578 = vpop.f32.mrf.mxu0
    %v10579 = vadd.f32 %v10550, %v10578
    %10580 = vdwg.mxu0
    %10581 = vmatpush.bf16.msra.mxu0 %v9859
    %10582 = vmatpush.bf16.msra.mxu0 %v9855
    %10583 = vmatpush.bf16.msra.mxu0 %v9851
    %10584 = vmatpush.bf16.msra.mxu0 %v9847
    %10585 = vmatpush.bf16.msra.mxu0 %v9843
    %10586 = vmatpush.bf16.msra.mxu0 %v9839
    %10587 = vmatpush.bf16.msra.mxu0 %v9835
    %10588 = vmatpush.bf16.msra.mxu0 %v9831
    %10589 = vmatmul.bf16.gmra.mxu0 %v7977
    %v10590 = vpop.f32.mrf.mxu0
    %v10591 = vadd.f32 %v10562, %v10590
    %v10592 = vpop.f32.mrf.mxu0
    %v10593 = vadd.f32 %v10564, %v10592
    %10594 = vmatmul.bf16.gmra.mxu0 %v8017
    %v10595 = vpop.f32.mrf.mxu0
    %v10596 = vadd.f32 %v10567, %v10595
    %v10597 = vpop.f32.mrf.mxu0
    %v10598 = vadd.f32 %v10569, %v10597
    %10599 = vmatmul.bf16.gmra.mxu0 %v8057
    %v10600 = vpop.f32.mrf.mxu0
    %v10601 = vadd.f32 %v10572, %v10600
    %v10602 = vpop.f32.mrf.mxu0
    %v10603 = vadd.f32 %v10574, %v10602
    %10604 = vmatmul.bf16.gmra.mxu0 %v8097
    %v10605 = vpop.f32.mrf.mxu0
    %v10606 = vadd.f32 %v10577, %v10605
    %v10607 = vpop.f32.mrf.mxu0
    %v10608 = vadd.f32 %v10579, %v10607
    %10609 = vdwg.mxu0
    %10610 = vmatpush.bf16.msra.mxu0 %v9891
    %10611 = vmatpush.bf16.msra.mxu0 %v9887
    %10612 = vmatpush.bf16.msra.mxu0 %v9883
    %10613 = vmatpush.bf16.msra.mxu0 %v9879
    %10614 = vmatpush.bf16.msra.mxu0 %v9875
    %10615 = vmatpush.bf16.msra.mxu0 %v9871
    %10616 = vmatpush.bf16.msra.mxu0 %v9867
    %10617 = vmatpush.bf16.msra.mxu0 %v9863
    %10618 = vmatmul.bf16.gmra.mxu0 %v7978
    %v10619 = vpop.f32.mrf.mxu0
    %v10620 = vadd.f32 %v10591, %v10619
    %v10621 = vpop.f32.mrf.mxu0
    %v10622 = vadd.f32 %v10593, %v10621
    %10623 = vmatmul.bf16.gmra.mxu0 %v8018
    %v10624 = vpop.f32.mrf.mxu0
    %v10625 = vadd.f32 %v10596, %v10624
    %v10626 = vpop.f32.mrf.mxu0
    %v10627 = vadd.f32 %v10598, %v10626
    %10628 = vmatmul.bf16.gmra.mxu0 %v8058
    %v10629 = vpop.f32.mrf.mxu0
    %v10630 = vadd.f32 %v10601, %v10629
    %v10631 = vpop.f32.mrf.mxu0
    %v10632 = vadd.f32 %v10603, %v10631
    %10633 = vmatmul.bf16.gmra.mxu0 %v8098
    %v10634 = vpop.f32.mrf.mxu0
    %v10635 = vadd.f32 %v10606, %v10634
    %v10636 = vpop.f32.mrf.mxu0
    %v10637 = vadd.f32 %v10608, %v10636
    %10638 = vdwg.mxu0
    %10639 = vmatpush.bf16.msra.mxu0 %v9923
    %10640 = vmatpush.bf16.msra.mxu0 %v9919
    %10641 = vmatpush.bf16.msra.mxu0 %v9915
    %10642 = vmatpush.bf16.msra.mxu0 %v9911
    %10643 = vmatpush.bf16.msra.mxu0 %v9907
    %10644 = vmatpush.bf16.msra.mxu0 %v9903
    %10645 = vmatpush.bf16.msra.mxu0 %v9899
    %10646 = vmatpush.bf16.msra.mxu0 %v9895
    %10647 = vmatmul.bf16.gmra.mxu0 %v7995
    %v10648 = vpop.f32.mrf.mxu0
    %v10649 = vadd.f32 %v10620, %v10648
    %v10650 = vpop.f32.mrf.mxu0
    %v10651 = vadd.f32 %v10622, %v10650
    %10652 = vmatmul.bf16.gmra.mxu0 %v8035
    %v10653 = vpop.f32.mrf.mxu0
    %v10654 = vadd.f32 %v10625, %v10653
    %v10655 = vpop.f32.mrf.mxu0
    %v10656 = vadd.f32 %v10627, %v10655
    %10657 = vmatmul.bf16.gmra.mxu0 %v8075
    %v10658 = vpop.f32.mrf.mxu0
    %v10659 = vadd.f32 %v10630, %v10658
    %v10660 = vpop.f32.mrf.mxu0
    %v10661 = vadd.f32 %v10632, %v10660
    %10662 = vmatmul.bf16.gmra.mxu0 0
    %v10663 = vpop.f32.mrf.mxu0
    %v10664 = vadd.f32 %v10635, %v10663
    %v10665 = vpop.f32.mrf.mxu0
    %v10666 = vadd.f32 %v10637, %v10665
    %10667 = vdwg.mxu0
    %10668 = vmatpush.bf16.msra.mxu0 %v9955
    %10669 = vmatpush.bf16.msra.mxu0 %v9951
    %10670 = vmatpush.bf16.msra.mxu0 %v9947
    %10671 = vmatpush.bf16.msra.mxu0 %v9943
    %10672 = vmatpush.bf16.msra.mxu0 %v9939
    %10673 = vmatpush.bf16.msra.mxu0 %v9935
    %10674 = vmatpush.bf16.msra.mxu0 %v9931
    %10675 = vmatpush.bf16.msra.mxu0 %v9927
    %10676 = vmatmul.bf16.gmra.mxu0 %v7996
    %v10677 = vpop.f32.mrf.mxu0
    %v10678 = vadd.f32 %v10649, %v10677
    %v10679 = vpop.f32.mrf.mxu0
    %v10680 = vadd.f32 %v10651, %v10679
    %10681 = vmatmul.bf16.gmra.mxu0 %v8036
    %v10682 = vpop.f32.mrf.mxu0
    %v10683 = vadd.f32 %v10654, %v10682
    %v10684 = vpop.f32.mrf.mxu0
    %v10685 = vadd.f32 %v10656, %v10684
    %10686 = vmatmul.bf16.gmra.mxu0 %v8076
    %v10687 = vpop.f32.mrf.mxu0
    %v10688 = vadd.f32 %v10659, %v10687
    %v10689 = vpop.f32.mrf.mxu0
    %v10690 = vadd.f32 %v10661, %v10689
    %10691 = vmatmul.bf16.gmra.mxu0 0
    %v10692 = vpop.f32.mrf.mxu0
    %v10693 = vadd.f32 %v10664, %v10692
    %v10694 = vpop.f32.mrf.mxu0
    %v10695 = vadd.f32 %v10666, %v10694
    %10696 = vdwg.mxu0
    %10697 = vmatpush.bf16.msra.mxu0 %v9987
    %10698 = vmatpush.bf16.msra.mxu0 %v9983
    %10699 = vmatpush.bf16.msra.mxu0 %v9979
    %10700 = vmatpush.bf16.msra.mxu0 %v9975
    %10701 = vmatpush.bf16.msra.mxu0 %v9971
    %10702 = vmatpush.bf16.msra.mxu0 %v9967
    %10703 = vmatpush.bf16.msra.mxu0 %v9963
    %10704 = vmatpush.bf16.msra.mxu0 %v9959
    %10705 = vmatmul.bf16.gmra.mxu0 %v7997
    %v10706 = vpop.f32.mrf.mxu0
    %v10707 = vadd.f32 %v10678, %v10706
    %v10708 = vpop.f32.mrf.mxu0
    %v10709 = vadd.f32 %v10680, %v10708
    %10710 = vmatmul.bf16.gmra.mxu0 %v8037
    %v10711 = vpop.f32.mrf.mxu0
    %v10712 = vadd.f32 %v10683, %v10711
    %v10713 = vpop.f32.mrf.mxu0
    %v10714 = vadd.f32 %v10685, %v10713
    %10715 = vmatmul.bf16.gmra.mxu0 %v8077
    %v10716 = vpop.f32.mrf.mxu0
    %v10717 = vadd.f32 %v10688, %v10716
    %v10718 = vpop.f32.mrf.mxu0
    %v10719 = vadd.f32 %v10690, %v10718
    %10720 = vmatmul.bf16.gmra.mxu0 0
    %v10721 = vpop.f32.mrf.mxu0
    %v10722 = vadd.f32 %v10693, %v10721
    %v10723 = vpop.f32.mrf.mxu0
    %v10724 = vadd.f32 %v10695, %v10723
    %10725 = vdwg.mxu0
    %10726 = vmatpush.bf16.msra.mxu0 %v10019
    %10727 = vmatpush.bf16.msra.mxu0 %v10015
    %10728 = vmatpush.bf16.msra.mxu0 %v10011
    %10729 = vmatpush.bf16.msra.mxu0 %v10007
    %10730 = vmatpush.bf16.msra.mxu0 %v10003
    %10731 = vmatpush.bf16.msra.mxu0 %v9999
    %10732 = vmatpush.bf16.msra.mxu0 %v9995
    %10733 = vmatpush.bf16.msra.mxu0 %v9991
    %10734 = vmatmul.bf16.gmra.mxu0 %v7998
    %v10735 = vpop.f32.mrf.mxu0
    %v10736 = vadd.f32 %v10707, %v10735
    %v10737 = vpop.f32.mrf.mxu0
    %v10738 = vadd.f32 %v10709, %v10737
    %10739 = vmatmul.bf16.gmra.mxu0 %v8038
    %v10740 = vpop.f32.mrf.mxu0
    %v10741 = vadd.f32 %v10712, %v10740
    %v10742 = vpop.f32.mrf.mxu0
    %v10743 = vadd.f32 %v10714, %v10742
    %10744 = vmatmul.bf16.gmra.mxu0 %v8078
    %v10745 = vpop.f32.mrf.mxu0
    %v10746 = vadd.f32 %v10717, %v10745
    %v10747 = vpop.f32.mrf.mxu0
    %v10748 = vadd.f32 %v10719, %v10747
    %10749 = vmatmul.bf16.gmra.mxu0 0
    %v10750 = vpop.f32.mrf.mxu0
    %v10751 = vadd.f32 %v10722, %v10750
    %v10752 = vpop.f32.mrf.mxu0
    %v10753 = vadd.f32 %v10724, %v10752
    %10754 = vdwg.mxu0
    %10755 = vmatpush.bf16.msra.mxu0 %v9668
    %10756 = vmatpush.bf16.msra.mxu0 %v9664
    %10757 = vmatpush.bf16.msra.mxu0 %v9660
    %10758 = vmatpush.bf16.msra.mxu0 %v9656
    %10759 = vmatpush.bf16.msra.mxu0 %v9652
    %10760 = vmatpush.bf16.msra.mxu0 %v9648
    %10761 = vmatpush.bf16.msra.mxu0 %v9644
    %10762 = vmatpush.bf16.msra.mxu0 %v9640
    %10763 = vmatmul.bf16.gmra.mxu0 0
    %v10764 = vpop.f32.mrf.mxu0
    %v10765 = vadd.f32 0.0, %v10764
    %v10766 = vpop.f32.mrf.mxu0
    %v10767 = vadd.f32 0.0, %v10766
    %10768 = vmatmul.bf16.gmra.mxu0 %v7995
    %v10769 = vpop.f32.mrf.mxu0
    %v10770 = vadd.f32 0.0, %v10769
    %v10771 = vpop.f32.mrf.mxu0
    %v10772 = vadd.f32 0.0, %v10771
    %10773 = vmatmul.bf16.gmra.mxu0 %v8035
    %v10774 = vpop.f32.mrf.mxu0
    %v10775 = vadd.f32 0.0, %v10774
    %v10776 = vpop.f32.mrf.mxu0
    %v10777 = vadd.f32 0.0, %v10776
    %10778 = vmatmul.bf16.gmra.mxu0 %v8075
    %v10779 = vpop.f32.mrf.mxu0
    %v10780 = vadd.f32 0.0, %v10779
    %v10781 = vpop.f32.mrf.mxu0
    %v10782 = vadd.f32 0.0, %v10781
    %10783 = vdwg.mxu0
    %10784 = vmatpush.bf16.msra.mxu0 %v9700
    %10785 = vmatpush.bf16.msra.mxu0 %v9696
    %10786 = vmatpush.bf16.msra.mxu0 %v9692
    %10787 = vmatpush.bf16.msra.mxu0 %v9688
    %10788 = vmatpush.bf16.msra.mxu0 %v9684
    %10789 = vmatpush.bf16.msra.mxu0 %v9680
    %10790 = vmatpush.bf16.msra.mxu0 %v9676
    %10791 = vmatpush.bf16.msra.mxu0 %v9672
    %10792 = vmatmul.bf16.gmra.mxu0 0
    %v10793 = vpop.f32.mrf.mxu0
    %v10794 = vadd.f32 %v10765, %v10793
    %v10795 = vpop.f32.mrf.mxu0
    %v10796 = vadd.f32 %v10767, %v10795
    %10797 = vmatmul.bf16.gmra.mxu0 %v7996
    %v10798 = vpop.f32.mrf.mxu0
    %v10799 = vadd.f32 %v10770, %v10798
    %v10800 = vpop.f32.mrf.mxu0
    %v10801 = vadd.f32 %v10772, %v10800
    %10802 = vmatmul.bf16.gmra.mxu0 %v8036
    %v10803 = vpop.f32.mrf.mxu0
    %v10804 = vadd.f32 %v10775, %v10803
    %v10805 = vpop.f32.mrf.mxu0
    %v10806 = vadd.f32 %v10777, %v10805
    %10807 = vmatmul.bf16.gmra.mxu0 %v8076
    %v10808 = vpop.f32.mrf.mxu0
    %v10809 = vadd.f32 %v10780, %v10808
    %v10810 = vpop.f32.mrf.mxu0
    %v10811 = vadd.f32 %v10782, %v10810
    %10812 = vdwg.mxu0
    %10813 = vmatpush.bf16.msra.mxu0 %v9732
    %10814 = vmatpush.bf16.msra.mxu0 %v9728
    %10815 = vmatpush.bf16.msra.mxu0 %v9724
    %10816 = vmatpush.bf16.msra.mxu0 %v9720
    %10817 = vmatpush.bf16.msra.mxu0 %v9716
    %10818 = vmatpush.bf16.msra.mxu0 %v9712
    %10819 = vmatpush.bf16.msra.mxu0 %v9708
    %10820 = vmatpush.bf16.msra.mxu0 %v9704
    %10821 = vmatmul.bf16.gmra.mxu0 0
    %v10822 = vpop.f32.mrf.mxu0
    %v10823 = vadd.f32 %v10794, %v10822
    %v10824 = vpop.f32.mrf.mxu0
    %v10825 = vadd.f32 %v10796, %v10824
    %10826 = vmatmul.bf16.gmra.mxu0 %v7997
    %v10827 = vpop.f32.mrf.mxu0
    %v10828 = vadd.f32 %v10799, %v10827
    %v10829 = vpop.f32.mrf.mxu0
    %v10830 = vadd.f32 %v10801, %v10829
    %10831 = vmatmul.bf16.gmra.mxu0 %v8037
    %v10832 = vpop.f32.mrf.mxu0
    %v10833 = vadd.f32 %v10804, %v10832
    %v10834 = vpop.f32.mrf.mxu0
    %v10835 = vadd.f32 %v10806, %v10834
    %10836 = vmatmul.bf16.gmra.mxu0 %v8077
    %v10837 = vpop.f32.mrf.mxu0
    %v10838 = vadd.f32 %v10809, %v10837
    %v10839 = vpop.f32.mrf.mxu0
    %v10840 = vadd.f32 %v10811, %v10839
    %10841 = vdwg.mxu0
    %10842 = vmatpush.bf16.msra.mxu0 %v9764
    %10843 = vmatpush.bf16.msra.mxu0 %v9760
    %10844 = vmatpush.bf16.msra.mxu0 %v9756
    %10845 = vmatpush.bf16.msra.mxu0 %v9752
    %10846 = vmatpush.bf16.msra.mxu0 %v9748
    %10847 = vmatpush.bf16.msra.mxu0 %v9744
    %10848 = vmatpush.bf16.msra.mxu0 %v9740
    %10849 = vmatpush.bf16.msra.mxu0 %v9736
    %10850 = vmatmul.bf16.gmra.mxu0 0
    %v10851 = vpop.f32.mrf.mxu0
    %v10852 = vadd.f32 %v10823, %v10851
    %v10853 = vpop.f32.mrf.mxu0
    %v10854 = vadd.f32 %v10825, %v10853
    %10855 = vmatmul.bf16.gmra.mxu0 %v7998
    %v10856 = vpop.f32.mrf.mxu0
    %v10857 = vadd.f32 %v10828, %v10856
    %v10858 = vpop.f32.mrf.mxu0
    %v10859 = vadd.f32 %v10830, %v10858
    %10860 = vmatmul.bf16.gmra.mxu0 %v8038
    %v10861 = vpop.f32.mrf.mxu0
    %v10862 = vadd.f32 %v10833, %v10861
    %v10863 = vpop.f32.mrf.mxu0
    %v10864 = vadd.f32 %v10835, %v10863
    %10865 = vmatmul.bf16.gmra.mxu0 %v8078
    %v10866 = vpop.f32.mrf.mxu0
    %v10867 = vadd.f32 %v10838, %v10866
    %v10868 = vpop.f32.mrf.mxu0
    %v10869 = vadd.f32 %v10840, %v10868
    %10870 = vdwg.mxu0
    %10871 = vmatpush.bf16.msra.mxu0 %v9796
    %10872 = vmatpush.bf16.msra.mxu0 %v9792
    %10873 = vmatpush.bf16.msra.mxu0 %v9788
    %10874 = vmatpush.bf16.msra.mxu0 %v9784
    %10875 = vmatpush.bf16.msra.mxu0 %v9780
    %10876 = vmatpush.bf16.msra.mxu0 %v9776
    %10877 = vmatpush.bf16.msra.mxu0 %v9772
    %10878 = vmatpush.bf16.msra.mxu0 %v9768
    %10879 = vmatmul.bf16.gmra.mxu0 %v7975
    %v10880 = vpop.f32.mrf.mxu0
    %v10881 = vadd.f32 %v10852, %v10880
    %v10882 = vpop.f32.mrf.mxu0
    %v10883 = vadd.f32 %v10854, %v10882
    %10884 = vmatmul.bf16.gmra.mxu0 %v8015
    %v10885 = vpop.f32.mrf.mxu0
    %v10886 = vadd.f32 %v10857, %v10885
    %v10887 = vpop.f32.mrf.mxu0
    %v10888 = vadd.f32 %v10859, %v10887
    %10889 = vmatmul.bf16.gmra.mxu0 %v8055
    %v10890 = vpop.f32.mrf.mxu0
    %v10891 = vadd.f32 %v10862, %v10890
    %v10892 = vpop.f32.mrf.mxu0
    %v10893 = vadd.f32 %v10864, %v10892
    %10894 = vmatmul.bf16.gmra.mxu0 %v8095
    %v10895 = vpop.f32.mrf.mxu0
    %v10896 = vadd.f32 %v10867, %v10895
    %v10897 = vpop.f32.mrf.mxu0
    %v10898 = vadd.f32 %v10869, %v10897
    %10899 = vdwg.mxu0
    %10900 = vmatpush.bf16.msra.mxu0 %v9828
    %10901 = vmatpush.bf16.msra.mxu0 %v9824
    %10902 = vmatpush.bf16.msra.mxu0 %v9820
    %10903 = vmatpush.bf16.msra.mxu0 %v9816
    %10904 = vmatpush.bf16.msra.mxu0 %v9812
    %10905 = vmatpush.bf16.msra.mxu0 %v9808
    %10906 = vmatpush.bf16.msra.mxu0 %v9804
    %10907 = vmatpush.bf16.msra.mxu0 %v9800
    %10908 = vmatmul.bf16.gmra.mxu0 %v7976
    %v10909 = vpop.f32.mrf.mxu0
    %v10910 = vadd.f32 %v10881, %v10909
    %v10911 = vpop.f32.mrf.mxu0
    %v10912 = vadd.f32 %v10883, %v10911
    %10913 = vmatmul.bf16.gmra.mxu0 %v8016
    %v10914 = vpop.f32.mrf.mxu0
    %v10915 = vadd.f32 %v10886, %v10914
    %v10916 = vpop.f32.mrf.mxu0
    %v10917 = vadd.f32 %v10888, %v10916
    %10918 = vmatmul.bf16.gmra.mxu0 %v8056
    %v10919 = vpop.f32.mrf.mxu0
    %v10920 = vadd.f32 %v10891, %v10919
    %v10921 = vpop.f32.mrf.mxu0
    %v10922 = vadd.f32 %v10893, %v10921
    %10923 = vmatmul.bf16.gmra.mxu0 %v8096
    %v10924 = vpop.f32.mrf.mxu0
    %v10925 = vadd.f32 %v10896, %v10924
    %v10926 = vpop.f32.mrf.mxu0
    %v10927 = vadd.f32 %v10898, %v10926
    %10928 = vdwg.mxu0
    %10929 = vmatpush.bf16.msra.mxu0 %v9860
    %10930 = vmatpush.bf16.msra.mxu0 %v9856
    %10931 = vmatpush.bf16.msra.mxu0 %v9852
    %10932 = vmatpush.bf16.msra.mxu0 %v9848
    %10933 = vmatpush.bf16.msra.mxu0 %v9844
    %10934 = vmatpush.bf16.msra.mxu0 %v9840
    %10935 = vmatpush.bf16.msra.mxu0 %v9836
    %10936 = vmatpush.bf16.msra.mxu0 %v9832
    %10937 = vmatmul.bf16.gmra.mxu0 %v7977
    %v10938 = vpop.f32.mrf.mxu0
    %v10939 = vadd.f32 %v10910, %v10938
    %v10940 = vpop.f32.mrf.mxu0
    %v10941 = vadd.f32 %v10912, %v10940
    %10942 = vmatmul.bf16.gmra.mxu0 %v8017
    %v10943 = vpop.f32.mrf.mxu0
    %v10944 = vadd.f32 %v10915, %v10943
    %v10945 = vpop.f32.mrf.mxu0
    %v10946 = vadd.f32 %v10917, %v10945
    %10947 = vmatmul.bf16.gmra.mxu0 %v8057
    %v10948 = vpop.f32.mrf.mxu0
    %v10949 = vadd.f32 %v10920, %v10948
    %v10950 = vpop.f32.mrf.mxu0
    %v10951 = vadd.f32 %v10922, %v10950
    %10952 = vmatmul.bf16.gmra.mxu0 %v8097
    %v10953 = vpop.f32.mrf.mxu0
    %v10954 = vadd.f32 %v10925, %v10953
    %v10955 = vpop.f32.mrf.mxu0
    %v10956 = vadd.f32 %v10927, %v10955
    %10957 = vdwg.mxu0
    %10958 = vmatpush.bf16.msra.mxu0 %v9892
    %10959 = vmatpush.bf16.msra.mxu0 %v9888
    %10960 = vmatpush.bf16.msra.mxu0 %v9884
    %10961 = vmatpush.bf16.msra.mxu0 %v9880
    %10962 = vmatpush.bf16.msra.mxu0 %v9876
    %10963 = vmatpush.bf16.msra.mxu0 %v9872
    %10964 = vmatpush.bf16.msra.mxu0 %v9868
    %10965 = vmatpush.bf16.msra.mxu0 %v9864
    %10966 = vmatmul.bf16.gmra.mxu0 %v7978
    %v10967 = vpop.f32.mrf.mxu0
    %v10968 = vadd.f32 %v10939, %v10967
    %v10969 = vpop.f32.mrf.mxu0
    %v10970 = vadd.f32 %v10941, %v10969
    %10971 = vmatmul.bf16.gmra.mxu0 %v8018
    %v10972 = vpop.f32.mrf.mxu0
    %v10973 = vadd.f32 %v10944, %v10972
    %v10974 = vpop.f32.mrf.mxu0
    %v10975 = vadd.f32 %v10946, %v10974
    %10976 = vmatmul.bf16.gmra.mxu0 %v8058
    %v10977 = vpop.f32.mrf.mxu0
    %v10978 = vadd.f32 %v10949, %v10977
    %v10979 = vpop.f32.mrf.mxu0
    %v10980 = vadd.f32 %v10951, %v10979
    %10981 = vmatmul.bf16.gmra.mxu0 %v8098
    %v10982 = vpop.f32.mrf.mxu0
    %v10983 = vadd.f32 %v10954, %v10982
    %v10984 = vpop.f32.mrf.mxu0
    %v10985 = vadd.f32 %v10956, %v10984
    %10986 = vdwg.mxu0
    %10987 = vmatpush.bf16.msra.mxu0 %v9924
    %10988 = vmatpush.bf16.msra.mxu0 %v9920
    %10989 = vmatpush.bf16.msra.mxu0 %v9916
    %10990 = vmatpush.bf16.msra.mxu0 %v9912
    %10991 = vmatpush.bf16.msra.mxu0 %v9908
    %10992 = vmatpush.bf16.msra.mxu0 %v9904
    %10993 = vmatpush.bf16.msra.mxu0 %v9900
    %10994 = vmatpush.bf16.msra.mxu0 %v9896
    %10995 = vmatmul.bf16.gmra.mxu0 %v7995
    %v10996 = vpop.f32.mrf.mxu0
    %v10997 = vadd.f32 %v10968, %v10996
    %v10998 = vpop.f32.mrf.mxu0
    %v10999 = vadd.f32 %v10970, %v10998
    %11000 = vmatmul.bf16.gmra.mxu0 %v8035
    %v11001 = vpop.f32.mrf.mxu0
    %v11002 = vadd.f32 %v10973, %v11001
    %v11003 = vpop.f32.mrf.mxu0
    %v11004 = vadd.f32 %v10975, %v11003
    %11005 = vmatmul.bf16.gmra.mxu0 %v8075
    %v11006 = vpop.f32.mrf.mxu0
    %v11007 = vadd.f32 %v10978, %v11006
    %v11008 = vpop.f32.mrf.mxu0
    %v11009 = vadd.f32 %v10980, %v11008
    %11010 = vmatmul.bf16.gmra.mxu0 0
    %v11011 = vpop.f32.mrf.mxu0
    %v11012 = vadd.f32 %v10983, %v11011
    %v11013 = vpop.f32.mrf.mxu0
    %v11014 = vadd.f32 %v10985, %v11013
    %11015 = vdwg.mxu0
    %11016 = vmatpush.bf16.msra.mxu0 %v9956
    %11017 = vmatpush.bf16.msra.mxu0 %v9952
    %11018 = vmatpush.bf16.msra.mxu0 %v9948
    %11019 = vmatpush.bf16.msra.mxu0 %v9944
    %11020 = vmatpush.bf16.msra.mxu0 %v9940
    %11021 = vmatpush.bf16.msra.mxu0 %v9936
    %11022 = vmatpush.bf16.msra.mxu0 %v9932
    %11023 = vmatpush.bf16.msra.mxu0 %v9928
    %11024 = vmatmul.bf16.gmra.mxu0 %v7996
    %v11025 = vpop.f32.mrf.mxu0
    %v11026 = vadd.f32 %v10997, %v11025
    %v11027 = vpop.f32.mrf.mxu0
    %v11028 = vadd.f32 %v10999, %v11027
    %11029 = vmatmul.bf16.gmra.mxu0 %v8036
    %v11030 = vpop.f32.mrf.mxu0
    %v11031 = vadd.f32 %v11002, %v11030
    %v11032 = vpop.f32.mrf.mxu0
    %v11033 = vadd.f32 %v11004, %v11032
    %11034 = vmatmul.bf16.gmra.mxu0 %v8076
    %v11035 = vpop.f32.mrf.mxu0
    %v11036 = vadd.f32 %v11007, %v11035
    %v11037 = vpop.f32.mrf.mxu0
    %v11038 = vadd.f32 %v11009, %v11037
    %11039 = vmatmul.bf16.gmra.mxu0 0
    %v11040 = vpop.f32.mrf.mxu0
    %v11041 = vadd.f32 %v11012, %v11040
    %v11042 = vpop.f32.mrf.mxu0
    %v11043 = vadd.f32 %v11014, %v11042
    %11044 = vdwg.mxu0
    %11045 = vmatpush.bf16.msra.mxu0 %v9988
    %11046 = vmatpush.bf16.msra.mxu0 %v9984
    %11047 = vmatpush.bf16.msra.mxu0 %v9980
    %11048 = vmatpush.bf16.msra.mxu0 %v9976
    %11049 = vmatpush.bf16.msra.mxu0 %v9972
    %11050 = vmatpush.bf16.msra.mxu0 %v9968
    %11051 = vmatpush.bf16.msra.mxu0 %v9964
    %11052 = vmatpush.bf16.msra.mxu0 %v9960
    %11053 = vmatmul.bf16.gmra.mxu0 %v7997
    %v11054 = vpop.f32.mrf.mxu0
    %v11055 = vadd.f32 %v11026, %v11054
    %v11056 = vpop.f32.mrf.mxu0
    %v11057 = vadd.f32 %v11028, %v11056
    %11058 = vmatmul.bf16.gmra.mxu0 %v8037
    %v11059 = vpop.f32.mrf.mxu0
    %v11060 = vadd.f32 %v11031, %v11059
    %v11061 = vpop.f32.mrf.mxu0
    %v11062 = vadd.f32 %v11033, %v11061
    %11063 = vmatmul.bf16.gmra.mxu0 %v8077
    %v11064 = vpop.f32.mrf.mxu0
    %v11065 = vadd.f32 %v11036, %v11064
    %v11066 = vpop.f32.mrf.mxu0
    %v11067 = vadd.f32 %v11038, %v11066
    %11068 = vmatmul.bf16.gmra.mxu0 0
    %v11069 = vpop.f32.mrf.mxu0
    %v11070 = vadd.f32 %v11041, %v11069
    %v11071 = vpop.f32.mrf.mxu0
    %v11072 = vadd.f32 %v11043, %v11071
    %11073 = vdwg.mxu0
    %11074 = vmatpush.bf16.msra.mxu0 %v10020
    %11075 = vmatpush.bf16.msra.mxu0 %v10016
    %11076 = vmatpush.bf16.msra.mxu0 %v10012
    %11077 = vmatpush.bf16.msra.mxu0 %v10008
    %11078 = vmatpush.bf16.msra.mxu0 %v10004
    %11079 = vmatpush.bf16.msra.mxu0 %v10000
    %11080 = vmatpush.bf16.msra.mxu0 %v9996
    %11081 = vmatpush.bf16.msra.mxu0 %v9992
    %11082 = vmatmul.bf16.gmra.mxu0 %v7998
    %v11083 = vpop.f32.mrf.mxu0
    %v11084 = vadd.f32 %v11055, %v11083
    %v11085 = vpop.f32.mrf.mxu0
    %v11086 = vadd.f32 %v11057, %v11085
    %11087 = vmatmul.bf16.gmra.mxu0 %v8038
    %v11088 = vpop.f32.mrf.mxu0
    %v11089 = vadd.f32 %v11060, %v11088
    %v11090 = vpop.f32.mrf.mxu0
    %v11091 = vadd.f32 %v11062, %v11090
    %11092 = vmatmul.bf16.gmra.mxu0 %v8078
    %v11093 = vpop.f32.mrf.mxu0
    %v11094 = vadd.f32 %v11065, %v11093
    %v11095 = vpop.f32.mrf.mxu0
    %v11096 = vadd.f32 %v11067, %v11095
    %11097 = vmatmul.bf16.gmra.mxu0 0
    %v11098 = vpop.f32.mrf.mxu0
    %v11099 = vadd.f32 %v11070, %v11098
    %v11100 = vpop.f32.mrf.mxu0
    %v11101 = vadd.f32 %v11072, %v11100
    %11102 = vdwg.mxu0
    %11103 = vmatpush.bf16.msra.mxu0 %v9669
    %11104 = vmatpush.bf16.msra.mxu0 %v9665
    %11105 = vmatpush.bf16.msra.mxu0 %v9661
    %11106 = vmatpush.bf16.msra.mxu0 %v9657
    %11107 = vmatpush.bf16.msra.mxu0 %v9653
    %11108 = vmatpush.bf16.msra.mxu0 %v9649
    %11109 = vmatpush.bf16.msra.mxu0 %v9645
    %11110 = vmatpush.bf16.msra.mxu0 %v9641
    %11111 = vmatmul.bf16.gmra.mxu0 0
    %v11112 = vpop.f32.mrf.mxu0
    %v11113 = vadd.f32 0.0, %v11112
    %v11114 = vpop.f32.mrf.mxu0
    %v11115 = vadd.f32 0.0, %v11114
    %11116 = vmatmul.bf16.gmra.mxu0 %v7995
    %v11117 = vpop.f32.mrf.mxu0
    %v11118 = vadd.f32 0.0, %v11117
    %v11119 = vpop.f32.mrf.mxu0
    %v11120 = vadd.f32 0.0, %v11119
    %11121 = vmatmul.bf16.gmra.mxu0 %v8035
    %v11122 = vpop.f32.mrf.mxu0
    %v11123 = vadd.f32 0.0, %v11122
    %v11124 = vpop.f32.mrf.mxu0
    %v11125 = vadd.f32 0.0, %v11124
    %11126 = vmatmul.bf16.gmra.mxu0 %v8075
    %v11127 = vpop.f32.mrf.mxu0
    %v11128 = vadd.f32 0.0, %v11127
    %v11129 = vpop.f32.mrf.mxu0
    %v11130 = vadd.f32 0.0, %v11129
    %11131 = vdwg.mxu0
    %11132 = vmatpush.bf16.msra.mxu0 %v9701
    %11133 = vmatpush.bf16.msra.mxu0 %v9697
    %11134 = vmatpush.bf16.msra.mxu0 %v9693
    %11135 = vmatpush.bf16.msra.mxu0 %v9689
    %11136 = vmatpush.bf16.msra.mxu0 %v9685
    %11137 = vmatpush.bf16.msra.mxu0 %v9681
    %11138 = vmatpush.bf16.msra.mxu0 %v9677
    %11139 = vmatpush.bf16.msra.mxu0 %v9673
    %11140 = vmatmul.bf16.gmra.mxu0 0
    %v11141 = vpop.f32.mrf.mxu0
    %v11142 = vadd.f32 %v11113, %v11141
    %v11143 = vpop.f32.mrf.mxu0
    %v11144 = vadd.f32 %v11115, %v11143
    %11145 = vmatmul.bf16.gmra.mxu0 %v7996
    %v11146 = vpop.f32.mrf.mxu0
    %v11147 = vadd.f32 %v11118, %v11146
    %v11148 = vpop.f32.mrf.mxu0
    %v11149 = vadd.f32 %v11120, %v11148
    %11150 = vmatmul.bf16.gmra.mxu0 %v8036
    %v11151 = vpop.f32.mrf.mxu0
    %v11152 = vadd.f32 %v11123, %v11151
    %v11153 = vpop.f32.mrf.mxu0
    %v11154 = vadd.f32 %v11125, %v11153
    %11155 = vmatmul.bf16.gmra.mxu0 %v8076
    %v11156 = vpop.f32.mrf.mxu0
    %v11157 = vadd.f32 %v11128, %v11156
    %v11158 = vpop.f32.mrf.mxu0
    %v11159 = vadd.f32 %v11130, %v11158
    %11160 = vdwg.mxu0
    %11161 = vmatpush.bf16.msra.mxu0 %v9733
    %11162 = vmatpush.bf16.msra.mxu0 %v9729
    %11163 = vmatpush.bf16.msra.mxu0 %v9725
    %11164 = vmatpush.bf16.msra.mxu0 %v9721
    %11165 = vmatpush.bf16.msra.mxu0 %v9717
    %11166 = vmatpush.bf16.msra.mxu0 %v9713
    %11167 = vmatpush.bf16.msra.mxu0 %v9709
    %11168 = vmatpush.bf16.msra.mxu0 %v9705
    %11169 = vmatmul.bf16.gmra.mxu0 0
    %v11170 = vpop.f32.mrf.mxu0
    %v11171 = vadd.f32 %v11142, %v11170
    %v11172 = vpop.f32.mrf.mxu0
    %v11173 = vadd.f32 %v11144, %v11172
    %11174 = vmatmul.bf16.gmra.mxu0 %v7997
    %v11175 = vpop.f32.mrf.mxu0
    %v11176 = vadd.f32 %v11147, %v11175
    %v11177 = vpop.f32.mrf.mxu0
    %v11178 = vadd.f32 %v11149, %v11177
    %11179 = vmatmul.bf16.gmra.mxu0 %v8037
    %v11180 = vpop.f32.mrf.mxu0
    %v11181 = vadd.f32 %v11152, %v11180
    %v11182 = vpop.f32.mrf.mxu0
    %v11183 = vadd.f32 %v11154, %v11182
    %11184 = vmatmul.bf16.gmra.mxu0 %v8077
    %v11185 = vpop.f32.mrf.mxu0
    %v11186 = vadd.f32 %v11157, %v11185
    %v11187 = vpop.f32.mrf.mxu0
    %v11188 = vadd.f32 %v11159, %v11187
    %11189 = vdwg.mxu0
    %11190 = vmatpush.bf16.msra.mxu0 %v9765
    %11191 = vmatpush.bf16.msra.mxu0 %v9761
    %11192 = vmatpush.bf16.msra.mxu0 %v9757
    %11193 = vmatpush.bf16.msra.mxu0 %v9753
    %11194 = vmatpush.bf16.msra.mxu0 %v9749
    %11195 = vmatpush.bf16.msra.mxu0 %v9745
    %11196 = vmatpush.bf16.msra.mxu0 %v9741
    %11197 = vmatpush.bf16.msra.mxu0 %v9737
    %11198 = vmatmul.bf16.gmra.mxu0 0
    %v11199 = vpop.f32.mrf.mxu0
    %v11200 = vadd.f32 %v11171, %v11199
    %v11201 = vpop.f32.mrf.mxu0
    %v11202 = vadd.f32 %v11173, %v11201
    %11203 = vmatmul.bf16.gmra.mxu0 %v7998
    %v11204 = vpop.f32.mrf.mxu0
    %v11205 = vadd.f32 %v11176, %v11204
    %v11206 = vpop.f32.mrf.mxu0
    %v11207 = vadd.f32 %v11178, %v11206
    %11208 = vmatmul.bf16.gmra.mxu0 %v8038
    %v11209 = vpop.f32.mrf.mxu0
    %v11210 = vadd.f32 %v11181, %v11209
    %v11211 = vpop.f32.mrf.mxu0
    %v11212 = vadd.f32 %v11183, %v11211
    %11213 = vmatmul.bf16.gmra.mxu0 %v8078
    %v11214 = vpop.f32.mrf.mxu0
    %v11215 = vadd.f32 %v11186, %v11214
    %v11216 = vpop.f32.mrf.mxu0
    %v11217 = vadd.f32 %v11188, %v11216
    %11218 = vdwg.mxu0
    %11219 = vmatpush.bf16.msra.mxu0 %v9797
    %11220 = vmatpush.bf16.msra.mxu0 %v9793
    %11221 = vmatpush.bf16.msra.mxu0 %v9789
    %11222 = vmatpush.bf16.msra.mxu0 %v9785
    %11223 = vmatpush.bf16.msra.mxu0 %v9781
    %11224 = vmatpush.bf16.msra.mxu0 %v9777
    %11225 = vmatpush.bf16.msra.mxu0 %v9773
    %11226 = vmatpush.bf16.msra.mxu0 %v9769
    %11227 = vmatmul.bf16.gmra.mxu0 %v7975
    %v11228 = vpop.f32.mrf.mxu0
    %v11229 = vadd.f32 %v11200, %v11228
    %v11230 = vpop.f32.mrf.mxu0
    %v11231 = vadd.f32 %v11202, %v11230
    %11232 = vmatmul.bf16.gmra.mxu0 %v8015
    %v11233 = vpop.f32.mrf.mxu0
    %v11234 = vadd.f32 %v11205, %v11233
    %v11235 = vpop.f32.mrf.mxu0
    %v11236 = vadd.f32 %v11207, %v11235
    %11237 = vmatmul.bf16.gmra.mxu0 %v8055
    %v11238 = vpop.f32.mrf.mxu0
    %v11239 = vadd.f32 %v11210, %v11238
    %v11240 = vpop.f32.mrf.mxu0
    %v11241 = vadd.f32 %v11212, %v11240
    %11242 = vmatmul.bf16.gmra.mxu0 %v8095
    %v11243 = vpop.f32.mrf.mxu0
    %v11244 = vadd.f32 %v11215, %v11243
    %v11245 = vpop.f32.mrf.mxu0
    %v11246 = vadd.f32 %v11217, %v11245
    %11247 = vdwg.mxu0
    %11248 = vmatpush.bf16.msra.mxu0 %v9829
    %11249 = vmatpush.bf16.msra.mxu0 %v9825
    %11250 = vmatpush.bf16.msra.mxu0 %v9821
    %11251 = vmatpush.bf16.msra.mxu0 %v9817
    %11252 = vmatpush.bf16.msra.mxu0 %v9813
    %11253 = vmatpush.bf16.msra.mxu0 %v9809
    %11254 = vmatpush.bf16.msra.mxu0 %v9805
    %11255 = vmatpush.bf16.msra.mxu0 %v9801
    %11256 = vmatmul.bf16.gmra.mxu0 %v7976
    %v11257 = vpop.f32.mrf.mxu0
    %v11258 = vadd.f32 %v11229, %v11257
    %v11259 = vpop.f32.mrf.mxu0
    %v11260 = vadd.f32 %v11231, %v11259
    %11261 = vmatmul.bf16.gmra.mxu0 %v8016
    %v11262 = vpop.f32.mrf.mxu0
    %v11263 = vadd.f32 %v11234, %v11262
    %v11264 = vpop.f32.mrf.mxu0
    %v11265 = vadd.f32 %v11236, %v11264
    %11266 = vmatmul.bf16.gmra.mxu0 %v8056
    %v11267 = vpop.f32.mrf.mxu0
    %v11268 = vadd.f32 %v11239, %v11267
    %v11269 = vpop.f32.mrf.mxu0
    %v11270 = vadd.f32 %v11241, %v11269
    %11271 = vmatmul.bf16.gmra.mxu0 %v8096
    %v11272 = vpop.f32.mrf.mxu0
    %v11273 = vadd.f32 %v11244, %v11272
    %v11274 = vpop.f32.mrf.mxu0
    %v11275 = vadd.f32 %v11246, %v11274
    %11276 = vdwg.mxu0
    %11277 = vmatpush.bf16.msra.mxu0 %v9861
    %11278 = vmatpush.bf16.msra.mxu0 %v9857
    %11279 = vmatpush.bf16.msra.mxu0 %v9853
    %11280 = vmatpush.bf16.msra.mxu0 %v9849
    %11281 = vmatpush.bf16.msra.mxu0 %v9845
    %11282 = vmatpush.bf16.msra.mxu0 %v9841
    %11283 = vmatpush.bf16.msra.mxu0 %v9837
    %11284 = vmatpush.bf16.msra.mxu0 %v9833
    %11285 = vmatmul.bf16.gmra.mxu0 %v7977
    %v11286 = vpop.f32.mrf.mxu0
    %v11287 = vadd.f32 %v11258, %v11286
    %v11288 = vpop.f32.mrf.mxu0
    %v11289 = vadd.f32 %v11260, %v11288
    %11290 = vmatmul.bf16.gmra.mxu0 %v8017
    %v11291 = vpop.f32.mrf.mxu0
    %v11292 = vadd.f32 %v11263, %v11291
    %v11293 = vpop.f32.mrf.mxu0
    %v11294 = vadd.f32 %v11265, %v11293
    %11295 = vmatmul.bf16.gmra.mxu0 %v8057
    %v11296 = vpop.f32.mrf.mxu0
    %v11297 = vadd.f32 %v11268, %v11296
    %v11298 = vpop.f32.mrf.mxu0
    %v11299 = vadd.f32 %v11270, %v11298
    %11300 = vmatmul.bf16.gmra.mxu0 %v8097
    %v11301 = vpop.f32.mrf.mxu0
    %v11302 = vadd.f32 %v11273, %v11301
    %v11303 = vpop.f32.mrf.mxu0
    %v11304 = vadd.f32 %v11275, %v11303
    %11305 = vdwg.mxu0
    %11306 = vmatpush.bf16.msra.mxu0 %v9893
    %11307 = vmatpush.bf16.msra.mxu0 %v9889
    %11308 = vmatpush.bf16.msra.mxu0 %v9885
    %11309 = vmatpush.bf16.msra.mxu0 %v9881
    %11310 = vmatpush.bf16.msra.mxu0 %v9877
    %11311 = vmatpush.bf16.msra.mxu0 %v9873
    %11312 = vmatpush.bf16.msra.mxu0 %v9869
    %11313 = vmatpush.bf16.msra.mxu0 %v9865
    %11314 = vmatmul.bf16.gmra.mxu0 %v7978
    %v11315 = vpop.f32.mrf.mxu0
    %v11316 = vadd.f32 %v11287, %v11315
    %v11317 = vpop.f32.mrf.mxu0
    %v11318 = vadd.f32 %v11289, %v11317
    %11319 = vmatmul.bf16.gmra.mxu0 %v8018
    %v11320 = vpop.f32.mrf.mxu0
    %v11321 = vadd.f32 %v11292, %v11320
    %v11322 = vpop.f32.mrf.mxu0
    %v11323 = vadd.f32 %v11294, %v11322
    %11324 = vmatmul.bf16.gmra.mxu0 %v8058
    %v11325 = vpop.f32.mrf.mxu0
    %v11326 = vadd.f32 %v11297, %v11325
    %v11327 = vpop.f32.mrf.mxu0
    %v11328 = vadd.f32 %v11299, %v11327
    %11329 = vmatmul.bf16.gmra.mxu0 %v8098
    %v11330 = vpop.f32.mrf.mxu0
    %v11331 = vadd.f32 %v11302, %v11330
    %v11332 = vpop.f32.mrf.mxu0
    %v11333 = vadd.f32 %v11304, %v11332
    %11334 = vdwg.mxu0
    %11335 = vmatpush.bf16.msra.mxu0 %v9925
    %11336 = vmatpush.bf16.msra.mxu0 %v9921
    %11337 = vmatpush.bf16.msra.mxu0 %v9917
    %11338 = vmatpush.bf16.msra.mxu0 %v9913
    %11339 = vmatpush.bf16.msra.mxu0 %v9909
    %11340 = vmatpush.bf16.msra.mxu0 %v9905
    %11341 = vmatpush.bf16.msra.mxu0 %v9901
    %11342 = vmatpush.bf16.msra.mxu0 %v9897
    %11343 = vmatmul.bf16.gmra.mxu0 %v7995
    %v11344 = vpop.f32.mrf.mxu0
    %v11345 = vadd.f32 %v11316, %v11344
    %v11346 = vpop.f32.mrf.mxu0
    %v11347 = vadd.f32 %v11318, %v11346
    %11348 = vmatmul.bf16.gmra.mxu0 %v8035
    %v11349 = vpop.f32.mrf.mxu0
    %v11350 = vadd.f32 %v11321, %v11349
    %v11351 = vpop.f32.mrf.mxu0
    %v11352 = vadd.f32 %v11323, %v11351
    %11353 = vmatmul.bf16.gmra.mxu0 %v8075
    %v11354 = vpop.f32.mrf.mxu0
    %v11355 = vadd.f32 %v11326, %v11354
    %v11356 = vpop.f32.mrf.mxu0
    %v11357 = vadd.f32 %v11328, %v11356
    %11358 = vmatmul.bf16.gmra.mxu0 0
    %v11359 = vpop.f32.mrf.mxu0
    %v11360 = vadd.f32 %v11331, %v11359
    %v11361 = vpop.f32.mrf.mxu0
    %v11362 = vadd.f32 %v11333, %v11361
    %11363 = vdwg.mxu0
    %11364 = vmatpush.bf16.msra.mxu0 %v9957
    %11365 = vmatpush.bf16.msra.mxu0 %v9953
    %11366 = vmatpush.bf16.msra.mxu0 %v9949
    %11367 = vmatpush.bf16.msra.mxu0 %v9945
    %11368 = vmatpush.bf16.msra.mxu0 %v9941
    %11369 = vmatpush.bf16.msra.mxu0 %v9937
    %11370 = vmatpush.bf16.msra.mxu0 %v9933
    %11371 = vmatpush.bf16.msra.mxu0 %v9929
    %11372 = vmatmul.bf16.gmra.mxu0 %v7996
    %v11373 = vpop.f32.mrf.mxu0
    %v11374 = vadd.f32 %v11345, %v11373
    %v11375 = vpop.f32.mrf.mxu0
    %v11376 = vadd.f32 %v11347, %v11375
    %11377 = vmatmul.bf16.gmra.mxu0 %v8036
    %v11378 = vpop.f32.mrf.mxu0
    %v11379 = vadd.f32 %v11350, %v11378
    %v11380 = vpop.f32.mrf.mxu0
    %v11381 = vadd.f32 %v11352, %v11380
    %11382 = vmatmul.bf16.gmra.mxu0 %v8076
    %v11383 = vpop.f32.mrf.mxu0
    %v11384 = vadd.f32 %v11355, %v11383
    %v11385 = vpop.f32.mrf.mxu0
    %v11386 = vadd.f32 %v11357, %v11385
    %11387 = vmatmul.bf16.gmra.mxu0 0
    %v11388 = vpop.f32.mrf.mxu0
    %v11389 = vadd.f32 %v11360, %v11388
    %v11390 = vpop.f32.mrf.mxu0
    %v11391 = vadd.f32 %v11362, %v11390
    %11392 = vdwg.mxu0
    %11393 = vmatpush.bf16.msra.mxu0 %v9989
    %11394 = vmatpush.bf16.msra.mxu0 %v9985
    %11395 = vmatpush.bf16.msra.mxu0 %v9981
    %11396 = vmatpush.bf16.msra.mxu0 %v9977
    %11397 = vmatpush.bf16.msra.mxu0 %v9973
    %11398 = vmatpush.bf16.msra.mxu0 %v9969
    %11399 = vmatpush.bf16.msra.mxu0 %v9965
    %11400 = vmatpush.bf16.msra.mxu0 %v9961
    %11401 = vmatmul.bf16.gmra.mxu0 %v7997
    %v11402 = vpop.f32.mrf.mxu0
    %v11403 = vadd.f32 %v11374, %v11402
    %v11404 = vpop.f32.mrf.mxu0
    %v11405 = vadd.f32 %v11376, %v11404
    %11406 = vmatmul.bf16.gmra.mxu0 %v8037
    %v11407 = vpop.f32.mrf.mxu0
    %v11408 = vadd.f32 %v11379, %v11407
    %v11409 = vpop.f32.mrf.mxu0
    %v11410 = vadd.f32 %v11381, %v11409
    %11411 = vmatmul.bf16.gmra.mxu0 %v8077
    %v11412 = vpop.f32.mrf.mxu0
    %v11413 = vadd.f32 %v11384, %v11412
    %v11414 = vpop.f32.mrf.mxu0
    %v11415 = vadd.f32 %v11386, %v11414
    %11416 = vmatmul.bf16.gmra.mxu0 0
    %v11417 = vpop.f32.mrf.mxu0
    %v11418 = vadd.f32 %v11389, %v11417
    %v11419 = vpop.f32.mrf.mxu0
    %v11420 = vadd.f32 %v11391, %v11419
    %11421 = vdwg.mxu0
    %11422 = vmatpush.bf16.msra.mxu0 %v10021
    %11423 = vmatpush.bf16.msra.mxu0 %v10017
    %11424 = vmatpush.bf16.msra.mxu0 %v10013
    %11425 = vmatpush.bf16.msra.mxu0 %v10009
    %11426 = vmatpush.bf16.msra.mxu0 %v10005
    %11427 = vmatpush.bf16.msra.mxu0 %v10001
    %11428 = vmatpush.bf16.msra.mxu0 %v9997
    %11429 = vmatpush.bf16.msra.mxu0 %v9993
    %11430 = vmatmul.bf16.gmra.mxu0 %v7998
    %v11431 = vpop.f32.mrf.mxu0
    %v11432 = vadd.f32 %v11403, %v11431
    %v11433 = vpop.f32.mrf.mxu0
    %v11434 = vadd.f32 %v11405, %v11433
    %11435 = vmatmul.bf16.gmra.mxu0 %v8038
    %v11436 = vpop.f32.mrf.mxu0
    %v11437 = vadd.f32 %v11408, %v11436
    %v11438 = vpop.f32.mrf.mxu0
    %v11439 = vadd.f32 %v11410, %v11438
    %11440 = vmatmul.bf16.gmra.mxu0 %v8078
    %v11441 = vpop.f32.mrf.mxu0
    %v11442 = vadd.f32 %v11413, %v11441
    %v11443 = vpop.f32.mrf.mxu0
    %v11444 = vadd.f32 %v11415, %v11443
    %11445 = vmatmul.bf16.gmra.mxu0 0
    %v11446 = vpop.f32.mrf.mxu0
    %v11447 = vadd.f32 %v11418, %v11446
    %v11448 = vpop.f32.mrf.mxu0
    %v11449 = vadd.f32 %v11420, %v11448
    %11450 = vdwg.mxu0
    %11451 = vmatpush.bf16.msra.mxu0 %v9670
    %11452 = vmatpush.bf16.msra.mxu0 %v9666
    %11453 = vmatpush.bf16.msra.mxu0 %v9662
    %11454 = vmatpush.bf16.msra.mxu0 %v9658
    %11455 = vmatpush.bf16.msra.mxu0 %v9654
    %11456 = vmatpush.bf16.msra.mxu0 %v9650
    %11457 = vmatpush.bf16.msra.mxu0 %v9646
    %11458 = vmatpush.bf16.msra.mxu0 %v9642
    %11459 = vmatmul.bf16.gmra.mxu0 0
    %v11460 = vpop.f32.mrf.mxu0
    %v11461 = vadd.f32 0.0, %v11460
    %v11462 = vpop.f32.mrf.mxu0
    %v11463 = vadd.f32 0.0, %v11462
    %11464 = vmatmul.bf16.gmra.mxu0 %v7995
    %v11465 = vpop.f32.mrf.mxu0
    %v11466 = vadd.f32 0.0, %v11465
    %v11467 = vpop.f32.mrf.mxu0
    %v11468 = vadd.f32 0.0, %v11467
    %11469 = vmatmul.bf16.gmra.mxu0 %v8035
    %v11470 = vpop.f32.mrf.mxu0
    %v11471 = vadd.f32 0.0, %v11470
    %v11472 = vpop.f32.mrf.mxu0
    %v11473 = vadd.f32 0.0, %v11472
    %11474 = vmatmul.bf16.gmra.mxu0 %v8075
    %v11475 = vpop.f32.mrf.mxu0
    %v11476 = vadd.f32 0.0, %v11475
    %v11477 = vpop.f32.mrf.mxu0
    %v11478 = vadd.f32 0.0, %v11477
    %11479 = vdwg.mxu0
    %11480 = vmatpush.bf16.msra.mxu0 %v9702
    %11481 = vmatpush.bf16.msra.mxu0 %v9698
    %11482 = vmatpush.bf16.msra.mxu0 %v9694
    %11483 = vmatpush.bf16.msra.mxu0 %v9690
    %11484 = vmatpush.bf16.msra.mxu0 %v9686
    %11485 = vmatpush.bf16.msra.mxu0 %v9682
    %11486 = vmatpush.bf16.msra.mxu0 %v9678
    %11487 = vmatpush.bf16.msra.mxu0 %v9674
    %11488 = vmatmul.bf16.gmra.mxu0 0
    %v11489 = vpop.f32.mrf.mxu0
    %v11490 = vadd.f32 %v11461, %v11489
    %v11491 = vpop.f32.mrf.mxu0
    %v11492 = vadd.f32 %v11463, %v11491
    %11493 = vmatmul.bf16.gmra.mxu0 %v7996
    %v11494 = vpop.f32.mrf.mxu0
    %v11495 = vadd.f32 %v11466, %v11494
    %v11496 = vpop.f32.mrf.mxu0
    %v11497 = vadd.f32 %v11468, %v11496
    %11498 = vmatmul.bf16.gmra.mxu0 %v8036
    %v11499 = vpop.f32.mrf.mxu0
    %v11500 = vadd.f32 %v11471, %v11499
    %v11501 = vpop.f32.mrf.mxu0
    %v11502 = vadd.f32 %v11473, %v11501
    %11503 = vmatmul.bf16.gmra.mxu0 %v8076
    %v11504 = vpop.f32.mrf.mxu0
    %v11505 = vadd.f32 %v11476, %v11504
    %v11506 = vpop.f32.mrf.mxu0
    %v11507 = vadd.f32 %v11478, %v11506
    %11508 = vdwg.mxu0
    %11509 = vmatpush.bf16.msra.mxu0 %v9734
    %11510 = vmatpush.bf16.msra.mxu0 %v9730
    %11511 = vmatpush.bf16.msra.mxu0 %v9726
    %11512 = vmatpush.bf16.msra.mxu0 %v9722
    %11513 = vmatpush.bf16.msra.mxu0 %v9718
    %11514 = vmatpush.bf16.msra.mxu0 %v9714
    %11515 = vmatpush.bf16.msra.mxu0 %v9710
    %11516 = vmatpush.bf16.msra.mxu0 %v9706
    %11517 = vmatmul.bf16.gmra.mxu0 0
    %v11518 = vpop.f32.mrf.mxu0
    %v11519 = vadd.f32 %v11490, %v11518
    %v11520 = vpop.f32.mrf.mxu0
    %v11521 = vadd.f32 %v11492, %v11520
    %11522 = vmatmul.bf16.gmra.mxu0 %v7997
    %v11523 = vpop.f32.mrf.mxu0
    %v11524 = vadd.f32 %v11495, %v11523
    %v11525 = vpop.f32.mrf.mxu0
    %v11526 = vadd.f32 %v11497, %v11525
    %11527 = vmatmul.bf16.gmra.mxu0 %v8037
    %v11528 = vpop.f32.mrf.mxu0
    %v11529 = vadd.f32 %v11500, %v11528
    %v11530 = vpop.f32.mrf.mxu0
    %v11531 = vadd.f32 %v11502, %v11530
    %11532 = vmatmul.bf16.gmra.mxu0 %v8077
    %v11533 = vpop.f32.mrf.mxu0
    %v11534 = vadd.f32 %v11505, %v11533
    %v11535 = vpop.f32.mrf.mxu0
    %v11536 = vadd.f32 %v11507, %v11535
    %11537 = vdwg.mxu0
    %11538 = vmatpush.bf16.msra.mxu0 %v9766
    %11539 = vmatpush.bf16.msra.mxu0 %v9762
    %11540 = vmatpush.bf16.msra.mxu0 %v9758
    %11541 = vmatpush.bf16.msra.mxu0 %v9754
    %11542 = vmatpush.bf16.msra.mxu0 %v9750
    %11543 = vmatpush.bf16.msra.mxu0 %v9746
    %11544 = vmatpush.bf16.msra.mxu0 %v9742
    %11545 = vmatpush.bf16.msra.mxu0 %v9738
    %11546 = vmatmul.bf16.gmra.mxu0 0
    %v11547 = vpop.f32.mrf.mxu0
    %v11548 = vadd.f32 %v11519, %v11547
    %v11549 = vpop.f32.mrf.mxu0
    %v11550 = vadd.f32 %v11521, %v11549
    %11551 = vmatmul.bf16.gmra.mxu0 %v7998
    %v11552 = vpop.f32.mrf.mxu0
    %v11553 = vadd.f32 %v11524, %v11552
    %v11554 = vpop.f32.mrf.mxu0
    %v11555 = vadd.f32 %v11526, %v11554
    %11556 = vmatmul.bf16.gmra.mxu0 %v8038
    %v11557 = vpop.f32.mrf.mxu0
    %v11558 = vadd.f32 %v11529, %v11557
    %v11559 = vpop.f32.mrf.mxu0
    %v11560 = vadd.f32 %v11531, %v11559
    %11561 = vmatmul.bf16.gmra.mxu0 %v8078
    %v11562 = vpop.f32.mrf.mxu0
    %v11563 = vadd.f32 %v11534, %v11562
    %v11564 = vpop.f32.mrf.mxu0
    %v11565 = vadd.f32 %v11536, %v11564
    %11566 = vdwg.mxu0
    %11567 = vmatpush.bf16.msra.mxu0 %v9798
    %11568 = vmatpush.bf16.msra.mxu0 %v9794
    %11569 = vmatpush.bf16.msra.mxu0 %v9790
    %11570 = vmatpush.bf16.msra.mxu0 %v9786
    %11571 = vmatpush.bf16.msra.mxu0 %v9782
    %11572 = vmatpush.bf16.msra.mxu0 %v9778
    %11573 = vmatpush.bf16.msra.mxu0 %v9774
    %11574 = vmatpush.bf16.msra.mxu0 %v9770
    %11575 = vmatmul.bf16.gmra.mxu0 %v7975
    %v11576 = vpop.f32.mrf.mxu0
    %v11577 = vadd.f32 %v11548, %v11576
    %v11578 = vpop.f32.mrf.mxu0
    %v11579 = vadd.f32 %v11550, %v11578
    %11580 = vmatmul.bf16.gmra.mxu0 %v8015
    %v11581 = vpop.f32.mrf.mxu0
    %v11582 = vadd.f32 %v11553, %v11581
    %v11583 = vpop.f32.mrf.mxu0
    %v11584 = vadd.f32 %v11555, %v11583
    %11585 = vmatmul.bf16.gmra.mxu0 %v8055
    %v11586 = vpop.f32.mrf.mxu0
    %v11587 = vadd.f32 %v11558, %v11586
    %v11588 = vpop.f32.mrf.mxu0
    %v11589 = vadd.f32 %v11560, %v11588
    %11590 = vmatmul.bf16.gmra.mxu0 %v8095
    %v11591 = vpop.f32.mrf.mxu0
    %v11592 = vadd.f32 %v11563, %v11591
    %v11593 = vpop.f32.mrf.mxu0
    %v11594 = vadd.f32 %v11565, %v11593
    %11595 = vdwg.mxu0
    %11596 = vmatpush.bf16.msra.mxu0 %v9830
    %11597 = vmatpush.bf16.msra.mxu0 %v9826
    %11598 = vmatpush.bf16.msra.mxu0 %v9822
    %11599 = vmatpush.bf16.msra.mxu0 %v9818
    %11600 = vmatpush.bf16.msra.mxu0 %v9814
    %11601 = vmatpush.bf16.msra.mxu0 %v9810
    %11602 = vmatpush.bf16.msra.mxu0 %v9806
    %11603 = vmatpush.bf16.msra.mxu0 %v9802
    %11604 = vmatmul.bf16.gmra.mxu0 %v7976
    %v11605 = vpop.f32.mrf.mxu0
    %v11606 = vadd.f32 %v11577, %v11605
    %v11607 = vpop.f32.mrf.mxu0
    %v11608 = vadd.f32 %v11579, %v11607
    %11609 = vmatmul.bf16.gmra.mxu0 %v8016
    %v11610 = vpop.f32.mrf.mxu0
    %v11611 = vadd.f32 %v11582, %v11610
    %v11612 = vpop.f32.mrf.mxu0
    %v11613 = vadd.f32 %v11584, %v11612
    %11614 = vmatmul.bf16.gmra.mxu0 %v8056
    %v11615 = vpop.f32.mrf.mxu0
    %v11616 = vadd.f32 %v11587, %v11615
    %v11617 = vpop.f32.mrf.mxu0
    %v11618 = vadd.f32 %v11589, %v11617
    %11619 = vmatmul.bf16.gmra.mxu0 %v8096
    %v11620 = vpop.f32.mrf.mxu0
    %v11621 = vadd.f32 %v11592, %v11620
    %v11622 = vpop.f32.mrf.mxu0
    %v11623 = vadd.f32 %v11594, %v11622
    %11624 = vdwg.mxu0
    %11625 = vmatpush.bf16.msra.mxu0 %v9862
    %11626 = vmatpush.bf16.msra.mxu0 %v9858
    %11627 = vmatpush.bf16.msra.mxu0 %v9854
    %11628 = vmatpush.bf16.msra.mxu0 %v9850
    %11629 = vmatpush.bf16.msra.mxu0 %v9846
    %11630 = vmatpush.bf16.msra.mxu0 %v9842
    %11631 = vmatpush.bf16.msra.mxu0 %v9838
    %11632 = vmatpush.bf16.msra.mxu0 %v9834
    %11633 = vmatmul.bf16.gmra.mxu0 %v7977
    %v11634 = vpop.f32.mrf.mxu0
    %v11635 = vadd.f32 %v11606, %v11634
    %v11636 = vpop.f32.mrf.mxu0
    %v11637 = vadd.f32 %v11608, %v11636
    %11638 = vmatmul.bf16.gmra.mxu0 %v8017
    %v11639 = vpop.f32.mrf.mxu0
    %v11640 = vadd.f32 %v11611, %v11639
    %v11641 = vpop.f32.mrf.mxu0
    %v11642 = vadd.f32 %v11613, %v11641
    %11643 = vmatmul.bf16.gmra.mxu0 %v8057
    %v11644 = vpop.f32.mrf.mxu0
    %v11645 = vadd.f32 %v11616, %v11644
    %v11646 = vpop.f32.mrf.mxu0
    %v11647 = vadd.f32 %v11618, %v11646
    %11648 = vmatmul.bf16.gmra.mxu0 %v8097
    %v11649 = vpop.f32.mrf.mxu0
    %v11650 = vadd.f32 %v11621, %v11649
    %v11651 = vpop.f32.mrf.mxu0
    %v11652 = vadd.f32 %v11623, %v11651
    %11653 = vdwg.mxu0
    %11654 = vmatpush.bf16.msra.mxu0 %v9894
    %11655 = vmatpush.bf16.msra.mxu0 %v9890
    %11656 = vmatpush.bf16.msra.mxu0 %v9886
    %11657 = vmatpush.bf16.msra.mxu0 %v9882
    %11658 = vmatpush.bf16.msra.mxu0 %v9878
    %11659 = vmatpush.bf16.msra.mxu0 %v9874
    %11660 = vmatpush.bf16.msra.mxu0 %v9870
    %11661 = vmatpush.bf16.msra.mxu0 %v9866
    %11662 = vmatmul.bf16.gmra.mxu0 %v7978
    %v11663 = vpop.f32.mrf.mxu0
    %v11664 = vadd.f32 %v11635, %v11663
    %v11665 = vpop.f32.mrf.mxu0
    %v11666 = vadd.f32 %v11637, %v11665
    %11667 = vmatmul.bf16.gmra.mxu0 %v8018
    %v11668 = vpop.f32.mrf.mxu0
    %v11669 = vadd.f32 %v11640, %v11668
    %v11670 = vpop.f32.mrf.mxu0
    %v11671 = vadd.f32 %v11642, %v11670
    %11672 = vmatmul.bf16.gmra.mxu0 %v8058
    %v11673 = vpop.f32.mrf.mxu0
    %v11674 = vadd.f32 %v11645, %v11673
    %v11675 = vpop.f32.mrf.mxu0
    %v11676 = vadd.f32 %v11647, %v11675
    %11677 = vmatmul.bf16.gmra.mxu0 %v8098
    %v11678 = vpop.f32.mrf.mxu0
    %v11679 = vadd.f32 %v11650, %v11678
    %v11680 = vpop.f32.mrf.mxu0
    %v11681 = vadd.f32 %v11652, %v11680
    %11682 = vdwg.mxu0
    %11683 = vmatpush.bf16.msra.mxu0 %v9926
    %11684 = vmatpush.bf16.msra.mxu0 %v9922
    %11685 = vmatpush.bf16.msra.mxu0 %v9918
    %11686 = vmatpush.bf16.msra.mxu0 %v9914
    %11687 = vmatpush.bf16.msra.mxu0 %v9910
    %11688 = vmatpush.bf16.msra.mxu0 %v9906
    %11689 = vmatpush.bf16.msra.mxu0 %v9902
    %11690 = vmatpush.bf16.msra.mxu0 %v9898
    %11691 = vmatmul.bf16.gmra.mxu0 %v7995
    %v11692 = vpop.f32.mrf.mxu0
    %v11693 = vadd.f32 %v11664, %v11692
    %v11694 = vpop.f32.mrf.mxu0
    %v11695 = vadd.f32 %v11666, %v11694
    %11696 = vmatmul.bf16.gmra.mxu0 %v8035
    %v11697 = vpop.f32.mrf.mxu0
    %v11698 = vadd.f32 %v11669, %v11697
    %v11699 = vpop.f32.mrf.mxu0
    %v11700 = vadd.f32 %v11671, %v11699
    %11701 = vmatmul.bf16.gmra.mxu0 %v8075
    %v11702 = vpop.f32.mrf.mxu0
    %v11703 = vadd.f32 %v11674, %v11702
    %v11704 = vpop.f32.mrf.mxu0
    %v11705 = vadd.f32 %v11676, %v11704
    %11706 = vmatmul.bf16.gmra.mxu0 0
    %v11707 = vpop.f32.mrf.mxu0
    %v11708 = vadd.f32 %v11679, %v11707
    %v11709 = vpop.f32.mrf.mxu0
    %v11710 = vadd.f32 %v11681, %v11709
    %11711 = vdwg.mxu0
    %11712 = vmatpush.bf16.msra.mxu0 %v9958
    %11713 = vmatpush.bf16.msra.mxu0 %v9954
    %11714 = vmatpush.bf16.msra.mxu0 %v9950
    %11715 = vmatpush.bf16.msra.mxu0 %v9946
    %11716 = vmatpush.bf16.msra.mxu0 %v9942
    %11717 = vmatpush.bf16.msra.mxu0 %v9938
    %11718 = vmatpush.bf16.msra.mxu0 %v9934
    %11719 = vmatpush.bf16.msra.mxu0 %v9930
    %11720 = vmatmul.bf16.gmra.mxu0 %v7996
    %v11721 = vpop.f32.mrf.mxu0
    %v11722 = vadd.f32 %v11693, %v11721
    %v11723 = vpop.f32.mrf.mxu0
    %v11724 = vadd.f32 %v11695, %v11723
    %11725 = vmatmul.bf16.gmra.mxu0 %v8036
    %v11726 = vpop.f32.mrf.mxu0
    %v11727 = vadd.f32 %v11698, %v11726
    %v11728 = vpop.f32.mrf.mxu0
    %v11729 = vadd.f32 %v11700, %v11728
    %11730 = vmatmul.bf16.gmra.mxu0 %v8076
    %v11731 = vpop.f32.mrf.mxu0
    %v11732 = vadd.f32 %v11703, %v11731
    %v11733 = vpop.f32.mrf.mxu0
    %v11734 = vadd.f32 %v11705, %v11733
    %11735 = vmatmul.bf16.gmra.mxu0 0
    %v11736 = vpop.f32.mrf.mxu0
    %v11737 = vadd.f32 %v11708, %v11736
    %v11738 = vpop.f32.mrf.mxu0
    %v11739 = vadd.f32 %v11710, %v11738
    %11740 = vdwg.mxu0
    %11741 = vmatpush.bf16.msra.mxu0 %v9990
    %11742 = vmatpush.bf16.msra.mxu0 %v9986
    %11743 = vmatpush.bf16.msra.mxu0 %v9982
    %11744 = vmatpush.bf16.msra.mxu0 %v9978
    %11745 = vmatpush.bf16.msra.mxu0 %v9974
    %11746 = vmatpush.bf16.msra.mxu0 %v9970
    %11747 = vmatpush.bf16.msra.mxu0 %v9966
    %11748 = vmatpush.bf16.msra.mxu0 %v9962
    %11749 = vmatmul.bf16.gmra.mxu0 %v7997
    %v11750 = vpop.f32.mrf.mxu0
    %v11751 = vadd.f32 %v11722, %v11750
    %v11752 = vpop.f32.mrf.mxu0
    %v11753 = vadd.f32 %v11724, %v11752
    %11754 = vmatmul.bf16.gmra.mxu0 %v8037
    %v11755 = vpop.f32.mrf.mxu0
    %v11756 = vadd.f32 %v11727, %v11755
    %v11757 = vpop.f32.mrf.mxu0
    %v11758 = vadd.f32 %v11729, %v11757
    %11759 = vmatmul.bf16.gmra.mxu0 %v8077
    %v11760 = vpop.f32.mrf.mxu0
    %v11761 = vadd.f32 %v11732, %v11760
    %v11762 = vpop.f32.mrf.mxu0
    %v11763 = vadd.f32 %v11734, %v11762
    %11764 = vmatmul.bf16.gmra.mxu0 0
    %v11765 = vpop.f32.mrf.mxu0
    %v11766 = vadd.f32 %v11737, %v11765
    %v11767 = vpop.f32.mrf.mxu0
    %v11768 = vadd.f32 %v11739, %v11767
    %11769 = vdwg.mxu0
    %11770 = vmatpush.bf16.msra.mxu0 %v10022
    %11771 = vmatpush.bf16.msra.mxu0 %v10018
    %11772 = vmatpush.bf16.msra.mxu0 %v10014
    %11773 = vmatpush.bf16.msra.mxu0 %v10010
    %11774 = vmatpush.bf16.msra.mxu0 %v10006
    %11775 = vmatpush.bf16.msra.mxu0 %v10002
    %11776 = vmatpush.bf16.msra.mxu0 %v9998
    %11777 = vmatpush.bf16.msra.mxu0 %v9994
    %11778 = vmatmul.bf16.gmra.mxu0 %v7998
    %v11779 = vpop.f32.mrf.mxu0
    %v11780 = vadd.f32 %v11751, %v11779
    %v11781 = vpop.f32.mrf.mxu0
    %v11782 = vadd.f32 %v11753, %v11781
    %11783 = vmatmul.bf16.gmra.mxu0 %v8038
    %v11784 = vpop.f32.mrf.mxu0
    %v11785 = vadd.f32 %v11756, %v11784
    %v11786 = vpop.f32.mrf.mxu0
    %v11787 = vadd.f32 %v11758, %v11786
    %11788 = vmatmul.bf16.gmra.mxu0 %v8078
    %v11789 = vpop.f32.mrf.mxu0
    %v11790 = vadd.f32 %v11761, %v11789
    %v11791 = vpop.f32.mrf.mxu0
    %v11792 = vadd.f32 %v11763, %v11791
    %11793 = vmatmul.bf16.gmra.mxu0 0
    %v11794 = vpop.f32.mrf.mxu0
    %v11795 = vadd.f32 %v11766, %v11794
    %v11796 = vpop.f32.mrf.mxu0
    %v11797 = vadd.f32 %v11768, %v11796
    %11798 = vdwg.mxu0
    %v11799 = vld [vmem:[#allocation7] sm:$0xff]
    %v11800 = vld [vmem:[#allocation7 + $0x8] sm:$0xff]
    %v11801 = vld [vmem:[#allocation7 + $0x10] sm:$0xff]
    %v11802 = vld [vmem:[#allocation7 + $0x18] sm:$0xff]
    %v11803 = vld [vmem:[#allocation7 + $0x20] sm:$0xff]
    %v11804 = vld [vmem:[#allocation7 + $0x28] sm:$0xff]
    %v11805 = vld [vmem:[#allocation7 + $0x30] sm:$0xff]
    %v11806 = vld [vmem:[#allocation7 + $0x38] sm:$0xff]
    %v11807 = vld [vmem:[#allocation7 + $0x40] sm:$0xff]
    %v11808 = vld [vmem:[#allocation7 + $0x48] sm:$0xff]
    %v11809 = vld [vmem:[#allocation7 + $0x50] sm:$0xff]
    %v11810 = vld [vmem:[#allocation7 + $0x58] sm:$0xff]
    %v11811 = vld [vmem:[#allocation7 + $0x60] sm:$0xff]
    %v11812 = vld [vmem:[#allocation7 + $0x68] sm:$0xff]
    %v11813 = vld [vmem:[#allocation7 + $0x70] sm:$0xff]
    %v11814 = vld [vmem:[#allocation7 + $0x78] sm:$0xff]
    %v11815 = vld [vmem:[#allocation7 + $0x80] sm:$0xff]
    %v11816 = vld [vmem:[#allocation7 + $0x88] sm:$0xff]
    %v11817 = vld [vmem:[#allocation7 + $0x90] sm:$0xff]
    %v11818 = vld [vmem:[#allocation7 + $0x98] sm:$0xff]
    %v11819 = vld [vmem:[#allocation7 + $0xa0] sm:$0xff]
    %v11820 = vld [vmem:[#allocation7 + $0xa8] sm:$0xff]
    %v11821 = vld [vmem:[#allocation7 + $0xb0] sm:$0xff]
    %v11822 = vld [vmem:[#allocation7 + $0xb8] sm:$0xff]
    %v11823 = vld [vmem:[#allocation7 + $0xc0] sm:$0xff]
    %v11824 = vld [vmem:[#allocation7 + $0xc8] sm:$0xff]
    %v11825 = vld [vmem:[#allocation7 + $0xd0] sm:$0xff]
    %v11826 = vld [vmem:[#allocation7 + $0xd8] sm:$0xff]
    %v11827 = vld [vmem:[#allocation7 + $0xe0] sm:$0xff]
    %v11828 = vld [vmem:[#allocation7 + $0xe8] sm:$0xff]
    %v11829 = vld [vmem:[#allocation7 + $0xf0] sm:$0xff]
    %v11830 = vld [vmem:[#allocation7 + $0xf8] sm:$0xff]
    %v11831 = vld [vmem:[#allocation7 + $0x100] sm:$0xff]
    %v11832 = vld [vmem:[#allocation7 + $0x108] sm:$0xff]
    %v11833 = vld [vmem:[#allocation7 + $0x110] sm:$0xff]
    %v11834 = vld [vmem:[#allocation7 + $0x118] sm:$0xff]
    %v11835 = vld [vmem:[#allocation7 + $0x120] sm:$0xff]
    %v11836 = vld [vmem:[#allocation7 + $0x128] sm:$0xff]
    %v11837 = vld [vmem:[#allocation7 + $0x130] sm:$0xff]
    %v11838 = vld [vmem:[#allocation7 + $0x138] sm:$0xff]
    %v11839 = vld [vmem:[#allocation7 + $0x140] sm:$0xff]
    %v11840 = vld [vmem:[#allocation7 + $0x148] sm:$0xff]
    %v11841 = vld [vmem:[#allocation7 + $0x150] sm:$0xff]
    %v11842 = vld [vmem:[#allocation7 + $0x158] sm:$0xff]
    %v11843 = vld [vmem:[#allocation7 + $0x160] sm:$0xff]
    %v11844 = vld [vmem:[#allocation7 + $0x168] sm:$0xff]
    %v11845 = vld [vmem:[#allocation7 + $0x170] sm:$0xff]
    %v11846 = vld [vmem:[#allocation7 + $0x178] sm:$0xff]
    %v11847 = vld [vmem:[#allocation7 + $0x180] sm:$0xff]
    %v11848 = vld [vmem:[#allocation7 + $0x188] sm:$0xff]
    %v11849 = vld [vmem:[#allocation7 + $0x190] sm:$0xff]
    %v11850 = vld [vmem:[#allocation7 + $0x198] sm:$0xff]
    %v11851 = vld [vmem:[#allocation7 + $0x1a0] sm:$0xff]
    %v11852 = vld [vmem:[#allocation7 + $0x1a8] sm:$0xff]
    %v11853 = vld [vmem:[#allocation7 + $0x1b0] sm:$0xff]
    %v11854 = vld [vmem:[#allocation7 + $0x1b8] sm:$0xff]
    %v11855 = vld [vmem:[#allocation7 + $0x1c0] sm:$0xff]
    %v11856 = vld [vmem:[#allocation7 + $0x1c8] sm:$0xff]
    %v11857 = vld [vmem:[#allocation7 + $0x1d0] sm:$0xff]
    %v11858 = vld [vmem:[#allocation7 + $0x1d8] sm:$0xff]
    %v11859 = vld [vmem:[#allocation7 + $0x1e0] sm:$0xff]
    %v11860 = vld [vmem:[#allocation7 + $0x1e8] sm:$0xff]
    %v11861 = vld [vmem:[#allocation7 + $0x1f0] sm:$0xff]
    %v11862 = vld [vmem:[#allocation7 + $0x1f8] sm:$0xff]
    %v11863 = vld [vmem:[#allocation9] sm:$0xff]
    %v11864 = vld [vmem:[#allocation9 + $0x8] sm:$0xff]
    %v11865 = vld [vmem:[#allocation9 + $0x10] sm:$0xff]
    %v11866 = vld [vmem:[#allocation9 + $0x18] sm:$0xff]
    %v11867 = vld [vmem:[#allocation9 + $0x20] sm:$0xff]
    %v11868 = vld [vmem:[#allocation9 + $0x28] sm:$0xff]
    %v11869 = vld [vmem:[#allocation9 + $0x30] sm:$0xff]
    %v11870 = vld [vmem:[#allocation9 + $0x38] sm:$0xff]
    %v11871 = vld [vmem:[#allocation9 + $0x40] sm:$0xff]
    %v11872 = vld [vmem:[#allocation9 + $0x48] sm:$0xff]
    %v11873 = vld [vmem:[#allocation9 + $0x50] sm:$0xff]
    %v11874 = vld [vmem:[#allocation9 + $0x58] sm:$0xff]
    %v11875 = vld [vmem:[#allocation9 + $0x60] sm:$0xff]
    %v11876 = vld [vmem:[#allocation9 + $0x68] sm:$0xff]
    %v11877 = vld [vmem:[#allocation9 + $0x70] sm:$0xff]
    %v11878 = vld [vmem:[#allocation9 + $0x78] sm:$0xff]
    %v11879 = vld [vmem:[#allocation9 + $0x80] sm:$0xff]
    %v11880 = vld [vmem:[#allocation9 + $0x88] sm:$0xff]
    %v11881 = vld [vmem:[#allocation9 + $0x90] sm:$0xff]
    %v11882 = vld [vmem:[#allocation9 + $0x98] sm:$0xff]
    %v11883 = vld [vmem:[#allocation9 + $0xa0] sm:$0xff]
    %v11884 = vld [vmem:[#allocation9 + $0xa8] sm:$0xff]
    %v11885 = vld [vmem:[#allocation9 + $0xb0] sm:$0xff]
    %v11886 = vld [vmem:[#allocation9 + $0xb8] sm:$0xff]
    %v11887 = vld [vmem:[#allocation9 + $0xc0] sm:$0xff]
    %v11888 = vld [vmem:[#allocation9 + $0xc8] sm:$0xff]
    %v11889 = vld [vmem:[#allocation9 + $0xd0] sm:$0xff]
    %v11890 = vld [vmem:[#allocation9 + $0xd8] sm:$0xff]
    %v11891 = vld [vmem:[#allocation9 + $0xe0] sm:$0xff]
    %v11892 = vld [vmem:[#allocation9 + $0xe8] sm:$0xff]
    %v11893 = vld [vmem:[#allocation9 + $0xf0] sm:$0xff]
    %v11894 = vld [vmem:[#allocation9 + $0xf8] sm:$0xff]
    %v11895 = vld [vmem:[#allocation9 + $0x100] sm:$0xff]
    %v11896 = vld [vmem:[#allocation9 + $0x108] sm:$0xff]
    %v11897 = vld [vmem:[#allocation9 + $0x110] sm:$0xff]
    %v11898 = vld [vmem:[#allocation9 + $0x118] sm:$0xff]
    %v11899 = vld [vmem:[#allocation9 + $0x120] sm:$0xff]
    %v11900 = vld [vmem:[#allocation9 + $0x128] sm:$0xff]
    %v11901 = vld [vmem:[#allocation9 + $0x130] sm:$0xff]
    %v11902 = vld [vmem:[#allocation9 + $0x138] sm:$0xff]
    %v11903 = vld [vmem:[#allocation9 + $0x140] sm:$0xff]
    %v11904 = vld [vmem:[#allocation9 + $0x148] sm:$0xff]
    %v11905 = vld [vmem:[#allocation9 + $0x150] sm:$0xff]
    %v11906 = vld [vmem:[#allocation9 + $0x158] sm:$0xff]
    %v11907 = vld [vmem:[#allocation9 + $0x160] sm:$0xff]
    %v11908 = vld [vmem:[#allocation9 + $0x168] sm:$0xff]
    %v11909 = vld [vmem:[#allocation9 + $0x170] sm:$0xff]
    %v11910 = vld [vmem:[#allocation9 + $0x178] sm:$0xff]
    %v11911 = vld [vmem:[#allocation9 + $0x180] sm:$0xff]
    %v11912 = vld [vmem:[#allocation9 + $0x188] sm:$0xff]
    %v11913 = vld [vmem:[#allocation9 + $0x190] sm:$0xff]
    %v11914 = vld [vmem:[#allocation9 + $0x198] sm:$0xff]
    %v11915 = vld [vmem:[#allocation9 + $0x1a0] sm:$0xff]
    %v11916 = vld [vmem:[#allocation9 + $0x1a8] sm:$0xff]
    %v11917 = vld [vmem:[#allocation9 + $0x1b0] sm:$0xff]
    %v11918 = vld [vmem:[#allocation9 + $0x1b8] sm:$0xff]
    %v11919 = vld [vmem:[#allocation9 + $0x1c0] sm:$0xff]
    %v11920 = vld [vmem:[#allocation9 + $0x1c8] sm:$0xff]
    %v11921 = vld [vmem:[#allocation9 + $0x1d0] sm:$0xff]
    %v11922 = vld [vmem:[#allocation9 + $0x1d8] sm:$0xff]
    %v11923 = vld [vmem:[#allocation9 + $0x1e0] sm:$0xff]
    %v11924 = vld [vmem:[#allocation9 + $0x1e8] sm:$0xff]
    %v11925 = vld [vmem:[#allocation9 + $0x1f0] sm:$0xff]
    %v11926 = vld [vmem:[#allocation9 + $0x1f8] sm:$0xff]
    %v11927 = vld [vmem:[%s11] sm:$0x1]
    %v11928 = vld [vmem:[%s12] sm:$0x1]
    %v11929 = vadd.f32 %v10736, %v10738
    %v11930 = vadd.f32 %v11929, %v10741
    %v11931 = vadd.f32 %v11930, %v10743
    %v11932 = vadd.f32 %v11931, %v10746
    %v11933 = vadd.f32 %v11932, %v10748
    %v11934 = vadd.f32 %v11933, %v10751
    %v11935 = vadd.f32 %v11934, %v10753
    %v11936 = vrot.slane %v11935, 4
    %v11937 = vadd.f32 %v11935, %v11936
    %v11938 = vrot.slane %v11937, 2
    %v11939 = vadd.f32 %v11937, %v11938
    %v11940 = vrot.slane %v11939, 1
    %v11941 = vadd.f32 %v11939, %v11940
    %v11942 = vadd.f32 %v11084, %v11086
    %v11943 = vadd.f32 %v11942, %v11089
    %v11944 = vadd.f32 %v11943, %v11091
    %v11945 = vadd.f32 %v11944, %v11094
    %v11946 = vadd.f32 %v11945, %v11096
    %v11947 = vadd.f32 %v11946, %v11099
    %v11948 = vadd.f32 %v11947, %v11101
    %v11949 = vrot.slane %v11948, 4
    %v11950 = vadd.f32 %v11948, %v11949
    %v11951 = vrot.slane %v11950, 2
    %v11952 = vadd.f32 %v11950, %v11951
    %v11953 = vrot.slane %v11952, 1
    %v11954 = vadd.f32 %v11952, %v11953
    %v11955 = vadd.f32 %v11432, %v11434
    %v11956 = vadd.f32 %v11955, %v11437
    %v11957 = vadd.f32 %v11956, %v11439
    %v11958 = vadd.f32 %v11957, %v11442
    %v11959 = vadd.f32 %v11958, %v11444
    %v11960 = vadd.f32 %v11959, %v11447
    %v11961 = vadd.f32 %v11960, %v11449
    %v11962 = vrot.slane %v11961, 4
    %v11963 = vadd.f32 %v11961, %v11962
    %v11964 = vrot.slane %v11963, 2
    %v11965 = vadd.f32 %v11963, %v11964
    %v11966 = vrot.slane %v11965, 1
    %v11967 = vadd.f32 %v11965, %v11966
    %v11968 = vadd.f32 %v11780, %v11782
    %v11969 = vadd.f32 %v11968, %v11785
    %v11970 = vadd.f32 %v11969, %v11787
    %v11971 = vadd.f32 %v11970, %v11790
    %v11972 = vadd.f32 %v11971, %v11792
    %v11973 = vadd.f32 %v11972, %v11795
    %v11974 = vadd.f32 %v11973, %v11797
    %v11975 = vrot.slane %v11974, 4
    %v11976 = vadd.f32 %v11974, %v11975
    %v11977 = vrot.slane %v11976, 2
    %v11978 = vadd.f32 %v11976, %v11977
    %v11979 = vrot.slane %v11978, 1
    %v11980 = vadd.f32 %v11978, %v11979
    %v11981 = vmul.f32 %v10736, %v10736
    %v11982 = vmul.f32 %v11084, %v11084
    %v11983 = vmul.f32 %v11432, %v11432
    %v11984 = vmul.f32 %v11780, %v11780
    %v11985 = vmul.f32 %v10738, %v10738
    %v11986 = vmul.f32 %v11086, %v11086
    %v11987 = vmul.f32 %v11434, %v11434
    %v11988 = vmul.f32 %v11782, %v11782
    %v11989 = vmul.f32 %v10741, %v10741
    %v11990 = vmul.f32 %v11089, %v11089
    %v11991 = vmul.f32 %v11437, %v11437
    %v11992 = vmul.f32 %v11785, %v11785
    %v11993 = vmul.f32 %v10743, %v10743
    %v11994 = vmul.f32 %v11091, %v11091
    %v11995 = vmul.f32 %v11439, %v11439
    %v11996 = vmul.f32 %v11787, %v11787
    %v11997 = vmul.f32 %v10746, %v10746
    %v11998 = vmul.f32 %v11094, %v11094
    %v11999 = vmul.f32 %v11442, %v11442
    %v12000 = vmul.f32 %v11790, %v11790
    %v12001 = vmul.f32 %v10748, %v10748
    %v12002 = vmul.f32 %v11096, %v11096
    %v12003 = vmul.f32 %v11444, %v11444
    %v12004 = vmul.f32 %v11792, %v11792
    %v12005 = vmul.f32 %v10751, %v10751
    %v12006 = vmul.f32 %v11099, %v11099
    %v12007 = vmul.f32 %v11447, %v11447
    %v12008 = vmul.f32 %v11795, %v11795
    %v12009 = vmul.f32 %v10753, %v10753
    %v12010 = vmul.f32 %v11101, %v11101
    %v12011 = vmul.f32 %v11449, %v11449
    %v12012 = vmul.f32 %v11797, %v11797
    %v12013 = vadd.f32 %v11981, %v11985
    %v12014 = vadd.f32 %v12013, %v11989
    %v12015 = vadd.f32 %v12014, %v11993
    %v12016 = vadd.f32 %v12015, %v11997
    %v12017 = vadd.f32 %v12016, %v12001
    %v12018 = vadd.f32 %v12017, %v12005
    %v12019 = vadd.f32 %v12018, %v12009
    %v12020 = vrot.slane %v12019, 4
    %v12021 = vadd.f32 %v12019, %v12020
    %v12022 = vrot.slane %v12021, 2
    %v12023 = vadd.f32 %v12021, %v12022
    %v12024 = vrot.slane %v12023, 1
    %v12025 = vadd.f32 %v12023, %v12024
    %v12026 = vadd.f32 %v11982, %v11986
    %v12027 = vadd.f32 %v12026, %v11990
    %v12028 = vadd.f32 %v12027, %v11994
    %v12029 = vadd.f32 %v12028, %v11998
    %v12030 = vadd.f32 %v12029, %v12002
    %v12031 = vadd.f32 %v12030, %v12006
    %v12032 = vadd.f32 %v12031, %v12010
    %v12033 = vrot.slane %v12032, 4
    %v12034 = vadd.f32 %v12032, %v12033
    %v12035 = vrot.slane %v12034, 2
    %v12036 = vadd.f32 %v12034, %v12035
    %v12037 = vrot.slane %v12036, 1
    %v12038 = vadd.f32 %v12036, %v12037
    %v12039 = vadd.f32 %v11983, %v11987
    %v12040 = vadd.f32 %v12039, %v11991
    %v12041 = vadd.f32 %v12040, %v11995
    %v12042 = vadd.f32 %v12041, %v11999
    %v12043 = vadd.f32 %v12042, %v12003
    %v12044 = vadd.f32 %v12043, %v12007
    %v12045 = vadd.f32 %v12044, %v12011
    %v12046 = vrot.slane %v12045, 4
    %v12047 = vadd.f32 %v12045, %v12046
    %v12048 = vrot.slane %v12047, 2
    %v12049 = vadd.f32 %v12047, %v12048
    %v12050 = vrot.slane %v12049, 1
    %v12051 = vadd.f32 %v12049, %v12050
    %v12052 = vadd.f32 %v11984, %v11988
    %v12053 = vadd.f32 %v12052, %v11992
    %v12054 = vadd.f32 %v12053, %v11996
    %v12055 = vadd.f32 %v12054, %v12000
    %v12056 = vadd.f32 %v12055, %v12004
    %v12057 = vadd.f32 %v12056, %v12008
    %v12058 = vadd.f32 %v12057, %v12012
    %v12059 = vrot.slane %v12058, 4
    %v12060 = vadd.f32 %v12058, %v12059
    %v12061 = vrot.slane %v12060, 2
    %v12062 = vadd.f32 %v12060, %v12061
    %v12063 = vrot.slane %v12062, 1
    %v12064 = vadd.f32 %v12062, %v12063
    %v12065 = vsel %vm7497, %v11941, %v12025
    %v12066 = vsel %vm7497, %v11954, %v12038
    %v12067 = vsel %vm7497, %v11967, %v12051
    %v12068 = vsel %vm7497, %v11980, %v12064
    %12069 = vmatpush.msra.mxu0 %v11814
    %12070 = vmatpush.msra.mxu0 %v11813
    %12071 = vmatpush.msra.mxu0 %v11812
    %12072 = vmatpush.msra.mxu0 %v11811
    %12073 = vmatpush.msra.mxu0 %v11810
    %12074 = vmatpush.msra.mxu0 %v11809
    %12075 = vmatpush.msra.mxu0 %v11808
    %12076 = vmatpush.msra.mxu0 %v11807
    %12077 = vmatpush.msra.mxu0 %v11806
    %12078 = vmatpush.msra.mxu0 %v11805
    %12079 = vmatpush.msra.mxu0 %v11804
    %12080 = vmatpush.msra.mxu0 %v11803
    %12081 = vmatpush.msra.mxu0 %v11802
    %12082 = vmatpush.msra.mxu0 %v11801
    %12083 = vmatpush.msra.mxu0 %v11800
    %12084 = vmatpush.msra.mxu0 %v11799
    %12085 = vmatmul.f32.gmra.mxu0 %v12065
    %v12086 = vpop.f32.mrf.mxu0
    %v12087 = vadd.f32 0.0, %v12086
    %12088 = vdwg.mxu0
    %12089 = vmatpush.msra.mxu0 %v11830
    %12090 = vmatpush.msra.mxu0 %v11829
    %12091 = vmatpush.msra.mxu0 %v11828
    %12092 = vmatpush.msra.mxu0 %v11827
    %12093 = vmatpush.msra.mxu0 %v11826
    %12094 = vmatpush.msra.mxu0 %v11825
    %12095 = vmatpush.msra.mxu0 %v11824
    %12096 = vmatpush.msra.mxu0 %v11823
    %12097 = vmatpush.msra.mxu0 %v11822
    %12098 = vmatpush.msra.mxu0 %v11821
    %12099 = vmatpush.msra.mxu0 %v11820
    %12100 = vmatpush.msra.mxu0 %v11819
    %12101 = vmatpush.msra.mxu0 %v11818
    %12102 = vmatpush.msra.mxu0 %v11817
    %12103 = vmatpush.msra.mxu0 %v11816
    %12104 = vmatpush.msra.mxu0 %v11815
    %12105 = vmatmul.f32.gmra.mxu0 %v12066
    %v12106 = vpop.f32.mrf.mxu0
    %v12107 = vadd.f32 %v12087, %v12106
    %12108 = vdwg.mxu0
    %12109 = vmatpush.msra.mxu0 %v11846
    %12110 = vmatpush.msra.mxu0 %v11845
    %12111 = vmatpush.msra.mxu0 %v11844
    %12112 = vmatpush.msra.mxu0 %v11843
    %12113 = vmatpush.msra.mxu0 %v11842
    %12114 = vmatpush.msra.mxu0 %v11841
    %12115 = vmatpush.msra.mxu0 %v11840
    %12116 = vmatpush.msra.mxu0 %v11839
    %12117 = vmatpush.msra.mxu0 %v11838
    %12118 = vmatpush.msra.mxu0 %v11837
    %12119 = vmatpush.msra.mxu0 %v11836
    %12120 = vmatpush.msra.mxu0 %v11835
    %12121 = vmatpush.msra.mxu0 %v11834
    %12122 = vmatpush.msra.mxu0 %v11833
    %12123 = vmatpush.msra.mxu0 %v11832
    %12124 = vmatpush.msra.mxu0 %v11831
    %12125 = vmatmul.f32.gmra.mxu0 %v12067
    %v12126 = vpop.f32.mrf.mxu0
    %v12127 = vadd.f32 %v12107, %v12126
    %12128 = vdwg.mxu0
    %12129 = vmatpush.msra.mxu0 %v11862
    %12130 = vmatpush.msra.mxu0 %v11861
    %12131 = vmatpush.msra.mxu0 %v11860
    %12132 = vmatpush.msra.mxu0 %v11859
    %12133 = vmatpush.msra.mxu0 %v11858
    %12134 = vmatpush.msra.mxu0 %v11857
    %12135 = vmatpush.msra.mxu0 %v11856
    %12136 = vmatpush.msra.mxu0 %v11855
    %12137 = vmatpush.msra.mxu0 %v11854
    %12138 = vmatpush.msra.mxu0 %v11853
    %12139 = vmatpush.msra.mxu0 %v11852
    %12140 = vmatpush.msra.mxu0 %v11851
    %12141 = vmatpush.msra.mxu0 %v11850
    %12142 = vmatpush.msra.mxu0 %v11849
    %12143 = vmatpush.msra.mxu0 %v11848
    %12144 = vmatpush.msra.mxu0 %v11847
    %12145 = vmatmul.f32.gmra.mxu0 %v12068
    %v12146 = vpop.f32.mrf.mxu0
    %v12147 = vadd.f32 %v12127, %v12146
    %12148 = vdwg.mxu0
    %v12149 = vrcp.pop 256.0
    %v12150 = vmul.f32 256.0, %v12149
    %v12151 = vsub.f32 1.0, %v12150
    %v12152 = vmul.f32 %v12149, %v12151
    %v12153 = vadd.f32 %v12149, %v12152
    %vm12154 = vweird.f32 %v12149
    %v12155 = vsel %vm12154, %v12149, %v12153
    %v12156 = vmul.f32 %v12147, %v12155
    %v12157 = vmul.f32 %v12156, %v12156
    %v12159 = vrot.slane %v12157, 7
    %v12161 = vsub.f32 %v12156, %v12159
    %v12162 = vmax.f32 %v12161, 0.0
    %v12163 = vadd.f32 %v12162, 1e-05
    %v12164 = vrsqrt.pop %v12163
    %v12165 = vmul.f32 %v12164, %v12163
    %v12166 = vmul.f32 %v12165, %v12164
    %v12167 = vmul.f32 0.5, %v12166
    %v12168 = vsub.f32 1.5, %v12167
    %v12169 = vmul.f32 %v12164, %v12168
    %vm12170 = vweird.f32 %v12163
    %vm12171 = vweird.f32 %v12164
    %vm12172 = vmor %vm12170, %vm12171
    %v12173 = vsel %vm12172, %v12164, %v12169
    %12175 = vst [vmem:[#allocation1] sm:$0xff] %v12173
    %s12176 = scalar_lea.vmem [#allocation1], 1
    %v12177 = vld [vmem:[%s12176] ss:$9 sm:$0xff]
    %v12179 = vmul.f32 %v11927, %v12177
    %v12180 = vmul.f32 %v12156, %v12179
    %v12181 = vsub.f32 %v11928, %v12180
    %v12183 = vperm.slane %v12181, 0
    %v12185 = vsel %vm7497, %v12179, %v12183
    %12186 = vmatpush.msra.mxu0 %v11923
    %12187 = vmatpush.msra.mxu0 %v11919
    %12188 = vmatpush.msra.mxu0 %v11915
    %12189 = vmatpush.msra.mxu0 %v11911
    %12190 = vmatpush.msra.mxu0 %v11907
    %12191 = vmatpush.msra.mxu0 %v11903
    %12192 = vmatpush.msra.mxu0 %v11899
    %12193 = vmatpush.msra.mxu0 %v11895
    %12194 = vmatpush.msra.mxu0 %v11891
    %12195 = vmatpush.msra.mxu0 %v11887
    %12196 = vmatpush.msra.mxu0 %v11883
    %12197 = vmatpush.msra.mxu0 %v11879
    %12198 = vmatpush.msra.mxu0 %v11875
    %12199 = vmatpush.msra.mxu0 %v11871
    %12200 = vmatpush.msra.mxu0 %v11867
    %12201 = vmatpush.msra.mxu0 %v11863
    %12202 = vmatmul.f32.gmra.mxu0 %v12185
    %v12203 = vpop.f32.mrf.mxu0
    %v12204 = vadd.f32 0.0, %v12203
    %12205 = vdwg.mxu0
    %12206 = vmatpush.msra.mxu0 %v11924
    %12207 = vmatpush.msra.mxu0 %v11920
    %12208 = vmatpush.msra.mxu0 %v11916
    %12209 = vmatpush.msra.mxu0 %v11912
    %12210 = vmatpush.msra.mxu0 %v11908
    %12211 = vmatpush.msra.mxu0 %v11904
    %12212 = vmatpush.msra.mxu0 %v11900
    %12213 = vmatpush.msra.mxu0 %v11896
    %12214 = vmatpush.msra.mxu0 %v11892
    %12215 = vmatpush.msra.mxu0 %v11888
    %12216 = vmatpush.msra.mxu0 %v11884
    %12217 = vmatpush.msra.mxu0 %v11880
    %12218 = vmatpush.msra.mxu0 %v11876
    %12219 = vmatpush.msra.mxu0 %v11872
    %12220 = vmatpush.msra.mxu0 %v11868
    %12221 = vmatpush.msra.mxu0 %v11864
    %12222 = vmatmul.f32.gmra.mxu0 %v12185
    %v12223 = vpop.f32.mrf.mxu0
    %v12224 = vadd.f32 0.0, %v12223
    %12225 = vdwg.mxu0
    %12226 = vmatpush.msra.mxu0 %v11925
    %12227 = vmatpush.msra.mxu0 %v11921
    %12228 = vmatpush.msra.mxu0 %v11917
    %12229 = vmatpush.msra.mxu0 %v11913
    %12230 = vmatpush.msra.mxu0 %v11909
    %12231 = vmatpush.msra.mxu0 %v11905
    %12232 = vmatpush.msra.mxu0 %v11901
    %12233 = vmatpush.msra.mxu0 %v11897
    %12234 = vmatpush.msra.mxu0 %v11893
    %12235 = vmatpush.msra.mxu0 %v11889
    %12236 = vmatpush.msra.mxu0 %v11885
    %12237 = vmatpush.msra.mxu0 %v11881
    %12238 = vmatpush.msra.mxu0 %v11877
    %12239 = vmatpush.msra.mxu0 %v11873
    %12240 = vmatpush.msra.mxu0 %v11869
    %12241 = vmatpush.msra.mxu0 %v11865
    %12242 = vmatmul.f32.gmra.mxu0 %v12185
    %v12243 = vpop.f32.mrf.mxu0
    %v12244 = vadd.f32 0.0, %v12243
    %12245 = vdwg.mxu0
    %12246 = vmatpush.msra.mxu0 %v11926
    %12247 = vmatpush.msra.mxu0 %v11922
    %12248 = vmatpush.msra.mxu0 %v11918
    %12249 = vmatpush.msra.mxu0 %v11914
    %12250 = vmatpush.msra.mxu0 %v11910
    %12251 = vmatpush.msra.mxu0 %v11906
    %12252 = vmatpush.msra.mxu0 %v11902
    %12253 = vmatpush.msra.mxu0 %v11898
    %12254 = vmatpush.msra.mxu0 %v11894
    %12255 = vmatpush.msra.mxu0 %v11890
    %12256 = vmatpush.msra.mxu0 %v11886
    %12257 = vmatpush.msra.mxu0 %v11882
    %12258 = vmatpush.msra.mxu0 %v11878
    %12259 = vmatpush.msra.mxu0 %v11874
    %12260 = vmatpush.msra.mxu0 %v11870
    %12261 = vmatpush.msra.mxu0 %v11866
    %12262 = vmatmul.f32.gmra.mxu0 %v12185
    %v12263 = vpop.f32.mrf.mxu0
    %v12264 = vadd.f32 0.0, %v12263
    %12265 = vdwg.mxu0
    %v12266 = vperm.slane %v12204, 0
    %v12267 = vperm.slane %v12224, 0
    %v12268 = vperm.slane %v12244, 0
    %v12269 = vperm.slane %v12264, 0
    %v12270 = vmul.f32 %v10736, %v12266
    %v12271 = vmul.f32 %v11084, %v12267
    %v12272 = vmul.f32 %v11432, %v12268
    %v12273 = vmul.f32 %v11780, %v12269
    %v12274 = vmul.f32 %v10738, %v12266
    %v12275 = vmul.f32 %v11086, %v12267
    %v12276 = vmul.f32 %v11434, %v12268
    %v12277 = vmul.f32 %v11782, %v12269
    %v12278 = vmul.f32 %v10741, %v12266
    %v12279 = vmul.f32 %v11089, %v12267
    %v12280 = vmul.f32 %v11437, %v12268
    %v12281 = vmul.f32 %v11785, %v12269
    %v12282 = vmul.f32 %v10743, %v12266
    %v12283 = vmul.f32 %v11091, %v12267
    %v12284 = vmul.f32 %v11439, %v12268
    %v12285 = vmul.f32 %v11787, %v12269
    %v12286 = vmul.f32 %v10746, %v12266
    %v12287 = vmul.f32 %v11094, %v12267
    %v12288 = vmul.f32 %v11442, %v12268
    %v12289 = vmul.f32 %v11790, %v12269
    %v12290 = vmul.f32 %v10748, %v12266
    %v12291 = vmul.f32 %v11096, %v12267
    %v12292 = vmul.f32 %v11444, %v12268
    %v12293 = vmul.f32 %v11792, %v12269
    %v12294 = vmul.f32 %v10751, %v12266
    %v12295 = vmul.f32 %v11099, %v12267
    %v12296 = vmul.f32 %v11447, %v12268
    %v12297 = vmul.f32 %v11795, %v12269
    %v12298 = vmul.f32 %v10753, %v12266
    %v12299 = vmul.f32 %v11101, %v12267
    %v12300 = vmul.f32 %v11449, %v12268
    %v12301 = vmul.f32 %v11797, %v12269
    %v12302 = vperm.slane %v12204, 1
    %v12303 = vperm.slane %v12224, 1
    %v12304 = vperm.slane %v12244, 1
    %v12305 = vperm.slane %v12264, 1
    %v12306 = vadd.f32 %v12270, %v12302
    %v12307 = vadd.f32 %v12271, %v12303
    %v12308 = vadd.f32 %v12272, %v12304
    %v12309 = vadd.f32 %v12273, %v12305
    %v12310 = vadd.f32 %v12274, %v12302
    %v12311 = vadd.f32 %v12275, %v12303
    %v12312 = vadd.f32 %v12276, %v12304
    %v12313 = vadd.f32 %v12277, %v12305
    %v12314 = vadd.f32 %v12278, %v12302
    %v12315 = vadd.f32 %v12279, %v12303
    %v12316 = vadd.f32 %v12280, %v12304
    %v12317 = vadd.f32 %v12281, %v12305
    %v12318 = vadd.f32 %v12282, %v12302
    %v12319 = vadd.f32 %v12283, %v12303
    %v12320 = vadd.f32 %v12284, %v12304
    %v12321 = vadd.f32 %v12285, %v12305
    %v12322 = vadd.f32 %v12286, %v12302
    %v12323 = vadd.f32 %v12287, %v12303
    %v12324 = vadd.f32 %v12288, %v12304
    %v12325 = vadd.f32 %v12289, %v12305
    %v12326 = vadd.f32 %v12290, %v12302
    %v12327 = vadd.f32 %v12291, %v12303
    %v12328 = vadd.f32 %v12292, %v12304
    %v12329 = vadd.f32 %v12293, %v12305
    %v12330 = vadd.f32 %v12294, %v12302
    %v12331 = vadd.f32 %v12295, %v12303
    %v12332 = vadd.f32 %v12296, %v12304
    %v12333 = vadd.f32 %v12297, %v12305
    %v12334 = vadd.f32 %v12298, %v12302
    %v12335 = vadd.f32 %v12299, %v12303
    %v12336 = vadd.f32 %v12300, %v12304
    %v12337 = vadd.f32 %v12301, %v12305
    %v12338 = vmul.f32 %v12306, 0.2
    %v12339 = vmul.f32 %v12307, 0.2
    %v12340 = vmul.f32 %v12308, 0.2
    %v12341 = vmul.f32 %v12309, 0.2
    %v12342 = vmul.f32 %v12310, 0.2
    %v12343 = vmul.f32 %v12311, 0.2
    %v12344 = vmul.f32 %v12312, 0.2
    %v12345 = vmul.f32 %v12313, 0.2
    %v12346 = vmul.f32 %v12314, 0.2
    %v12347 = vmul.f32 %v12315, 0.2
    %v12348 = vmul.f32 %v12316, 0.2
    %v12349 = vmul.f32 %v12317, 0.2
    %v12350 = vmul.f32 %v12318, 0.2
    %v12351 = vmul.f32 %v12319, 0.2
    %v12352 = vmul.f32 %v12320, 0.2
    %v12353 = vmul.f32 %v12321, 0.2
    %v12354 = vmul.f32 %v12322, 0.2
    %v12355 = vmul.f32 %v12323, 0.2
    %v12356 = vmul.f32 %v12324, 0.2
    %v12357 = vmul.f32 %v12325, 0.2
    %v12358 = vmul.f32 %v12326, 0.2
    %v12359 = vmul.f32 %v12327, 0.2
    %v12360 = vmul.f32 %v12328, 0.2
    %v12361 = vmul.f32 %v12329, 0.2
    %v12362 = vmul.f32 %v12330, 0.2
    %v12363 = vmul.f32 %v12331, 0.2
    %v12364 = vmul.f32 %v12332, 0.2
    %v12365 = vmul.f32 %v12333, 0.2
    %v12366 = vmul.f32 %v12334, 0.2
    %v12367 = vmul.f32 %v12335, 0.2
    %v12368 = vmul.f32 %v12336, 0.2
    %v12369 = vmul.f32 %v12337, 0.2
    %v12370 = vmax.f32 %v12306, %v12338
    %v12371 = vmax.f32 %v12307, %v12339
    %v12372 = vmax.f32 %v12308, %v12340
    %v12373 = vmax.f32 %v12309, %v12341
    %v12374 = vmax.f32 %v12310, %v12342
    %v12375 = vmax.f32 %v12311, %v12343
    %v12376 = vmax.f32 %v12312, %v12344
    %v12377 = vmax.f32 %v12313, %v12345
    %v12378 = vmax.f32 %v12314, %v12346
    %v12379 = vmax.f32 %v12315, %v12347
    %v12380 = vmax.f32 %v12316, %v12348
    %v12381 = vmax.f32 %v12317, %v12349
    %v12382 = vmax.f32 %v12318, %v12350
    %v12383 = vmax.f32 %v12319, %v12351
    %v12384 = vmax.f32 %v12320, %v12352
    %v12385 = vmax.f32 %v12321, %v12353
    %v12386 = vmax.f32 %v12322, %v12354
    %v12387 = vmax.f32 %v12323, %v12355
    %v12388 = vmax.f32 %v12324, %v12356
    %v12389 = vmax.f32 %v12325, %v12357
    %v12390 = vmax.f32 %v12326, %v12358
    %v12391 = vmax.f32 %v12327, %v12359
    %v12392 = vmax.f32 %v12328, %v12360
    %v12393 = vmax.f32 %v12329, %v12361
    %v12394 = vmax.f32 %v12330, %v12362
    %v12395 = vmax.f32 %v12331, %v12363
    %v12396 = vmax.f32 %v12332, %v12364
    %v12397 = vmax.f32 %v12333, %v12365
    %v12398 = vmax.f32 %v12334, %v12366
    %v12399 = vmax.f32 %v12335, %v12367
    %v12400 = vmax.f32 %v12336, %v12368
    %v12401 = vmax.f32 %v12337, %v12369
    %v12402 = vpack.c.bf16 %v12371, %v12370
    %v12403 = vpack.c.bf16 %v12373, %v12372
    %v12404 = vpack.c.bf16 %v12375, %v12374
    %v12405 = vpack.c.bf16 %v12377, %v12376
    %v12406 = vpack.c.bf16 %v12379, %v12378
    %v12407 = vpack.c.bf16 %v12381, %v12380
    %v12408 = vpack.c.bf16 %v12383, %v12382
    %v12409 = vpack.c.bf16 %v12385, %v12384
    %v12410 = vpack.c.bf16 %v12387, %v12386
    %v12411 = vpack.c.bf16 %v12389, %v12388
    %v12412 = vpack.c.bf16 %v12391, %v12390
    %v12413 = vpack.c.bf16 %v12393, %v12392
    %v12414 = vpack.c.bf16 %v12395, %v12394
    %v12415 = vpack.c.bf16 %v12397, %v12396
    %v12416 = vpack.c.bf16 %v12399, %v12398
    %v12417 = vpack.c.bf16 %v12401, %v12400
    %v12422 = vunpack.c.l.b16 %v12402
    %v12423 = vunpack.c.h.b16 %v12402
    %v12424 = vunpack.c.l.b16 %v12403
    %v12425 = vunpack.c.h.b16 %v12403
    %v12426 = vunpack.c.l.b16 %v12404
    %v12427 = vunpack.c.h.b16 %v12404
    %v12428 = vunpack.c.l.b16 %v12405
    %v12429 = vunpack.c.h.b16 %v12405
    %v12430 = vpack.c.b16 %v12426, %v12422
    %v12431 = vpack.c.b16 %v12427, %v12423
    %v12432 = vpack.c.b16 %v12428, %v12424
    %v12433 = vpack.c.b16 %v12429, %v12425
    %v12442 = vunpack.c.l.b16 %v12406
    %v12443 = vunpack.c.h.b16 %v12406
    %v12444 = vunpack.c.l.b16 %v12407
    %v12445 = vunpack.c.h.b16 %v12407
    %v12446 = vunpack.c.l.b16 %v12408
    %v12447 = vunpack.c.h.b16 %v12408
    %v12448 = vunpack.c.l.b16 %v12409
    %v12449 = vunpack.c.h.b16 %v12409
    %v12450 = vpack.c.b16 %v12446, %v12442
    %v12451 = vpack.c.b16 %v12447, %v12443
    %v12452 = vpack.c.b16 %v12448, %v12444
    %v12453 = vpack.c.b16 %v12449, %v12445
    %v12462 = vunpack.c.l.b16 %v12410
    %v12463 = vunpack.c.h.b16 %v12410
    %v12464 = vunpack.c.l.b16 %v12411
    %v12465 = vunpack.c.h.b16 %v12411
    %v12466 = vunpack.c.l.b16 %v12412
    %v12467 = vunpack.c.h.b16 %v12412
    %v12468 = vunpack.c.l.b16 %v12413
    %v12469 = vunpack.c.h.b16 %v12413
    %v12470 = vpack.c.b16 %v12466, %v12462
    %v12471 = vpack.c.b16 %v12467, %v12463
    %v12472 = vpack.c.b16 %v12468, %v12464
    %v12473 = vpack.c.b16 %v12469, %v12465
    %v12482 = vunpack.c.l.b16 %v12414
    %v12483 = vunpack.c.h.b16 %v12414
    %v12484 = vunpack.c.l.b16 %v12415
    %v12485 = vunpack.c.h.b16 %v12415
    %v12486 = vunpack.c.l.b16 %v12416
    %v12487 = vunpack.c.h.b16 %v12416
    %v12488 = vunpack.c.l.b16 %v12417
    %v12489 = vunpack.c.h.b16 %v12417
    %v12490 = vpack.c.b16 %v12486, %v12482
    %v12491 = vpack.c.b16 %v12487, %v12483
    %v12492 = vpack.c.b16 %v12488, %v12484
    %v12493 = vpack.c.b16 %v12489, %v12485
    %v12498 = vld [vmem:[%s4] sm:$0xf]
    %v12499 = vld [vmem:[%s4 + $0x4] sm:$0xf]
    %v12500 = vld [vmem:[%s4 + $0x8] sm:$0xf]
    %v12501 = vld [vmem:[%s4 + $0xc] sm:$0xf]
    %v12502 = vld [vmem:[%s4 + $0x10] sm:$0xf]
    %v12503 = vld [vmem:[%s4 + $0x14] sm:$0xf]
    %v12504 = vld [vmem:[%s4 + $0x18] sm:$0xf]
    %v12505 = vld [vmem:[%s4 + $0x1c] sm:$0xf]
    %v12506 = vld [vmem:[%s4 + $0x20] sm:$0xf]
    %v12507 = vld [vmem:[%s4 + $0x24] sm:$0xf]
    %v12508 = vld [vmem:[%s4 + $0x28] sm:$0xf]
    %v12509 = vld [vmem:[%s4 + $0x2c] sm:$0xf]
    %v12510 = vld [vmem:[%s4 + $0x30] sm:$0xf]
    %v12511 = vld [vmem:[%s4 + $0x34] sm:$0xf]
    %v12512 = vld [vmem:[%s4 + $0x38] sm:$0xf]
    %v12513 = vld [vmem:[%s4 + $0x3c] sm:$0xf]
    %v12514 = vld [vmem:[%s4 + $0x40] sm:$0xf]
    %v12515 = vld [vmem:[%s4 + $0x44] sm:$0xf]
    %v12516 = vld [vmem:[%s4 + $0x48] sm:$0xf]
    %v12517 = vld [vmem:[%s4 + $0x4c] sm:$0xf]
    %v12518 = vld [vmem:[%s4 + $0x50] sm:$0xf]
    %v12519 = vld [vmem:[%s4 + $0x54] sm:$0xf]
    %v12520 = vld [vmem:[%s4 + $0x58] sm:$0xf]
    %v12521 = vld [vmem:[%s4 + $0x5c] sm:$0xf]
    %v12522 = vld [vmem:[%s4 + $0x60] sm:$0xf]
    %v12523 = vld [vmem:[%s4 + $0x64] sm:$0xf]
    %v12524 = vld [vmem:[%s4 + $0x68] sm:$0xf]
    %v12525 = vld [vmem:[%s4 + $0x6c] sm:$0xf]
    %v12526 = vld [vmem:[%s4 + $0x70] sm:$0xf]
    %v12527 = vld [vmem:[%s4 + $0x74] sm:$0xf]
    %v12528 = vld [vmem:[%s4 + $0x78] sm:$0xf]
    %v12529 = vld [vmem:[%s4 + $0x7c] sm:$0xf]
    %v12530 = vld [vmem:[%s4 + $0x80] sm:$0xf]
    %v12531 = vld [vmem:[%s4 + $0x84] sm:$0xf]
    %v12532 = vld [vmem:[%s4 + $0x88] sm:$0xf]
    %v12533 = vld [vmem:[%s4 + $0x8c] sm:$0xf]
    %v12534 = vld [vmem:[%s4 + $0x90] sm:$0xf]
    %v12535 = vld [vmem:[%s4 + $0x94] sm:$0xf]
    %v12536 = vld [vmem:[%s4 + $0x98] sm:$0xf]
    %v12537 = vld [vmem:[%s4 + $0x9c] sm:$0xf]
    %v12538 = vld [vmem:[%s4 + $0xa0] sm:$0xf]
    %v12539 = vld [vmem:[%s4 + $0xa4] sm:$0xf]
    %v12540 = vld [vmem:[%s4 + $0xa8] sm:$0xf]
    %v12541 = vld [vmem:[%s4 + $0xac] sm:$0xf]
    %v12542 = vld [vmem:[%s4 + $0xb0] sm:$0xf]
    %v12543 = vld [vmem:[%s4 + $0xb4] sm:$0xf]
    %v12544 = vld [vmem:[%s4 + $0xb8] sm:$0xf]
    %v12545 = vld [vmem:[%s4 + $0xbc] sm:$0xf]
    %v12546 = vld [vmem:[%s4 + $0xc0] sm:$0xf]
    %v12547 = vld [vmem:[%s4 + $0xc4] sm:$0xf]
    %v12548 = vld [vmem:[%s4 + $0xc8] sm:$0xf]
    %v12549 = vld [vmem:[%s4 + $0xcc] sm:$0xf]
    %v12550 = vld [vmem:[%s4 + $0xd0] sm:$0xf]
    %v12551 = vld [vmem:[%s4 + $0xd4] sm:$0xf]
    %v12552 = vld [vmem:[%s4 + $0xd8] sm:$0xf]
    %v12553 = vld [vmem:[%s4 + $0xdc] sm:$0xf]
    %v12554 = vld [vmem:[%s4 + $0xe0] sm:$0xf]
    %v12555 = vld [vmem:[%s4 + $0xe4] sm:$0xf]
    %v12556 = vld [vmem:[%s4 + $0xe8] sm:$0xf]
    %v12557 = vld [vmem:[%s4 + $0xec] sm:$0xf]
    %v12558 = vld [vmem:[%s4 + $0xf0] sm:$0xf]
    %v12559 = vld [vmem:[%s4 + $0xf4] sm:$0xf]
    %v12560 = vld [vmem:[%s4 + $0xf8] sm:$0xf]
    %v12561 = vld [vmem:[%s4 + $0xfc] sm:$0xf]
    %v12562 = vld [vmem:[%s4 + $0x100] sm:$0xf]
    %v12563 = vld [vmem:[%s4 + $0x104] sm:$0xf]
    %v12564 = vld [vmem:[%s4 + $0x108] sm:$0xf]
    %v12565 = vld [vmem:[%s4 + $0x10c] sm:$0xf]
    %v12566 = vld [vmem:[%s4 + $0x110] sm:$0xf]
    %v12567 = vld [vmem:[%s4 + $0x114] sm:$0xf]
    %v12568 = vld [vmem:[%s4 + $0x118] sm:$0xf]
    %v12569 = vld [vmem:[%s4 + $0x11c] sm:$0xf]
    %v12570 = vld [vmem:[%s4 + $0x120] sm:$0xf]
    %v12571 = vld [vmem:[%s4 + $0x124] sm:$0xf]
    %v12572 = vld [vmem:[%s4 + $0x128] sm:$0xf]
    %v12573 = vld [vmem:[%s4 + $0x12c] sm:$0xf]
    %v12574 = vld [vmem:[%s4 + $0x130] sm:$0xf]
    %v12575 = vld [vmem:[%s4 + $0x134] sm:$0xf]
    %v12576 = vld [vmem:[%s4 + $0x138] sm:$0xf]
    %v12577 = vld [vmem:[%s4 + $0x13c] sm:$0xf]
    %v12578 = vld [vmem:[%s4 + $0x140] sm:$0xf]
    %v12579 = vld [vmem:[%s4 + $0x144] sm:$0xf]
    %v12580 = vld [vmem:[%s4 + $0x148] sm:$0xf]
    %v12581 = vld [vmem:[%s4 + $0x14c] sm:$0xf]
    %v12582 = vld [vmem:[%s4 + $0x150] sm:$0xf]
    %v12583 = vld [vmem:[%s4 + $0x154] sm:$0xf]
    %v12584 = vld [vmem:[%s4 + $0x158] sm:$0xf]
    %v12585 = vld [vmem:[%s4 + $0x15c] sm:$0xf]
    %v12586 = vld [vmem:[%s4 + $0x160] sm:$0xf]
    %v12587 = vld [vmem:[%s4 + $0x164] sm:$0xf]
    %v12588 = vld [vmem:[%s4 + $0x168] sm:$0xf]
    %v12589 = vld [vmem:[%s4 + $0x16c] sm:$0xf]
    %v12590 = vld [vmem:[%s4 + $0x170] sm:$0xf]
    %v12591 = vld [vmem:[%s4 + $0x174] sm:$0xf]
    %v12592 = vld [vmem:[%s4 + $0x178] sm:$0xf]
    %v12593 = vld [vmem:[%s4 + $0x17c] sm:$0xf]
    %v12594 = vld [vmem:[%s4 + $0x180] sm:$0xf]
    %v12595 = vld [vmem:[%s4 + $0x184] sm:$0xf]
    %v12596 = vld [vmem:[%s4 + $0x188] sm:$0xf]
    %v12597 = vld [vmem:[%s4 + $0x18c] sm:$0xf]
    %v12598 = vld [vmem:[%s4 + $0x190] sm:$0xf]
    %v12599 = vld [vmem:[%s4 + $0x194] sm:$0xf]
    %v12600 = vld [vmem:[%s4 + $0x198] sm:$0xf]
    %v12601 = vld [vmem:[%s4 + $0x19c] sm:$0xf]
    %v12602 = vld [vmem:[%s4 + $0x1a0] sm:$0xf]
    %v12603 = vld [vmem:[%s4 + $0x1a4] sm:$0xf]
    %v12604 = vld [vmem:[%s4 + $0x1a8] sm:$0xf]
    %v12605 = vld [vmem:[%s4 + $0x1ac] sm:$0xf]
    %v12606 = vld [vmem:[%s4 + $0x1b0] sm:$0xf]
    %v12607 = vld [vmem:[%s4 + $0x1b4] sm:$0xf]
    %v12608 = vld [vmem:[%s4 + $0x1b8] sm:$0xf]
    %v12609 = vld [vmem:[%s4 + $0x1bc] sm:$0xf]
    %v12610 = vld [vmem:[%s4 + $0x1c0] sm:$0xf]
    %v12611 = vld [vmem:[%s4 + $0x1c4] sm:$0xf]
    %v12612 = vld [vmem:[%s4 + $0x1c8] sm:$0xf]
    %v12613 = vld [vmem:[%s4 + $0x1cc] sm:$0xf]
    %v12614 = vld [vmem:[%s4 + $0x1d0] sm:$0xf]
    %v12615 = vld [vmem:[%s4 + $0x1d4] sm:$0xf]
    %v12616 = vld [vmem:[%s4 + $0x1d8] sm:$0xf]
    %v12617 = vld [vmem:[%s4 + $0x1dc] sm:$0xf]
    %v12618 = vld [vmem:[%s4 + $0x1e0] sm:$0xf]
    %v12619 = vld [vmem:[%s4 + $0x1e4] sm:$0xf]
    %v12620 = vld [vmem:[%s4 + $0x1e8] sm:$0xf]
    %v12621 = vld [vmem:[%s4 + $0x1ec] sm:$0xf]
    %v12622 = vld [vmem:[%s4 + $0x1f0] sm:$0xf]
    %v12623 = vld [vmem:[%s4 + $0x1f4] sm:$0xf]
    %v12624 = vld [vmem:[%s4 + $0x1f8] sm:$0xf]
    %v12625 = vld [vmem:[%s4 + $0x1fc] sm:$0xf]
    %v12626 = vld [vmem:[%s4 + $0x200] sm:$0xf]
    %v12627 = vld [vmem:[%s4 + $0x204] sm:$0xf]
    %v12628 = vld [vmem:[%s4 + $0x208] sm:$0xf]
    %v12629 = vld [vmem:[%s4 + $0x20c] sm:$0xf]
    %v12630 = vld [vmem:[%s4 + $0x210] sm:$0xf]
    %v12631 = vld [vmem:[%s4 + $0x214] sm:$0xf]
    %v12632 = vld [vmem:[%s4 + $0x218] sm:$0xf]
    %v12633 = vld [vmem:[%s4 + $0x21c] sm:$0xf]
    %v12634 = vld [vmem:[%s4 + $0x220] sm:$0xf]
    %v12635 = vld [vmem:[%s4 + $0x224] sm:$0xf]
    %v12636 = vld [vmem:[%s4 + $0x228] sm:$0xf]
    %v12637 = vld [vmem:[%s4 + $0x22c] sm:$0xf]
    %v12638 = vld [vmem:[%s4 + $0x230] sm:$0xf]
    %v12639 = vld [vmem:[%s4 + $0x234] sm:$0xf]
    %v12640 = vld [vmem:[%s4 + $0x238] sm:$0xf]
    %v12641 = vld [vmem:[%s4 + $0x23c] sm:$0xf]
    %v12642 = vld [vmem:[%s4 + $0x240] sm:$0xf]
    %v12643 = vld [vmem:[%s4 + $0x244] sm:$0xf]
    %v12644 = vld [vmem:[%s4 + $0x248] sm:$0xf]
    %v12645 = vld [vmem:[%s4 + $0x24c] sm:$0xf]
    %v12646 = vld [vmem:[%s4 + $0x250] sm:$0xf]
    %v12647 = vld [vmem:[%s4 + $0x254] sm:$0xf]
    %v12648 = vld [vmem:[%s4 + $0x258] sm:$0xf]
    %v12649 = vld [vmem:[%s4 + $0x25c] sm:$0xf]
    %v12650 = vld [vmem:[%s4 + $0x260] sm:$0xf]
    %v12651 = vld [vmem:[%s4 + $0x264] sm:$0xf]
    %v12652 = vld [vmem:[%s4 + $0x268] sm:$0xf]
    %v12653 = vld [vmem:[%s4 + $0x26c] sm:$0xf]
    %v12654 = vld [vmem:[%s4 + $0x270] sm:$0xf]
    %v12655 = vld [vmem:[%s4 + $0x274] sm:$0xf]
    %v12656 = vld [vmem:[%s4 + $0x278] sm:$0xf]
    %v12657 = vld [vmem:[%s4 + $0x27c] sm:$0xf]
    %v12658 = vld [vmem:[%s4 + $0x280] sm:$0xf]
    %v12659 = vld [vmem:[%s4 + $0x284] sm:$0xf]
    %v12660 = vld [vmem:[%s4 + $0x288] sm:$0xf]
    %v12661 = vld [vmem:[%s4 + $0x28c] sm:$0xf]
    %v12662 = vld [vmem:[%s4 + $0x290] sm:$0xf]
    %v12663 = vld [vmem:[%s4 + $0x294] sm:$0xf]
    %v12664 = vld [vmem:[%s4 + $0x298] sm:$0xf]
    %v12665 = vld [vmem:[%s4 + $0x29c] sm:$0xf]
    %v12666 = vld [vmem:[%s4 + $0x2a0] sm:$0xf]
    %v12667 = vld [vmem:[%s4 + $0x2a4] sm:$0xf]
    %v12668 = vld [vmem:[%s4 + $0x2a8] sm:$0xf]
    %v12669 = vld [vmem:[%s4 + $0x2ac] sm:$0xf]
    %v12670 = vld [vmem:[%s4 + $0x2b0] sm:$0xf]
    %v12671 = vld [vmem:[%s4 + $0x2b4] sm:$0xf]
    %v12672 = vld [vmem:[%s4 + $0x2b8] sm:$0xf]
    %v12673 = vld [vmem:[%s4 + $0x2bc] sm:$0xf]
    %v12674 = vld [vmem:[%s4 + $0x2c0] sm:$0xf]
    %v12675 = vld [vmem:[%s4 + $0x2c4] sm:$0xf]
    %v12676 = vld [vmem:[%s4 + $0x2c8] sm:$0xf]
    %v12677 = vld [vmem:[%s4 + $0x2cc] sm:$0xf]
    %v12678 = vld [vmem:[%s4 + $0x2d0] sm:$0xf]
    %v12679 = vld [vmem:[%s4 + $0x2d4] sm:$0xf]
    %v12680 = vld [vmem:[%s4 + $0x2d8] sm:$0xf]
    %v12681 = vld [vmem:[%s4 + $0x2dc] sm:$0xf]
    %v12682 = vld [vmem:[%s4 + $0x2e0] sm:$0xf]
    %v12683 = vld [vmem:[%s4 + $0x2e4] sm:$0xf]
    %v12684 = vld [vmem:[%s4 + $0x2e8] sm:$0xf]
    %v12685 = vld [vmem:[%s4 + $0x2ec] sm:$0xf]
    %v12686 = vld [vmem:[%s4 + $0x2f0] sm:$0xf]
    %v12687 = vld [vmem:[%s4 + $0x2f4] sm:$0xf]
    %v12688 = vld [vmem:[%s4 + $0x2f8] sm:$0xf]
    %v12689 = vld [vmem:[%s4 + $0x2fc] sm:$0xf]
    %v12690 = vld [vmem:[%s4 + $0x300] sm:$0xf]
    %v12691 = vld [vmem:[%s4 + $0x304] sm:$0xf]
    %v12692 = vld [vmem:[%s4 + $0x308] sm:$0xf]
    %v12693 = vld [vmem:[%s4 + $0x30c] sm:$0xf]
    %v12694 = vld [vmem:[%s4 + $0x310] sm:$0xf]
    %v12695 = vld [vmem:[%s4 + $0x314] sm:$0xf]
    %v12696 = vld [vmem:[%s4 + $0x318] sm:$0xf]
    %v12697 = vld [vmem:[%s4 + $0x31c] sm:$0xf]
    %v12698 = vld [vmem:[%s4 + $0x320] sm:$0xf]
    %v12699 = vld [vmem:[%s4 + $0x324] sm:$0xf]
    %v12700 = vld [vmem:[%s4 + $0x328] sm:$0xf]
    %v12701 = vld [vmem:[%s4 + $0x32c] sm:$0xf]
    %v12702 = vld [vmem:[%s4 + $0x330] sm:$0xf]
    %v12703 = vld [vmem:[%s4 + $0x334] sm:$0xf]
    %v12704 = vld [vmem:[%s4 + $0x338] sm:$0xf]
    %v12705 = vld [vmem:[%s4 + $0x33c] sm:$0xf]
    %v12706 = vld [vmem:[%s4 + $0x340] sm:$0xf]
    %v12707 = vld [vmem:[%s4 + $0x344] sm:$0xf]
    %v12708 = vld [vmem:[%s4 + $0x348] sm:$0xf]
    %v12709 = vld [vmem:[%s4 + $0x34c] sm:$0xf]
    %v12710 = vld [vmem:[%s4 + $0x350] sm:$0xf]
    %v12711 = vld [vmem:[%s4 + $0x354] sm:$0xf]
    %v12712 = vld [vmem:[%s4 + $0x358] sm:$0xf]
    %v12713 = vld [vmem:[%s4 + $0x35c] sm:$0xf]
    %v12714 = vld [vmem:[%s4 + $0x360] sm:$0xf]
    %v12715 = vld [vmem:[%s4 + $0x364] sm:$0xf]
    %v12716 = vld [vmem:[%s4 + $0x368] sm:$0xf]
    %v12717 = vld [vmem:[%s4 + $0x36c] sm:$0xf]
    %v12718 = vld [vmem:[%s4 + $0x370] sm:$0xf]
    %v12719 = vld [vmem:[%s4 + $0x374] sm:$0xf]
    %v12720 = vld [vmem:[%s4 + $0x378] sm:$0xf]
    %v12721 = vld [vmem:[%s4 + $0x37c] sm:$0xf]
    %v12722 = vld [vmem:[%s4 + $0x380] sm:$0xf]
    %v12723 = vld [vmem:[%s4 + $0x384] sm:$0xf]
    %v12724 = vld [vmem:[%s4 + $0x388] sm:$0xf]
    %v12725 = vld [vmem:[%s4 + $0x38c] sm:$0xf]
    %v12726 = vld [vmem:[%s4 + $0x390] sm:$0xf]
    %v12727 = vld [vmem:[%s4 + $0x394] sm:$0xf]
    %v12728 = vld [vmem:[%s4 + $0x398] sm:$0xf]
    %v12729 = vld [vmem:[%s4 + $0x39c] sm:$0xf]
    %v12730 = vld [vmem:[%s4 + $0x3a0] sm:$0xf]
    %v12731 = vld [vmem:[%s4 + $0x3a4] sm:$0xf]
    %v12732 = vld [vmem:[%s4 + $0x3a8] sm:$0xf]
    %v12733 = vld [vmem:[%s4 + $0x3ac] sm:$0xf]
    %v12734 = vld [vmem:[%s4 + $0x3b0] sm:$0xf]
    %v12735 = vld [vmem:[%s4 + $0x3b4] sm:$0xf]
    %v12736 = vld [vmem:[%s4 + $0x3b8] sm:$0xf]
    %v12737 = vld [vmem:[%s4 + $0x3bc] sm:$0xf]
    %v12738 = vld [vmem:[%s4 + $0x3c0] sm:$0xf]
    %v12739 = vld [vmem:[%s4 + $0x3c4] sm:$0xf]
    %v12740 = vld [vmem:[%s4 + $0x3c8] sm:$0xf]
    %v12741 = vld [vmem:[%s4 + $0x3cc] sm:$0xf]
    %v12742 = vld [vmem:[%s4 + $0x3d0] sm:$0xf]
    %v12743 = vld [vmem:[%s4 + $0x3d4] sm:$0xf]
    %v12744 = vld [vmem:[%s4 + $0x3d8] sm:$0xf]
    %v12745 = vld [vmem:[%s4 + $0x3dc] sm:$0xf]
    %v12746 = vld [vmem:[%s4 + $0x3e0] sm:$0xf]
    %v12747 = vld [vmem:[%s4 + $0x3e4] sm:$0xf]
    %v12748 = vld [vmem:[%s4 + $0x3e8] sm:$0xf]
    %v12749 = vld [vmem:[%s4 + $0x3ec] sm:$0xf]
    %v12750 = vld [vmem:[%s4 + $0x3f0] sm:$0xf]
    %v12751 = vld [vmem:[%s4 + $0x3f4] sm:$0xf]
    %v12752 = vld [vmem:[%s4 + $0x3f8] sm:$0xf]
    %v12753 = vld [vmem:[%s4 + $0x3fc] sm:$0xf]
    %v13010 = vunpack.c.l.b16 %v12498
    %v13011 = vunpack.c.l.b16 %v12499
    %v13012 = vunpack.c.l.b16 %v12500
    %v13013 = vunpack.c.l.b16 %v12501
    %v13014 = vunpack.c.l.b16 %v12502
    %v13015 = vunpack.c.l.b16 %v12503
    %v13016 = vunpack.c.l.b16 %v12504
    %v13017 = vunpack.c.l.b16 %v12505
    %v13018 = vunpack.c.l.b16 %v12506
    %v13019 = vunpack.c.l.b16 %v12507
    %v13020 = vunpack.c.l.b16 %v12508
    %v13021 = vunpack.c.l.b16 %v12509
    %v13022 = vunpack.c.l.b16 %v12510
    %v13023 = vunpack.c.l.b16 %v12511
    %v13024 = vunpack.c.l.b16 %v12512
    %v13025 = vunpack.c.l.b16 %v12513
    %v13026 = vunpack.c.l.b16 %v12514
    %v13027 = vunpack.c.l.b16 %v12515
    %v13028 = vunpack.c.l.b16 %v12516
    %v13029 = vunpack.c.l.b16 %v12517
    %v13030 = vunpack.c.l.b16 %v12518
    %v13031 = vunpack.c.l.b16 %v12519
    %v13032 = vunpack.c.l.b16 %v12520
    %v13033 = vunpack.c.l.b16 %v12521
    %v13034 = vunpack.c.l.b16 %v12522
    %v13035 = vunpack.c.l.b16 %v12523
    %v13036 = vunpack.c.l.b16 %v12524
    %v13037 = vunpack.c.l.b16 %v12525
    %v13038 = vunpack.c.l.b16 %v12526
    %v13039 = vunpack.c.l.b16 %v12527
    %v13040 = vunpack.c.l.b16 %v12528
    %v13041 = vunpack.c.l.b16 %v12529
    %v13042 = vunpack.c.l.b16 %v12530
    %v13043 = vunpack.c.l.b16 %v12531
    %v13044 = vunpack.c.l.b16 %v12532
    %v13045 = vunpack.c.l.b16 %v12533
    %v13046 = vunpack.c.l.b16 %v12534
    %v13047 = vunpack.c.l.b16 %v12535
    %v13048 = vunpack.c.l.b16 %v12536
    %v13049 = vunpack.c.l.b16 %v12537
    %v13050 = vunpack.c.l.b16 %v12538
    %v13051 = vunpack.c.l.b16 %v12539
    %v13052 = vunpack.c.l.b16 %v12540
    %v13053 = vunpack.c.l.b16 %v12541
    %v13054 = vunpack.c.l.b16 %v12542
    %v13055 = vunpack.c.l.b16 %v12543
    %v13056 = vunpack.c.l.b16 %v12544
    %v13057 = vunpack.c.l.b16 %v12545
    %v13058 = vunpack.c.l.b16 %v12546
    %v13059 = vunpack.c.l.b16 %v12547
    %v13060 = vunpack.c.l.b16 %v12548
    %v13061 = vunpack.c.l.b16 %v12549
    %v13062 = vunpack.c.l.b16 %v12550
    %v13063 = vunpack.c.l.b16 %v12551
    %v13064 = vunpack.c.l.b16 %v12552
    %v13065 = vunpack.c.l.b16 %v12553
    %v13066 = vunpack.c.l.b16 %v12554
    %v13067 = vunpack.c.l.b16 %v12555
    %v13068 = vunpack.c.l.b16 %v12556
    %v13069 = vunpack.c.l.b16 %v12557
    %v13070 = vunpack.c.l.b16 %v12558
    %v13071 = vunpack.c.l.b16 %v12559
    %v13072 = vunpack.c.l.b16 %v12560
    %v13073 = vunpack.c.l.b16 %v12561
    %v13074 = vunpack.c.l.b16 %v12562
    %v13075 = vunpack.c.l.b16 %v12563
    %v13076 = vunpack.c.l.b16 %v12564
    %v13077 = vunpack.c.l.b16 %v12565
    %v13078 = vunpack.c.l.b16 %v12566
    %v13079 = vunpack.c.l.b16 %v12567
    %v13080 = vunpack.c.l.b16 %v12568
    %v13081 = vunpack.c.l.b16 %v12569
    %v13082 = vunpack.c.l.b16 %v12570
    %v13083 = vunpack.c.l.b16 %v12571
    %v13084 = vunpack.c.l.b16 %v12572
    %v13085 = vunpack.c.l.b16 %v12573
    %v13086 = vunpack.c.l.b16 %v12574
    %v13087 = vunpack.c.l.b16 %v12575
    %v13088 = vunpack.c.l.b16 %v12576
    %v13089 = vunpack.c.l.b16 %v12577
    %v13090 = vunpack.c.l.b16 %v12578
    %v13091 = vunpack.c.l.b16 %v12579
    %v13092 = vunpack.c.l.b16 %v12580
    %v13093 = vunpack.c.l.b16 %v12581
    %v13094 = vunpack.c.l.b16 %v12582
    %v13095 = vunpack.c.l.b16 %v12583
    %v13096 = vunpack.c.l.b16 %v12584
    %v13097 = vunpack.c.l.b16 %v12585
    %v13098 = vunpack.c.l.b16 %v12586
    %v13099 = vunpack.c.l.b16 %v12587
    %v13100 = vunpack.c.l.b16 %v12588
    %v13101 = vunpack.c.l.b16 %v12589
    %v13102 = vunpack.c.l.b16 %v12590
    %v13103 = vunpack.c.l.b16 %v12591
    %v13104 = vunpack.c.l.b16 %v12592
    %v13105 = vunpack.c.l.b16 %v12593
    %v13106 = vunpack.c.l.b16 %v12594
    %v13107 = vunpack.c.l.b16 %v12595
    %v13108 = vunpack.c.l.b16 %v12596
    %v13109 = vunpack.c.l.b16 %v12597
    %v13110 = vunpack.c.l.b16 %v12598
    %v13111 = vunpack.c.l.b16 %v12599
    %v13112 = vunpack.c.l.b16 %v12600
    %v13113 = vunpack.c.l.b16 %v12601
    %v13114 = vunpack.c.l.b16 %v12602
    %v13115 = vunpack.c.l.b16 %v12603
    %v13116 = vunpack.c.l.b16 %v12604
    %v13117 = vunpack.c.l.b16 %v12605
    %v13118 = vunpack.c.l.b16 %v12606
    %v13119 = vunpack.c.l.b16 %v12607
    %v13120 = vunpack.c.l.b16 %v12608
    %v13121 = vunpack.c.l.b16 %v12609
    %v13122 = vunpack.c.l.b16 %v12610
    %v13123 = vunpack.c.l.b16 %v12611
    %v13124 = vunpack.c.l.b16 %v12612
    %v13125 = vunpack.c.l.b16 %v12613
    %v13126 = vunpack.c.l.b16 %v12614
    %v13127 = vunpack.c.l.b16 %v12615
    %v13128 = vunpack.c.l.b16 %v12616
    %v13129 = vunpack.c.l.b16 %v12617
    %v13130 = vunpack.c.l.b16 %v12618
    %v13131 = vunpack.c.l.b16 %v12619
    %v13132 = vunpack.c.l.b16 %v12620
    %v13133 = vunpack.c.l.b16 %v12621
    %v13134 = vunpack.c.l.b16 %v12622
    %v13135 = vunpack.c.l.b16 %v12623
    %v13136 = vunpack.c.l.b16 %v12624
    %v13137 = vunpack.c.l.b16 %v12625
    %v13138 = vunpack.c.l.b16 %v12626
    %v13139 = vunpack.c.l.b16 %v12627
    %v13140 = vunpack.c.l.b16 %v12628
    %v13141 = vunpack.c.l.b16 %v12629
    %v13142 = vunpack.c.l.b16 %v12630
    %v13143 = vunpack.c.l.b16 %v12631
    %v13144 = vunpack.c.l.b16 %v12632
    %v13145 = vunpack.c.l.b16 %v12633
    %v13146 = vunpack.c.l.b16 %v12634
    %v13147 = vunpack.c.l.b16 %v12635
    %v13148 = vunpack.c.l.b16 %v12636
    %v13149 = vunpack.c.l.b16 %v12637
    %v13150 = vunpack.c.l.b16 %v12638
    %v13151 = vunpack.c.l.b16 %v12639
    %v13152 = vunpack.c.l.b16 %v12640
    %v13153 = vunpack.c.l.b16 %v12641
    %v13154 = vunpack.c.l.b16 %v12642
    %v13155 = vunpack.c.l.b16 %v12643
    %v13156 = vunpack.c.l.b16 %v12644
    %v13157 = vunpack.c.l.b16 %v12645
    %v13158 = vunpack.c.l.b16 %v12646
    %v13159 = vunpack.c.l.b16 %v12647
    %v13160 = vunpack.c.l.b16 %v12648
    %v13161 = vunpack.c.l.b16 %v12649
    %v13162 = vunpack.c.l.b16 %v12650
    %v13163 = vunpack.c.l.b16 %v12651
    %v13164 = vunpack.c.l.b16 %v12652
    %v13165 = vunpack.c.l.b16 %v12653
    %v13166 = vunpack.c.l.b16 %v12654
    %v13167 = vunpack.c.l.b16 %v12655
    %v13168 = vunpack.c.l.b16 %v12656
    %v13169 = vunpack.c.l.b16 %v12657
    %v13170 = vunpack.c.l.b16 %v12658
    %v13171 = vunpack.c.l.b16 %v12659
    %v13172 = vunpack.c.l.b16 %v12660
    %v13173 = vunpack.c.l.b16 %v12661
    %v13174 = vunpack.c.l.b16 %v12662
    %v13175 = vunpack.c.l.b16 %v12663
    %v13176 = vunpack.c.l.b16 %v12664
    %v13177 = vunpack.c.l.b16 %v12665
    %v13178 = vunpack.c.l.b16 %v12666
    %v13179 = vunpack.c.l.b16 %v12667
    %v13180 = vunpack.c.l.b16 %v12668
    %v13181 = vunpack.c.l.b16 %v12669
    %v13182 = vunpack.c.l.b16 %v12670
    %v13183 = vunpack.c.l.b16 %v12671
    %v13184 = vunpack.c.l.b16 %v12672
    %v13185 = vunpack.c.l.b16 %v12673
    %v13186 = vunpack.c.l.b16 %v12674
    %v13187 = vunpack.c.l.b16 %v12675
    %v13188 = vunpack.c.l.b16 %v12676
    %v13189 = vunpack.c.l.b16 %v12677
    %v13190 = vunpack.c.l.b16 %v12678
    %v13191 = vunpack.c.l.b16 %v12679
    %v13192 = vunpack.c.l.b16 %v12680
    %v13193 = vunpack.c.l.b16 %v12681
    %v13194 = vunpack.c.l.b16 %v12682
    %v13195 = vunpack.c.l.b16 %v12683
    %v13196 = vunpack.c.l.b16 %v12684
    %v13197 = vunpack.c.l.b16 %v12685
    %v13198 = vunpack.c.l.b16 %v12686
    %v13199 = vunpack.c.l.b16 %v12687
    %v13200 = vunpack.c.l.b16 %v12688
    %v13201 = vunpack.c.l.b16 %v12689
    %v13202 = vunpack.c.l.b16 %v12690
    %v13203 = vunpack.c.l.b16 %v12691
    %v13204 = vunpack.c.l.b16 %v12692
    %v13205 = vunpack.c.l.b16 %v12693
    %v13206 = vunpack.c.l.b16 %v12694
    %v13207 = vunpack.c.l.b16 %v12695
    %v13208 = vunpack.c.l.b16 %v12696
    %v13209 = vunpack.c.l.b16 %v12697
    %v13210 = vunpack.c.l.b16 %v12698
    %v13211 = vunpack.c.l.b16 %v12699
    %v13212 = vunpack.c.l.b16 %v12700
    %v13213 = vunpack.c.l.b16 %v12701
    %v13214 = vunpack.c.l.b16 %v12702
    %v13215 = vunpack.c.l.b16 %v12703
    %v13216 = vunpack.c.l.b16 %v12704
    %v13217 = vunpack.c.l.b16 %v12705
    %v13218 = vunpack.c.l.b16 %v12706
    %v13219 = vunpack.c.l.b16 %v12707
    %v13220 = vunpack.c.l.b16 %v12708
    %v13221 = vunpack.c.l.b16 %v12709
    %v13222 = vunpack.c.l.b16 %v12710
    %v13223 = vunpack.c.l.b16 %v12711
    %v13224 = vunpack.c.l.b16 %v12712
    %v13225 = vunpack.c.l.b16 %v12713
    %v13226 = vunpack.c.l.b16 %v12714
    %v13227 = vunpack.c.l.b16 %v12715
    %v13228 = vunpack.c.l.b16 %v12716
    %v13229 = vunpack.c.l.b16 %v12717
    %v13230 = vunpack.c.l.b16 %v12718
    %v13231 = vunpack.c.l.b16 %v12719
    %v13232 = vunpack.c.l.b16 %v12720
    %v13233 = vunpack.c.l.b16 %v12721
    %v13234 = vunpack.c.l.b16 %v12722
    %v13235 = vunpack.c.l.b16 %v12723
    %v13236 = vunpack.c.l.b16 %v12724
    %v13237 = vunpack.c.l.b16 %v12725
    %v13238 = vunpack.c.l.b16 %v12726
    %v13239 = vunpack.c.l.b16 %v12727
    %v13240 = vunpack.c.l.b16 %v12728
    %v13241 = vunpack.c.l.b16 %v12729
    %v13242 = vunpack.c.l.b16 %v12730
    %v13243 = vunpack.c.l.b16 %v12731
    %v13244 = vunpack.c.l.b16 %v12732
    %v13245 = vunpack.c.l.b16 %v12733
    %v13246 = vunpack.c.l.b16 %v12734
    %v13247 = vunpack.c.l.b16 %v12735
    %v13248 = vunpack.c.l.b16 %v12736
    %v13249 = vunpack.c.l.b16 %v12737
    %v13250 = vunpack.c.l.b16 %v12738
    %v13251 = vunpack.c.l.b16 %v12739
    %v13252 = vunpack.c.l.b16 %v12740
    %v13253 = vunpack.c.l.b16 %v12741
    %v13254 = vunpack.c.l.b16 %v12742
    %v13255 = vunpack.c.l.b16 %v12743
    %v13256 = vunpack.c.l.b16 %v12744
    %v13257 = vunpack.c.l.b16 %v12745
    %v13258 = vunpack.c.l.b16 %v12746
    %v13259 = vunpack.c.l.b16 %v12747
    %v13260 = vunpack.c.l.b16 %v12748
    %v13261 = vunpack.c.l.b16 %v12749
    %v13262 = vunpack.c.l.b16 %v12750
    %v13263 = vunpack.c.l.b16 %v12751
    %v13264 = vunpack.c.l.b16 %v12752
    %v13265 = vunpack.c.l.b16 %v12753
    %v13266 = vpack.c.b16 %v13011, %v13010
    %v13267 = vpack.c.b16 %v13013, %v13012
    %v13268 = vpack.c.b16 %v13015, %v13014
    %v13269 = vpack.c.b16 %v13017, %v13016
    %v13270 = vpack.c.b16 %v13019, %v13018
    %v13271 = vpack.c.b16 %v13021, %v13020
    %v13272 = vpack.c.b16 %v13023, %v13022
    %v13273 = vpack.c.b16 %v13025, %v13024
    %v13274 = vpack.c.b16 %v13027, %v13026
    %v13275 = vpack.c.b16 %v13029, %v13028
    %v13276 = vpack.c.b16 %v13031, %v13030
    %v13277 = vpack.c.b16 %v13033, %v13032
    %v13278 = vpack.c.b16 %v13035, %v13034
    %v13279 = vpack.c.b16 %v13037, %v13036
    %v13280 = vpack.c.b16 %v13039, %v13038
    %v13281 = vpack.c.b16 %v13041, %v13040
    %v13282 = vpack.c.b16 %v13043, %v13042
    %v13283 = vpack.c.b16 %v13045, %v13044
    %v13284 = vpack.c.b16 %v13047, %v13046
    %v13285 = vpack.c.b16 %v13049, %v13048
    %v13286 = vpack.c.b16 %v13051, %v13050
    %v13287 = vpack.c.b16 %v13053, %v13052
    %v13288 = vpack.c.b16 %v13055, %v13054
    %v13289 = vpack.c.b16 %v13057, %v13056
    %v13290 = vpack.c.b16 %v13059, %v13058
    %v13291 = vpack.c.b16 %v13061, %v13060
    %v13292 = vpack.c.b16 %v13063, %v13062
    %v13293 = vpack.c.b16 %v13065, %v13064
    %v13294 = vpack.c.b16 %v13067, %v13066
    %v13295 = vpack.c.b16 %v13069, %v13068
    %v13296 = vpack.c.b16 %v13071, %v13070
    %v13297 = vpack.c.b16 %v13073, %v13072
    %v13298 = vpack.c.b16 %v13075, %v13074
    %v13299 = vpack.c.b16 %v13077, %v13076
    %v13300 = vpack.c.b16 %v13079, %v13078
    %v13301 = vpack.c.b16 %v13081, %v13080
    %v13302 = vpack.c.b16 %v13083, %v13082
    %v13303 = vpack.c.b16 %v13085, %v13084
    %v13304 = vpack.c.b16 %v13087, %v13086
    %v13305 = vpack.c.b16 %v13089, %v13088
    %v13306 = vpack.c.b16 %v13091, %v13090
    %v13307 = vpack.c.b16 %v13093, %v13092
    %v13308 = vpack.c.b16 %v13095, %v13094
    %v13309 = vpack.c.b16 %v13097, %v13096
    %v13310 = vpack.c.b16 %v13099, %v13098
    %v13311 = vpack.c.b16 %v13101, %v13100
    %v13312 = vpack.c.b16 %v13103, %v13102
    %v13313 = vpack.c.b16 %v13105, %v13104
    %v13314 = vpack.c.b16 %v13107, %v13106
    %v13315 = vpack.c.b16 %v13109, %v13108
    %v13316 = vpack.c.b16 %v13111, %v13110
    %v13317 = vpack.c.b16 %v13113, %v13112
    %v13318 = vpack.c.b16 %v13115, %v13114
    %v13319 = vpack.c.b16 %v13117, %v13116
    %v13320 = vpack.c.b16 %v13119, %v13118
    %v13321 = vpack.c.b16 %v13121, %v13120
    %v13322 = vpack.c.b16 %v13123, %v13122
    %v13323 = vpack.c.b16 %v13125, %v13124
    %v13324 = vpack.c.b16 %v13127, %v13126
    %v13325 = vpack.c.b16 %v13129, %v13128
    %v13326 = vpack.c.b16 %v13131, %v13130
    %v13327 = vpack.c.b16 %v13133, %v13132
    %v13328 = vpack.c.b16 %v13135, %v13134
    %v13329 = vpack.c.b16 %v13137, %v13136
    %v13330 = vpack.c.b16 %v13139, %v13138
    %v13331 = vpack.c.b16 %v13141, %v13140
    %v13332 = vpack.c.b16 %v13143, %v13142
    %v13333 = vpack.c.b16 %v13145, %v13144
    %v13334 = vpack.c.b16 %v13147, %v13146
    %v13335 = vpack.c.b16 %v13149, %v13148
    %v13336 = vpack.c.b16 %v13151, %v13150
    %v13337 = vpack.c.b16 %v13153, %v13152
    %v13338 = vpack.c.b16 %v13155, %v13154
    %v13339 = vpack.c.b16 %v13157, %v13156
    %v13340 = vpack.c.b16 %v13159, %v13158
    %v13341 = vpack.c.b16 %v13161, %v13160
    %v13342 = vpack.c.b16 %v13163, %v13162
    %v13343 = vpack.c.b16 %v13165, %v13164
    %v13344 = vpack.c.b16 %v13167, %v13166
    %v13345 = vpack.c.b16 %v13169, %v13168
    %v13346 = vpack.c.b16 %v13171, %v13170
    %v13347 = vpack.c.b16 %v13173, %v13172
    %v13348 = vpack.c.b16 %v13175, %v13174
    %v13349 = vpack.c.b16 %v13177, %v13176
    %v13350 = vpack.c.b16 %v13179, %v13178
    %v13351 = vpack.c.b16 %v13181, %v13180
    %v13352 = vpack.c.b16 %v13183, %v13182
    %v13353 = vpack.c.b16 %v13185, %v13184
    %v13354 = vpack.c.b16 %v13187, %v13186
    %v13355 = vpack.c.b16 %v13189, %v13188
    %v13356 = vpack.c.b16 %v13191, %v13190
    %v13357 = vpack.c.b16 %v13193, %v13192
    %v13358 = vpack.c.b16 %v13195, %v13194
    %v13359 = vpack.c.b16 %v13197, %v13196
    %v13360 = vpack.c.b16 %v13199, %v13198
    %v13361 = vpack.c.b16 %v13201, %v13200
    %v13362 = vpack.c.b16 %v13203, %v13202
    %v13363 = vpack.c.b16 %v13205, %v13204
    %v13364 = vpack.c.b16 %v13207, %v13206
    %v13365 = vpack.c.b16 %v13209, %v13208
    %v13366 = vpack.c.b16 %v13211, %v13210
    %v13367 = vpack.c.b16 %v13213, %v13212
    %v13368 = vpack.c.b16 %v13215, %v13214
    %v13369 = vpack.c.b16 %v13217, %v13216
    %v13370 = vpack.c.b16 %v13219, %v13218
    %v13371 = vpack.c.b16 %v13221, %v13220
    %v13372 = vpack.c.b16 %v13223, %v13222
    %v13373 = vpack.c.b16 %v13225, %v13224
    %v13374 = vpack.c.b16 %v13227, %v13226
    %v13375 = vpack.c.b16 %v13229, %v13228
    %v13376 = vpack.c.b16 %v13231, %v13230
    %v13377 = vpack.c.b16 %v13233, %v13232
    %v13378 = vpack.c.b16 %v13235, %v13234
    %v13379 = vpack.c.b16 %v13237, %v13236
    %v13380 = vpack.c.b16 %v13239, %v13238
    %v13381 = vpack.c.b16 %v13241, %v13240
    %v13382 = vpack.c.b16 %v13243, %v13242
    %v13383 = vpack.c.b16 %v13245, %v13244
    %v13384 = vpack.c.b16 %v13247, %v13246
    %v13385 = vpack.c.b16 %v13249, %v13248
    %v13386 = vpack.c.b16 %v13251, %v13250
    %v13387 = vpack.c.b16 %v13253, %v13252
    %v13388 = vpack.c.b16 %v13255, %v13254
    %v13389 = vpack.c.b16 %v13257, %v13256
    %v13390 = vpack.c.b16 %v13259, %v13258
    %v13391 = vpack.c.b16 %v13261, %v13260
    %v13392 = vpack.c.b16 %v13263, %v13262
    %v13393 = vpack.c.b16 %v13265, %v13264
    %13522 = vmatpush.bf16.msra.mxu0 %v13273
    %13523 = vmatpush.bf16.msra.mxu0 %v13272
    %13524 = vmatpush.bf16.msra.mxu0 %v13271
    %13525 = vmatpush.bf16.msra.mxu0 %v13270
    %13526 = vmatpush.bf16.msra.mxu0 %v13269
    %13527 = vmatpush.bf16.msra.mxu0 %v13268
    %13528 = vmatpush.bf16.msra.mxu0 %v13267
    %13529 = vmatpush.bf16.msra.mxu0 %v13266
    %13530 = vmatmul.bf16.gmra.mxu0 %v12430
    %v13531 = vpop.f32.mrf.mxu0
    %v13532 = vadd.f32 0.0, %v13531
    %v13533 = vpop.f32.mrf.mxu0
    %v13534 = vadd.f32 0.0, %v13533
    %13535 = vdwg.mxu0
    %13536 = vmatpush.bf16.msra.mxu0 %v13281
    %13537 = vmatpush.bf16.msra.mxu0 %v13280
    %13538 = vmatpush.bf16.msra.mxu0 %v13279
    %13539 = vmatpush.bf16.msra.mxu0 %v13278
    %13540 = vmatpush.bf16.msra.mxu0 %v13277
    %13541 = vmatpush.bf16.msra.mxu0 %v13276
    %13542 = vmatpush.bf16.msra.mxu0 %v13275
    %13543 = vmatpush.bf16.msra.mxu0 %v13274
    %13544 = vmatmul.bf16.gmra.mxu0 %v12431
    %v13545 = vpop.f32.mrf.mxu0
    %v13546 = vadd.f32 %v13532, %v13545
    %v13547 = vpop.f32.mrf.mxu0
    %v13548 = vadd.f32 %v13534, %v13547
    %13549 = vdwg.mxu0
    %13550 = vmatpush.bf16.msra.mxu0 %v13289
    %13551 = vmatpush.bf16.msra.mxu0 %v13288
    %13552 = vmatpush.bf16.msra.mxu0 %v13287
    %13553 = vmatpush.bf16.msra.mxu0 %v13286
    %13554 = vmatpush.bf16.msra.mxu0 %v13285
    %13555 = vmatpush.bf16.msra.mxu0 %v13284
    %13556 = vmatpush.bf16.msra.mxu0 %v13283
    %13557 = vmatpush.bf16.msra.mxu0 %v13282
    %13558 = vmatmul.bf16.gmra.mxu0 %v12432
    %v13559 = vpop.f32.mrf.mxu0
    %v13560 = vadd.f32 %v13546, %v13559
    %v13561 = vpop.f32.mrf.mxu0
    %v13562 = vadd.f32 %v13548, %v13561
    %13563 = vdwg.mxu0
    %13564 = vmatpush.bf16.msra.mxu0 %v13297
    %13565 = vmatpush.bf16.msra.mxu0 %v13296
    %13566 = vmatpush.bf16.msra.mxu0 %v13295
    %13567 = vmatpush.bf16.msra.mxu0 %v13294
    %13568 = vmatpush.bf16.msra.mxu0 %v13293
    %13569 = vmatpush.bf16.msra.mxu0 %v13292
    %13570 = vmatpush.bf16.msra.mxu0 %v13291
    %13571 = vmatpush.bf16.msra.mxu0 %v13290
    %13572 = vmatmul.bf16.gmra.mxu0 %v12433
    %v13573 = vpop.f32.mrf.mxu0
    %v13574 = vadd.f32 %v13560, %v13573
    %v13575 = vpop.f32.mrf.mxu0
    %v13576 = vadd.f32 %v13562, %v13575
    %13577 = vdwg.mxu0
    %13578 = vmatpush.bf16.msra.mxu0 %v13305
    %13579 = vmatpush.bf16.msra.mxu0 %v13304
    %13580 = vmatpush.bf16.msra.mxu0 %v13303
    %13581 = vmatpush.bf16.msra.mxu0 %v13302
    %13582 = vmatpush.bf16.msra.mxu0 %v13301
    %13583 = vmatpush.bf16.msra.mxu0 %v13300
    %13584 = vmatpush.bf16.msra.mxu0 %v13299
    %13585 = vmatpush.bf16.msra.mxu0 %v13298
    %13586 = vmatmul.bf16.gmra.mxu0 %v12450
    %v13587 = vpop.f32.mrf.mxu0
    %v13588 = vadd.f32 %v13574, %v13587
    %v13589 = vpop.f32.mrf.mxu0
    %v13590 = vadd.f32 %v13576, %v13589
    %13591 = vdwg.mxu0
    %13592 = vmatpush.bf16.msra.mxu0 %v13313
    %13593 = vmatpush.bf16.msra.mxu0 %v13312
    %13594 = vmatpush.bf16.msra.mxu0 %v13311
    %13595 = vmatpush.bf16.msra.mxu0 %v13310
    %13596 = vmatpush.bf16.msra.mxu0 %v13309
    %13597 = vmatpush.bf16.msra.mxu0 %v13308
    %13598 = vmatpush.bf16.msra.mxu0 %v13307
    %13599 = vmatpush.bf16.msra.mxu0 %v13306
    %13600 = vmatmul.bf16.gmra.mxu0 %v12451
    %v13601 = vpop.f32.mrf.mxu0
    %v13602 = vadd.f32 %v13588, %v13601
    %v13603 = vpop.f32.mrf.mxu0
    %v13604 = vadd.f32 %v13590, %v13603
    %13605 = vdwg.mxu0
    %13606 = vmatpush.bf16.msra.mxu0 %v13321
    %13607 = vmatpush.bf16.msra.mxu0 %v13320
    %13608 = vmatpush.bf16.msra.mxu0 %v13319
    %13609 = vmatpush.bf16.msra.mxu0 %v13318
    %13610 = vmatpush.bf16.msra.mxu0 %v13317
    %13611 = vmatpush.bf16.msra.mxu0 %v13316
    %13612 = vmatpush.bf16.msra.mxu0 %v13315
    %13613 = vmatpush.bf16.msra.mxu0 %v13314
    %13614 = vmatmul.bf16.gmra.mxu0 %v12452
    %v13615 = vpop.f32.mrf.mxu0
    %v13616 = vadd.f32 %v13602, %v13615
    %v13617 = vpop.f32.mrf.mxu0
    %v13618 = vadd.f32 %v13604, %v13617
    %13619 = vdwg.mxu0
    %13620 = vmatpush.bf16.msra.mxu0 %v13329
    %13621 = vmatpush.bf16.msra.mxu0 %v13328
    %13622 = vmatpush.bf16.msra.mxu0 %v13327
    %13623 = vmatpush.bf16.msra.mxu0 %v13326
    %13624 = vmatpush.bf16.msra.mxu0 %v13325
    %13625 = vmatpush.bf16.msra.mxu0 %v13324
    %13626 = vmatpush.bf16.msra.mxu0 %v13323
    %13627 = vmatpush.bf16.msra.mxu0 %v13322
    %13628 = vmatmul.bf16.gmra.mxu0 %v12453
    %v13629 = vpop.f32.mrf.mxu0
    %v13630 = vadd.f32 %v13616, %v13629
    %v13631 = vpop.f32.mrf.mxu0
    %v13632 = vadd.f32 %v13618, %v13631
    %13633 = vdwg.mxu0
    %13634 = vmatpush.bf16.msra.mxu0 %v13337
    %13635 = vmatpush.bf16.msra.mxu0 %v13336
    %13636 = vmatpush.bf16.msra.mxu0 %v13335
    %13637 = vmatpush.bf16.msra.mxu0 %v13334
    %13638 = vmatpush.bf16.msra.mxu0 %v13333
    %13639 = vmatpush.bf16.msra.mxu0 %v13332
    %13640 = vmatpush.bf16.msra.mxu0 %v13331
    %13641 = vmatpush.bf16.msra.mxu0 %v13330
    %13642 = vmatmul.bf16.gmra.mxu0 %v12470
    %v13643 = vpop.f32.mrf.mxu0
    %v13644 = vadd.f32 %v13630, %v13643
    %v13645 = vpop.f32.mrf.mxu0
    %v13646 = vadd.f32 %v13632, %v13645
    %13647 = vdwg.mxu0
    %13648 = vmatpush.bf16.msra.mxu0 %v13345
    %13649 = vmatpush.bf16.msra.mxu0 %v13344
    %13650 = vmatpush.bf16.msra.mxu0 %v13343
    %13651 = vmatpush.bf16.msra.mxu0 %v13342
    %13652 = vmatpush.bf16.msra.mxu0 %v13341
    %13653 = vmatpush.bf16.msra.mxu0 %v13340
    %13654 = vmatpush.bf16.msra.mxu0 %v13339
    %13655 = vmatpush.bf16.msra.mxu0 %v13338
    %13656 = vmatmul.bf16.gmra.mxu0 %v12471
    %v13657 = vpop.f32.mrf.mxu0
    %v13658 = vadd.f32 %v13644, %v13657
    %v13659 = vpop.f32.mrf.mxu0
    %v13660 = vadd.f32 %v13646, %v13659
    %13661 = vdwg.mxu0
    %13662 = vmatpush.bf16.msra.mxu0 %v13353
    %13663 = vmatpush.bf16.msra.mxu0 %v13352
    %13664 = vmatpush.bf16.msra.mxu0 %v13351
    %13665 = vmatpush.bf16.msra.mxu0 %v13350
    %13666 = vmatpush.bf16.msra.mxu0 %v13349
    %13667 = vmatpush.bf16.msra.mxu0 %v13348
    %13668 = vmatpush.bf16.msra.mxu0 %v13347
    %13669 = vmatpush.bf16.msra.mxu0 %v13346
    %13670 = vmatmul.bf16.gmra.mxu0 %v12472
    %v13671 = vpop.f32.mrf.mxu0
    %v13672 = vadd.f32 %v13658, %v13671
    %v13673 = vpop.f32.mrf.mxu0
    %v13674 = vadd.f32 %v13660, %v13673
    %13675 = vdwg.mxu0
    %13676 = vmatpush.bf16.msra.mxu0 %v13361
    %13677 = vmatpush.bf16.msra.mxu0 %v13360
    %13678 = vmatpush.bf16.msra.mxu0 %v13359
    %13679 = vmatpush.bf16.msra.mxu0 %v13358
    %13680 = vmatpush.bf16.msra.mxu0 %v13357
    %13681 = vmatpush.bf16.msra.mxu0 %v13356
    %13682 = vmatpush.bf16.msra.mxu0 %v13355
    %13683 = vmatpush.bf16.msra.mxu0 %v13354
    %13684 = vmatmul.bf16.gmra.mxu0 %v12473
    %v13685 = vpop.f32.mrf.mxu0
    %v13686 = vadd.f32 %v13672, %v13685
    %v13687 = vpop.f32.mrf.mxu0
    %v13688 = vadd.f32 %v13674, %v13687
    %13689 = vdwg.mxu0
    %13690 = vmatpush.bf16.msra.mxu0 %v13369
    %13691 = vmatpush.bf16.msra.mxu0 %v13368
    %13692 = vmatpush.bf16.msra.mxu0 %v13367
    %13693 = vmatpush.bf16.msra.mxu0 %v13366
    %13694 = vmatpush.bf16.msra.mxu0 %v13365
    %13695 = vmatpush.bf16.msra.mxu0 %v13364
    %13696 = vmatpush.bf16.msra.mxu0 %v13363
    %13697 = vmatpush.bf16.msra.mxu0 %v13362
    %13698 = vmatmul.bf16.gmra.mxu0 %v12490
    %v13699 = vpop.f32.mrf.mxu0
    %v13700 = vadd.f32 %v13686, %v13699
    %v13701 = vpop.f32.mrf.mxu0
    %v13702 = vadd.f32 %v13688, %v13701
    %13703 = vdwg.mxu0
    %13704 = vmatpush.bf16.msra.mxu0 %v13377
    %13705 = vmatpush.bf16.msra.mxu0 %v13376
    %13706 = vmatpush.bf16.msra.mxu0 %v13375
    %13707 = vmatpush.bf16.msra.mxu0 %v13374
    %13708 = vmatpush.bf16.msra.mxu0 %v13373
    %13709 = vmatpush.bf16.msra.mxu0 %v13372
    %13710 = vmatpush.bf16.msra.mxu0 %v13371
    %13711 = vmatpush.bf16.msra.mxu0 %v13370
    %13712 = vmatmul.bf16.gmra.mxu0 %v12491
    %v13713 = vpop.f32.mrf.mxu0
    %v13714 = vadd.f32 %v13700, %v13713
    %v13715 = vpop.f32.mrf.mxu0
    %v13716 = vadd.f32 %v13702, %v13715
    %13717 = vdwg.mxu0
    %13718 = vmatpush.bf16.msra.mxu0 %v13385
    %13719 = vmatpush.bf16.msra.mxu0 %v13384
    %13720 = vmatpush.bf16.msra.mxu0 %v13383
    %13721 = vmatpush.bf16.msra.mxu0 %v13382
    %13722 = vmatpush.bf16.msra.mxu0 %v13381
    %13723 = vmatpush.bf16.msra.mxu0 %v13380
    %13724 = vmatpush.bf16.msra.mxu0 %v13379
    %13725 = vmatpush.bf16.msra.mxu0 %v13378
    %13726 = vmatmul.bf16.gmra.mxu0 %v12492
    %v13727 = vpop.f32.mrf.mxu0
    %v13728 = vadd.f32 %v13714, %v13727
    %v13729 = vpop.f32.mrf.mxu0
    %v13730 = vadd.f32 %v13716, %v13729
    %13731 = vdwg.mxu0
    %13732 = vmatpush.bf16.msra.mxu0 %v13393
    %13733 = vmatpush.bf16.msra.mxu0 %v13392
    %13734 = vmatpush.bf16.msra.mxu0 %v13391
    %13735 = vmatpush.bf16.msra.mxu0 %v13390
    %13736 = vmatpush.bf16.msra.mxu0 %v13389
    %13737 = vmatpush.bf16.msra.mxu0 %v13388
    %13738 = vmatpush.bf16.msra.mxu0 %v13387
    %13739 = vmatpush.bf16.msra.mxu0 %v13386
    %13740 = vmatmul.bf16.gmra.mxu0 %v12493
    %v13741 = vpop.f32.mrf.mxu0
    %v13742 = vadd.f32 %v13728, %v13741
    %v13743 = vpop.f32.mrf.mxu0
    %v13744 = vadd.f32 %v13730, %v13743
    %13745 = vdwg.mxu0
    %v13746 = vsub.f32 0.0, %v13742
    %v13747 = vsub.f32 0.0, %v13744
    %v13748 = vmul.f32 %v13746, 1.442695
    %v13749 = vpow.pop %v13748
    %v13750 = vmul.f32 %v13747, 1.442695
    %v13751 = vpow.pop %v13750
    %v13752 = vadd.f32 %v13749, 1.0
    %v13753 = vadd.f32 %v13751, 1.0
    %v13754 = vrcp.pop %v13752
    %v13755 = vrcp.pop %v13753
    %13756 = vst [vmem:[%s13] sm:$0xff] %v13754
    %13757 = vst [vmem:[%s13 + $0x8] sm:$0xff] %v13755
    // Predicated region
    $region74: #{discriminator_forward.1} parent=1 // pred_check
      _
    $region75: #{discriminator_forward.1} parent=1 // pred_check_branch
      %13759 = sbr.rel (0) target = $region77
    $region76: #{discriminator_forward.1} parent=1 // pred_region
      _
    $region77: #{discriminator_forward.1} parent=1 // pred_fallthru
      _
    // Predicated region
    $region78: #{discriminator_forward.1} parent=1 // pred_check
      _
    $region79: #{discriminator_forward.1} parent=1 // pred_check_branch
      %13761 = sbr.rel (0) target = $region81
    $region80: #{discriminator_forward.1} parent=1 // pred_region
      _
    $region81: #{discriminator_forward.1} parent=1 // pred_fallthru
      _
    %13762 = vsyncpa [#allocation3], 1
    %13763 = vsyncpa [#allocation5], 1
    %13764 = vsyncpa [#allocation8], 1

</llo_original>
